<compile_context>
chip_gen: v7x
topology: tpu7x:2x2x1
jax: 0.10.0
libtpu: 0.0.40
codegen_flags: <defaults>
</compile_context>

<pallas_src>
import numpy as np

import jax
import jax.numpy as jnp
from jax import lax
from jax.experimental import pallas as pl
from jax.experimental.pallas import tpu as pltpu

EPS = 1e-5  # torch.nn.BatchNorm2d default eps


def conv_out(n, k, s, p):
    return (n + 2 * p - k) // s + 1


# --------------------- host-side one-time preparation ---------------------- #

def build_gather_matrix(H, W, B, kh, kw, stride, pad, Ho, Wo):
    """0/1 matrix G of shape (kh*kw*Ho*Wo*B, H*W*B).

    Rows ordered (t=(ki,kj), ho, wo, b); cols ordered (h, w, b).
    G @ act (act rows ordered (h,w,b)) yields, per kernel tap t, that tap's
    im2col patch rows; padded positions come out as zeros.
    NOTE: both dims scale with B (O(B^2) memory).  Fine at the small batches
    used here; for large B switch to a batch-independent spatial-only gather.
    """
    n_in = H * W * B
    n_out = Ho * Wo * B
    G = np.zeros((kh * kw * n_out, n_in), np.float32)
    for ki in range(kh):
        for kj in range(kw):
            t = ki * kw + kj
            for ho in range(Ho):
                h = stride * ho - pad + ki
                if not (0 <= h < H):
                    continue
                for wo in range(Wo):
                    w = stride * wo - pad + kj
                    if not (0 <= w < W):
                        continue
                    for b in range(B):
                        r = t * n_out + (ho * Wo + wo) * B + b
                        c = (h * W + w) * B + b
                        G[r, c] = 1.0
    return G


def coord_contribution(w1_full, B, H, W, H1, W1):
    """Precompute conv1's response to the (data-independent) coordinate planes.

    Returns an f32 (H1*W1*B, 64) map, rows ordered (h1, w1, b).
    """
    # TODO(synk): SpatialDimensionAdder source is not provided; assume
    # normalized [0,1] row/col coordinate planes (forward maps them to [-1,1]).
    i = jnp.broadcast_to(jnp.linspace(0.0, 1.0, H).reshape(1, 1, H, 1), (1, 1, H, W))
    j = jnp.broadcast_to(jnp.linspace(0.0, 1.0, W).reshape(1, 1, 1, W), (1, 1, H, W))
    coords = jnp.concatenate([i * 2.0 - 1.0, j * 2.0 - 1.0], axis=1)      # (1,2,H,W)
    wc = jnp.asarray(w1_full[:, 3:5], jnp.float32)                        # (64,2,5,5)
    y = lax.conv_general_dilated(coords, wc, (2, 2), [(1, 1), (1, 1)],
                                 dimension_numbers=('NCHW', 'OIHW', 'NCHW'))
    y = jnp.transpose(y[0], (1, 2, 0))                                    # (H1,W1,64)
    y = jnp.broadcast_to(y[:, :, None, :], (H1, W1, B, 64))
    return y.reshape(H1 * W1 * B, 64)


def prepare_kernel_operands(params, B, H, W):
    """Reorganize torch-layout parameters into kernel-friendly 2-D operands."""
    H1, W1 = conv_out(H, 5, 2, 1), conv_out(W, 5, 2, 1)
    H2, W2 = conv_out(H1, 7, 2, 1), conv_out(W1, 7, 2, 1)
    H3, W3 = conv_out(H2, 5, 2, 1), conv_out(W2, 5, 2, 1)
    dims = dict(B=B, H=H, W=W, H1=H1, W1=W1, H2=H2, W2=W2, H3=H3, W3=W3)

    f32 = lambda a: jnp.asarray(a, jnp.float32)
    b16 = lambda a: jnp.asarray(a, jnp.bfloat16)
    ops = {}
    # conv1: only the 3 data channels go through the im2col matmul; the coord
    # channels are folded into the precomputed additive map 'cmap'.
    ops['w1'] = b16(params['w1'][:, :3].reshape(64, 3 * 5 * 5).T)        # (75,64)
    ops['cmap'] = f32(coord_contribution(params['w1'], B, H, W, H1, W1))  # (n1,64)
    ops['g1'] = f32(params['g1'].reshape(1, 64))
    ops['be1'] = f32(params['be1'].reshape(1, 64))
    # conv2 / conv3: 0/1 gather matrices (exact in bf16) + per-tap weights
    # with rows ordered (t, cin).
    ops['G2'] = b16(build_gather_matrix(H1, W1, B, 7, 7, 2, 1, H2, W2))
    ops['w2'] = b16(params['w2'].transpose(2, 3, 1, 0).reshape(7 * 7 * 64, 32))
    ops['g2'] = f32(params['g2'].reshape(1, 32))
    ops['be2'] = f32(params['be2'].reshape(1, 32))
    ops['G3'] = b16(build_gather_matrix(H2, W2, B, 5, 5, 2, 1, H3, W3))
    ops['w3'] = b16(params['w3'].transpose(2, 3, 1, 0).reshape(5 * 5 * 32, 16))
    ops['g3'] = f32(params['g3'].reshape(1, 16))
    ops['be3'] = f32(params['be3'].reshape(1, 16))
    # fc1: permute rows from torch flatten order (c, h, w) to kernel (hw, c).
    hw3 = H3 * W3
    ops['fc1_w'] = f32(params['fc1_w'].reshape(16, hw3, 64)
                       .transpose(1, 0, 2).reshape(hw3 * 16, 64))
    ops['fc1_b'] = f32(params['fc1_b'].reshape(1, 64))
    ops['fc2_w'] = f32(params['fc2_w'])
    ops['fc2_b'] = f32(params['fc2_b'].reshape(1, 64))
    ops['fc3_w'] = f32(params['fc3_w'])
    ops['fc3_b'] = f32(params['fc3_b'].reshape(1, 6))
    return ops, dims


# ------------------------------- JAX glue ----------------------------------- #

def add_coord_channels(x):
    """(B,3,H,W) -> (B,5,H,W).  Used only by the pure-JAX reference."""
    B, _, H, W = x.shape
    i = jnp.broadcast_to(jnp.linspace(0.0, 1.0, H).reshape(1, 1, H, 1), (B, 1, H, W))
    j = jnp.broadcast_to(jnp.linspace(0.0, 1.0, W).reshape(1, 1, 1, W), (B, 1, H, W))
    return jnp.concatenate([x, i * 2.0 - 1.0, j * 2.0 - 1.0], axis=1)


def im2col_hwb(x, kh, kw, stride, pad):
    """(B,C,H,W) -> (Ho*Wo*B, C*kh*kw); rows ordered (ho,wo,b), cols (c,ki,kj)."""
    B, C, H, W = x.shape
    Ho, Wo = conv_out(H, kh, stride, pad), conv_out(W, kw, stride, pad)
    xp = jnp.pad(x, ((0, 0), (0, 0), (pad, pad), (pad, pad)))
    taps = []
    for i in range(kh):
        for j in range(kw):
            taps.append(xp[:, :, i:i + stride * Ho:stride, j:j + stride * Wo:stride])
    col = jnp.stack(taps, axis=2)                    # (B, C, kh*kw, Ho, Wo)
    col = col.reshape(B, C * kh * kw, Ho, Wo)        # features ordered (c, ki, kj)
    return col.transpose(2, 3, 0, 1).reshape(Ho * Wo * B, C * kh * kw)


# ------------------------------ Pallas kernel ------------------------------- #

def _tree_sum(terms):
    """Balanced pairwise sum -> no long serialized accumulation chain."""
    terms = list(terms)
    while len(terms) > 1:
        nxt = [terms[i] + terms[i + 1] for i in range(0, len(terms) - 1, 2)]
        if len(terms) % 2:
            nxt.append(terms[-1])
        terms = nxt
    return terms[0]


def _bn_relu(y, gamma, beta):
    """Training-mode BatchNorm (over all rows) + ReLU, single-pass stats.

    Column reductions are done as ones-row matmuls (MXU), var = E[x^2]-mean^2.
    """
    n = y.shape[0]
    ones = jnp.ones((1, n), jnp.float32)
    inv_n = 1.0 / n
    mean = jnp.dot(ones, y, preferred_element_type=jnp.float32) * inv_n
    meansq = jnp.dot(ones, y * y, preferred_element_type=jnp.float32) * inv_n
    var = meansq - mean * mean
    scale = lax.rsqrt(var + EPS) * gamma
    return jnp.maximum((y - mean) * scale + beta, 0.0)


def make_fused_kernel(dims):
    B = dims['B']
    n2 = dims['H2'] * dims['W2'] * B          # conv2 output rows (h,w,b)
    n3 = dims['H3'] * dims['W3'] * B          # conv3 output rows (h,w,b)
    hw3 = dims['H3'] * dims['W3']

    def kernel(p1_ref, w1_ref, cmap_ref, g1_ref, be1_ref,
               G2_hbm, w2_hbm, g2_ref, be2_ref,
               G3_ref, w3_ref, g3_ref, be3_ref,
               f1w_ref, f1b_ref, f2w_ref, f2b_ref, f3w_ref, f3b_ref,
               out_ref,
               G2_vmem, w2_vmem, sem):
        # ---- kick off DMA of conv2's big constants; overlap with conv1 ------
        cp_g2 = pltpu.make_async_copy(G2_hbm, G2_vmem, sem.at[0])
        cp_w2 = pltpu.make_async_copy(w2_hbm, w2_vmem, sem.at[1])
        cp_g2.start()
        cp_w2.start()

        # ---- conv1 (3 data channels) + coord map + BN + ReLU ----------------
        a1 = jnp.dot(p1_ref[...], w1_ref[...], preferred_element_type=jnp.float32)
        a1 = _bn_relu(a1 + cmap_ref[...], g1_ref[...], be1_ref[...])  # (n1, 64)
        a1_bf = a1.astype(jnp.bfloat16)

        # ---- conv2: in-VMEM im2col (gather matmul) + per-tap matmuls --------
        cp_g2.wait()
        cp_w2.wait()
        P2 = jnp.dot(G2_vmem[...], a1_bf,
                     preferred_element_type=jnp.float32)     # (49*n2, 64)
        P2 = P2.astype(jnp.bfloat16)   # exact: each gather row selects one value
        w2 = w2_vmem[...]
        acc2 = _tree_sum([
            jnp.dot(P2[t * n2:(t + 1) * n2, :], w2[t * 64:(t + 1) * 64, :],
                    preferred_element_type=jnp.float32)
            for t in range(7 * 7)])
        a2 = _bn_relu(acc2, g2_ref[...], be2_ref[...])        # (n2, 32)
        a2_bf = a2.astype(jnp.bfloat16)

        # ---- conv3 ----------------------------------------------------------
        P3 = jnp.dot(G3_ref[...], a2_bf,
                     preferred_element_type=jnp.float32)      # (25*n3, 32)
        P3 = P3.astype(jnp.bfloat16)
        w3 = w3_ref[...]
        acc3 = _tree_sum([
            jnp.dot(P3[t * n3:(t + 1) * n3, :], w3[t * 32:(t + 1) * 32, :],
                    preferred_element_type=jnp.float32)
            for t in range(5 * 5)])
        a3 = _bn_relu(acc3, g3_ref[...], be3_ref[...])        # (n3, 16), rows (h,w,b)

        # ---- fc1 (flatten handled by host-side fc1 row permutation) ---------
        f1w = f1w_ref[...]
        y = _tree_sum([f1b_ref[...]] + [
            jnp.dot(a3[hw * B:(hw + 1) * B, :], f1w[hw * 16:(hw + 1) * 16, :],
                    preferred_element_type=jnp.float32)
            for hw in range(hw3)])
        y = jnp.maximum(y, 0.0)

        # ---- fc2 / fc3 -------------------------------------------------------
        y = jnp.maximum(jnp.dot(y, f2w_ref[...], preferred_element_type=jnp.float32)
                        + f2b_ref[...], 0.0)
        out_ref[...] = (jnp.dot(y, f3w_ref[...], preferred_element_type=jnp.float32)
                        + f3b_ref[...])

    return kernel


def forward(ops, dims, x):
    """x: (B, 3, H, W) NCHW -> (B, 6).  Single fused pallas_call."""
    # Host-side im2col for conv1 only (3 channels, ~70 KB).  An in-kernel G1
    # gather matrix for conv1 would be several MB, so it stays here.
    patches1 = im2col_hwb(x, 5, 5, 2, 1).astype(jnp.bfloat16)   # (n1, 75)
    B = dims['B']
    n1 = dims['H1'] * dims['W1'] * B
    n2 = dims['H2'] * dims['W2'] * B
    kernel = make_fused_kernel(dims)

    any_spec = pl.BlockSpec(memory_space=pl.ANY)                      # manual DMA
    vmem_spec = pl.BlockSpec(memory_space=pltpu.MemorySpace.VMEM)     # whole array
    in_specs = [vmem_spec] * 19
    in_specs[5] = any_spec   # G2 stays in HBM; copied async inside the kernel
    in_specs[6] = any_spec   # w2 likewise

    return pl.pallas_call(
        kernel,
        out_shape=jax.ShapeDtypeStruct((B, 6), jnp.float32),
        in_specs=in_specs,
        out_specs=vmem_spec,
        scratch_shapes=[
            pltpu.VMEM((7 * 7 * n2, n1), jnp.bfloat16),   # G2 landing buffer
            pltpu.VMEM((7 * 7 * 64, 32), jnp.bfloat16),   # w2 landing buffer
            pltpu.SemaphoreType.DMA((2,)),
        ],
    )(patches1, ops['w1'], ops['cmap'], ops['g1'], ops['be1'],
      ops['G2'], ops['w2'], ops['g2'], ops['be2'],
      ops['G3'], ops['w3'], ops['g3'], ops['be3'],
      ops['fc1_w'], ops['fc1_b'], ops['fc2_w'], ops['fc2_b'],
      ops['fc3_w'], ops['fc3_b'])


# ---------------------- pure-JAX reference (validation) --------------------- #

def _ref_conv_bn_relu(x, w, b, g, be, stride, pad):
    y = lax.conv_general_dilated(x, w, (stride, stride), [(pad, pad), (pad, pad)],
                                 dimension_numbers=('NCHW', 'OIHW', 'NCHW'))
    y = y + b.reshape(1, -1, 1, 1)                      # conv bias (cancels in BN)
    mean = jnp.mean(y, axis=(0, 2, 3), keepdims=True)
    var = jnp.mean(jnp.square(y - mean), axis=(0, 2, 3), keepdims=True)
    y_hat = (y - mean) * lax.rsqrt(var + EPS)
    return jnp.maximum(y_hat * g.reshape(1, -1, 1, 1) + be.reshape(1, -1, 1, 1), 0.0)


def ref_forward(params, x):
    B = x.shape[0]
    x5 = add_coord_channels(x)
    h = _ref_conv_bn_relu(x5, params['w1'], params['b1'], params['g1'], params['be1'], 2, 1)
    h = _ref_conv_bn_relu(h, params['w2'], params['b2'], params['g2'], params['be2'], 2, 1)
    h = _ref_conv_bn_relu(h, params['w3'], params['b3'], params['g3'], params['be3'], 2, 1)
    flat = h.reshape(B, -1)                             # torch .view: (C,H,W) order
    f1 = jnp.maximum(flat @ params['fc1_w'] + params['fc1_b'], 0.0)
    f2 = jnp.maximum(f1 @ params['fc2_w'] + params['fc2_b'], 0.0)
    return f2 @ params['fc3_w'] + params['fc3_b']


# -------------------------------- parameters -------------------------------- #

def init_params(key):
    ks = jax.random.split(key, 18)
    r = lambda k, shape, s=0.1: (s * jax.random.normal(k, shape)).astype(jnp.float32)
    p = {}
    p['w1'] = r(ks[0], (64, 5, 5, 5));   p['b1'] = r(ks[1], (64,))
    p['g1'] = 1.0 + r(ks[2], (64,));     p['be1'] = r(ks[3], (64,))
    p['w2'] = r(ks[4], (32, 64, 7, 7));  p['b2'] = r(ks[5], (32,))
    p['g2'] = 1.0 + r(ks[6], (32,));     p['be2'] = r(ks[7], (32,))
    p['w3'] = r(ks[8], (16, 32, 5, 5));  p['b3'] = r(ks[9], (16,))
    p['g3'] = 1.0 + r(ks[10], (16,));    p['be3'] = r(ks[11], (16,))
    p['fc1_w'] = r(ks[12], (32, 64));    p['fc1_b'] = r(ks[13], (64,))
    p['fc2_w'] = r(ks[14], (64, 64));    p['fc2_b'] = r(ks[15], (64,))
    p['fc3_w'] = r(ks[16], (64, 6));     p['fc3_b'] = r(ks[17], (6,))
    return p


if __name__ == "__main__":
    key = jax.random.PRNGKey(0)
    pkey, xkey = jax.random.split(key)
    params = init_params(pkey)

    # Image size chosen so the conv stack flattens to 16*1*2 = 32 features,
    # matching FullImageNetwork_32's fc1 (in_features=32):
    #   (20,28) -conv1 s2-> (9,13) -conv2 s2-> (3,5) -conv3 s2-> (1,2)
    B, H, W = 2, 20, 28
    x = jax.random.normal(xkey, (B, 3, H, W), dtype=jnp.float32)

    ops, dims = prepare_kernel_operands(params, B, H, W)
    fwd = jax.jit(lambda operands, image: forward(operands, dims, image))

    out = jax.block_until_ready(fwd(ops, x))
    assert out.shape == (B, 6), out.shape

    # bf16 MXU operands (per perf review) introduce ~0.1-1% rounding vs the
    # pure-f32 reference, so the comparison tolerance is 1e-2.
    ref = ref_forward(params, x)
    assert jnp.allclose(out, ref, rtol=1e-2, atol=1e-2), (out, ref)

    print("KERNEL_OK")
</pallas_src>

<mosaic_0001>
module attributes {stable_mosaic.version = 11 : i64} {
  func.func @kernel(%arg0: memref<234x75xbf16, #tpu.memory_space<vmem>>, %arg1: memref<75x64xbf16, #tpu.memory_space<vmem>>, %arg2: memref<234x64xf32, #tpu.memory_space<vmem>>, %arg3: memref<1x64xf32, #tpu.memory_space<vmem>>, %arg4: memref<1x64xf32, #tpu.memory_space<vmem>>, %arg5: memref<1470x234xbf16, #tpu.memory_space<any>>, %arg6: memref<3136x32xbf16, #tpu.memory_space<any>>, %arg7: memref<1x32xf32, #tpu.memory_space<vmem>>, %arg8: memref<1x32xf32, #tpu.memory_space<vmem>>, %arg9: memref<100x30xbf16, #tpu.memory_space<vmem>>, %arg10: memref<800x16xbf16, #tpu.memory_space<vmem>>, %arg11: memref<1x16xf32, #tpu.memory_space<vmem>>, %arg12: memref<1x16xf32, #tpu.memory_space<vmem>>, %arg13: memref<32x64xf32, #tpu.memory_space<vmem>>, %arg14: memref<1x64xf32, #tpu.memory_space<vmem>>, %arg15: memref<64x64xf32, #tpu.memory_space<vmem>>, %arg16: memref<1x64xf32, #tpu.memory_space<vmem>>, %arg17: memref<64x6xf32, #tpu.memory_space<vmem>>, %arg18: memref<1x6xf32, #tpu.memory_space<vmem>>, %arg19: memref<2x6xf32, #tpu.memory_space<vmem>>, %arg20: memref<1470x234xbf16, #tpu.memory_space<vmem>>, %arg21: memref<3136x32xbf16, #tpu.memory_space<vmem>>, %arg22: memref<2x!tpu.dma_semaphore, #tpu.memory_space<semaphore_mem>>) attributes {dimension_semantics = [], scalar_prefetch = 0 : i64, scratch_operands = 3 : i64, tpu.core_type = #tpu.core_type<tc>} {
    %c0_i32 = arith.constant 0 : i32
    %0 = tpu.memref_slice %arg22[%c0_i32] : memref<2x!tpu.dma_semaphore, #tpu.memory_space<semaphore_mem>> -> memref<1x!tpu.dma_semaphore, #tpu.memory_space<semaphore_mem>>
    %1 = tpu.memref_squeeze %0 : memref<1x!tpu.dma_semaphore, #tpu.memory_space<semaphore_mem>> -> memref<!tpu.dma_semaphore, #tpu.memory_space<semaphore_mem>>
    tpu.enqueue_dma source(%arg5 : memref<1470x234xbf16, #tpu.memory_space<any>>) target(%arg20 : memref<1470x234xbf16, #tpu.memory_space<vmem>>) target_semaphore(%1 : memref<!tpu.dma_semaphore, #tpu.memory_space<semaphore_mem>>)
    %c1_i32 = arith.constant 1 : i32
    %2 = tpu.memref_slice %arg22[%c1_i32] : memref<2x!tpu.dma_semaphore, #tpu.memory_space<semaphore_mem>> -> memref<1x!tpu.dma_semaphore, #tpu.memory_space<semaphore_mem>>
    %3 = tpu.memref_squeeze %2 : memref<1x!tpu.dma_semaphore, #tpu.memory_space<semaphore_mem>> -> memref<!tpu.dma_semaphore, #tpu.memory_space<semaphore_mem>>
    tpu.enqueue_dma source(%arg6 : memref<3136x32xbf16, #tpu.memory_space<any>>) target(%arg21 : memref<3136x32xbf16, #tpu.memory_space<vmem>>) target_semaphore(%3 : memref<!tpu.dma_semaphore, #tpu.memory_space<semaphore_mem>>)
    %c0 = arith.constant 0 : index
    %c0_0 = arith.constant 0 : index
    %4 = vector.load %arg0[%c0, %c0_0] : memref<234x75xbf16, #tpu.memory_space<vmem>>, vector<234x75xbf16>
    %c0_1 = arith.constant 0 : index
    %c0_2 = arith.constant 0 : index
    %5 = vector.load %arg1[%c0_1, %c0_2] : memref<75x64xbf16, #tpu.memory_space<vmem>>, vector<75x64xbf16>
    %cst = arith.constant dense<0.000000e+00> : vector<234x64xf32>
    %6 = tpu.matmul %4, %5, %cst {dimension_numbers = #tpu.dot_dimension_numbers<[1], [0], [0], [1], [0, 0, 1, 1], [], []>} : vector<234x75xbf16>, vector<75x64xbf16>, vector<234x64xf32> -> vector<234x64xf32>
    %c0_3 = arith.constant 0 : index
    %c0_4 = arith.constant 0 : index
    %7 = vector.load %arg2[%c0_3, %c0_4] : memref<234x64xf32, #tpu.memory_space<vmem>>, vector<234x64xf32>
    %8 = arith.addf %6, %7 : vector<234x64xf32>
    %c0_5 = arith.constant 0 : index
    %c0_6 = arith.constant 0 : index
    %9 = vector.load %arg3[%c0_5, %c0_6] : memref<1x64xf32, #tpu.memory_space<vmem>>, vector<1x64xf32>
    %c0_7 = arith.constant 0 : index
    %c0_8 = arith.constant 0 : index
    %10 = vector.load %arg4[%c0_7, %c0_8] : memref<1x64xf32, #tpu.memory_space<vmem>>, vector<1x64xf32>
    %cst_9 = arith.constant 1.000000e+00 : f32
    %11 = vector.broadcast %cst_9 : f32 to vector<1x234xf32>
    %cst_10 = arith.constant dense<0.000000e+00> : vector<1x64xf32>
    %12 = tpu.matmul %11, %8, %cst_10 {dimension_numbers = #tpu.dot_dimension_numbers<[1], [0], [0], [1], [0, 0, 1, 1], [], []>} : vector<1x234xf32>, vector<234x64xf32>, vector<1x64xf32> -> vector<1x64xf32>
    %cst_11 = arith.constant 0.00427350448 : f32
    %13 = vector.broadcast %cst_11 : f32 to vector<1x64xf32>
    %14 = arith.mulf %12, %13 : vector<1x64xf32>
    %15 = arith.mulf %8, %8 : vector<234x64xf32>
    %cst_12 = arith.constant dense<0.000000e+00> : vector<1x64xf32>
    %16 = tpu.matmul %11, %15, %cst_12 {dimension_numbers = #tpu.dot_dimension_numbers<[1], [0], [0], [1], [0, 0, 1, 1], [], []>} : vector<1x234xf32>, vector<234x64xf32>, vector<1x64xf32> -> vector<1x64xf32>
    %cst_13 = arith.constant 0.00427350448 : f32
    %17 = vector.broadcast %cst_13 : f32 to vector<1x64xf32>
    %18 = arith.mulf %16, %17 : vector<1x64xf32>
    %19 = arith.mulf %14, %14 : vector<1x64xf32>
    %20 = arith.subf %18, %19 : vector<1x64xf32>
    %cst_14 = arith.constant 9.99999974E-6 : f32
    %21 = vector.broadcast %cst_14 : f32 to vector<1x64xf32>
    %22 = arith.addf %20, %21 : vector<1x64xf32>
    %23 = math.rsqrt %22 : vector<1x64xf32>
    %24 = arith.mulf %23, %9 : vector<1x64xf32>
    %25 = vector.broadcast %14 : vector<1x64xf32> to vector<234x64xf32>
    %26 = arith.subf %8, %25 : vector<234x64xf32>
    %27 = vector.broadcast %24 : vector<1x64xf32> to vector<234x64xf32>
    %28 = arith.mulf %26, %27 : vector<234x64xf32>
    %29 = vector.broadcast %10 : vector<1x64xf32> to vector<234x64xf32>
    %30 = arith.addf %28, %29 : vector<234x64xf32>
    %cst_15 = arith.constant 0.000000e+00 : f32
    %31 = vector.broadcast %cst_15 : f32 to vector<234x64xf32>
    %32 = arith.maximumf %30, %31 : vector<234x64xf32>
    %33 = arith.truncf %32 : vector<234x64xf32> to vector<234x64xbf16>
    %c0_i32_16 = arith.constant 0 : i32
    %34 = tpu.memref_slice %arg22[%c0_i32_16] : memref<2x!tpu.dma_semaphore, #tpu.memory_space<semaphore_mem>> -> memref<1x!tpu.dma_semaphore, #tpu.memory_space<semaphore_mem>>
    %35 = tpu.memref_squeeze %34 : memref<1x!tpu.dma_semaphore, #tpu.memory_space<semaphore_mem>> -> memref<!tpu.dma_semaphore, #tpu.memory_space<semaphore_mem>>
    tpu.wait_dma2 semaphore(%35 : memref<!tpu.dma_semaphore, #tpu.memory_space<semaphore_mem>>) src(%arg5 : memref<1470x234xbf16, #tpu.memory_space<any>>) dst(%arg20 : memref<1470x234xbf16, #tpu.memory_space<vmem>>)
    %c1_i32_17 = arith.constant 1 : i32
    %36 = tpu.memref_slice %arg22[%c1_i32_17] : memref<2x!tpu.dma_semaphore, #tpu.memory_space<semaphore_mem>> -> memref<1x!tpu.dma_semaphore, #tpu.memory_space<semaphore_mem>>
    %37 = tpu.memref_squeeze %36 : memref<1x!tpu.dma_semaphore, #tpu.memory_space<semaphore_mem>> -> memref<!tpu.dma_semaphore, #tpu.memory_space<semaphore_mem>>
    tpu.wait_dma2 semaphore(%37 : memref<!tpu.dma_semaphore, #tpu.memory_space<semaphore_mem>>) src(%arg6 : memref<3136x32xbf16, #tpu.memory_space<any>>) dst(%arg21 : memref<3136x32xbf16, #tpu.memory_space<vmem>>)
    %c0_18 = arith.constant 0 : index
    %c0_19 = arith.constant 0 : index
    %38 = vector.load %arg20[%c0_18, %c0_19] : memref<1470x234xbf16, #tpu.memory_space<vmem>>, vector<1470x234xbf16>
    %cst_20 = arith.constant dense<0.000000e+00> : vector<1470x64xf32>
    %39 = tpu.matmul %38, %33, %cst_20 {dimension_numbers = #tpu.dot_dimension_numbers<[1], [0], [0], [1], [0, 0, 1, 1], [], []>} : vector<1470x234xbf16>, vector<234x64xbf16>, vector<1470x64xf32> -> vector<1470x64xf32>
    %40 = arith.truncf %39 : vector<1470x64xf32> to vector<1470x64xbf16>
    %c0_21 = arith.constant 0 : index
    %c0_22 = arith.constant 0 : index
    %41 = vector.load %arg21[%c0_21, %c0_22] : memref<3136x32xbf16, #tpu.memory_space<vmem>>, vector<3136x32xbf16>
    %42 = vector.extract_strided_slice %40 {offsets = [0, 0], sizes = [30, 64], strides = [1, 1]} : vector<1470x64xbf16> to vector<30x64xbf16>
    %43 = vector.extract_strided_slice %41 {offsets = [0, 0], sizes = [64, 32], strides = [1, 1]} : vector<3136x32xbf16> to vector<64x32xbf16>
    %cst_23 = arith.constant dense<0.000000e+00> : vector<30x32xf32>
    %44 = tpu.matmul %42, %43, %cst_23 {dimension_numbers = #tpu.dot_dimension_numbers<[1], [0], [0], [1], [0, 0, 1, 1], [], []>} : vector<30x64xbf16>, vector<64x32xbf16>, vector<30x32xf32> -> vector<30x32xf32>
    %45 = vector.extract_strided_slice %40 {offsets = [30, 0], sizes = [30, 64], strides = [1, 1]} : vector<1470x64xbf16> to vector<30x64xbf16>
    %46 = vector.extract_strided_slice %41 {offsets = [64, 0], sizes = [64, 32], strides = [1, 1]} : vector<3136x32xbf16> to vector<64x32xbf16>
    %cst_24 = arith.constant dense<0.000000e+00> : vector<30x32xf32>
    %47 = tpu.matmul %45, %46, %cst_24 {dimension_numbers = #tpu.dot_dimension_numbers<[1], [0], [0], [1], [0, 0, 1, 1], [], []>} : vector<30x64xbf16>, vector<64x32xbf16>, vector<30x32xf32> -> vector<30x32xf32>
    %48 = vector.extract_strided_slice %40 {offsets = [60, 0], sizes = [30, 64], strides = [1, 1]} : vector<1470x64xbf16> to vector<30x64xbf16>
    %49 = vector.extract_strided_slice %41 {offsets = [128, 0], sizes = [64, 32], strides = [1, 1]} : vector<3136x32xbf16> to vector<64x32xbf16>
    %cst_25 = arith.constant dense<0.000000e+00> : vector<30x32xf32>
    %50 = tpu.matmul %48, %49, %cst_25 {dimension_numbers = #tpu.dot_dimension_numbers<[1], [0], [0], [1], [0, 0, 1, 1], [], []>} : vector<30x64xbf16>, vector<64x32xbf16>, vector<30x32xf32> -> vector<30x32xf32>
    %51 = vector.extract_strided_slice %40 {offsets = [90, 0], sizes = [30, 64], strides = [1, 1]} : vector<1470x64xbf16> to vector<30x64xbf16>
    %52 = vector.extract_strided_slice %41 {offsets = [192, 0], sizes = [64, 32], strides = [1, 1]} : vector<3136x32xbf16> to vector<64x32xbf16>
    %cst_26 = arith.constant dense<0.000000e+00> : vector<30x32xf32>
    %53 = tpu.matmul %51, %52, %cst_26 {dimension_numbers = #tpu.dot_dimension_numbers<[1], [0], [0], [1], [0, 0, 1, 1], [], []>} : vector<30x64xbf16>, vector<64x32xbf16>, vector<30x32xf32> -> vector<30x32xf32>
    %54 = vector.extract_strided_slice %40 {offsets = [120, 0], sizes = [30, 64], strides = [1, 1]} : vector<1470x64xbf16> to vector<30x64xbf16>
    %55 = vector.extract_strided_slice %41 {offsets = [256, 0], sizes = [64, 32], strides = [1, 1]} : vector<3136x32xbf16> to vector<64x32xbf16>
    %cst_27 = arith.constant dense<0.000000e+00> : vector<30x32xf32>
    %56 = tpu.matmul %54, %55, %cst_27 {dimension_numbers = #tpu.dot_dimension_numbers<[1], [0], [0], [1], [0, 0, 1, 1], [], []>} : vector<30x64xbf16>, vector<64x32xbf16>, vector<30x32xf32> -> vector<30x32xf32>
    %57 = vector.extract_strided_slice %40 {offsets = [150, 0], sizes = [30, 64], strides = [1, 1]} : vector<1470x64xbf16> to vector<30x64xbf16>
    %58 = vector.extract_strided_slice %41 {offsets = [320, 0], sizes = [64, 32], strides = [1, 1]} : vector<3136x32xbf16> to vector<64x32xbf16>
    %cst_28 = arith.constant dense<0.000000e+00> : vector<30x32xf32>
    %59 = tpu.matmul %57, %58, %cst_28 {dimension_numbers = #tpu.dot_dimension_numbers<[1], [0], [0], [1], [0, 0, 1, 1], [], []>} : vector<30x64xbf16>, vector<64x32xbf16>, vector<30x32xf32> -> vector<30x32xf32>
    %60 = vector.extract_strided_slice %40 {offsets = [180, 0], sizes = [30, 64], strides = [1, 1]} : vector<1470x64xbf16> to vector<30x64xbf16>
    %61 = vector.extract_strided_slice %41 {offsets = [384, 0], sizes = [64, 32], strides = [1, 1]} : vector<3136x32xbf16> to vector<64x32xbf16>
    %cst_29 = arith.constant dense<0.000000e+00> : vector<30x32xf32>
    %62 = tpu.matmul %60, %61, %cst_29 {dimension_numbers = #tpu.dot_dimension_numbers<[1], [0], [0], [1], [0, 0, 1, 1], [], []>} : vector<30x64xbf16>, vector<64x32xbf16>, vector<30x32xf32> -> vector<30x32xf32>
    %63 = vector.extract_strided_slice %40 {offsets = [210, 0], sizes = [30, 64], strides = [1, 1]} : vector<1470x64xbf16> to vector<30x64xbf16>
    %64 = vector.extract_strided_slice %41 {offsets = [448, 0], sizes = [64, 32], strides = [1, 1]} : vector<3136x32xbf16> to vector<64x32xbf16>
    %cst_30 = arith.constant dense<0.000000e+00> : vector<30x32xf32>
    %65 = tpu.matmul %63, %64, %cst_30 {dimension_numbers = #tpu.dot_dimension_numbers<[1], [0], [0], [1], [0, 0, 1, 1], [], []>} : vector<30x64xbf16>, vector<64x32xbf16>, vector<30x32xf32> -> vector<30x32xf32>
    %66 = vector.extract_strided_slice %40 {offsets = [240, 0], sizes = [30, 64], strides = [1, 1]} : vector<1470x64xbf16> to vector<30x64xbf16>
    %67 = vector.extract_strided_slice %41 {offsets = [512, 0], sizes = [64, 32], strides = [1, 1]} : vector<3136x32xbf16> to vector<64x32xbf16>
    %cst_31 = arith.constant dense<0.000000e+00> : vector<30x32xf32>
    %68 = tpu.matmul %66, %67, %cst_31 {dimension_numbers = #tpu.dot_dimension_numbers<[1], [0], [0], [1], [0, 0, 1, 1], [], []>} : vector<30x64xbf16>, vector<64x32xbf16>, vector<30x32xf32> -> vector<30x32xf32>
    %69 = vector.extract_strided_slice %40 {offsets = [270, 0], sizes = [30, 64], strides = [1, 1]} : vector<1470x64xbf16> to vector<30x64xbf16>
    %70 = vector.extract_strided_slice %41 {offsets = [576, 0], sizes = [64, 32], strides = [1, 1]} : vector<3136x32xbf16> to vector<64x32xbf16>
    %cst_32 = arith.constant dense<0.000000e+00> : vector<30x32xf32>
    %71 = tpu.matmul %69, %70, %cst_32 {dimension_numbers = #tpu.dot_dimension_numbers<[1], [0], [0], [1], [0, 0, 1, 1], [], []>} : vector<30x64xbf16>, vector<64x32xbf16>, vector<30x32xf32> -> vector<30x32xf32>
    %72 = vector.extract_strided_slice %40 {offsets = [300, 0], sizes = [30, 64], strides = [1, 1]} : vector<1470x64xbf16> to vector<30x64xbf16>
    %73 = vector.extract_strided_slice %41 {offsets = [640, 0], sizes = [64, 32], strides = [1, 1]} : vector<3136x32xbf16> to vector<64x32xbf16>
    %cst_33 = arith.constant dense<0.000000e+00> : vector<30x32xf32>
    %74 = tpu.matmul %72, %73, %cst_33 {dimension_numbers = #tpu.dot_dimension_numbers<[1], [0], [0], [1], [0, 0, 1, 1], [], []>} : vector<30x64xbf16>, vector<64x32xbf16>, vector<30x32xf32> -> vector<30x32xf32>
    %75 = vector.extract_strided_slice %40 {offsets = [330, 0], sizes = [30, 64], strides = [1, 1]} : vector<1470x64xbf16> to vector<30x64xbf16>
    %76 = vector.extract_strided_slice %41 {offsets = [704, 0], sizes = [64, 32], strides = [1, 1]} : vector<3136x32xbf16> to vector<64x32xbf16>
    %cst_34 = arith.constant dense<0.000000e+00> : vector<30x32xf32>
    %77 = tpu.matmul %75, %76, %cst_34 {dimension_numbers = #tpu.dot_dimension_numbers<[1], [0], [0], [1], [0, 0, 1, 1], [], []>} : vector<30x64xbf16>, vector<64x32xbf16>, vector<30x32xf32> -> vector<30x32xf32>
    %78 = vector.extract_strided_slice %40 {offsets = [360, 0], sizes = [30, 64], strides = [1, 1]} : vector<1470x64xbf16> to vector<30x64xbf16>
    %79 = vector.extract_strided_slice %41 {offsets = [768, 0], sizes = [64, 32], strides = [1, 1]} : vector<3136x32xbf16> to vector<64x32xbf16>
    %cst_35 = arith.constant dense<0.000000e+00> : vector<30x32xf32>
    %80 = tpu.matmul %78, %79, %cst_35 {dimension_numbers = #tpu.dot_dimension_numbers<[1], [0], [0], [1], [0, 0, 1, 1], [], []>} : vector<30x64xbf16>, vector<64x32xbf16>, vector<30x32xf32> -> vector<30x32xf32>
    %81 = vector.extract_strided_slice %40 {offsets = [390, 0], sizes = [30, 64], strides = [1, 1]} : vector<1470x64xbf16> to vector<30x64xbf16>
    %82 = vector.extract_strided_slice %41 {offsets = [832, 0], sizes = [64, 32], strides = [1, 1]} : vector<3136x32xbf16> to vector<64x32xbf16>
    %cst_36 = arith.constant dense<0.000000e+00> : vector<30x32xf32>
    %83 = tpu.matmul %81, %82, %cst_36 {dimension_numbers = #tpu.dot_dimension_numbers<[1], [0], [0], [1], [0, 0, 1, 1], [], []>} : vector<30x64xbf16>, vector<64x32xbf16>, vector<30x32xf32> -> vector<30x32xf32>
    %84 = vector.extract_strided_slice %40 {offsets = [420, 0], sizes = [30, 64], strides = [1, 1]} : vector<1470x64xbf16> to vector<30x64xbf16>
    %85 = vector.extract_strided_slice %41 {offsets = [896, 0], sizes = [64, 32], strides = [1, 1]} : vector<3136x32xbf16> to vector<64x32xbf16>
    %cst_37 = arith.constant dense<0.000000e+00> : vector<30x32xf32>
    %86 = tpu.matmul %84, %85, %cst_37 {dimension_numbers = #tpu.dot_dimension_numbers<[1], [0], [0], [1], [0, 0, 1, 1], [], []>} : vector<30x64xbf16>, vector<64x32xbf16>, vector<30x32xf32> -> vector<30x32xf32>
    %87 = vector.extract_strided_slice %40 {offsets = [450, 0], sizes = [30, 64], strides = [1, 1]} : vector<1470x64xbf16> to vector<30x64xbf16>
    %88 = vector.extract_strided_slice %41 {offsets = [960, 0], sizes = [64, 32], strides = [1, 1]} : vector<3136x32xbf16> to vector<64x32xbf16>
    %cst_38 = arith.constant dense<0.000000e+00> : vector<30x32xf32>
    %89 = tpu.matmul %87, %88, %cst_38 {dimension_numbers = #tpu.dot_dimension_numbers<[1], [0], [0], [1], [0, 0, 1, 1], [], []>} : vector<30x64xbf16>, vector<64x32xbf16>, vector<30x32xf32> -> vector<30x32xf32>
    %90 = vector.extract_strided_slice %40 {offsets = [480, 0], sizes = [30, 64], strides = [1, 1]} : vector<1470x64xbf16> to vector<30x64xbf16>
    %91 = vector.extract_strided_slice %41 {offsets = [1024, 0], sizes = [64, 32], strides = [1, 1]} : vector<3136x32xbf16> to vector<64x32xbf16>
    %cst_39 = arith.constant dense<0.000000e+00> : vector<30x32xf32>
    %92 = tpu.matmul %90, %91, %cst_39 {dimension_numbers = #tpu.dot_dimension_numbers<[1], [0], [0], [1], [0, 0, 1, 1], [], []>} : vector<30x64xbf16>, vector<64x32xbf16>, vector<30x32xf32> -> vector<30x32xf32>
    %93 = vector.extract_strided_slice %40 {offsets = [510, 0], sizes = [30, 64], strides = [1, 1]} : vector<1470x64xbf16> to vector<30x64xbf16>
    %94 = vector.extract_strided_slice %41 {offsets = [1088, 0], sizes = [64, 32], strides = [1, 1]} : vector<3136x32xbf16> to vector<64x32xbf16>
    %cst_40 = arith.constant dense<0.000000e+00> : vector<30x32xf32>
    %95 = tpu.matmul %93, %94, %cst_40 {dimension_numbers = #tpu.dot_dimension_numbers<[1], [0], [0], [1], [0, 0, 1, 1], [], []>} : vector<30x64xbf16>, vector<64x32xbf16>, vector<30x32xf32> -> vector<30x32xf32>
    %96 = vector.extract_strided_slice %40 {offsets = [540, 0], sizes = [30, 64], strides = [1, 1]} : vector<1470x64xbf16> to vector<30x64xbf16>
    %97 = vector.extract_strided_slice %41 {offsets = [1152, 0], sizes = [64, 32], strides = [1, 1]} : vector<3136x32xbf16> to vector<64x32xbf16>
    %cst_41 = arith.constant dense<0.000000e+00> : vector<30x32xf32>
    %98 = tpu.matmul %96, %97, %cst_41 {dimension_numbers = #tpu.dot_dimension_numbers<[1], [0], [0], [1], [0, 0, 1, 1], [], []>} : vector<30x64xbf16>, vector<64x32xbf16>, vector<30x32xf32> -> vector<30x32xf32>
    %99 = vector.extract_strided_slice %40 {offsets = [570, 0], sizes = [30, 64], strides = [1, 1]} : vector<1470x64xbf16> to vector<30x64xbf16>
    %100 = vector.extract_strided_slice %41 {offsets = [1216, 0], sizes = [64, 32], strides = [1, 1]} : vector<3136x32xbf16> to vector<64x32xbf16>
    %cst_42 = arith.constant dense<0.000000e+00> : vector<30x32xf32>
    %101 = tpu.matmul %99, %100, %cst_42 {dimension_numbers = #tpu.dot_dimension_numbers<[1], [0], [0], [1], [0, 0, 1, 1], [], []>} : vector<30x64xbf16>, vector<64x32xbf16>, vector<30x32xf32> -> vector<30x32xf32>
    %102 = vector.extract_strided_slice %40 {offsets = [600, 0], sizes = [30, 64], strides = [1, 1]} : vector<1470x64xbf16> to vector<30x64xbf16>
    %103 = vector.extract_strided_slice %41 {offsets = [1280, 0], sizes = [64, 32], strides = [1, 1]} : vector<3136x32xbf16> to vector<64x32xbf16>
    %cst_43 = arith.constant dense<0.000000e+00> : vector<30x32xf32>
    %104 = tpu.matmul %102, %103, %cst_43 {dimension_numbers = #tpu.dot_dimension_numbers<[1], [0], [0], [1], [0, 0, 1, 1], [], []>} : vector<30x64xbf16>, vector<64x32xbf16>, vector<30x32xf32> -> vector<30x32xf32>
    %105 = vector.extract_strided_slice %40 {offsets = [630, 0], sizes = [30, 64], strides = [1, 1]} : vector<1470x64xbf16> to vector<30x64xbf16>
    %106 = vector.extract_strided_slice %41 {offsets = [1344, 0], sizes = [64, 32], strides = [1, 1]} : vector<3136x32xbf16> to vector<64x32xbf16>
    %cst_44 = arith.constant dense<0.000000e+00> : vector<30x32xf32>
    %107 = tpu.matmul %105, %106, %cst_44 {dimension_numbers = #tpu.dot_dimension_numbers<[1], [0], [0], [1], [0, 0, 1, 1], [], []>} : vector<30x64xbf16>, vector<64x32xbf16>, vector<30x32xf32> -> vector<30x32xf32>
    %108 = vector.extract_strided_slice %40 {offsets = [660, 0], sizes = [30, 64], strides = [1, 1]} : vector<1470x64xbf16> to vector<30x64xbf16>
    %109 = vector.extract_strided_slice %41 {offsets = [1408, 0], sizes = [64, 32], strides = [1, 1]} : vector<3136x32xbf16> to vector<64x32xbf16>
    %cst_45 = arith.constant dense<0.000000e+00> : vector<30x32xf32>
    %110 = tpu.matmul %108, %109, %cst_45 {dimension_numbers = #tpu.dot_dimension_numbers<[1], [0], [0], [1], [0, 0, 1, 1], [], []>} : vector<30x64xbf16>, vector<64x32xbf16>, vector<30x32xf32> -> vector<30x32xf32>
    %111 = vector.extract_strided_slice %40 {offsets = [690, 0], sizes = [30, 64], strides = [1, 1]} : vector<1470x64xbf16> to vector<30x64xbf16>
    %112 = vector.extract_strided_slice %41 {offsets = [1472, 0], sizes = [64, 32], strides = [1, 1]} : vector<3136x32xbf16> to vector<64x32xbf16>
    %cst_46 = arith.constant dense<0.000000e+00> : vector<30x32xf32>
    %113 = tpu.matmul %111, %112, %cst_46 {dimension_numbers = #tpu.dot_dimension_numbers<[1], [0], [0], [1], [0, 0, 1, 1], [], []>} : vector<30x64xbf16>, vector<64x32xbf16>, vector<30x32xf32> -> vector<30x32xf32>
    %114 = vector.extract_strided_slice %40 {offsets = [720, 0], sizes = [30, 64], strides = [1, 1]} : vector<1470x64xbf16> to vector<30x64xbf16>
    %115 = vector.extract_strided_slice %41 {offsets = [1536, 0], sizes = [64, 32], strides = [1, 1]} : vector<3136x32xbf16> to vector<64x32xbf16>
    %cst_47 = arith.constant dense<0.000000e+00> : vector<30x32xf32>
    %116 = tpu.matmul %114, %115, %cst_47 {dimension_numbers = #tpu.dot_dimension_numbers<[1], [0], [0], [1], [0, 0, 1, 1], [], []>} : vector<30x64xbf16>, vector<64x32xbf16>, vector<30x32xf32> -> vector<30x32xf32>
    %117 = vector.extract_strided_slice %40 {offsets = [750, 0], sizes = [30, 64], strides = [1, 1]} : vector<1470x64xbf16> to vector<30x64xbf16>
    %118 = vector.extract_strided_slice %41 {offsets = [1600, 0], sizes = [64, 32], strides = [1, 1]} : vector<3136x32xbf16> to vector<64x32xbf16>
    %cst_48 = arith.constant dense<0.000000e+00> : vector<30x32xf32>
    %119 = tpu.matmul %117, %118, %cst_48 {dimension_numbers = #tpu.dot_dimension_numbers<[1], [0], [0], [1], [0, 0, 1, 1], [], []>} : vector<30x64xbf16>, vector<64x32xbf16>, vector<30x32xf32> -> vector<30x32xf32>
    %120 = vector.extract_strided_slice %40 {offsets = [780, 0], sizes = [30, 64], strides = [1, 1]} : vector<1470x64xbf16> to vector<30x64xbf16>
    %121 = vector.extract_strided_slice %41 {offsets = [1664, 0], sizes = [64, 32], strides = [1, 1]} : vector<3136x32xbf16> to vector<64x32xbf16>
    %cst_49 = arith.constant dense<0.000000e+00> : vector<30x32xf32>
    %122 = tpu.matmul %120, %121, %cst_49 {dimension_numbers = #tpu.dot_dimension_numbers<[1], [0], [0], [1], [0, 0, 1, 1], [], []>} : vector<30x64xbf16>, vector<64x32xbf16>, vector<30x32xf32> -> vector<30x32xf32>
    %123 = vector.extract_strided_slice %40 {offsets = [810, 0], sizes = [30, 64], strides = [1, 1]} : vector<1470x64xbf16> to vector<30x64xbf16>
    %124 = vector.extract_strided_slice %41 {offsets = [1728, 0], sizes = [64, 32], strides = [1, 1]} : vector<3136x32xbf16> to vector<64x32xbf16>
    %cst_50 = arith.constant dense<0.000000e+00> : vector<30x32xf32>
    %125 = tpu.matmul %123, %124, %cst_50 {dimension_numbers = #tpu.dot_dimension_numbers<[1], [0], [0], [1], [0, 0, 1, 1], [], []>} : vector<30x64xbf16>, vector<64x32xbf16>, vector<30x32xf32> -> vector<30x32xf32>
    %126 = vector.extract_strided_slice %40 {offsets = [840, 0], sizes = [30, 64], strides = [1, 1]} : vector<1470x64xbf16> to vector<30x64xbf16>
    %127 = vector.extract_strided_slice %41 {offsets = [1792, 0], sizes = [64, 32], strides = [1, 1]} : vector<3136x32xbf16> to vector<64x32xbf16>
    %cst_51 = arith.constant dense<0.000000e+00> : vector<30x32xf32>
    %128 = tpu.matmul %126, %127, %cst_51 {dimension_numbers = #tpu.dot_dimension_numbers<[1], [0], [0], [1], [0, 0, 1, 1], [], []>} : vector<30x64xbf16>, vector<64x32xbf16>, vector<30x32xf32> -> vector<30x32xf32>
    %129 = vector.extract_strided_slice %40 {offsets = [870, 0], sizes = [30, 64], strides = [1, 1]} : vector<1470x64xbf16> to vector<30x64xbf16>
    %130 = vector.extract_strided_slice %41 {offsets = [1856, 0], sizes = [64, 32], strides = [1, 1]} : vector<3136x32xbf16> to vector<64x32xbf16>
    %cst_52 = arith.constant dense<0.000000e+00> : vector<30x32xf32>
    %131 = tpu.matmul %129, %130, %cst_52 {dimension_numbers = #tpu.dot_dimension_numbers<[1], [0], [0], [1], [0, 0, 1, 1], [], []>} : vector<30x64xbf16>, vector<64x32xbf16>, vector<30x32xf32> -> vector<30x32xf32>
    %132 = vector.extract_strided_slice %40 {offsets = [900, 0], sizes = [30, 64], strides = [1, 1]} : vector<1470x64xbf16> to vector<30x64xbf16>
    %133 = vector.extract_strided_slice %41 {offsets = [1920, 0], sizes = [64, 32], strides = [1, 1]} : vector<3136x32xbf16> to vector<64x32xbf16>
    %cst_53 = arith.constant dense<0.000000e+00> : vector<30x32xf32>
    %134 = tpu.matmul %132, %133, %cst_53 {dimension_numbers = #tpu.dot_dimension_numbers<[1], [0], [0], [1], [0, 0, 1, 1], [], []>} : vector<30x64xbf16>, vector<64x32xbf16>, vector<30x32xf32> -> vector<30x32xf32>
    %135 = vector.extract_strided_slice %40 {offsets = [930, 0], sizes = [30, 64], strides = [1, 1]} : vector<1470x64xbf16> to vector<30x64xbf16>
    %136 = vector.extract_strided_slice %41 {offsets = [1984, 0], sizes = [64, 32], strides = [1, 1]} : vector<3136x32xbf16> to vector<64x32xbf16>
    %cst_54 = arith.constant dense<0.000000e+00> : vector<30x32xf32>
    %137 = tpu.matmul %135, %136, %cst_54 {dimension_numbers = #tpu.dot_dimension_numbers<[1], [0], [0], [1], [0, 0, 1, 1], [], []>} : vector<30x64xbf16>, vector<64x32xbf16>, vector<30x32xf32> -> vector<30x32xf32>
    %138 = vector.extract_strided_slice %40 {offsets = [960, 0], sizes = [30, 64], strides = [1, 1]} : vector<1470x64xbf16> to vector<30x64xbf16>
    %139 = vector.extract_strided_slice %41 {offsets = [2048, 0], sizes = [64, 32], strides = [1, 1]} : vector<3136x32xbf16> to vector<64x32xbf16>
    %cst_55 = arith.constant dense<0.000000e+00> : vector<30x32xf32>
    %140 = tpu.matmul %138, %139, %cst_55 {dimension_numbers = #tpu.dot_dimension_numbers<[1], [0], [0], [1], [0, 0, 1, 1], [], []>} : vector<30x64xbf16>, vector<64x32xbf16>, vector<30x32xf32> -> vector<30x32xf32>
    %141 = vector.extract_strided_slice %40 {offsets = [990, 0], sizes = [30, 64], strides = [1, 1]} : vector<1470x64xbf16> to vector<30x64xbf16>
    %142 = vector.extract_strided_slice %41 {offsets = [2112, 0], sizes = [64, 32], strides = [1, 1]} : vector<3136x32xbf16> to vector<64x32xbf16>
    %cst_56 = arith.constant dense<0.000000e+00> : vector<30x32xf32>
    %143 = tpu.matmul %141, %142, %cst_56 {dimension_numbers = #tpu.dot_dimension_numbers<[1], [0], [0], [1], [0, 0, 1, 1], [], []>} : vector<30x64xbf16>, vector<64x32xbf16>, vector<30x32xf32> -> vector<30x32xf32>
    %144 = vector.extract_strided_slice %40 {offsets = [1020, 0], sizes = [30, 64], strides = [1, 1]} : vector<1470x64xbf16> to vector<30x64xbf16>
    %145 = vector.extract_strided_slice %41 {offsets = [2176, 0], sizes = [64, 32], strides = [1, 1]} : vector<3136x32xbf16> to vector<64x32xbf16>
    %cst_57 = arith.constant dense<0.000000e+00> : vector<30x32xf32>
    %146 = tpu.matmul %144, %145, %cst_57 {dimension_numbers = #tpu.dot_dimension_numbers<[1], [0], [0], [1], [0, 0, 1, 1], [], []>} : vector<30x64xbf16>, vector<64x32xbf16>, vector<30x32xf32> -> vector<30x32xf32>
    %147 = vector.extract_strided_slice %40 {offsets = [1050, 0], sizes = [30, 64], strides = [1, 1]} : vector<1470x64xbf16> to vector<30x64xbf16>
    %148 = vector.extract_strided_slice %41 {offsets = [2240, 0], sizes = [64, 32], strides = [1, 1]} : vector<3136x32xbf16> to vector<64x32xbf16>
    %cst_58 = arith.constant dense<0.000000e+00> : vector<30x32xf32>
    %149 = tpu.matmul %147, %148, %cst_58 {dimension_numbers = #tpu.dot_dimension_numbers<[1], [0], [0], [1], [0, 0, 1, 1], [], []>} : vector<30x64xbf16>, vector<64x32xbf16>, vector<30x32xf32> -> vector<30x32xf32>
    %150 = vector.extract_strided_slice %40 {offsets = [1080, 0], sizes = [30, 64], strides = [1, 1]} : vector<1470x64xbf16> to vector<30x64xbf16>
    %151 = vector.extract_strided_slice %41 {offsets = [2304, 0], sizes = [64, 32], strides = [1, 1]} : vector<3136x32xbf16> to vector<64x32xbf16>
    %cst_59 = arith.constant dense<0.000000e+00> : vector<30x32xf32>
    %152 = tpu.matmul %150, %151, %cst_59 {dimension_numbers = #tpu.dot_dimension_numbers<[1], [0], [0], [1], [0, 0, 1, 1], [], []>} : vector<30x64xbf16>, vector<64x32xbf16>, vector<30x32xf32> -> vector<30x32xf32>
    %153 = vector.extract_strided_slice %40 {offsets = [1110, 0], sizes = [30, 64], strides = [1, 1]} : vector<1470x64xbf16> to vector<30x64xbf16>
    %154 = vector.extract_strided_slice %41 {offsets = [2368, 0], sizes = [64, 32], strides = [1, 1]} : vector<3136x32xbf16> to vector<64x32xbf16>
    %cst_60 = arith.constant dense<0.000000e+00> : vector<30x32xf32>
    %155 = tpu.matmul %153, %154, %cst_60 {dimension_numbers = #tpu.dot_dimension_numbers<[1], [0], [0], [1], [0, 0, 1, 1], [], []>} : vector<30x64xbf16>, vector<64x32xbf16>, vector<30x32xf32> -> vector<30x32xf32>
    %156 = vector.extract_strided_slice %40 {offsets = [1140, 0], sizes = [30, 64], strides = [1, 1]} : vector<1470x64xbf16> to vector<30x64xbf16>
    %157 = vector.extract_strided_slice %41 {offsets = [2432, 0], sizes = [64, 32], strides = [1, 1]} : vector<3136x32xbf16> to vector<64x32xbf16>
    %cst_61 = arith.constant dense<0.000000e+00> : vector<30x32xf32>
    %158 = tpu.matmul %156, %157, %cst_61 {dimension_numbers = #tpu.dot_dimension_numbers<[1], [0], [0], [1], [0, 0, 1, 1], [], []>} : vector<30x64xbf16>, vector<64x32xbf16>, vector<30x32xf32> -> vector<30x32xf32>
    %159 = vector.extract_strided_slice %40 {offsets = [1170, 0], sizes = [30, 64], strides = [1, 1]} : vector<1470x64xbf16> to vector<30x64xbf16>
    %160 = vector.extract_strided_slice %41 {offsets = [2496, 0], sizes = [64, 32], strides = [1, 1]} : vector<3136x32xbf16> to vector<64x32xbf16>
    %cst_62 = arith.constant dense<0.000000e+00> : vector<30x32xf32>
    %161 = tpu.matmul %159, %160, %cst_62 {dimension_numbers = #tpu.dot_dimension_numbers<[1], [0], [0], [1], [0, 0, 1, 1], [], []>} : vector<30x64xbf16>, vector<64x32xbf16>, vector<30x32xf32> -> vector<30x32xf32>
    %162 = vector.extract_strided_slice %40 {offsets = [1200, 0], sizes = [30, 64], strides = [1, 1]} : vector<1470x64xbf16> to vector<30x64xbf16>
    %163 = vector.extract_strided_slice %41 {offsets = [2560, 0], sizes = [64, 32], strides = [1, 1]} : vector<3136x32xbf16> to vector<64x32xbf16>
    %cst_63 = arith.constant dense<0.000000e+00> : vector<30x32xf32>
    %164 = tpu.matmul %162, %163, %cst_63 {dimension_numbers = #tpu.dot_dimension_numbers<[1], [0], [0], [1], [0, 0, 1, 1], [], []>} : vector<30x64xbf16>, vector<64x32xbf16>, vector<30x32xf32> -> vector<30x32xf32>
    %165 = vector.extract_strided_slice %40 {offsets = [1230, 0], sizes = [30, 64], strides = [1, 1]} : vector<1470x64xbf16> to vector<30x64xbf16>
    %166 = vector.extract_strided_slice %41 {offsets = [2624, 0], sizes = [64, 32], strides = [1, 1]} : vector<3136x32xbf16> to vector<64x32xbf16>
    %cst_64 = arith.constant dense<0.000000e+00> : vector<30x32xf32>
    %167 = tpu.matmul %165, %166, %cst_64 {dimension_numbers = #tpu.dot_dimension_numbers<[1], [0], [0], [1], [0, 0, 1, 1], [], []>} : vector<30x64xbf16>, vector<64x32xbf16>, vector<30x32xf32> -> vector<30x32xf32>
    %168 = vector.extract_strided_slice %40 {offsets = [1260, 0], sizes = [30, 64], strides = [1, 1]} : vector<1470x64xbf16> to vector<30x64xbf16>
    %169 = vector.extract_strided_slice %41 {offsets = [2688, 0], sizes = [64, 32], strides = [1, 1]} : vector<3136x32xbf16> to vector<64x32xbf16>
    %cst_65 = arith.constant dense<0.000000e+00> : vector<30x32xf32>
    %170 = tpu.matmul %168, %169, %cst_65 {dimension_numbers = #tpu.dot_dimension_numbers<[1], [0], [0], [1], [0, 0, 1, 1], [], []>} : vector<30x64xbf16>, vector<64x32xbf16>, vector<30x32xf32> -> vector<30x32xf32>
    %171 = vector.extract_strided_slice %40 {offsets = [1290, 0], sizes = [30, 64], strides = [1, 1]} : vector<1470x64xbf16> to vector<30x64xbf16>
    %172 = vector.extract_strided_slice %41 {offsets = [2752, 0], sizes = [64, 32], strides = [1, 1]} : vector<3136x32xbf16> to vector<64x32xbf16>
    %cst_66 = arith.constant dense<0.000000e+00> : vector<30x32xf32>
    %173 = tpu.matmul %171, %172, %cst_66 {dimension_numbers = #tpu.dot_dimension_numbers<[1], [0], [0], [1], [0, 0, 1, 1], [], []>} : vector<30x64xbf16>, vector<64x32xbf16>, vector<30x32xf32> -> vector<30x32xf32>
    %174 = vector.extract_strided_slice %40 {offsets = [1320, 0], sizes = [30, 64], strides = [1, 1]} : vector<1470x64xbf16> to vector<30x64xbf16>
    %175 = vector.extract_strided_slice %41 {offsets = [2816, 0], sizes = [64, 32], strides = [1, 1]} : vector<3136x32xbf16> to vector<64x32xbf16>
    %cst_67 = arith.constant dense<0.000000e+00> : vector<30x32xf32>
    %176 = tpu.matmul %174, %175, %cst_67 {dimension_numbers = #tpu.dot_dimension_numbers<[1], [0], [0], [1], [0, 0, 1, 1], [], []>} : vector<30x64xbf16>, vector<64x32xbf16>, vector<30x32xf32> -> vector<30x32xf32>
    %177 = vector.extract_strided_slice %40 {offsets = [1350, 0], sizes = [30, 64], strides = [1, 1]} : vector<1470x64xbf16> to vector<30x64xbf16>
    %178 = vector.extract_strided_slice %41 {offsets = [2880, 0], sizes = [64, 32], strides = [1, 1]} : vector<3136x32xbf16> to vector<64x32xbf16>
    %cst_68 = arith.constant dense<0.000000e+00> : vector<30x32xf32>
    %179 = tpu.matmul %177, %178, %cst_68 {dimension_numbers = #tpu.dot_dimension_numbers<[1], [0], [0], [1], [0, 0, 1, 1], [], []>} : vector<30x64xbf16>, vector<64x32xbf16>, vector<30x32xf32> -> vector<30x32xf32>
    %180 = vector.extract_strided_slice %40 {offsets = [1380, 0], sizes = [30, 64], strides = [1, 1]} : vector<1470x64xbf16> to vector<30x64xbf16>
    %181 = vector.extract_strided_slice %41 {offsets = [2944, 0], sizes = [64, 32], strides = [1, 1]} : vector<3136x32xbf16> to vector<64x32xbf16>
    %cst_69 = arith.constant dense<0.000000e+00> : vector<30x32xf32>
    %182 = tpu.matmul %180, %181, %cst_69 {dimension_numbers = #tpu.dot_dimension_numbers<[1], [0], [0], [1], [0, 0, 1, 1], [], []>} : vector<30x64xbf16>, vector<64x32xbf16>, vector<30x32xf32> -> vector<30x32xf32>
    %183 = vector.extract_strided_slice %40 {offsets = [1410, 0], sizes = [30, 64], strides = [1, 1]} : vector<1470x64xbf16> to vector<30x64xbf16>
    %184 = vector.extract_strided_slice %41 {offsets = [3008, 0], sizes = [64, 32], strides = [1, 1]} : vector<3136x32xbf16> to vector<64x32xbf16>
    %cst_70 = arith.constant dense<0.000000e+00> : vector<30x32xf32>
    %185 = tpu.matmul %183, %184, %cst_70 {dimension_numbers = #tpu.dot_dimension_numbers<[1], [0], [0], [1], [0, 0, 1, 1], [], []>} : vector<30x64xbf16>, vector<64x32xbf16>, vector<30x32xf32> -> vector<30x32xf32>
    %186 = vector.extract_strided_slice %40 {offsets = [1440, 0], sizes = [30, 64], strides = [1, 1]} : vector<1470x64xbf16> to vector<30x64xbf16>
    %187 = vector.extract_strided_slice %41 {offsets = [3072, 0], sizes = [64, 32], strides = [1, 1]} : vector<3136x32xbf16> to vector<64x32xbf16>
    %cst_71 = arith.constant dense<0.000000e+00> : vector<30x32xf32>
    %188 = tpu.matmul %186, %187, %cst_71 {dimension_numbers = #tpu.dot_dimension_numbers<[1], [0], [0], [1], [0, 0, 1, 1], [], []>} : vector<30x64xbf16>, vector<64x32xbf16>, vector<30x32xf32> -> vector<30x32xf32>
    %189 = arith.addf %44, %47 : vector<30x32xf32>
    %190 = arith.addf %50, %53 : vector<30x32xf32>
    %191 = arith.addf %56, %59 : vector<30x32xf32>
    %192 = arith.addf %62, %65 : vector<30x32xf32>
    %193 = arith.addf %68, %71 : vector<30x32xf32>
    %194 = arith.addf %74, %77 : vector<30x32xf32>
    %195 = arith.addf %80, %83 : vector<30x32xf32>
    %196 = arith.addf %86, %89 : vector<30x32xf32>
    %197 = arith.addf %92, %95 : vector<30x32xf32>
    %198 = arith.addf %98, %101 : vector<30x32xf32>
    %199 = arith.addf %104, %107 : vector<30x32xf32>
    %200 = arith.addf %110, %113 : vector<30x32xf32>
    %201 = arith.addf %116, %119 : vector<30x32xf32>
    %202 = arith.addf %122, %125 : vector<30x32xf32>
    %203 = arith.addf %128, %131 : vector<30x32xf32>
    %204 = arith.addf %134, %137 : vector<30x32xf32>
    %205 = arith.addf %140, %143 : vector<30x32xf32>
    %206 = arith.addf %146, %149 : vector<30x32xf32>
    %207 = arith.addf %152, %155 : vector<30x32xf32>
    %208 = arith.addf %158, %161 : vector<30x32xf32>
    %209 = arith.addf %164, %167 : vector<30x32xf32>
    %210 = arith.addf %170, %173 : vector<30x32xf32>
    %211 = arith.addf %176, %179 : vector<30x32xf32>
    %212 = arith.addf %182, %185 : vector<30x32xf32>
    %213 = arith.addf %189, %190 : vector<30x32xf32>
    %214 = arith.addf %191, %192 : vector<30x32xf32>
    %215 = arith.addf %193, %194 : vector<30x32xf32>
    %216 = arith.addf %195, %196 : vector<30x32xf32>
    %217 = arith.addf %197, %198 : vector<30x32xf32>
    %218 = arith.addf %199, %200 : vector<30x32xf32>
    %219 = arith.addf %201, %202 : vector<30x32xf32>
    %220 = arith.addf %203, %204 : vector<30x32xf32>
    %221 = arith.addf %205, %206 : vector<30x32xf32>
    %222 = arith.addf %207, %208 : vector<30x32xf32>
    %223 = arith.addf %209, %210 : vector<30x32xf32>
    %224 = arith.addf %211, %212 : vector<30x32xf32>
    %225 = arith.addf %213, %214 : vector<30x32xf32>
    %226 = arith.addf %215, %216 : vector<30x32xf32>
    %227 = arith.addf %217, %218 : vector<30x32xf32>
    %228 = arith.addf %219, %220 : vector<30x32xf32>
    %229 = arith.addf %221, %222 : vector<30x32xf32>
    %230 = arith.addf %223, %224 : vector<30x32xf32>
    %231 = arith.addf %225, %226 : vector<30x32xf32>
    %232 = arith.addf %227, %228 : vector<30x32xf32>
    %233 = arith.addf %229, %230 : vector<30x32xf32>
    %234 = arith.addf %231, %232 : vector<30x32xf32>
    %235 = arith.addf %233, %188 : vector<30x32xf32>
    %236 = arith.addf %234, %235 : vector<30x32xf32>
    %c0_72 = arith.constant 0 : index
    %c0_73 = arith.constant 0 : index
    %237 = vector.load %arg7[%c0_72, %c0_73] : memref<1x32xf32, #tpu.memory_space<vmem>>, vector<1x32xf32>
    %c0_74 = arith.constant 0 : index
    %c0_75 = arith.constant 0 : index
    %238 = vector.load %arg8[%c0_74, %c0_75] : memref<1x32xf32, #tpu.memory_space<vmem>>, vector<1x32xf32>
    %cst_76 = arith.constant 1.000000e+00 : f32
    %239 = vector.broadcast %cst_76 : f32 to vector<1x30xf32>
    %cst_77 = arith.constant dense<0.000000e+00> : vector<1x32xf32>
    %240 = tpu.matmul %239, %236, %cst_77 {dimension_numbers = #tpu.dot_dimension_numbers<[1], [0], [0], [1], [0, 0, 1, 1], [], []>} : vector<1x30xf32>, vector<30x32xf32>, vector<1x32xf32> -> vector<1x32xf32>
    %cst_78 = arith.constant 0.0333333351 : f32
    %241 = vector.broadcast %cst_78 : f32 to vector<1x32xf32>
    %242 = arith.mulf %240, %241 : vector<1x32xf32>
    %243 = arith.mulf %236, %236 : vector<30x32xf32>
    %cst_79 = arith.constant dense<0.000000e+00> : vector<1x32xf32>
    %244 = tpu.matmul %239, %243, %cst_79 {dimension_numbers = #tpu.dot_dimension_numbers<[1], [0], [0], [1], [0, 0, 1, 1], [], []>} : vector<1x30xf32>, vector<30x32xf32>, vector<1x32xf32> -> vector<1x32xf32>
    %cst_80 = arith.constant 0.0333333351 : f32
    %245 = vector.broadcast %cst_80 : f32 to vector<1x32xf32>
    %246 = arith.mulf %244, %245 : vector<1x32xf32>
    %247 = arith.mulf %242, %242 : vector<1x32xf32>
    %248 = arith.subf %246, %247 : vector<1x32xf32>
    %cst_81 = arith.constant 9.99999974E-6 : f32
    %249 = vector.broadcast %cst_81 : f32 to vector<1x32xf32>
    %250 = arith.addf %248, %249 : vector<1x32xf32>
    %251 = math.rsqrt %250 : vector<1x32xf32>
    %252 = arith.mulf %251, %237 : vector<1x32xf32>
    %253 = vector.broadcast %242 : vector<1x32xf32> to vector<30x32xf32>
    %254 = arith.subf %236, %253 : vector<30x32xf32>
    %255 = vector.broadcast %252 : vector<1x32xf32> to vector<30x32xf32>
    %256 = arith.mulf %254, %255 : vector<30x32xf32>
    %257 = vector.broadcast %238 : vector<1x32xf32> to vector<30x32xf32>
    %258 = arith.addf %256, %257 : vector<30x32xf32>
    %cst_82 = arith.constant 0.000000e+00 : f32
    %259 = vector.broadcast %cst_82 : f32 to vector<30x32xf32>
    %260 = arith.maximumf %258, %259 : vector<30x32xf32>
    %261 = arith.truncf %260 : vector<30x32xf32> to vector<30x32xbf16>
    %c0_83 = arith.constant 0 : index
    %c0_84 = arith.constant 0 : index
    %262 = vector.load %arg9[%c0_83, %c0_84] : memref<100x30xbf16, #tpu.memory_space<vmem>>, vector<100x30xbf16>
    %cst_85 = arith.constant dense<0.000000e+00> : vector<100x32xf32>
    %263 = tpu.matmul %262, %261, %cst_85 {dimension_numbers = #tpu.dot_dimension_numbers<[1], [0], [0], [1], [0, 0, 1, 1], [], []>} : vector<100x30xbf16>, vector<30x32xbf16>, vector<100x32xf32> -> vector<100x32xf32>
    %264 = arith.truncf %263 : vector<100x32xf32> to vector<100x32xbf16>
    %c0_86 = arith.constant 0 : index
    %c0_87 = arith.constant 0 : index
    %265 = vector.load %arg10[%c0_86, %c0_87] : memref<800x16xbf16, #tpu.memory_space<vmem>>, vector<800x16xbf16>
    %266 = vector.extract_strided_slice %264 {offsets = [0, 0], sizes = [4, 32], strides = [1, 1]} : vector<100x32xbf16> to vector<4x32xbf16>
    %267 = vector.extract_strided_slice %265 {offsets = [0, 0], sizes = [32, 16], strides = [1, 1]} : vector<800x16xbf16> to vector<32x16xbf16>
    %cst_88 = arith.constant dense<0.000000e+00> : vector<4x16xf32>
    %268 = tpu.matmul %266, %267, %cst_88 {dimension_numbers = #tpu.dot_dimension_numbers<[1], [0], [0], [1], [0, 0, 1, 1], [], []>} : vector<4x32xbf16>, vector<32x16xbf16>, vector<4x16xf32> -> vector<4x16xf32>
    %269 = vector.extract_strided_slice %264 {offsets = [4, 0], sizes = [4, 32], strides = [1, 1]} : vector<100x32xbf16> to vector<4x32xbf16>
    %270 = vector.extract_strided_slice %265 {offsets = [32, 0], sizes = [32, 16], strides = [1, 1]} : vector<800x16xbf16> to vector<32x16xbf16>
    %cst_89 = arith.constant dense<0.000000e+00> : vector<4x16xf32>
    %271 = tpu.matmul %269, %270, %cst_89 {dimension_numbers = #tpu.dot_dimension_numbers<[1], [0], [0], [1], [0, 0, 1, 1], [], []>} : vector<4x32xbf16>, vector<32x16xbf16>, vector<4x16xf32> -> vector<4x16xf32>
    %272 = vector.extract_strided_slice %264 {offsets = [8, 0], sizes = [4, 32], strides = [1, 1]} : vector<100x32xbf16> to vector<4x32xbf16>
    %273 = vector.extract_strided_slice %265 {offsets = [64, 0], sizes = [32, 16], strides = [1, 1]} : vector<800x16xbf16> to vector<32x16xbf16>
    %cst_90 = arith.constant dense<0.000000e+00> : vector<4x16xf32>
    %274 = tpu.matmul %272, %273, %cst_90 {dimension_numbers = #tpu.dot_dimension_numbers<[1], [0], [0], [1], [0, 0, 1, 1], [], []>} : vector<4x32xbf16>, vector<32x16xbf16>, vector<4x16xf32> -> vector<4x16xf32>
    %275 = vector.extract_strided_slice %264 {offsets = [12, 0], sizes = [4, 32], strides = [1, 1]} : vector<100x32xbf16> to vector<4x32xbf16>
    %276 = vector.extract_strided_slice %265 {offsets = [96, 0], sizes = [32, 16], strides = [1, 1]} : vector<800x16xbf16> to vector<32x16xbf16>
    %cst_91 = arith.constant dense<0.000000e+00> : vector<4x16xf32>
    %277 = tpu.matmul %275, %276, %cst_91 {dimension_numbers = #tpu.dot_dimension_numbers<[1], [0], [0], [1], [0, 0, 1, 1], [], []>} : vector<4x32xbf16>, vector<32x16xbf16>, vector<4x16xf32> -> vector<4x16xf32>
    %278 = vector.extract_strided_slice %264 {offsets = [16, 0], sizes = [4, 32], strides = [1, 1]} : vector<100x32xbf16> to vector<4x32xbf16>
    %279 = vector.extract_strided_slice %265 {offsets = [128, 0], sizes = [32, 16], strides = [1, 1]} : vector<800x16xbf16> to vector<32x16xbf16>
    %cst_92 = arith.constant dense<0.000000e+00> : vector<4x16xf32>
    %280 = tpu.matmul %278, %279, %cst_92 {dimension_numbers = #tpu.dot_dimension_numbers<[1], [0], [0], [1], [0, 0, 1, 1], [], []>} : vector<4x32xbf16>, vector<32x16xbf16>, vector<4x16xf32> -> vector<4x16xf32>
    %281 = vector.extract_strided_slice %264 {offsets = [20, 0], sizes = [4, 32], strides = [1, 1]} : vector<100x32xbf16> to vector<4x32xbf16>
    %282 = vector.extract_strided_slice %265 {offsets = [160, 0], sizes = [32, 16], strides = [1, 1]} : vector<800x16xbf16> to vector<32x16xbf16>
    %cst_93 = arith.constant dense<0.000000e+00> : vector<4x16xf32>
    %283 = tpu.matmul %281, %282, %cst_93 {dimension_numbers = #tpu.dot_dimension_numbers<[1], [0], [0], [1], [0, 0, 1, 1], [], []>} : vector<4x32xbf16>, vector<32x16xbf16>, vector<4x16xf32> -> vector<4x16xf32>
    %284 = vector.extract_strided_slice %264 {offsets = [24, 0], sizes = [4, 32], strides = [1, 1]} : vector<100x32xbf16> to vector<4x32xbf16>
    %285 = vector.extract_strided_slice %265 {offsets = [192, 0], sizes = [32, 16], strides = [1, 1]} : vector<800x16xbf16> to vector<32x16xbf16>
    %cst_94 = arith.constant dense<0.000000e+00> : vector<4x16xf32>
    %286 = tpu.matmul %284, %285, %cst_94 {dimension_numbers = #tpu.dot_dimension_numbers<[1], [0], [0], [1], [0, 0, 1, 1], [], []>} : vector<4x32xbf16>, vector<32x16xbf16>, vector<4x16xf32> -> vector<4x16xf32>
    %287 = vector.extract_strided_slice %264 {offsets = [28, 0], sizes = [4, 32], strides = [1, 1]} : vector<100x32xbf16> to vector<4x32xbf16>
    %288 = vector.extract_strided_slice %265 {offsets = [224, 0], sizes = [32, 16], strides = [1, 1]} : vector<800x16xbf16> to vector<32x16xbf16>
    %cst_95 = arith.constant dense<0.000000e+00> : vector<4x16xf32>
    %289 = tpu.matmul %287, %288, %cst_95 {dimension_numbers = #tpu.dot_dimension_numbers<[1], [0], [0], [1], [0, 0, 1, 1], [], []>} : vector<4x32xbf16>, vector<32x16xbf16>, vector<4x16xf32> -> vector<4x16xf32>
    %290 = vector.extract_strided_slice %264 {offsets = [32, 0], sizes = [4, 32], strides = [1, 1]} : vector<100x32xbf16> to vector<4x32xbf16>
    %291 = vector.extract_strided_slice %265 {offsets = [256, 0], sizes = [32, 16], strides = [1, 1]} : vector<800x16xbf16> to vector<32x16xbf16>
    %cst_96 = arith.constant dense<0.000000e+00> : vector<4x16xf32>
    %292 = tpu.matmul %290, %291, %cst_96 {dimension_numbers = #tpu.dot_dimension_numbers<[1], [0], [0], [1], [0, 0, 1, 1], [], []>} : vector<4x32xbf16>, vector<32x16xbf16>, vector<4x16xf32> -> vector<4x16xf32>
    %293 = vector.extract_strided_slice %264 {offsets = [36, 0], sizes = [4, 32], strides = [1, 1]} : vector<100x32xbf16> to vector<4x32xbf16>
    %294 = vector.extract_strided_slice %265 {offsets = [288, 0], sizes = [32, 16], strides = [1, 1]} : vector<800x16xbf16> to vector<32x16xbf16>
    %cst_97 = arith.constant dense<0.000000e+00> : vector<4x16xf32>
    %295 = tpu.matmul %293, %294, %cst_97 {dimension_numbers = #tpu.dot_dimension_numbers<[1], [0], [0], [1], [0, 0, 1, 1], [], []>} : vector<4x32xbf16>, vector<32x16xbf16>, vector<4x16xf32> -> vector<4x16xf32>
    %296 = vector.extract_strided_slice %264 {offsets = [40, 0], sizes = [4, 32], strides = [1, 1]} : vector<100x32xbf16> to vector<4x32xbf16>
    %297 = vector.extract_strided_slice %265 {offsets = [320, 0], sizes = [32, 16], strides = [1, 1]} : vector<800x16xbf16> to vector<32x16xbf16>
    %cst_98 = arith.constant dense<0.000000e+00> : vector<4x16xf32>
    %298 = tpu.matmul %296, %297, %cst_98 {dimension_numbers = #tpu.dot_dimension_numbers<[1], [0], [0], [1], [0, 0, 1, 1], [], []>} : vector<4x32xbf16>, vector<32x16xbf16>, vector<4x16xf32> -> vector<4x16xf32>
    %299 = vector.extract_strided_slice %264 {offsets = [44, 0], sizes = [4, 32], strides = [1, 1]} : vector<100x32xbf16> to vector<4x32xbf16>
    %300 = vector.extract_strided_slice %265 {offsets = [352, 0], sizes = [32, 16], strides = [1, 1]} : vector<800x16xbf16> to vector<32x16xbf16>
    %cst_99 = arith.constant dense<0.000000e+00> : vector<4x16xf32>
    %301 = tpu.matmul %299, %300, %cst_99 {dimension_numbers = #tpu.dot_dimension_numbers<[1], [0], [0], [1], [0, 0, 1, 1], [], []>} : vector<4x32xbf16>, vector<32x16xbf16>, vector<4x16xf32> -> vector<4x16xf32>
    %302 = vector.extract_strided_slice %264 {offsets = [48, 0], sizes = [4, 32], strides = [1, 1]} : vector<100x32xbf16> to vector<4x32xbf16>
    %303 = vector.extract_strided_slice %265 {offsets = [384, 0], sizes = [32, 16], strides = [1, 1]} : vector<800x16xbf16> to vector<32x16xbf16>
    %cst_100 = arith.constant dense<0.000000e+00> : vector<4x16xf32>
    %304 = tpu.matmul %302, %303, %cst_100 {dimension_numbers = #tpu.dot_dimension_numbers<[1], [0], [0], [1], [0, 0, 1, 1], [], []>} : vector<4x32xbf16>, vector<32x16xbf16>, vector<4x16xf32> -> vector<4x16xf32>
    %305 = vector.extract_strided_slice %264 {offsets = [52, 0], sizes = [4, 32], strides = [1, 1]} : vector<100x32xbf16> to vector<4x32xbf16>
    %306 = vector.extract_strided_slice %265 {offsets = [416, 0], sizes = [32, 16], strides = [1, 1]} : vector<800x16xbf16> to vector<32x16xbf16>
    %cst_101 = arith.constant dense<0.000000e+00> : vector<4x16xf32>
    %307 = tpu.matmul %305, %306, %cst_101 {dimension_numbers = #tpu.dot_dimension_numbers<[1], [0], [0], [1], [0, 0, 1, 1], [], []>} : vector<4x32xbf16>, vector<32x16xbf16>, vector<4x16xf32> -> vector<4x16xf32>
    %308 = vector.extract_strided_slice %264 {offsets = [56, 0], sizes = [4, 32], strides = [1, 1]} : vector<100x32xbf16> to vector<4x32xbf16>
    %309 = vector.extract_strided_slice %265 {offsets = [448, 0], sizes = [32, 16], strides = [1, 1]} : vector<800x16xbf16> to vector<32x16xbf16>
    %cst_102 = arith.constant dense<0.000000e+00> : vector<4x16xf32>
    %310 = tpu.matmul %308, %309, %cst_102 {dimension_numbers = #tpu.dot_dimension_numbers<[1], [0], [0], [1], [0, 0, 1, 1], [], []>} : vector<4x32xbf16>, vector<32x16xbf16>, vector<4x16xf32> -> vector<4x16xf32>
    %311 = vector.extract_strided_slice %264 {offsets = [60, 0], sizes = [4, 32], strides = [1, 1]} : vector<100x32xbf16> to vector<4x32xbf16>
    %312 = vector.extract_strided_slice %265 {offsets = [480, 0], sizes = [32, 16], strides = [1, 1]} : vector<800x16xbf16> to vector<32x16xbf16>
    %cst_103 = arith.constant dense<0.000000e+00> : vector<4x16xf32>
    %313 = tpu.matmul %311, %312, %cst_103 {dimension_numbers = #tpu.dot_dimension_numbers<[1], [0], [0], [1], [0, 0, 1, 1], [], []>} : vector<4x32xbf16>, vector<32x16xbf16>, vector<4x16xf32> -> vector<4x16xf32>
    %314 = vector.extract_strided_slice %264 {offsets = [64, 0], sizes = [4, 32], strides = [1, 1]} : vector<100x32xbf16> to vector<4x32xbf16>
    %315 = vector.extract_strided_slice %265 {offsets = [512, 0], sizes = [32, 16], strides = [1, 1]} : vector<800x16xbf16> to vector<32x16xbf16>
    %cst_104 = arith.constant dense<0.000000e+00> : vector<4x16xf32>
    %316 = tpu.matmul %314, %315, %cst_104 {dimension_numbers = #tpu.dot_dimension_numbers<[1], [0], [0], [1], [0, 0, 1, 1], [], []>} : vector<4x32xbf16>, vector<32x16xbf16>, vector<4x16xf32> -> vector<4x16xf32>
    %317 = vector.extract_strided_slice %264 {offsets = [68, 0], sizes = [4, 32], strides = [1, 1]} : vector<100x32xbf16> to vector<4x32xbf16>
    %318 = vector.extract_strided_slice %265 {offsets = [544, 0], sizes = [32, 16], strides = [1, 1]} : vector<800x16xbf16> to vector<32x16xbf16>
    %cst_105 = arith.constant dense<0.000000e+00> : vector<4x16xf32>
    %319 = tpu.matmul %317, %318, %cst_105 {dimension_numbers = #tpu.dot_dimension_numbers<[1], [0], [0], [1], [0, 0, 1, 1], [], []>} : vector<4x32xbf16>, vector<32x16xbf16>, vector<4x16xf32> -> vector<4x16xf32>
    %320 = vector.extract_strided_slice %264 {offsets = [72, 0], sizes = [4, 32], strides = [1, 1]} : vector<100x32xbf16> to vector<4x32xbf16>
    %321 = vector.extract_strided_slice %265 {offsets = [576, 0], sizes = [32, 16], strides = [1, 1]} : vector<800x16xbf16> to vector<32x16xbf16>
    %cst_106 = arith.constant dense<0.000000e+00> : vector<4x16xf32>
    %322 = tpu.matmul %320, %321, %cst_106 {dimension_numbers = #tpu.dot_dimension_numbers<[1], [0], [0], [1], [0, 0, 1, 1], [], []>} : vector<4x32xbf16>, vector<32x16xbf16>, vector<4x16xf32> -> vector<4x16xf32>
    %323 = vector.extract_strided_slice %264 {offsets = [76, 0], sizes = [4, 32], strides = [1, 1]} : vector<100x32xbf16> to vector<4x32xbf16>
    %324 = vector.extract_strided_slice %265 {offsets = [608, 0], sizes = [32, 16], strides = [1, 1]} : vector<800x16xbf16> to vector<32x16xbf16>
    %cst_107 = arith.constant dense<0.000000e+00> : vector<4x16xf32>
    %325 = tpu.matmul %323, %324, %cst_107 {dimension_numbers = #tpu.dot_dimension_numbers<[1], [0], [0], [1], [0, 0, 1, 1], [], []>} : vector<4x32xbf16>, vector<32x16xbf16>, vector<4x16xf32> -> vector<4x16xf32>
    %326 = vector.extract_strided_slice %264 {offsets = [80, 0], sizes = [4, 32], strides = [1, 1]} : vector<100x32xbf16> to vector<4x32xbf16>
    %327 = vector.extract_strided_slice %265 {offsets = [640, 0], sizes = [32, 16], strides = [1, 1]} : vector<800x16xbf16> to vector<32x16xbf16>
    %cst_108 = arith.constant dense<0.000000e+00> : vector<4x16xf32>
    %328 = tpu.matmul %326, %327, %cst_108 {dimension_numbers = #tpu.dot_dimension_numbers<[1], [0], [0], [1], [0, 0, 1, 1], [], []>} : vector<4x32xbf16>, vector<32x16xbf16>, vector<4x16xf32> -> vector<4x16xf32>
    %329 = vector.extract_strided_slice %264 {offsets = [84, 0], sizes = [4, 32], strides = [1, 1]} : vector<100x32xbf16> to vector<4x32xbf16>
    %330 = vector.extract_strided_slice %265 {offsets = [672, 0], sizes = [32, 16], strides = [1, 1]} : vector<800x16xbf16> to vector<32x16xbf16>
    %cst_109 = arith.constant dense<0.000000e+00> : vector<4x16xf32>
    %331 = tpu.matmul %329, %330, %cst_109 {dimension_numbers = #tpu.dot_dimension_numbers<[1], [0], [0], [1], [0, 0, 1, 1], [], []>} : vector<4x32xbf16>, vector<32x16xbf16>, vector<4x16xf32> -> vector<4x16xf32>
    %332 = vector.extract_strided_slice %264 {offsets = [88, 0], sizes = [4, 32], strides = [1, 1]} : vector<100x32xbf16> to vector<4x32xbf16>
    %333 = vector.extract_strided_slice %265 {offsets = [704, 0], sizes = [32, 16], strides = [1, 1]} : vector<800x16xbf16> to vector<32x16xbf16>
    %cst_110 = arith.constant dense<0.000000e+00> : vector<4x16xf32>
    %334 = tpu.matmul %332, %333, %cst_110 {dimension_numbers = #tpu.dot_dimension_numbers<[1], [0], [0], [1], [0, 0, 1, 1], [], []>} : vector<4x32xbf16>, vector<32x16xbf16>, vector<4x16xf32> -> vector<4x16xf32>
    %335 = vector.extract_strided_slice %264 {offsets = [92, 0], sizes = [4, 32], strides = [1, 1]} : vector<100x32xbf16> to vector<4x32xbf16>
    %336 = vector.extract_strided_slice %265 {offsets = [736, 0], sizes = [32, 16], strides = [1, 1]} : vector<800x16xbf16> to vector<32x16xbf16>
    %cst_111 = arith.constant dense<0.000000e+00> : vector<4x16xf32>
    %337 = tpu.matmul %335, %336, %cst_111 {dimension_numbers = #tpu.dot_dimension_numbers<[1], [0], [0], [1], [0, 0, 1, 1], [], []>} : vector<4x32xbf16>, vector<32x16xbf16>, vector<4x16xf32> -> vector<4x16xf32>
    %338 = vector.extract_strided_slice %264 {offsets = [96, 0], sizes = [4, 32], strides = [1, 1]} : vector<100x32xbf16> to vector<4x32xbf16>
    %339 = vector.extract_strided_slice %265 {offsets = [768, 0], sizes = [32, 16], strides = [1, 1]} : vector<800x16xbf16> to vector<32x16xbf16>
    %cst_112 = arith.constant dense<0.000000e+00> : vector<4x16xf32>
    %340 = tpu.matmul %338, %339, %cst_112 {dimension_numbers = #tpu.dot_dimension_numbers<[1], [0], [0], [1], [0, 0, 1, 1], [], []>} : vector<4x32xbf16>, vector<32x16xbf16>, vector<4x16xf32> -> vector<4x16xf32>
    %341 = arith.addf %268, %271 : vector<4x16xf32>
    %342 = arith.addf %274, %277 : vector<4x16xf32>
    %343 = arith.addf %280, %283 : vector<4x16xf32>
    %344 = arith.addf %286, %289 : vector<4x16xf32>
    %345 = arith.addf %292, %295 : vector<4x16xf32>
    %346 = arith.addf %298, %301 : vector<4x16xf32>
    %347 = arith.addf %304, %307 : vector<4x16xf32>
    %348 = arith.addf %310, %313 : vector<4x16xf32>
    %349 = arith.addf %316, %319 : vector<4x16xf32>
    %350 = arith.addf %322, %325 : vector<4x16xf32>
    %351 = arith.addf %328, %331 : vector<4x16xf32>
    %352 = arith.addf %334, %337 : vector<4x16xf32>
    %353 = arith.addf %341, %342 : vector<4x16xf32>
    %354 = arith.addf %343, %344 : vector<4x16xf32>
    %355 = arith.addf %345, %346 : vector<4x16xf32>
    %356 = arith.addf %347, %348 : vector<4x16xf32>
    %357 = arith.addf %349, %350 : vector<4x16xf32>
    %358 = arith.addf %351, %352 : vector<4x16xf32>
    %359 = arith.addf %353, %354 : vector<4x16xf32>
    %360 = arith.addf %355, %356 : vector<4x16xf32>
    %361 = arith.addf %357, %358 : vector<4x16xf32>
    %362 = arith.addf %359, %360 : vector<4x16xf32>
    %363 = arith.addf %361, %340 : vector<4x16xf32>
    %364 = arith.addf %362, %363 : vector<4x16xf32>
    %c0_113 = arith.constant 0 : index
    %c0_114 = arith.constant 0 : index
    %365 = vector.load %arg11[%c0_113, %c0_114] : memref<1x16xf32, #tpu.memory_space<vmem>>, vector<1x16xf32>
    %c0_115 = arith.constant 0 : index
    %c0_116 = arith.constant 0 : index
    %366 = vector.load %arg12[%c0_115, %c0_116] : memref<1x16xf32, #tpu.memory_space<vmem>>, vector<1x16xf32>
    %cst_117 = arith.constant 1.000000e+00 : f32
    %367 = vector.broadcast %cst_117 : f32 to vector<1x4xf32>
    %cst_118 = arith.constant dense<0.000000e+00> : vector<1x16xf32>
    %368 = tpu.matmul %367, %364, %cst_118 {dimension_numbers = #tpu.dot_dimension_numbers<[1], [0], [0], [1], [0, 0, 1, 1], [], []>} : vector<1x4xf32>, vector<4x16xf32>, vector<1x16xf32> -> vector<1x16xf32>
    %cst_119 = arith.constant 2.500000e-01 : f32
    %369 = vector.broadcast %cst_119 : f32 to vector<1x16xf32>
    %370 = arith.mulf %368, %369 : vector<1x16xf32>
    %371 = arith.mulf %364, %364 : vector<4x16xf32>
    %cst_120 = arith.constant dense<0.000000e+00> : vector<1x16xf32>
    %372 = tpu.matmul %367, %371, %cst_120 {dimension_numbers = #tpu.dot_dimension_numbers<[1], [0], [0], [1], [0, 0, 1, 1], [], []>} : vector<1x4xf32>, vector<4x16xf32>, vector<1x16xf32> -> vector<1x16xf32>
    %cst_121 = arith.constant 2.500000e-01 : f32
    %373 = vector.broadcast %cst_121 : f32 to vector<1x16xf32>
    %374 = arith.mulf %372, %373 : vector<1x16xf32>
    %375 = arith.mulf %370, %370 : vector<1x16xf32>
    %376 = arith.subf %374, %375 : vector<1x16xf32>
    %cst_122 = arith.constant 9.99999974E-6 : f32
    %377 = vector.broadcast %cst_122 : f32 to vector<1x16xf32>
    %378 = arith.addf %376, %377 : vector<1x16xf32>
    %379 = math.rsqrt %378 : vector<1x16xf32>
    %380 = arith.mulf %379, %365 : vector<1x16xf32>
    %381 = vector.broadcast %370 : vector<1x16xf32> to vector<4x16xf32>
    %382 = arith.subf %364, %381 : vector<4x16xf32>
    %383 = vector.broadcast %380 : vector<1x16xf32> to vector<4x16xf32>
    %384 = arith.mulf %382, %383 : vector<4x16xf32>
    %385 = vector.broadcast %366 : vector<1x16xf32> to vector<4x16xf32>
    %386 = arith.addf %384, %385 : vector<4x16xf32>
    %cst_123 = arith.constant 0.000000e+00 : f32
    %387 = vector.broadcast %cst_123 : f32 to vector<4x16xf32>
    %388 = arith.maximumf %386, %387 : vector<4x16xf32>
    %c0_124 = arith.constant 0 : index
    %c0_125 = arith.constant 0 : index
    %389 = vector.load %arg13[%c0_124, %c0_125] : memref<32x64xf32, #tpu.memory_space<vmem>>, vector<32x64xf32>
    %c0_126 = arith.constant 0 : index
    %c0_127 = arith.constant 0 : index
    %390 = vector.load %arg14[%c0_126, %c0_127] : memref<1x64xf32, #tpu.memory_space<vmem>>, vector<1x64xf32>
    %391 = vector.extract_strided_slice %388 {offsets = [0, 0], sizes = [2, 16], strides = [1, 1]} : vector<4x16xf32> to vector<2x16xf32>
    %392 = vector.extract_strided_slice %389 {offsets = [0, 0], sizes = [16, 64], strides = [1, 1]} : vector<32x64xf32> to vector<16x64xf32>
    %cst_128 = arith.constant dense<0.000000e+00> : vector<2x64xf32>
    %393 = tpu.matmul %391, %392, %cst_128 {dimension_numbers = #tpu.dot_dimension_numbers<[1], [0], [0], [1], [0, 0, 1, 1], [], []>} : vector<2x16xf32>, vector<16x64xf32>, vector<2x64xf32> -> vector<2x64xf32>
    %394 = vector.extract_strided_slice %388 {offsets = [2, 0], sizes = [2, 16], strides = [1, 1]} : vector<4x16xf32> to vector<2x16xf32>
    %395 = vector.extract_strided_slice %389 {offsets = [16, 0], sizes = [16, 64], strides = [1, 1]} : vector<32x64xf32> to vector<16x64xf32>
    %cst_129 = arith.constant dense<0.000000e+00> : vector<2x64xf32>
    %396 = tpu.matmul %394, %395, %cst_129 {dimension_numbers = #tpu.dot_dimension_numbers<[1], [0], [0], [1], [0, 0, 1, 1], [], []>} : vector<2x16xf32>, vector<16x64xf32>, vector<2x64xf32> -> vector<2x64xf32>
    %397 = vector.broadcast %390 : vector<1x64xf32> to vector<2x64xf32>
    %398 = arith.addf %397, %393 : vector<2x64xf32>
    %399 = arith.addf %398, %396 : vector<2x64xf32>
    %cst_130 = arith.constant 0.000000e+00 : f32
    %400 = vector.broadcast %cst_130 : f32 to vector<2x64xf32>
    %401 = arith.maximumf %399, %400 : vector<2x64xf32>
    %c0_131 = arith.constant 0 : index
    %c0_132 = arith.constant 0 : index
    %402 = vector.load %arg15[%c0_131, %c0_132] : memref<64x64xf32, #tpu.memory_space<vmem>>, vector<64x64xf32>
    %cst_133 = arith.constant dense<0.000000e+00> : vector<2x64xf32>
    %403 = tpu.matmul %401, %402, %cst_133 {dimension_numbers = #tpu.dot_dimension_numbers<[1], [0], [0], [1], [0, 0, 1, 1], [], []>} : vector<2x64xf32>, vector<64x64xf32>, vector<2x64xf32> -> vector<2x64xf32>
    %c0_134 = arith.constant 0 : index
    %c0_135 = arith.constant 0 : index
    %404 = vector.load %arg16[%c0_134, %c0_135] : memref<1x64xf32, #tpu.memory_space<vmem>>, vector<1x64xf32>
    %405 = vector.broadcast %404 : vector<1x64xf32> to vector<2x64xf32>
    %406 = arith.addf %403, %405 : vector<2x64xf32>
    %cst_136 = arith.constant 0.000000e+00 : f32
    %407 = vector.broadcast %cst_136 : f32 to vector<2x64xf32>
    %408 = arith.maximumf %406, %407 : vector<2x64xf32>
    %c0_137 = arith.constant 0 : index
    %c0_138 = arith.constant 0 : index
    %409 = vector.load %arg17[%c0_137, %c0_138] : memref<64x6xf32, #tpu.memory_space<vmem>>, vector<64x6xf32>
    %cst_139 = arith.constant dense<0.000000e+00> : vector<2x6xf32>
    %410 = tpu.matmul %408, %409, %cst_139 {dimension_numbers = #tpu.dot_dimension_numbers<[1], [0], [0], [1], [0, 0, 1, 1], [], []>} : vector<2x64xf32>, vector<64x6xf32>, vector<2x6xf32> -> vector<2x6xf32>
    %c0_140 = arith.constant 0 : index
    %c0_141 = arith.constant 0 : index
    %411 = vector.load %arg18[%c0_140, %c0_141] : memref<1x6xf32, #tpu.memory_space<vmem>>, vector<1x6xf32>
    %412 = vector.broadcast %411 : vector<1x6xf32> to vector<2x6xf32>
    %413 = arith.addf %410, %412 : vector<2x6xf32>
    %c0_142 = arith.constant 0 : index
    %c0_143 = arith.constant 0 : index
    %414 = vector.load %arg19[%c0_142, %c0_143] : memref<2x6xf32, #tpu.memory_space<vmem>>, vector<2x6xf32>
    tpu.vector_store %arg19[%c0_142, %c0_143], %413 {strides = array<i32>} : memref<2x6xf32, #tpu.memory_space<vmem>>, vector<2x6xf32>,
    return
  }
}

</mosaic_0001>

<llo_original>
// kernel: _lambda_.1
$region0: #{_lambda_.1}
  #allocation0 [shape = 'u32[]', space=smem, size = 0x4, offset = 0x4, fixed_abs, tag = 'smem constant byte address 0x4 - core index']
  #allocation1 [shape = 'u32[144,128]{1,0:T(1,128)}', space=vmem, size = 0x12000, scoped, tag = 'internal scratch']
  #allocation2 [shape = 'bf16[1470,234]{1,0:T(8,128)(2,1)}', space=vmem, size = 0xb8000, scoped, tag = 'scratch operand']
  #allocation3 [shape = 'bf16[3136,32]{1,0:T(16,128)(2,1)}', space=vmem, size = 0xc4000, scoped, tag = 'scratch operand']
  #allocation4 [shape = 's32[2]{0}', space=sflag, size = 0x8, scoped, tag = 'scratch operand']
  #allocation7 [shape = 's32[]', space=sflag, size = 0x4, offset = 0, fixed_abs, tag = 'sflag constant byte address 0x0 - dummy sync flag']
  #allocation8 [shape = 's32[]', space=sflag, size = 0x4, offset = 0, fixed_abs, tag = 'sflag constant byte address 0x0 - dummy sync flag']
  %s0 = inlined_call_operand.vmem [shape: bf16[234,75], index: 0, kind: input, shape index: {}]
  %s1 = inlined_call_operand.vmem [shape: bf16[75,64], index: 1, kind: input, shape index: {}]
  %s2 = inlined_call_operand.vmem [shape: f32[234,64], index: 2, kind: input, shape index: {}]
  %s3 = inlined_call_operand.vmem [shape: f32[1,64], index: 3, kind: input, shape index: {}]
  %s4 = inlined_call_operand.vmem [shape: f32[1,64], index: 4, kind: input, shape index: {}]
  %s5 = inlined_call_operand.vmem [shape: bf16[1470,234], index: 5, kind: input, shape index: {}]
  %s6 = inlined_call_operand.vmem [shape: bf16[3136,32], index: 6, kind: input, shape index: {}]
  %s7 = inlined_call_operand.vmem [shape: f32[1,32], index: 7, kind: input, shape index: {}]
  %s8 = inlined_call_operand.vmem [shape: f32[1,32], index: 8, kind: input, shape index: {}]
  %s9 = inlined_call_operand.vmem [shape: bf16[100,30], index: 9, kind: input, shape index: {}]
  %s10 = inlined_call_operand.vmem [shape: bf16[800,16], index: 10, kind: input, shape index: {}]
  %s11 = inlined_call_operand.vmem [shape: f32[1,16], index: 11, kind: input, shape index: {}]
  %s12 = inlined_call_operand.vmem [shape: f32[1,16], index: 12, kind: input, shape index: {}]
  %s13 = inlined_call_operand.vmem [shape: f32[32,64], index: 13, kind: input, shape index: {}]
  %s14 = inlined_call_operand.vmem [shape: f32[1,64], index: 14, kind: input, shape index: {}]
  %s15 = inlined_call_operand.vmem [shape: f32[64,64], index: 15, kind: input, shape index: {}]
  %s16 = inlined_call_operand.vmem [shape: f32[1,64], index: 16, kind: input, shape index: {}]
  %s17 = inlined_call_operand.vmem [shape: f32[64,6], index: 17, kind: input, shape index: {}]
  %s18 = inlined_call_operand.vmem [shape: f32[1,6], index: 18, kind: input, shape index: {}]
  %s19 = inlined_call_operand.hbm [shape: f32[2,6], index: 19, kind: output, shape index: {}]
  %s20 = sld [smem:[#allocation0]]
  $region146: #{_lambda_.1} parent=0
    _
  %s22 = ssub.s32 1, %s20
  %s23 = scalar_select 0, %s22, %s20
  $region1: #{_lambda_.1} parent=0
    #allocation5 [shape = 'u8[1024]{0}', space=vmem, size = 0x400, scoped, tag = 'output window, operand 0, single buffered']
    #allocation6 [shape = 's32[1]{0}', space=sflag, size = 0x4, scoped, tag = 'scoped memory for _lambda_.1']
    %24 = vsyncpa [#allocation6], 0
    // Predicated region
    $region2: #{_lambda_.1} parent=1 // pred_check
      _
    $region3: #{_lambda_.1} parent=1 // pred_check_branch
      %26 = sbr.rel (0) target = $region5
    $region4: #{_lambda_.1} parent=1 // pred_region
      _
    $region5: #{_lambda_.1} parent=1 // pred_fallthru
      _
    // Predicated region
    $region6: #{_lambda_.1} parent=1 // pred_check
      _
    $region7: #{_lambda_.1} parent=1 // pred_check_branch
      %28 = sbr.rel (0) target = $region9
    $region8: #{_lambda_.1} parent=1 // pred_region
      _
    $region9: #{_lambda_.1} parent=1 // pred_fallthru
      _
    // Predicated region
    $region10: #{_lambda_.1} parent=1 // pred_check
      _
    $region11: #{_lambda_.1} parent=1 // pred_check_branch
      %30 = sbr.rel (0) target = $region13
    $region12: #{_lambda_.1} parent=1 // pred_region
      _
    $region13: #{_lambda_.1} parent=1 // pred_fallthru
      _
    // Predicated region
    $region14: #{_lambda_.1} parent=1 // pred_check
      _
    $region15: #{_lambda_.1} parent=1 // pred_check_branch
      %32 = sbr.rel (0) target = $region17
    $region16: #{_lambda_.1} parent=1 // pred_region
      _
    $region17: #{_lambda_.1} parent=1 // pred_fallthru
      _
    // Predicated region
    $region18: #{_lambda_.1} parent=1 // pred_check
      _
    $region19: #{_lambda_.1} parent=1 // pred_check_branch
      %34 = sbr.rel (0) target = $region21
    $region20: #{_lambda_.1} parent=1 // pred_region
      _
    $region21: #{_lambda_.1} parent=1 // pred_fallthru
      _
    // Predicated region
    $region22: #{_lambda_.1} parent=1 // pred_check
      _
    $region23: #{_lambda_.1} parent=1 // pred_check_branch
      %36 = sbr.rel (0) target = $region25
    $region24: #{_lambda_.1} parent=1 // pred_region
      _
    $region25: #{_lambda_.1} parent=1 // pred_fallthru
      _
    // Predicated region
    $region26: #{_lambda_.1} parent=1 // pred_check
      _
    $region27: #{_lambda_.1} parent=1 // pred_check_branch
      %38 = sbr.rel (0) target = $region29
    $region28: #{_lambda_.1} parent=1 // pred_region
      _
    $region29: #{_lambda_.1} parent=1 // pred_fallthru
      _
    // Predicated region
    $region30: #{_lambda_.1} parent=1 // pred_check
      _
    $region31: #{_lambda_.1} parent=1 // pred_check_branch
      %40 = sbr.rel (0) target = $region33
    $region32: #{_lambda_.1} parent=1 // pred_region
      _
    $region33: #{_lambda_.1} parent=1 // pred_fallthru
      _
    // Predicated region
    $region34: #{_lambda_.1} parent=1 // pred_check
      _
    $region35: #{_lambda_.1} parent=1 // pred_check_branch
      %42 = sbr.rel (0) target = $region37
    $region36: #{_lambda_.1} parent=1 // pred_region
      _
    $region37: #{_lambda_.1} parent=1 // pred_fallthru
      _
    // Predicated region
    $region38: #{_lambda_.1} parent=1 // pred_check
      _
    $region39: #{_lambda_.1} parent=1 // pred_check_branch
      %44 = sbr.rel (0) target = $region41
    $region40: #{_lambda_.1} parent=1 // pred_region
      _
    $region41: #{_lambda_.1} parent=1 // pred_fallthru
      _
    // Predicated region
    $region42: #{_lambda_.1} parent=1 // pred_check
      _
    $region43: #{_lambda_.1} parent=1 // pred_check_branch
      %46 = sbr.rel (0) target = $region45
    $region44: #{_lambda_.1} parent=1 // pred_region
      _
    $region45: #{_lambda_.1} parent=1 // pred_fallthru
      _
    // Predicated region
    $region46: #{_lambda_.1} parent=1 // pred_check
      _
    $region47: #{_lambda_.1} parent=1 // pred_check_branch
      %48 = sbr.rel (0) target = $region49
    $region48: #{_lambda_.1} parent=1 // pred_region
      _
    $region49: #{_lambda_.1} parent=1 // pred_fallthru
      _
    // Predicated region
    $region50: #{_lambda_.1} parent=1 // pred_check
      _
    $region51: #{_lambda_.1} parent=1 // pred_check_branch
      %50 = sbr.rel (0) target = $region53
    $region52: #{_lambda_.1} parent=1 // pred_region
      _
    $region53: #{_lambda_.1} parent=1 // pred_fallthru
      _
    // Predicated region
    $region54: #{_lambda_.1} parent=1 // pred_check
      _
    $region55: #{_lambda_.1} parent=1 // pred_check_branch
      %52 = sbr.rel (0) target = $region57
    $region56: #{_lambda_.1} parent=1 // pred_region
      _
    $region57: #{_lambda_.1} parent=1 // pred_fallthru
      _
    // Predicated region
    $region58: #{_lambda_.1} parent=1 // pred_check
      _
    $region59: #{_lambda_.1} parent=1 // pred_check_branch
      %54 = sbr.rel (0) target = $region61
    $region60: #{_lambda_.1} parent=1 // pred_region
      _
    $region61: #{_lambda_.1} parent=1 // pred_fallthru
      _
    // Predicated region
    $region62: #{_lambda_.1} parent=1 // pred_check
      _
    $region63: #{_lambda_.1} parent=1 // pred_check_branch
      %56 = sbr.rel (0) target = $region65
    $region64: #{_lambda_.1} parent=1 // pred_region
      _
    $region65: #{_lambda_.1} parent=1 // pred_fallthru
      _
    // Predicated region
    $region66: #{_lambda_.1} parent=1 // pred_check
      _
    $region67: #{_lambda_.1} parent=1 // pred_check_branch
      %58 = sbr.rel (0) target = $region69
    $region68: #{_lambda_.1} parent=1 // pred_region
      _
    $region69: #{_lambda_.1} parent=1 // pred_fallthru
      _
    %p61 = scmp.lt.u32.totalorder 1472, 8
    %p62 = pneg %p61
    // Predicated region
    $region70: #{_lambda_.1} parent=1 // pred_check
      _
    $region71: #{_lambda_.1} parent=1 // pred_check_branch
      %64 = sbr.rel (%p61) target = $region73
    $region72: #{_lambda_.1} parent=1 // pred_region
      %s79 = sand.u32 1472, 7
      %p80 = scmp.eq.s32.totalorder %s79, 0
      // Predicated region
      $region85: #{_lambda_.1} parent=72 // pred_check
        %p81 = pneg %p80
      $region86: #{_lambda_.1} parent=72 // pred_check_branch
        %83 = sbr.rel (%p81) target = $region88
      $region87: #{_lambda_.1} parent=72 // pred_region
        loop: start=0, step=1, limit=1
        $region89: #{_lambda_.1} parent=87 // loop_pre_header
          _
        $region90: #{_lambda_.1} parent=87 // loop_header
          %s85 = sphi 0, %s89
          %p86 = scmp.ge.s32.totalorder %s85, 1
          %s90 = sphi %s5, %s5
          %s91 = sphi [#allocation2], [#allocation2]
        $region91: #{_lambda_.1} parent=87 // loop_header_branch
          %88 = sbr.rel (%p86) target = $region95
        $region92: #{_lambda_.1} parent=87 // loop_body
          %v92 = vld [vmem:[%s90] sm:$0xff]
          %93 = vst [vmem:[%s91] sm:$0xff] %v92
          %v94 = vld [vmem:[%s90 + $0x8] sm:$0xff]
          %95 = vst [vmem:[%s91 + $0x8] sm:$0xff] %v94
          %v96 = vld [vmem:[%s90 + $0x10] sm:$0xff]
          %97 = vst [vmem:[%s91 + $0x10] sm:$0xff] %v96
          %v98 = vld [vmem:[%s90 + $0x18] sm:$0xff]
          %99 = vst [vmem:[%s91 + $0x18] sm:$0xff] %v98
          %v100 = vld [vmem:[%s90 + $0x20] sm:$0xff]
          %101 = vst [vmem:[%s91 + $0x20] sm:$0xff] %v100
          %v102 = vld [vmem:[%s90 + $0x28] sm:$0xff]
          %103 = vst [vmem:[%s91 + $0x28] sm:$0xff] %v102
          %v104 = vld [vmem:[%s90 + $0x30] sm:$0xff]
          %105 = vst [vmem:[%s91 + $0x30] sm:$0xff] %v104
          %v106 = vld [vmem:[%s90 + $0x38] sm:$0xff]
          %107 = vst [vmem:[%s91 + $0x38] sm:$0xff] %v106
          %v108 = vld [vmem:[%s90 + $0x40] sm:$0xff]
          %109 = vst [vmem:[%s91 + $0x40] sm:$0xff] %v108
          %v110 = vld [vmem:[%s90 + $0x48] sm:$0xff]
          %111 = vst [vmem:[%s91 + $0x48] sm:$0xff] %v110
          %v112 = vld [vmem:[%s90 + $0x50] sm:$0xff]
          %113 = vst [vmem:[%s91 + $0x50] sm:$0xff] %v112
          %v114 = vld [vmem:[%s90 + $0x58] sm:$0xff]
          %115 = vst [vmem:[%s91 + $0x58] sm:$0xff] %v114
          %v116 = vld [vmem:[%s90 + $0x60] sm:$0xff]
          %117 = vst [vmem:[%s91 + $0x60] sm:$0xff] %v116
          %v118 = vld [vmem:[%s90 + $0x68] sm:$0xff]
          %119 = vst [vmem:[%s91 + $0x68] sm:$0xff] %v118
          %v120 = vld [vmem:[%s90 + $0x70] sm:$0xff]
          %121 = vst [vmem:[%s91 + $0x70] sm:$0xff] %v120
          %v122 = vld [vmem:[%s90 + $0x78] sm:$0xff]
          %123 = vst [vmem:[%s91 + $0x78] sm:$0xff] %v122
          %v124 = vld [vmem:[%s90 + $0x80] sm:$0xff]
          %125 = vst [vmem:[%s91 + $0x80] sm:$0xff] %v124
          %v126 = vld [vmem:[%s90 + $0x88] sm:$0xff]
          %127 = vst [vmem:[%s91 + $0x88] sm:$0xff] %v126
          %v128 = vld [vmem:[%s90 + $0x90] sm:$0xff]
          %129 = vst [vmem:[%s91 + $0x90] sm:$0xff] %v128
          %v130 = vld [vmem:[%s90 + $0x98] sm:$0xff]
          %131 = vst [vmem:[%s91 + $0x98] sm:$0xff] %v130
          %v132 = vld [vmem:[%s90 + $0xa0] sm:$0xff]
          %133 = vst [vmem:[%s91 + $0xa0] sm:$0xff] %v132
          %v134 = vld [vmem:[%s90 + $0xa8] sm:$0xff]
          %135 = vst [vmem:[%s91 + $0xa8] sm:$0xff] %v134
          %v136 = vld [vmem:[%s90 + $0xb0] sm:$0xff]
          %137 = vst [vmem:[%s91 + $0xb0] sm:$0xff] %v136
          %v138 = vld [vmem:[%s90 + $0xb8] sm:$0xff]
          %139 = vst [vmem:[%s91 + $0xb8] sm:$0xff] %v138
          %v140 = vld [vmem:[%s90 + $0xc0] sm:$0xff]
          %141 = vst [vmem:[%s91 + $0xc0] sm:$0xff] %v140
          %v142 = vld [vmem:[%s90 + $0xc8] sm:$0xff]
          %143 = vst [vmem:[%s91 + $0xc8] sm:$0xff] %v142
          %v144 = vld [vmem:[%s90 + $0xd0] sm:$0xff]
          %145 = vst [vmem:[%s91 + $0xd0] sm:$0xff] %v144
          %v146 = vld [vmem:[%s90 + $0xd8] sm:$0xff]
          %147 = vst [vmem:[%s91 + $0xd8] sm:$0xff] %v146
          %v148 = vld [vmem:[%s90 + $0xe0] sm:$0xff]
          %149 = vst [vmem:[%s91 + $0xe0] sm:$0xff] %v148
          %v150 = vld [vmem:[%s90 + $0xe8] sm:$0xff]
          %151 = vst [vmem:[%s91 + $0xe8] sm:$0xff] %v150
          %v152 = vld [vmem:[%s90 + $0xf0] sm:$0xff]
          %153 = vst [vmem:[%s91 + $0xf0] sm:$0xff] %v152
          %v154 = vld [vmem:[%s90 + $0xf8] sm:$0xff]
          %155 = vst [vmem:[%s91 + $0xf8] sm:$0xff] %v154
          %v156 = vld [vmem:[%s90 + $0x100] sm:$0xff]
          %157 = vst [vmem:[%s91 + $0x100] sm:$0xff] %v156
          %v158 = vld [vmem:[%s90 + $0x108] sm:$0xff]
          %159 = vst [vmem:[%s91 + $0x108] sm:$0xff] %v158
          %v160 = vld [vmem:[%s90 + $0x110] sm:$0xff]
          %161 = vst [vmem:[%s91 + $0x110] sm:$0xff] %v160
          %v162 = vld [vmem:[%s90 + $0x118] sm:$0xff]
          %163 = vst [vmem:[%s91 + $0x118] sm:$0xff] %v162
          %v164 = vld [vmem:[%s90 + $0x120] sm:$0xff]
          %165 = vst [vmem:[%s91 + $0x120] sm:$0xff] %v164
          %v166 = vld [vmem:[%s90 + $0x128] sm:$0xff]
          %167 = vst [vmem:[%s91 + $0x128] sm:$0xff] %v166
          %v168 = vld [vmem:[%s90 + $0x130] sm:$0xff]
          %169 = vst [vmem:[%s91 + $0x130] sm:$0xff] %v168
          %v170 = vld [vmem:[%s90 + $0x138] sm:$0xff]
          %171 = vst [vmem:[%s91 + $0x138] sm:$0xff] %v170
          %v172 = vld [vmem:[%s90 + $0x140] sm:$0xff]
          %173 = vst [vmem:[%s91 + $0x140] sm:$0xff] %v172
          %v174 = vld [vmem:[%s90 + $0x148] sm:$0xff]
          %175 = vst [vmem:[%s91 + $0x148] sm:$0xff] %v174
          %v176 = vld [vmem:[%s90 + $0x150] sm:$0xff]
          %177 = vst [vmem:[%s91 + $0x150] sm:$0xff] %v176
          %v178 = vld [vmem:[%s90 + $0x158] sm:$0xff]
          %179 = vst [vmem:[%s91 + $0x158] sm:$0xff] %v178
          %v180 = vld [vmem:[%s90 + $0x160] sm:$0xff]
          %181 = vst [vmem:[%s91 + $0x160] sm:$0xff] %v180
          %v182 = vld [vmem:[%s90 + $0x168] sm:$0xff]
          %183 = vst [vmem:[%s91 + $0x168] sm:$0xff] %v182
          %v184 = vld [vmem:[%s90 + $0x170] sm:$0xff]
          %185 = vst [vmem:[%s91 + $0x170] sm:$0xff] %v184
          %v186 = vld [vmem:[%s90 + $0x178] sm:$0xff]
          %187 = vst [vmem:[%s91 + $0x178] sm:$0xff] %v186
          %v188 = vld [vmem:[%s90 + $0x180] sm:$0xff]
          %189 = vst [vmem:[%s91 + $0x180] sm:$0xff] %v188
          %v190 = vld [vmem:[%s90 + $0x188] sm:$0xff]
          %191 = vst [vmem:[%s91 + $0x188] sm:$0xff] %v190
          %v192 = vld [vmem:[%s90 + $0x190] sm:$0xff]
          %193 = vst [vmem:[%s91 + $0x190] sm:$0xff] %v192
          %v194 = vld [vmem:[%s90 + $0x198] sm:$0xff]
          %195 = vst [vmem:[%s91 + $0x198] sm:$0xff] %v194
          %v196 = vld [vmem:[%s90 + $0x1a0] sm:$0xff]
          %197 = vst [vmem:[%s91 + $0x1a0] sm:$0xff] %v196
          %v198 = vld [vmem:[%s90 + $0x1a8] sm:$0xff]
          %199 = vst [vmem:[%s91 + $0x1a8] sm:$0xff] %v198
          %v200 = vld [vmem:[%s90 + $0x1b0] sm:$0xff]
          %201 = vst [vmem:[%s91 + $0x1b0] sm:$0xff] %v200
          %v202 = vld [vmem:[%s90 + $0x1b8] sm:$0xff]
          %203 = vst [vmem:[%s91 + $0x1b8] sm:$0xff] %v202
          %v204 = vld [vmem:[%s90 + $0x1c0] sm:$0xff]
          %205 = vst [vmem:[%s91 + $0x1c0] sm:$0xff] %v204
          %v206 = vld [vmem:[%s90 + $0x1c8] sm:$0xff]
          %207 = vst [vmem:[%s91 + $0x1c8] sm:$0xff] %v206
          %v208 = vld [vmem:[%s90 + $0x1d0] sm:$0xff]
          %209 = vst [vmem:[%s91 + $0x1d0] sm:$0xff] %v208
          %v210 = vld [vmem:[%s90 + $0x1d8] sm:$0xff]
          %211 = vst [vmem:[%s91 + $0x1d8] sm:$0xff] %v210
          %v212 = vld [vmem:[%s90 + $0x1e0] sm:$0xff]
          %213 = vst [vmem:[%s91 + $0x1e0] sm:$0xff] %v212
          %v214 = vld [vmem:[%s90 + $0x1e8] sm:$0xff]
          %215 = vst [vmem:[%s91 + $0x1e8] sm:$0xff] %v214
          %v216 = vld [vmem:[%s90 + $0x1f0] sm:$0xff]
          %217 = vst [vmem:[%s91 + $0x1f0] sm:$0xff] %v216
          %v218 = vld [vmem:[%s90 + $0x1f8] sm:$0xff]
          %219 = vst [vmem:[%s91 + $0x1f8] sm:$0xff] %v218
          %v220 = vld [vmem:[%s90 + $0x200] sm:$0xff]
          %221 = vst [vmem:[%s91 + $0x200] sm:$0xff] %v220
          %v222 = vld [vmem:[%s90 + $0x208] sm:$0xff]
          %223 = vst [vmem:[%s91 + $0x208] sm:$0xff] %v222
          %v224 = vld [vmem:[%s90 + $0x210] sm:$0xff]
          %225 = vst [vmem:[%s91 + $0x210] sm:$0xff] %v224
          %v226 = vld [vmem:[%s90 + $0x218] sm:$0xff]
          %227 = vst [vmem:[%s91 + $0x218] sm:$0xff] %v226
          %v228 = vld [vmem:[%s90 + $0x220] sm:$0xff]
          %229 = vst [vmem:[%s91 + $0x220] sm:$0xff] %v228
          %v230 = vld [vmem:[%s90 + $0x228] sm:$0xff]
          %231 = vst [vmem:[%s91 + $0x228] sm:$0xff] %v230
          %v232 = vld [vmem:[%s90 + $0x230] sm:$0xff]
          %233 = vst [vmem:[%s91 + $0x230] sm:$0xff] %v232
          %v234 = vld [vmem:[%s90 + $0x238] sm:$0xff]
          %235 = vst [vmem:[%s91 + $0x238] sm:$0xff] %v234
          %v236 = vld [vmem:[%s90 + $0x240] sm:$0xff]
          %237 = vst [vmem:[%s91 + $0x240] sm:$0xff] %v236
          %v238 = vld [vmem:[%s90 + $0x248] sm:$0xff]
          %239 = vst [vmem:[%s91 + $0x248] sm:$0xff] %v238
          %v240 = vld [vmem:[%s90 + $0x250] sm:$0xff]
          %241 = vst [vmem:[%s91 + $0x250] sm:$0xff] %v240
          %v242 = vld [vmem:[%s90 + $0x258] sm:$0xff]
          %243 = vst [vmem:[%s91 + $0x258] sm:$0xff] %v242
          %v244 = vld [vmem:[%s90 + $0x260] sm:$0xff]
          %245 = vst [vmem:[%s91 + $0x260] sm:$0xff] %v244
          %v246 = vld [vmem:[%s90 + $0x268] sm:$0xff]
          %247 = vst [vmem:[%s91 + $0x268] sm:$0xff] %v246
          %v248 = vld [vmem:[%s90 + $0x270] sm:$0xff]
          %249 = vst [vmem:[%s91 + $0x270] sm:$0xff] %v248
          %v250 = vld [vmem:[%s90 + $0x278] sm:$0xff]
          %251 = vst [vmem:[%s91 + $0x278] sm:$0xff] %v250
          %v252 = vld [vmem:[%s90 + $0x280] sm:$0xff]
          %253 = vst [vmem:[%s91 + $0x280] sm:$0xff] %v252
          %v254 = vld [vmem:[%s90 + $0x288] sm:$0xff]
          %255 = vst [vmem:[%s91 + $0x288] sm:$0xff] %v254
          %v256 = vld [vmem:[%s90 + $0x290] sm:$0xff]
          %257 = vst [vmem:[%s91 + $0x290] sm:$0xff] %v256
          %v258 = vld [vmem:[%s90 + $0x298] sm:$0xff]
          %259 = vst [vmem:[%s91 + $0x298] sm:$0xff] %v258
          %v260 = vld [vmem:[%s90 + $0x2a0] sm:$0xff]
          %261 = vst [vmem:[%s91 + $0x2a0] sm:$0xff] %v260
          %v262 = vld [vmem:[%s90 + $0x2a8] sm:$0xff]
          %263 = vst [vmem:[%s91 + $0x2a8] sm:$0xff] %v262
          %v264 = vld [vmem:[%s90 + $0x2b0] sm:$0xff]
          %265 = vst [vmem:[%s91 + $0x2b0] sm:$0xff] %v264
          %v266 = vld [vmem:[%s90 + $0x2b8] sm:$0xff]
          %267 = vst [vmem:[%s91 + $0x2b8] sm:$0xff] %v266
          %v268 = vld [vmem:[%s90 + $0x2c0] sm:$0xff]
          %269 = vst [vmem:[%s91 + $0x2c0] sm:$0xff] %v268
          %v270 = vld [vmem:[%s90 + $0x2c8] sm:$0xff]
          %271 = vst [vmem:[%s91 + $0x2c8] sm:$0xff] %v270
          %v272 = vld [vmem:[%s90 + $0x2d0] sm:$0xff]
          %273 = vst [vmem:[%s91 + $0x2d0] sm:$0xff] %v272
          %v274 = vld [vmem:[%s90 + $0x2d8] sm:$0xff]
          %275 = vst [vmem:[%s91 + $0x2d8] sm:$0xff] %v274
          %v276 = vld [vmem:[%s90 + $0x2e0] sm:$0xff]
          %277 = vst [vmem:[%s91 + $0x2e0] sm:$0xff] %v276
          %v278 = vld [vmem:[%s90 + $0x2e8] sm:$0xff]
          %279 = vst [vmem:[%s91 + $0x2e8] sm:$0xff] %v278
          %v280 = vld [vmem:[%s90 + $0x2f0] sm:$0xff]
          %281 = vst [vmem:[%s91 + $0x2f0] sm:$0xff] %v280
          %v282 = vld [vmem:[%s90 + $0x2f8] sm:$0xff]
          %283 = vst [vmem:[%s91 + $0x2f8] sm:$0xff] %v282
          %v284 = vld [vmem:[%s90 + $0x300] sm:$0xff]
          %285 = vst [vmem:[%s91 + $0x300] sm:$0xff] %v284
          %v286 = vld [vmem:[%s90 + $0x308] sm:$0xff]
          %287 = vst [vmem:[%s91 + $0x308] sm:$0xff] %v286
          %v288 = vld [vmem:[%s90 + $0x310] sm:$0xff]
          %289 = vst [vmem:[%s91 + $0x310] sm:$0xff] %v288
          %v290 = vld [vmem:[%s90 + $0x318] sm:$0xff]
          %291 = vst [vmem:[%s91 + $0x318] sm:$0xff] %v290
          %v292 = vld [vmem:[%s90 + $0x320] sm:$0xff]
          %293 = vst [vmem:[%s91 + $0x320] sm:$0xff] %v292
          %v294 = vld [vmem:[%s90 + $0x328] sm:$0xff]
          %295 = vst [vmem:[%s91 + $0x328] sm:$0xff] %v294
          %v296 = vld [vmem:[%s90 + $0x330] sm:$0xff]
          %297 = vst [vmem:[%s91 + $0x330] sm:$0xff] %v296
          %v298 = vld [vmem:[%s90 + $0x338] sm:$0xff]
          %299 = vst [vmem:[%s91 + $0x338] sm:$0xff] %v298
          %v300 = vld [vmem:[%s90 + $0x340] sm:$0xff]
          %301 = vst [vmem:[%s91 + $0x340] sm:$0xff] %v300
          %v302 = vld [vmem:[%s90 + $0x348] sm:$0xff]
          %303 = vst [vmem:[%s91 + $0x348] sm:$0xff] %v302
          %v304 = vld [vmem:[%s90 + $0x350] sm:$0xff]
          %305 = vst [vmem:[%s91 + $0x350] sm:$0xff] %v304
          %v306 = vld [vmem:[%s90 + $0x358] sm:$0xff]
          %307 = vst [vmem:[%s91 + $0x358] sm:$0xff] %v306
          %v308 = vld [vmem:[%s90 + $0x360] sm:$0xff]
          %309 = vst [vmem:[%s91 + $0x360] sm:$0xff] %v308
          %v310 = vld [vmem:[%s90 + $0x368] sm:$0xff]
          %311 = vst [vmem:[%s91 + $0x368] sm:$0xff] %v310
          %v312 = vld [vmem:[%s90 + $0x370] sm:$0xff]
          %313 = vst [vmem:[%s91 + $0x370] sm:$0xff] %v312
          %v314 = vld [vmem:[%s90 + $0x378] sm:$0xff]
          %315 = vst [vmem:[%s91 + $0x378] sm:$0xff] %v314
          %v316 = vld [vmem:[%s90 + $0x380] sm:$0xff]
          %317 = vst [vmem:[%s91 + $0x380] sm:$0xff] %v316
          %v318 = vld [vmem:[%s90 + $0x388] sm:$0xff]
          %319 = vst [vmem:[%s91 + $0x388] sm:$0xff] %v318
          %v320 = vld [vmem:[%s90 + $0x390] sm:$0xff]
          %321 = vst [vmem:[%s91 + $0x390] sm:$0xff] %v320
          %v322 = vld [vmem:[%s90 + $0x398] sm:$0xff]
          %323 = vst [vmem:[%s91 + $0x398] sm:$0xff] %v322
          %v324 = vld [vmem:[%s90 + $0x3a0] sm:$0xff]
          %325 = vst [vmem:[%s91 + $0x3a0] sm:$0xff] %v324
          %v326 = vld [vmem:[%s90 + $0x3a8] sm:$0xff]
          %327 = vst [vmem:[%s91 + $0x3a8] sm:$0xff] %v326
          %v328 = vld [vmem:[%s90 + $0x3b0] sm:$0xff]
          %329 = vst [vmem:[%s91 + $0x3b0] sm:$0xff] %v328
          %v330 = vld [vmem:[%s90 + $0x3b8] sm:$0xff]
          %331 = vst [vmem:[%s91 + $0x3b8] sm:$0xff] %v330
          %v332 = vld [vmem:[%s90 + $0x3c0] sm:$0xff]
          %333 = vst [vmem:[%s91 + $0x3c0] sm:$0xff] %v332
          %v334 = vld [vmem:[%s90 + $0x3c8] sm:$0xff]
          %335 = vst [vmem:[%s91 + $0x3c8] sm:$0xff] %v334
          %v336 = vld [vmem:[%s90 + $0x3d0] sm:$0xff]
          %337 = vst [vmem:[%s91 + $0x3d0] sm:$0xff] %v336
          %v338 = vld [vmem:[%s90 + $0x3d8] sm:$0xff]
          %339 = vst [vmem:[%s91 + $0x3d8] sm:$0xff] %v338
          %v340 = vld [vmem:[%s90 + $0x3e0] sm:$0xff]
          %341 = vst [vmem:[%s91 + $0x3e0] sm:$0xff] %v340
          %v342 = vld [vmem:[%s90 + $0x3e8] sm:$0xff]
          %343 = vst [vmem:[%s91 + $0x3e8] sm:$0xff] %v342
          %v344 = vld [vmem:[%s90 + $0x3f0] sm:$0xff]
          %345 = vst [vmem:[%s91 + $0x3f0] sm:$0xff] %v344
          %v346 = vld [vmem:[%s90 + $0x3f8] sm:$0xff]
          %347 = vst [vmem:[%s91 + $0x3f8] sm:$0xff] %v346
          %v348 = vld [vmem:[%s90 + $0x400] sm:$0xff]
          %349 = vst [vmem:[%s91 + $0x400] sm:$0xff] %v348
          %v350 = vld [vmem:[%s90 + $0x408] sm:$0xff]
          %351 = vst [vmem:[%s91 + $0x408] sm:$0xff] %v350
          %v352 = vld [vmem:[%s90 + $0x410] sm:$0xff]
          %353 = vst [vmem:[%s91 + $0x410] sm:$0xff] %v352
          %v354 = vld [vmem:[%s90 + $0x418] sm:$0xff]
          %355 = vst [vmem:[%s91 + $0x418] sm:$0xff] %v354
          %v356 = vld [vmem:[%s90 + $0x420] sm:$0xff]
          %357 = vst [vmem:[%s91 + $0x420] sm:$0xff] %v356
          %v358 = vld [vmem:[%s90 + $0x428] sm:$0xff]
          %359 = vst [vmem:[%s91 + $0x428] sm:$0xff] %v358
          %v360 = vld [vmem:[%s90 + $0x430] sm:$0xff]
          %361 = vst [vmem:[%s91 + $0x430] sm:$0xff] %v360
          %v362 = vld [vmem:[%s90 + $0x438] sm:$0xff]
          %363 = vst [vmem:[%s91 + $0x438] sm:$0xff] %v362
          %v364 = vld [vmem:[%s90 + $0x440] sm:$0xff]
          %365 = vst [vmem:[%s91 + $0x440] sm:$0xff] %v364
          %v366 = vld [vmem:[%s90 + $0x448] sm:$0xff]
          %367 = vst [vmem:[%s91 + $0x448] sm:$0xff] %v366
          %v368 = vld [vmem:[%s90 + $0x450] sm:$0xff]
          %369 = vst [vmem:[%s91 + $0x450] sm:$0xff] %v368
          %v370 = vld [vmem:[%s90 + $0x458] sm:$0xff]
          %371 = vst [vmem:[%s91 + $0x458] sm:$0xff] %v370
          %v372 = vld [vmem:[%s90 + $0x460] sm:$0xff]
          %373 = vst [vmem:[%s91 + $0x460] sm:$0xff] %v372
          %v374 = vld [vmem:[%s90 + $0x468] sm:$0xff]
          %375 = vst [vmem:[%s91 + $0x468] sm:$0xff] %v374
          %v376 = vld [vmem:[%s90 + $0x470] sm:$0xff]
          %377 = vst [vmem:[%s91 + $0x470] sm:$0xff] %v376
          %v378 = vld [vmem:[%s90 + $0x478] sm:$0xff]
          %379 = vst [vmem:[%s91 + $0x478] sm:$0xff] %v378
          %v380 = vld [vmem:[%s90 + $0x480] sm:$0xff]
          %381 = vst [vmem:[%s91 + $0x480] sm:$0xff] %v380
          %v382 = vld [vmem:[%s90 + $0x488] sm:$0xff]
          %383 = vst [vmem:[%s91 + $0x488] sm:$0xff] %v382
          %v384 = vld [vmem:[%s90 + $0x490] sm:$0xff]
          %385 = vst [vmem:[%s91 + $0x490] sm:$0xff] %v384
          %v386 = vld [vmem:[%s90 + $0x498] sm:$0xff]
          %387 = vst [vmem:[%s91 + $0x498] sm:$0xff] %v386
          %v388 = vld [vmem:[%s90 + $0x4a0] sm:$0xff]
          %389 = vst [vmem:[%s91 + $0x4a0] sm:$0xff] %v388
          %v390 = vld [vmem:[%s90 + $0x4a8] sm:$0xff]
          %391 = vst [vmem:[%s91 + $0x4a8] sm:$0xff] %v390
          %v392 = vld [vmem:[%s90 + $0x4b0] sm:$0xff]
          %393 = vst [vmem:[%s91 + $0x4b0] sm:$0xff] %v392
          %v394 = vld [vmem:[%s90 + $0x4b8] sm:$0xff]
          %395 = vst [vmem:[%s91 + $0x4b8] sm:$0xff] %v394
          %v396 = vld [vmem:[%s90 + $0x4c0] sm:$0xff]
          %397 = vst [vmem:[%s91 + $0x4c0] sm:$0xff] %v396
          %v398 = vld [vmem:[%s90 + $0x4c8] sm:$0xff]
          %399 = vst [vmem:[%s91 + $0x4c8] sm:$0xff] %v398
          %v400 = vld [vmem:[%s90 + $0x4d0] sm:$0xff]
          %401 = vst [vmem:[%s91 + $0x4d0] sm:$0xff] %v400
          %v402 = vld [vmem:[%s90 + $0x4d8] sm:$0xff]
          %403 = vst [vmem:[%s91 + $0x4d8] sm:$0xff] %v402
          %v404 = vld [vmem:[%s90 + $0x4e0] sm:$0xff]
          %405 = vst [vmem:[%s91 + $0x4e0] sm:$0xff] %v404
          %v406 = vld [vmem:[%s90 + $0x4e8] sm:$0xff]
          %407 = vst [vmem:[%s91 + $0x4e8] sm:$0xff] %v406
          %v408 = vld [vmem:[%s90 + $0x4f0] sm:$0xff]
          %409 = vst [vmem:[%s91 + $0x4f0] sm:$0xff] %v408
          %v410 = vld [vmem:[%s90 + $0x4f8] sm:$0xff]
          %411 = vst [vmem:[%s91 + $0x4f8] sm:$0xff] %v410
          %v412 = vld [vmem:[%s90 + $0x500] sm:$0xff]
          %413 = vst [vmem:[%s91 + $0x500] sm:$0xff] %v412
          %v414 = vld [vmem:[%s90 + $0x508] sm:$0xff]
          %415 = vst [vmem:[%s91 + $0x508] sm:$0xff] %v414
          %v416 = vld [vmem:[%s90 + $0x510] sm:$0xff]
          %417 = vst [vmem:[%s91 + $0x510] sm:$0xff] %v416
          %v418 = vld [vmem:[%s90 + $0x518] sm:$0xff]
          %419 = vst [vmem:[%s91 + $0x518] sm:$0xff] %v418
          %v420 = vld [vmem:[%s90 + $0x520] sm:$0xff]
          %421 = vst [vmem:[%s91 + $0x520] sm:$0xff] %v420
          %v422 = vld [vmem:[%s90 + $0x528] sm:$0xff]
          %423 = vst [vmem:[%s91 + $0x528] sm:$0xff] %v422
          %v424 = vld [vmem:[%s90 + $0x530] sm:$0xff]
          %425 = vst [vmem:[%s91 + $0x530] sm:$0xff] %v424
          %v426 = vld [vmem:[%s90 + $0x538] sm:$0xff]
          %427 = vst [vmem:[%s91 + $0x538] sm:$0xff] %v426
          %v428 = vld [vmem:[%s90 + $0x540] sm:$0xff]
          %429 = vst [vmem:[%s91 + $0x540] sm:$0xff] %v428
          %v430 = vld [vmem:[%s90 + $0x548] sm:$0xff]
          %431 = vst [vmem:[%s91 + $0x548] sm:$0xff] %v430
          %v432 = vld [vmem:[%s90 + $0x550] sm:$0xff]
          %433 = vst [vmem:[%s91 + $0x550] sm:$0xff] %v432
          %v434 = vld [vmem:[%s90 + $0x558] sm:$0xff]
          %435 = vst [vmem:[%s91 + $0x558] sm:$0xff] %v434
          %v436 = vld [vmem:[%s90 + $0x560] sm:$0xff]
          %437 = vst [vmem:[%s91 + $0x560] sm:$0xff] %v436
          %v438 = vld [vmem:[%s90 + $0x568] sm:$0xff]
          %439 = vst [vmem:[%s91 + $0x568] sm:$0xff] %v438
          %v440 = vld [vmem:[%s90 + $0x570] sm:$0xff]
          %441 = vst [vmem:[%s91 + $0x570] sm:$0xff] %v440
          %v442 = vld [vmem:[%s90 + $0x578] sm:$0xff]
          %443 = vst [vmem:[%s91 + $0x578] sm:$0xff] %v442
          %v444 = vld [vmem:[%s90 + $0x580] sm:$0xff]
          %445 = vst [vmem:[%s91 + $0x580] sm:$0xff] %v444
          %v446 = vld [vmem:[%s90 + $0x588] sm:$0xff]
          %447 = vst [vmem:[%s91 + $0x588] sm:$0xff] %v446
          %v448 = vld [vmem:[%s90 + $0x590] sm:$0xff]
          %449 = vst [vmem:[%s91 + $0x590] sm:$0xff] %v448
          %v450 = vld [vmem:[%s90 + $0x598] sm:$0xff]
          %451 = vst [vmem:[%s91 + $0x598] sm:$0xff] %v450
          %v452 = vld [vmem:[%s90 + $0x5a0] sm:$0xff]
          %453 = vst [vmem:[%s91 + $0x5a0] sm:$0xff] %v452
          %v454 = vld [vmem:[%s90 + $0x5a8] sm:$0xff]
          %455 = vst [vmem:[%s91 + $0x5a8] sm:$0xff] %v454
          %v456 = vld [vmem:[%s90 + $0x5b0] sm:$0xff]
          %457 = vst [vmem:[%s91 + $0x5b0] sm:$0xff] %v456
          %v458 = vld [vmem:[%s90 + $0x5b8] sm:$0xff]
          %459 = vst [vmem:[%s91 + $0x5b8] sm:$0xff] %v458
        $region93: #{_lambda_.1} parent=87 // loop_footer
          %s89 = sadd.s32 1, %s85
        $region94: #{_lambda_.1} parent=87 // loop_footer_branch
          %84 = sbr.rel target = $region90
        $region95: #{_lambda_.1} parent=87 // loop_exit
          _
      $region88: #{_lambda_.1} parent=72 // pred_fallthru
        _
      %p460 = pneg %p80
      // Predicated region
      $region96: #{_lambda_.1} parent=72 // pred_check
        _
      $region97: #{_lambda_.1} parent=72 // pred_check_branch
        %462 = sbr.rel (%p80) target = $region99
      $region98: #{_lambda_.1} parent=72 // pred_region
        %s463 = sand.u32 1472, 7
      $region99: #{_lambda_.1} parent=72 // pred_fallthru
        _
    $region73: #{_lambda_.1} parent=1 // pred_fallthru
      _
    // Predicated region
    $region74: #{_lambda_.1} parent=1 // pred_check
      %p65 = pneg %p61
    $region75: #{_lambda_.1} parent=1 // pred_check_branch
      %67 = sbr.rel (%p65) target = $region77
    $region76: #{_lambda_.1} parent=1 // pred_region
      %s68 = sshllo.u32 0, 1472
      loop: start=0, step=1, limit=1
      $region78: #{_lambda_.1} parent=76 // loop_pre_header
        _
      $region79: #{_lambda_.1} parent=76 // loop_header
        %s70 = sphi 0, %s74
        %p71 = scmp.ge.s32.totalorder %s70, 1
        %s75 = sphi %s5, %s5
        %s76 = sphi [#allocation2], [#allocation2]
      $region80: #{_lambda_.1} parent=76 // loop_header_branch
        %73 = sbr.rel (%p71) target = $region84
      $region81: #{_lambda_.1} parent=76 // loop_body
        %v77 = vld [vmem:[%s75] sm:%s68]
        %78 = vst [vmem:[%s76] sm:%s68] %v77
      $region82: #{_lambda_.1} parent=76 // loop_footer
        %s74 = sadd.s32 1, %s70
      $region83: #{_lambda_.1} parent=76 // loop_footer_branch
        %69 = sbr.rel target = $region79
      $region84: #{_lambda_.1} parent=76 // loop_exit
        _
    $region77: #{_lambda_.1} parent=1 // pred_fallthru
      _
    // Predicated region
    $region100: #{_lambda_.1} parent=1 // pred_check
      _
    $region101: #{_lambda_.1} parent=1 // pred_check_branch
      %466 = sbr.rel (0) target = $region103
    $region102: #{_lambda_.1} parent=1 // pred_region
      %467 = vsyncadd [#allocation4], 23552
    $region103: #{_lambda_.1} parent=1 // pred_fallthru
      _
    %s468 = scalar_lea.sflag [#allocation4], 1
    %p470 = scmp.lt.u32.totalorder 1568, 8
    %p471 = pneg %p470
    // Predicated region
    $region104: #{_lambda_.1} parent=1 // pred_check
      _
    $region105: #{_lambda_.1} parent=1 // pred_check_branch
      %473 = sbr.rel (%p470) target = $region107
    $region106: #{_lambda_.1} parent=1 // pred_region
      %s488 = sand.u32 1568, 7
      %p489 = scmp.eq.s32.totalorder %s488, 0
      // Predicated region
      $region119: #{_lambda_.1} parent=106 // pred_check
        %p490 = pneg %p489
      $region120: #{_lambda_.1} parent=106 // pred_check_branch
        %492 = sbr.rel (%p490) target = $region122
      $region121: #{_lambda_.1} parent=106 // pred_region
        loop: start=0, step=1, limit=1
        $region123: #{_lambda_.1} parent=121 // loop_pre_header
          _
        $region124: #{_lambda_.1} parent=121 // loop_header
          %s494 = sphi 0, %s498
          %p495 = scmp.ge.s32.totalorder %s494, 1
          %s499 = sphi %s6, %s6
          %s500 = sphi [#allocation3], [#allocation3]
        $region125: #{_lambda_.1} parent=121 // loop_header_branch
          %497 = sbr.rel (%p495) target = $region129
        $region126: #{_lambda_.1} parent=121 // loop_body
          %v501 = vld [vmem:[%s499] sm:$0xff]
          %502 = vst [vmem:[%s500] sm:$0xff] %v501
          %v503 = vld [vmem:[%s499 + $0x8] sm:$0xff]
          %504 = vst [vmem:[%s500 + $0x8] sm:$0xff] %v503
          %v505 = vld [vmem:[%s499 + $0x10] sm:$0xff]
          %506 = vst [vmem:[%s500 + $0x10] sm:$0xff] %v505
          %v507 = vld [vmem:[%s499 + $0x18] sm:$0xff]
          %508 = vst [vmem:[%s500 + $0x18] sm:$0xff] %v507
          %v509 = vld [vmem:[%s499 + $0x20] sm:$0xff]
          %510 = vst [vmem:[%s500 + $0x20] sm:$0xff] %v509
          %v511 = vld [vmem:[%s499 + $0x28] sm:$0xff]
          %512 = vst [vmem:[%s500 + $0x28] sm:$0xff] %v511
          %v513 = vld [vmem:[%s499 + $0x30] sm:$0xff]
          %514 = vst [vmem:[%s500 + $0x30] sm:$0xff] %v513
          %v515 = vld [vmem:[%s499 + $0x38] sm:$0xff]
          %516 = vst [vmem:[%s500 + $0x38] sm:$0xff] %v515
          %v517 = vld [vmem:[%s499 + $0x40] sm:$0xff]
          %518 = vst [vmem:[%s500 + $0x40] sm:$0xff] %v517
          %v519 = vld [vmem:[%s499 + $0x48] sm:$0xff]
          %520 = vst [vmem:[%s500 + $0x48] sm:$0xff] %v519
          %v521 = vld [vmem:[%s499 + $0x50] sm:$0xff]
          %522 = vst [vmem:[%s500 + $0x50] sm:$0xff] %v521
          %v523 = vld [vmem:[%s499 + $0x58] sm:$0xff]
          %524 = vst [vmem:[%s500 + $0x58] sm:$0xff] %v523
          %v525 = vld [vmem:[%s499 + $0x60] sm:$0xff]
          %526 = vst [vmem:[%s500 + $0x60] sm:$0xff] %v525
          %v527 = vld [vmem:[%s499 + $0x68] sm:$0xff]
          %528 = vst [vmem:[%s500 + $0x68] sm:$0xff] %v527
          %v529 = vld [vmem:[%s499 + $0x70] sm:$0xff]
          %530 = vst [vmem:[%s500 + $0x70] sm:$0xff] %v529
          %v531 = vld [vmem:[%s499 + $0x78] sm:$0xff]
          %532 = vst [vmem:[%s500 + $0x78] sm:$0xff] %v531
          %v533 = vld [vmem:[%s499 + $0x80] sm:$0xff]
          %534 = vst [vmem:[%s500 + $0x80] sm:$0xff] %v533
          %v535 = vld [vmem:[%s499 + $0x88] sm:$0xff]
          %536 = vst [vmem:[%s500 + $0x88] sm:$0xff] %v535
          %v537 = vld [vmem:[%s499 + $0x90] sm:$0xff]
          %538 = vst [vmem:[%s500 + $0x90] sm:$0xff] %v537
          %v539 = vld [vmem:[%s499 + $0x98] sm:$0xff]
          %540 = vst [vmem:[%s500 + $0x98] sm:$0xff] %v539
          %v541 = vld [vmem:[%s499 + $0xa0] sm:$0xff]
          %542 = vst [vmem:[%s500 + $0xa0] sm:$0xff] %v541
          %v543 = vld [vmem:[%s499 + $0xa8] sm:$0xff]
          %544 = vst [vmem:[%s500 + $0xa8] sm:$0xff] %v543
          %v545 = vld [vmem:[%s499 + $0xb0] sm:$0xff]
          %546 = vst [vmem:[%s500 + $0xb0] sm:$0xff] %v545
          %v547 = vld [vmem:[%s499 + $0xb8] sm:$0xff]
          %548 = vst [vmem:[%s500 + $0xb8] sm:$0xff] %v547
          %v549 = vld [vmem:[%s499 + $0xc0] sm:$0xff]
          %550 = vst [vmem:[%s500 + $0xc0] sm:$0xff] %v549
          %v551 = vld [vmem:[%s499 + $0xc8] sm:$0xff]
          %552 = vst [vmem:[%s500 + $0xc8] sm:$0xff] %v551
          %v553 = vld [vmem:[%s499 + $0xd0] sm:$0xff]
          %554 = vst [vmem:[%s500 + $0xd0] sm:$0xff] %v553
          %v555 = vld [vmem:[%s499 + $0xd8] sm:$0xff]
          %556 = vst [vmem:[%s500 + $0xd8] sm:$0xff] %v555
          %v557 = vld [vmem:[%s499 + $0xe0] sm:$0xff]
          %558 = vst [vmem:[%s500 + $0xe0] sm:$0xff] %v557
          %v559 = vld [vmem:[%s499 + $0xe8] sm:$0xff]
          %560 = vst [vmem:[%s500 + $0xe8] sm:$0xff] %v559
          %v561 = vld [vmem:[%s499 + $0xf0] sm:$0xff]
          %562 = vst [vmem:[%s500 + $0xf0] sm:$0xff] %v561
          %v563 = vld [vmem:[%s499 + $0xf8] sm:$0xff]
          %564 = vst [vmem:[%s500 + $0xf8] sm:$0xff] %v563
          %v565 = vld [vmem:[%s499 + $0x100] sm:$0xff]
          %566 = vst [vmem:[%s500 + $0x100] sm:$0xff] %v565
          %v567 = vld [vmem:[%s499 + $0x108] sm:$0xff]
          %568 = vst [vmem:[%s500 + $0x108] sm:$0xff] %v567
          %v569 = vld [vmem:[%s499 + $0x110] sm:$0xff]
          %570 = vst [vmem:[%s500 + $0x110] sm:$0xff] %v569
          %v571 = vld [vmem:[%s499 + $0x118] sm:$0xff]
          %572 = vst [vmem:[%s500 + $0x118] sm:$0xff] %v571
          %v573 = vld [vmem:[%s499 + $0x120] sm:$0xff]
          %574 = vst [vmem:[%s500 + $0x120] sm:$0xff] %v573
          %v575 = vld [vmem:[%s499 + $0x128] sm:$0xff]
          %576 = vst [vmem:[%s500 + $0x128] sm:$0xff] %v575
          %v577 = vld [vmem:[%s499 + $0x130] sm:$0xff]
          %578 = vst [vmem:[%s500 + $0x130] sm:$0xff] %v577
          %v579 = vld [vmem:[%s499 + $0x138] sm:$0xff]
          %580 = vst [vmem:[%s500 + $0x138] sm:$0xff] %v579
          %v581 = vld [vmem:[%s499 + $0x140] sm:$0xff]
          %582 = vst [vmem:[%s500 + $0x140] sm:$0xff] %v581
          %v583 = vld [vmem:[%s499 + $0x148] sm:$0xff]
          %584 = vst [vmem:[%s500 + $0x148] sm:$0xff] %v583
          %v585 = vld [vmem:[%s499 + $0x150] sm:$0xff]
          %586 = vst [vmem:[%s500 + $0x150] sm:$0xff] %v585
          %v587 = vld [vmem:[%s499 + $0x158] sm:$0xff]
          %588 = vst [vmem:[%s500 + $0x158] sm:$0xff] %v587
          %v589 = vld [vmem:[%s499 + $0x160] sm:$0xff]
          %590 = vst [vmem:[%s500 + $0x160] sm:$0xff] %v589
          %v591 = vld [vmem:[%s499 + $0x168] sm:$0xff]
          %592 = vst [vmem:[%s500 + $0x168] sm:$0xff] %v591
          %v593 = vld [vmem:[%s499 + $0x170] sm:$0xff]
          %594 = vst [vmem:[%s500 + $0x170] sm:$0xff] %v593
          %v595 = vld [vmem:[%s499 + $0x178] sm:$0xff]
          %596 = vst [vmem:[%s500 + $0x178] sm:$0xff] %v595
          %v597 = vld [vmem:[%s499 + $0x180] sm:$0xff]
          %598 = vst [vmem:[%s500 + $0x180] sm:$0xff] %v597
          %v599 = vld [vmem:[%s499 + $0x188] sm:$0xff]
          %600 = vst [vmem:[%s500 + $0x188] sm:$0xff] %v599
          %v601 = vld [vmem:[%s499 + $0x190] sm:$0xff]
          %602 = vst [vmem:[%s500 + $0x190] sm:$0xff] %v601
          %v603 = vld [vmem:[%s499 + $0x198] sm:$0xff]
          %604 = vst [vmem:[%s500 + $0x198] sm:$0xff] %v603
          %v605 = vld [vmem:[%s499 + $0x1a0] sm:$0xff]
          %606 = vst [vmem:[%s500 + $0x1a0] sm:$0xff] %v605
          %v607 = vld [vmem:[%s499 + $0x1a8] sm:$0xff]
          %608 = vst [vmem:[%s500 + $0x1a8] sm:$0xff] %v607
          %v609 = vld [vmem:[%s499 + $0x1b0] sm:$0xff]
          %610 = vst [vmem:[%s500 + $0x1b0] sm:$0xff] %v609
          %v611 = vld [vmem:[%s499 + $0x1b8] sm:$0xff]
          %612 = vst [vmem:[%s500 + $0x1b8] sm:$0xff] %v611
          %v613 = vld [vmem:[%s499 + $0x1c0] sm:$0xff]
          %614 = vst [vmem:[%s500 + $0x1c0] sm:$0xff] %v613
          %v615 = vld [vmem:[%s499 + $0x1c8] sm:$0xff]
          %616 = vst [vmem:[%s500 + $0x1c8] sm:$0xff] %v615
          %v617 = vld [vmem:[%s499 + $0x1d0] sm:$0xff]
          %618 = vst [vmem:[%s500 + $0x1d0] sm:$0xff] %v617
          %v619 = vld [vmem:[%s499 + $0x1d8] sm:$0xff]
          %620 = vst [vmem:[%s500 + $0x1d8] sm:$0xff] %v619
          %v621 = vld [vmem:[%s499 + $0x1e0] sm:$0xff]
          %622 = vst [vmem:[%s500 + $0x1e0] sm:$0xff] %v621
          %v623 = vld [vmem:[%s499 + $0x1e8] sm:$0xff]
          %624 = vst [vmem:[%s500 + $0x1e8] sm:$0xff] %v623
          %v625 = vld [vmem:[%s499 + $0x1f0] sm:$0xff]
          %626 = vst [vmem:[%s500 + $0x1f0] sm:$0xff] %v625
          %v627 = vld [vmem:[%s499 + $0x1f8] sm:$0xff]
          %628 = vst [vmem:[%s500 + $0x1f8] sm:$0xff] %v627
          %v629 = vld [vmem:[%s499 + $0x200] sm:$0xff]
          %630 = vst [vmem:[%s500 + $0x200] sm:$0xff] %v629
          %v631 = vld [vmem:[%s499 + $0x208] sm:$0xff]
          %632 = vst [vmem:[%s500 + $0x208] sm:$0xff] %v631
          %v633 = vld [vmem:[%s499 + $0x210] sm:$0xff]
          %634 = vst [vmem:[%s500 + $0x210] sm:$0xff] %v633
          %v635 = vld [vmem:[%s499 + $0x218] sm:$0xff]
          %636 = vst [vmem:[%s500 + $0x218] sm:$0xff] %v635
          %v637 = vld [vmem:[%s499 + $0x220] sm:$0xff]
          %638 = vst [vmem:[%s500 + $0x220] sm:$0xff] %v637
          %v639 = vld [vmem:[%s499 + $0x228] sm:$0xff]
          %640 = vst [vmem:[%s500 + $0x228] sm:$0xff] %v639
          %v641 = vld [vmem:[%s499 + $0x230] sm:$0xff]
          %642 = vst [vmem:[%s500 + $0x230] sm:$0xff] %v641
          %v643 = vld [vmem:[%s499 + $0x238] sm:$0xff]
          %644 = vst [vmem:[%s500 + $0x238] sm:$0xff] %v643
          %v645 = vld [vmem:[%s499 + $0x240] sm:$0xff]
          %646 = vst [vmem:[%s500 + $0x240] sm:$0xff] %v645
          %v647 = vld [vmem:[%s499 + $0x248] sm:$0xff]
          %648 = vst [vmem:[%s500 + $0x248] sm:$0xff] %v647
          %v649 = vld [vmem:[%s499 + $0x250] sm:$0xff]
          %650 = vst [vmem:[%s500 + $0x250] sm:$0xff] %v649
          %v651 = vld [vmem:[%s499 + $0x258] sm:$0xff]
          %652 = vst [vmem:[%s500 + $0x258] sm:$0xff] %v651
          %v653 = vld [vmem:[%s499 + $0x260] sm:$0xff]
          %654 = vst [vmem:[%s500 + $0x260] sm:$0xff] %v653
          %v655 = vld [vmem:[%s499 + $0x268] sm:$0xff]
          %656 = vst [vmem:[%s500 + $0x268] sm:$0xff] %v655
          %v657 = vld [vmem:[%s499 + $0x270] sm:$0xff]
          %658 = vst [vmem:[%s500 + $0x270] sm:$0xff] %v657
          %v659 = vld [vmem:[%s499 + $0x278] sm:$0xff]
          %660 = vst [vmem:[%s500 + $0x278] sm:$0xff] %v659
          %v661 = vld [vmem:[%s499 + $0x280] sm:$0xff]
          %662 = vst [vmem:[%s500 + $0x280] sm:$0xff] %v661
          %v663 = vld [vmem:[%s499 + $0x288] sm:$0xff]
          %664 = vst [vmem:[%s500 + $0x288] sm:$0xff] %v663
          %v665 = vld [vmem:[%s499 + $0x290] sm:$0xff]
          %666 = vst [vmem:[%s500 + $0x290] sm:$0xff] %v665
          %v667 = vld [vmem:[%s499 + $0x298] sm:$0xff]
          %668 = vst [vmem:[%s500 + $0x298] sm:$0xff] %v667
          %v669 = vld [vmem:[%s499 + $0x2a0] sm:$0xff]
          %670 = vst [vmem:[%s500 + $0x2a0] sm:$0xff] %v669
          %v671 = vld [vmem:[%s499 + $0x2a8] sm:$0xff]
          %672 = vst [vmem:[%s500 + $0x2a8] sm:$0xff] %v671
          %v673 = vld [vmem:[%s499 + $0x2b0] sm:$0xff]
          %674 = vst [vmem:[%s500 + $0x2b0] sm:$0xff] %v673
          %v675 = vld [vmem:[%s499 + $0x2b8] sm:$0xff]
          %676 = vst [vmem:[%s500 + $0x2b8] sm:$0xff] %v675
          %v677 = vld [vmem:[%s499 + $0x2c0] sm:$0xff]
          %678 = vst [vmem:[%s500 + $0x2c0] sm:$0xff] %v677
          %v679 = vld [vmem:[%s499 + $0x2c8] sm:$0xff]
          %680 = vst [vmem:[%s500 + $0x2c8] sm:$0xff] %v679
          %v681 = vld [vmem:[%s499 + $0x2d0] sm:$0xff]
          %682 = vst [vmem:[%s500 + $0x2d0] sm:$0xff] %v681
          %v683 = vld [vmem:[%s499 + $0x2d8] sm:$0xff]
          %684 = vst [vmem:[%s500 + $0x2d8] sm:$0xff] %v683
          %v685 = vld [vmem:[%s499 + $0x2e0] sm:$0xff]
          %686 = vst [vmem:[%s500 + $0x2e0] sm:$0xff] %v685
          %v687 = vld [vmem:[%s499 + $0x2e8] sm:$0xff]
          %688 = vst [vmem:[%s500 + $0x2e8] sm:$0xff] %v687
          %v689 = vld [vmem:[%s499 + $0x2f0] sm:$0xff]
          %690 = vst [vmem:[%s500 + $0x2f0] sm:$0xff] %v689
          %v691 = vld [vmem:[%s499 + $0x2f8] sm:$0xff]
          %692 = vst [vmem:[%s500 + $0x2f8] sm:$0xff] %v691
          %v693 = vld [vmem:[%s499 + $0x300] sm:$0xff]
          %694 = vst [vmem:[%s500 + $0x300] sm:$0xff] %v693
          %v695 = vld [vmem:[%s499 + $0x308] sm:$0xff]
          %696 = vst [vmem:[%s500 + $0x308] sm:$0xff] %v695
          %v697 = vld [vmem:[%s499 + $0x310] sm:$0xff]
          %698 = vst [vmem:[%s500 + $0x310] sm:$0xff] %v697
          %v699 = vld [vmem:[%s499 + $0x318] sm:$0xff]
          %700 = vst [vmem:[%s500 + $0x318] sm:$0xff] %v699
          %v701 = vld [vmem:[%s499 + $0x320] sm:$0xff]
          %702 = vst [vmem:[%s500 + $0x320] sm:$0xff] %v701
          %v703 = vld [vmem:[%s499 + $0x328] sm:$0xff]
          %704 = vst [vmem:[%s500 + $0x328] sm:$0xff] %v703
          %v705 = vld [vmem:[%s499 + $0x330] sm:$0xff]
          %706 = vst [vmem:[%s500 + $0x330] sm:$0xff] %v705
          %v707 = vld [vmem:[%s499 + $0x338] sm:$0xff]
          %708 = vst [vmem:[%s500 + $0x338] sm:$0xff] %v707
          %v709 = vld [vmem:[%s499 + $0x340] sm:$0xff]
          %710 = vst [vmem:[%s500 + $0x340] sm:$0xff] %v709
          %v711 = vld [vmem:[%s499 + $0x348] sm:$0xff]
          %712 = vst [vmem:[%s500 + $0x348] sm:$0xff] %v711
          %v713 = vld [vmem:[%s499 + $0x350] sm:$0xff]
          %714 = vst [vmem:[%s500 + $0x350] sm:$0xff] %v713
          %v715 = vld [vmem:[%s499 + $0x358] sm:$0xff]
          %716 = vst [vmem:[%s500 + $0x358] sm:$0xff] %v715
          %v717 = vld [vmem:[%s499 + $0x360] sm:$0xff]
          %718 = vst [vmem:[%s500 + $0x360] sm:$0xff] %v717
          %v719 = vld [vmem:[%s499 + $0x368] sm:$0xff]
          %720 = vst [vmem:[%s500 + $0x368] sm:$0xff] %v719
          %v721 = vld [vmem:[%s499 + $0x370] sm:$0xff]
          %722 = vst [vmem:[%s500 + $0x370] sm:$0xff] %v721
          %v723 = vld [vmem:[%s499 + $0x378] sm:$0xff]
          %724 = vst [vmem:[%s500 + $0x378] sm:$0xff] %v723
          %v725 = vld [vmem:[%s499 + $0x380] sm:$0xff]
          %726 = vst [vmem:[%s500 + $0x380] sm:$0xff] %v725
          %v727 = vld [vmem:[%s499 + $0x388] sm:$0xff]
          %728 = vst [vmem:[%s500 + $0x388] sm:$0xff] %v727
          %v729 = vld [vmem:[%s499 + $0x390] sm:$0xff]
          %730 = vst [vmem:[%s500 + $0x390] sm:$0xff] %v729
          %v731 = vld [vmem:[%s499 + $0x398] sm:$0xff]
          %732 = vst [vmem:[%s500 + $0x398] sm:$0xff] %v731
          %v733 = vld [vmem:[%s499 + $0x3a0] sm:$0xff]
          %734 = vst [vmem:[%s500 + $0x3a0] sm:$0xff] %v733
          %v735 = vld [vmem:[%s499 + $0x3a8] sm:$0xff]
          %736 = vst [vmem:[%s500 + $0x3a8] sm:$0xff] %v735
          %v737 = vld [vmem:[%s499 + $0x3b0] sm:$0xff]
          %738 = vst [vmem:[%s500 + $0x3b0] sm:$0xff] %v737
          %v739 = vld [vmem:[%s499 + $0x3b8] sm:$0xff]
          %740 = vst [vmem:[%s500 + $0x3b8] sm:$0xff] %v739
          %v741 = vld [vmem:[%s499 + $0x3c0] sm:$0xff]
          %742 = vst [vmem:[%s500 + $0x3c0] sm:$0xff] %v741
          %v743 = vld [vmem:[%s499 + $0x3c8] sm:$0xff]
          %744 = vst [vmem:[%s500 + $0x3c8] sm:$0xff] %v743
          %v745 = vld [vmem:[%s499 + $0x3d0] sm:$0xff]
          %746 = vst [vmem:[%s500 + $0x3d0] sm:$0xff] %v745
          %v747 = vld [vmem:[%s499 + $0x3d8] sm:$0xff]
          %748 = vst [vmem:[%s500 + $0x3d8] sm:$0xff] %v747
          %v749 = vld [vmem:[%s499 + $0x3e0] sm:$0xff]
          %750 = vst [vmem:[%s500 + $0x3e0] sm:$0xff] %v749
          %v751 = vld [vmem:[%s499 + $0x3e8] sm:$0xff]
          %752 = vst [vmem:[%s500 + $0x3e8] sm:$0xff] %v751
          %v753 = vld [vmem:[%s499 + $0x3f0] sm:$0xff]
          %754 = vst [vmem:[%s500 + $0x3f0] sm:$0xff] %v753
          %v755 = vld [vmem:[%s499 + $0x3f8] sm:$0xff]
          %756 = vst [vmem:[%s500 + $0x3f8] sm:$0xff] %v755
          %v757 = vld [vmem:[%s499 + $0x400] sm:$0xff]
          %758 = vst [vmem:[%s500 + $0x400] sm:$0xff] %v757
          %v759 = vld [vmem:[%s499 + $0x408] sm:$0xff]
          %760 = vst [vmem:[%s500 + $0x408] sm:$0xff] %v759
          %v761 = vld [vmem:[%s499 + $0x410] sm:$0xff]
          %762 = vst [vmem:[%s500 + $0x410] sm:$0xff] %v761
          %v763 = vld [vmem:[%s499 + $0x418] sm:$0xff]
          %764 = vst [vmem:[%s500 + $0x418] sm:$0xff] %v763
          %v765 = vld [vmem:[%s499 + $0x420] sm:$0xff]
          %766 = vst [vmem:[%s500 + $0x420] sm:$0xff] %v765
          %v767 = vld [vmem:[%s499 + $0x428] sm:$0xff]
          %768 = vst [vmem:[%s500 + $0x428] sm:$0xff] %v767
          %v769 = vld [vmem:[%s499 + $0x430] sm:$0xff]
          %770 = vst [vmem:[%s500 + $0x430] sm:$0xff] %v769
          %v771 = vld [vmem:[%s499 + $0x438] sm:$0xff]
          %772 = vst [vmem:[%s500 + $0x438] sm:$0xff] %v771
          %v773 = vld [vmem:[%s499 + $0x440] sm:$0xff]
          %774 = vst [vmem:[%s500 + $0x440] sm:$0xff] %v773
          %v775 = vld [vmem:[%s499 + $0x448] sm:$0xff]
          %776 = vst [vmem:[%s500 + $0x448] sm:$0xff] %v775
          %v777 = vld [vmem:[%s499 + $0x450] sm:$0xff]
          %778 = vst [vmem:[%s500 + $0x450] sm:$0xff] %v777
          %v779 = vld [vmem:[%s499 + $0x458] sm:$0xff]
          %780 = vst [vmem:[%s500 + $0x458] sm:$0xff] %v779
          %v781 = vld [vmem:[%s499 + $0x460] sm:$0xff]
          %782 = vst [vmem:[%s500 + $0x460] sm:$0xff] %v781
          %v783 = vld [vmem:[%s499 + $0x468] sm:$0xff]
          %784 = vst [vmem:[%s500 + $0x468] sm:$0xff] %v783
          %v785 = vld [vmem:[%s499 + $0x470] sm:$0xff]
          %786 = vst [vmem:[%s500 + $0x470] sm:$0xff] %v785
          %v787 = vld [vmem:[%s499 + $0x478] sm:$0xff]
          %788 = vst [vmem:[%s500 + $0x478] sm:$0xff] %v787
          %v789 = vld [vmem:[%s499 + $0x480] sm:$0xff]
          %790 = vst [vmem:[%s500 + $0x480] sm:$0xff] %v789
          %v791 = vld [vmem:[%s499 + $0x488] sm:$0xff]
          %792 = vst [vmem:[%s500 + $0x488] sm:$0xff] %v791
          %v793 = vld [vmem:[%s499 + $0x490] sm:$0xff]
          %794 = vst [vmem:[%s500 + $0x490] sm:$0xff] %v793
          %v795 = vld [vmem:[%s499 + $0x498] sm:$0xff]
          %796 = vst [vmem:[%s500 + $0x498] sm:$0xff] %v795
          %v797 = vld [vmem:[%s499 + $0x4a0] sm:$0xff]
          %798 = vst [vmem:[%s500 + $0x4a0] sm:$0xff] %v797
          %v799 = vld [vmem:[%s499 + $0x4a8] sm:$0xff]
          %800 = vst [vmem:[%s500 + $0x4a8] sm:$0xff] %v799
          %v801 = vld [vmem:[%s499 + $0x4b0] sm:$0xff]
          %802 = vst [vmem:[%s500 + $0x4b0] sm:$0xff] %v801
          %v803 = vld [vmem:[%s499 + $0x4b8] sm:$0xff]
          %804 = vst [vmem:[%s500 + $0x4b8] sm:$0xff] %v803
          %v805 = vld [vmem:[%s499 + $0x4c0] sm:$0xff]
          %806 = vst [vmem:[%s500 + $0x4c0] sm:$0xff] %v805
          %v807 = vld [vmem:[%s499 + $0x4c8] sm:$0xff]
          %808 = vst [vmem:[%s500 + $0x4c8] sm:$0xff] %v807
          %v809 = vld [vmem:[%s499 + $0x4d0] sm:$0xff]
          %810 = vst [vmem:[%s500 + $0x4d0] sm:$0xff] %v809
          %v811 = vld [vmem:[%s499 + $0x4d8] sm:$0xff]
          %812 = vst [vmem:[%s500 + $0x4d8] sm:$0xff] %v811
          %v813 = vld [vmem:[%s499 + $0x4e0] sm:$0xff]
          %814 = vst [vmem:[%s500 + $0x4e0] sm:$0xff] %v813
          %v815 = vld [vmem:[%s499 + $0x4e8] sm:$0xff]
          %816 = vst [vmem:[%s500 + $0x4e8] sm:$0xff] %v815
          %v817 = vld [vmem:[%s499 + $0x4f0] sm:$0xff]
          %818 = vst [vmem:[%s500 + $0x4f0] sm:$0xff] %v817
          %v819 = vld [vmem:[%s499 + $0x4f8] sm:$0xff]
          %820 = vst [vmem:[%s500 + $0x4f8] sm:$0xff] %v819
          %v821 = vld [vmem:[%s499 + $0x500] sm:$0xff]
          %822 = vst [vmem:[%s500 + $0x500] sm:$0xff] %v821
          %v823 = vld [vmem:[%s499 + $0x508] sm:$0xff]
          %824 = vst [vmem:[%s500 + $0x508] sm:$0xff] %v823
          %v825 = vld [vmem:[%s499 + $0x510] sm:$0xff]
          %826 = vst [vmem:[%s500 + $0x510] sm:$0xff] %v825
          %v827 = vld [vmem:[%s499 + $0x518] sm:$0xff]
          %828 = vst [vmem:[%s500 + $0x518] sm:$0xff] %v827
          %v829 = vld [vmem:[%s499 + $0x520] sm:$0xff]
          %830 = vst [vmem:[%s500 + $0x520] sm:$0xff] %v829
          %v831 = vld [vmem:[%s499 + $0x528] sm:$0xff]
          %832 = vst [vmem:[%s500 + $0x528] sm:$0xff] %v831
          %v833 = vld [vmem:[%s499 + $0x530] sm:$0xff]
          %834 = vst [vmem:[%s500 + $0x530] sm:$0xff] %v833
          %v835 = vld [vmem:[%s499 + $0x538] sm:$0xff]
          %836 = vst [vmem:[%s500 + $0x538] sm:$0xff] %v835
          %v837 = vld [vmem:[%s499 + $0x540] sm:$0xff]
          %838 = vst [vmem:[%s500 + $0x540] sm:$0xff] %v837
          %v839 = vld [vmem:[%s499 + $0x548] sm:$0xff]
          %840 = vst [vmem:[%s500 + $0x548] sm:$0xff] %v839
          %v841 = vld [vmem:[%s499 + $0x550] sm:$0xff]
          %842 = vst [vmem:[%s500 + $0x550] sm:$0xff] %v841
          %v843 = vld [vmem:[%s499 + $0x558] sm:$0xff]
          %844 = vst [vmem:[%s500 + $0x558] sm:$0xff] %v843
          %v845 = vld [vmem:[%s499 + $0x560] sm:$0xff]
          %846 = vst [vmem:[%s500 + $0x560] sm:$0xff] %v845
          %v847 = vld [vmem:[%s499 + $0x568] sm:$0xff]
          %848 = vst [vmem:[%s500 + $0x568] sm:$0xff] %v847
          %v849 = vld [vmem:[%s499 + $0x570] sm:$0xff]
          %850 = vst [vmem:[%s500 + $0x570] sm:$0xff] %v849
          %v851 = vld [vmem:[%s499 + $0x578] sm:$0xff]
          %852 = vst [vmem:[%s500 + $0x578] sm:$0xff] %v851
          %v853 = vld [vmem:[%s499 + $0x580] sm:$0xff]
          %854 = vst [vmem:[%s500 + $0x580] sm:$0xff] %v853
          %v855 = vld [vmem:[%s499 + $0x588] sm:$0xff]
          %856 = vst [vmem:[%s500 + $0x588] sm:$0xff] %v855
          %v857 = vld [vmem:[%s499 + $0x590] sm:$0xff]
          %858 = vst [vmem:[%s500 + $0x590] sm:$0xff] %v857
          %v859 = vld [vmem:[%s499 + $0x598] sm:$0xff]
          %860 = vst [vmem:[%s500 + $0x598] sm:$0xff] %v859
          %v861 = vld [vmem:[%s499 + $0x5a0] sm:$0xff]
          %862 = vst [vmem:[%s500 + $0x5a0] sm:$0xff] %v861
          %v863 = vld [vmem:[%s499 + $0x5a8] sm:$0xff]
          %864 = vst [vmem:[%s500 + $0x5a8] sm:$0xff] %v863
          %v865 = vld [vmem:[%s499 + $0x5b0] sm:$0xff]
          %866 = vst [vmem:[%s500 + $0x5b0] sm:$0xff] %v865
          %v867 = vld [vmem:[%s499 + $0x5b8] sm:$0xff]
          %868 = vst [vmem:[%s500 + $0x5b8] sm:$0xff] %v867
          %v869 = vld [vmem:[%s499 + $0x5c0] sm:$0xff]
          %870 = vst [vmem:[%s500 + $0x5c0] sm:$0xff] %v869
          %v871 = vld [vmem:[%s499 + $0x5c8] sm:$0xff]
          %872 = vst [vmem:[%s500 + $0x5c8] sm:$0xff] %v871
          %v873 = vld [vmem:[%s499 + $0x5d0] sm:$0xff]
          %874 = vst [vmem:[%s500 + $0x5d0] sm:$0xff] %v873
          %v875 = vld [vmem:[%s499 + $0x5d8] sm:$0xff]
          %876 = vst [vmem:[%s500 + $0x5d8] sm:$0xff] %v875
          %v877 = vld [vmem:[%s499 + $0x5e0] sm:$0xff]
          %878 = vst [vmem:[%s500 + $0x5e0] sm:$0xff] %v877
          %v879 = vld [vmem:[%s499 + $0x5e8] sm:$0xff]
          %880 = vst [vmem:[%s500 + $0x5e8] sm:$0xff] %v879
          %v881 = vld [vmem:[%s499 + $0x5f0] sm:$0xff]
          %882 = vst [vmem:[%s500 + $0x5f0] sm:$0xff] %v881
          %v883 = vld [vmem:[%s499 + $0x5f8] sm:$0xff]
          %884 = vst [vmem:[%s500 + $0x5f8] sm:$0xff] %v883
          %v885 = vld [vmem:[%s499 + $0x600] sm:$0xff]
          %886 = vst [vmem:[%s500 + $0x600] sm:$0xff] %v885
          %v887 = vld [vmem:[%s499 + $0x608] sm:$0xff]
          %888 = vst [vmem:[%s500 + $0x608] sm:$0xff] %v887
          %v889 = vld [vmem:[%s499 + $0x610] sm:$0xff]
          %890 = vst [vmem:[%s500 + $0x610] sm:$0xff] %v889
          %v891 = vld [vmem:[%s499 + $0x618] sm:$0xff]
          %892 = vst [vmem:[%s500 + $0x618] sm:$0xff] %v891
        $region127: #{_lambda_.1} parent=121 // loop_footer
          %s498 = sadd.s32 1, %s494
        $region128: #{_lambda_.1} parent=121 // loop_footer_branch
          %493 = sbr.rel target = $region124
        $region129: #{_lambda_.1} parent=121 // loop_exit
          _
      $region122: #{_lambda_.1} parent=106 // pred_fallthru
        _
      %p893 = pneg %p489
      // Predicated region
      $region130: #{_lambda_.1} parent=106 // pred_check
        _
      $region131: #{_lambda_.1} parent=106 // pred_check_branch
        %895 = sbr.rel (%p489) target = $region133
      $region132: #{_lambda_.1} parent=106 // pred_region
        %s896 = sand.u32 1568, 7
      $region133: #{_lambda_.1} parent=106 // pred_fallthru
        _
    $region107: #{_lambda_.1} parent=1 // pred_fallthru
      _
    // Predicated region
    $region108: #{_lambda_.1} parent=1 // pred_check
      %p474 = pneg %p470
    $region109: #{_lambda_.1} parent=1 // pred_check_branch
      %476 = sbr.rel (%p474) target = $region111
    $region110: #{_lambda_.1} parent=1 // pred_region
      %s477 = sshllo.u32 0, 1568
      loop: start=0, step=1, limit=1
      $region112: #{_lambda_.1} parent=110 // loop_pre_header
        _
      $region113: #{_lambda_.1} parent=110 // loop_header
        %s479 = sphi 0, %s483
        %p480 = scmp.ge.s32.totalorder %s479, 1
        %s484 = sphi %s6, %s6
        %s485 = sphi [#allocation3], [#allocation3]
      $region114: #{_lambda_.1} parent=110 // loop_header_branch
        %482 = sbr.rel (%p480) target = $region118
      $region115: #{_lambda_.1} parent=110 // loop_body
        %v486 = vld [vmem:[%s484] sm:%s477]
        %487 = vst [vmem:[%s485] sm:%s477] %v486
      $region116: #{_lambda_.1} parent=110 // loop_footer
        %s483 = sadd.s32 1, %s479
      $region117: #{_lambda_.1} parent=110 // loop_footer_branch
        %478 = sbr.rel target = $region113
      $region118: #{_lambda_.1} parent=110 // loop_exit
        _
    $region111: #{_lambda_.1} parent=1 // pred_fallthru
      _
    // Predicated region
    $region134: #{_lambda_.1} parent=1 // pred_check
      _
    $region135: #{_lambda_.1} parent=1 // pred_check_branch
      %899 = sbr.rel (0) target = $region137
    $region136: #{_lambda_.1} parent=1 // pred_region
      %900 = vsyncadd %s468, 25088
    $region137: #{_lambda_.1} parent=1 // pred_fallthru
      _
    %v901 = vld [vmem:[%s0] sm:$0xf]
    %v902 = vld [vmem:[%s0 + $0x4] sm:$0xf]
    %v903 = vld [vmem:[%s0 + $0x8] sm:$0xf]
    %v904 = vld [vmem:[%s0 + $0xc] sm:$0xf]
    %v905 = vld [vmem:[%s0 + $0x10] sm:$0xf]
    %v906 = vld [vmem:[%s0 + $0x14] sm:$0xf]
    %v907 = vld [vmem:[%s0 + $0x18] sm:$0xf]
    %v908 = vld [vmem:[%s0 + $0x1c] sm:$0xf]
    %v909 = vld [vmem:[%s0 + $0x20] sm:$0xf]
    %v910 = vld [vmem:[%s0 + $0x24] sm:$0xf]
    %v911 = vld [vmem:[%s0 + $0x28] sm:$0xf]
    %v912 = vld [vmem:[%s0 + $0x2c] sm:$0xf]
    %v913 = vld [vmem:[%s0 + $0x30] sm:$0xf]
    %v914 = vld [vmem:[%s0 + $0x34] sm:$0xf]
    %v915 = vld [vmem:[%s0 + $0x38] sm:$0xf]
    %v916 = vld [vmem:[%s0 + $0x3c] sm:$0xf]
    %v917 = vld [vmem:[%s0 + $0x40] sm:$0xf]
    %v918 = vld [vmem:[%s0 + $0x44] sm:$0xf]
    %v919 = vld [vmem:[%s0 + $0x48] sm:$0xf]
    %v920 = vld [vmem:[%s0 + $0x4c] sm:$0xf]
    %v921 = vld [vmem:[%s0 + $0x50] sm:$0xf]
    %v922 = vld [vmem:[%s0 + $0x54] sm:$0xf]
    %v923 = vld [vmem:[%s0 + $0x58] sm:$0xf]
    %v924 = vld [vmem:[%s0 + $0x5c] sm:$0xf]
    %v925 = vld [vmem:[%s0 + $0x60] sm:$0xf]
    %v926 = vld [vmem:[%s0 + $0x64] sm:$0xf]
    %v927 = vld [vmem:[%s0 + $0x68] sm:$0xf]
    %v928 = vld [vmem:[%s0 + $0x6c] sm:$0xf]
    %v929 = vld [vmem:[%s0 + $0x70] sm:$0xf]
    %v930 = vld [vmem:[%s0 + $0x74] sm:$0x1]
    %v931 = vld [vmem:[%s1] sm:$0xf]
    %v932 = vld [vmem:[%s1 + $0x4] sm:$0xf]
    %v933 = vld [vmem:[%s1 + $0x8] sm:$0xf]
    %v934 = vld [vmem:[%s1 + $0xc] sm:$0xf]
    %v935 = vld [vmem:[%s1 + $0x10] sm:$0xf]
    %v936 = vld [vmem:[%s1 + $0x14] sm:$0xf]
    %v937 = vld [vmem:[%s1 + $0x18] sm:$0xf]
    %v938 = vld [vmem:[%s1 + $0x1c] sm:$0xf]
    %v939 = vld [vmem:[%s1 + $0x20] sm:$0xf]
    %v940 = vld [vmem:[%s1 + $0x24] sm:$0x3]
    %v941 = vld [vmem:[%s2] sm:$0xff]
    %v942 = vld [vmem:[%s2 + $0x8] sm:$0xff]
    %v943 = vld [vmem:[%s2 + $0x10] sm:$0xff]
    %v944 = vld [vmem:[%s2 + $0x18] sm:$0xff]
    %v945 = vld [vmem:[%s2 + $0x20] sm:$0xff]
    %v946 = vld [vmem:[%s2 + $0x28] sm:$0xff]
    %v947 = vld [vmem:[%s2 + $0x30] sm:$0xff]
    %v948 = vld [vmem:[%s2 + $0x38] sm:$0xff]
    %v949 = vld [vmem:[%s2 + $0x40] sm:$0xff]
    %v950 = vld [vmem:[%s2 + $0x48] sm:$0xff]
    %v951 = vld [vmem:[%s2 + $0x50] sm:$0xff]
    %v952 = vld [vmem:[%s2 + $0x58] sm:$0xff]
    %v953 = vld [vmem:[%s2 + $0x60] sm:$0xff]
    %v954 = vld [vmem:[%s2 + $0x68] sm:$0xff]
    %v955 = vld [vmem:[%s2 + $0x70] sm:$0xff]
    %v956 = vld [vmem:[%s2 + $0x78] sm:$0xff]
    %v957 = vld [vmem:[%s2 + $0x80] sm:$0xff]
    %v958 = vld [vmem:[%s2 + $0x88] sm:$0xff]
    %v959 = vld [vmem:[%s2 + $0x90] sm:$0xff]
    %v960 = vld [vmem:[%s2 + $0x98] sm:$0xff]
    %v961 = vld [vmem:[%s2 + $0xa0] sm:$0xff]
    %v962 = vld [vmem:[%s2 + $0xa8] sm:$0xff]
    %v963 = vld [vmem:[%s2 + $0xb0] sm:$0xff]
    %v964 = vld [vmem:[%s2 + $0xb8] sm:$0xff]
    %v965 = vld [vmem:[%s2 + $0xc0] sm:$0xff]
    %v966 = vld [vmem:[%s2 + $0xc8] sm:$0xff]
    %v967 = vld [vmem:[%s2 + $0xd0] sm:$0xff]
    %v968 = vld [vmem:[%s2 + $0xd8] sm:$0xff]
    %v969 = vld [vmem:[%s2 + $0xe0] sm:$0xff]
    %v970 = vld [vmem:[%s2 + $0xe8] sm:$0x3]
    %v1001 = vunpack.c.l.b16 %v901
    %v1002 = vunpack.c.l.b16 %v902
    %v1003 = vunpack.c.l.b16 %v903
    %v1004 = vunpack.c.l.b16 %v904
    %v1005 = vunpack.c.l.b16 %v905
    %v1006 = vunpack.c.l.b16 %v906
    %v1007 = vunpack.c.l.b16 %v907
    %v1008 = vunpack.c.l.b16 %v908
    %v1009 = vunpack.c.l.b16 %v909
    %v1010 = vunpack.c.l.b16 %v910
    %v1011 = vunpack.c.l.b16 %v911
    %v1012 = vunpack.c.l.b16 %v912
    %v1013 = vunpack.c.l.b16 %v913
    %v1014 = vunpack.c.l.b16 %v914
    %v1015 = vunpack.c.l.b16 %v915
    %v1016 = vunpack.c.l.b16 %v916
    %v1017 = vunpack.c.l.b16 %v917
    %v1018 = vunpack.c.l.b16 %v918
    %v1019 = vunpack.c.l.b16 %v919
    %v1020 = vunpack.c.l.b16 %v920
    %v1021 = vunpack.c.l.b16 %v921
    %v1022 = vunpack.c.l.b16 %v922
    %v1023 = vunpack.c.l.b16 %v923
    %v1024 = vunpack.c.l.b16 %v924
    %v1025 = vunpack.c.l.b16 %v925
    %v1026 = vunpack.c.l.b16 %v926
    %v1027 = vunpack.c.l.b16 %v927
    %v1028 = vunpack.c.l.b16 %v928
    %v1029 = vunpack.c.l.b16 %v929
    %v1030 = vunpack.c.l.b16 %v930
    %v1031 = vpack.c.b16 %v1002, %v1001
    %v1032 = vpack.c.b16 %v1004, %v1003
    %v1033 = vpack.c.b16 %v1006, %v1005
    %v1034 = vpack.c.b16 %v1008, %v1007
    %v1035 = vpack.c.b16 %v1010, %v1009
    %v1036 = vpack.c.b16 %v1012, %v1011
    %v1037 = vpack.c.b16 %v1014, %v1013
    %v1038 = vpack.c.b16 %v1016, %v1015
    %v1039 = vpack.c.b16 %v1018, %v1017
    %v1040 = vpack.c.b16 %v1020, %v1019
    %v1041 = vpack.c.b16 %v1022, %v1021
    %v1042 = vpack.c.b16 %v1024, %v1023
    %v1043 = vpack.c.b16 %v1026, %v1025
    %v1044 = vpack.c.b16 %v1028, %v1027
    %v1045 = vpack.c.b16 %v1030, %v1029
    %v1056 = vunpack.c.l.b16 %v931
    %v1057 = vunpack.c.l.b16 %v932
    %v1058 = vunpack.c.l.b16 %v933
    %v1059 = vunpack.c.l.b16 %v934
    %v1060 = vunpack.c.l.b16 %v935
    %v1061 = vunpack.c.l.b16 %v936
    %v1062 = vunpack.c.l.b16 %v937
    %v1063 = vunpack.c.l.b16 %v938
    %v1064 = vunpack.c.l.b16 %v939
    %v1065 = vunpack.c.l.b16 %v940
    %v1066 = vpack.c.b16 %v1057, %v1056
    %v1067 = vpack.c.b16 %v1059, %v1058
    %v1068 = vpack.c.b16 %v1061, %v1060
    %v1069 = vpack.c.b16 %v1063, %v1062
    %v1070 = vpack.c.b16 %v1065, %v1064
    %vm1075 = vcmask 613376
    %v1077 = vsel %vm1075, %v1031, 0
    %v1080 = vsel %vm1075, %v1032, 0
    %v1083 = vsel %vm1075, %v1033, 0
    %v1086 = vsel %vm1075, %v1034, 0
    %v1089 = vsel %vm1075, %v1035, 0
    %v1092 = vsel %vm1075, %v1036, 0
    %v1095 = vsel %vm1075, %v1037, 0
    %v1098 = vsel %vm1075, %v1038, 0
    %v1101 = vsel %vm1075, %v1039, 0
    %v1104 = vsel %vm1075, %v1040, 0
    %v1107 = vsel %vm1075, %v1041, 0
    %v1110 = vsel %vm1075, %v1042, 0
    %v1113 = vsel %vm1075, %v1043, 0
    %v1116 = vsel %vm1075, %v1044, 0
    %v1119 = vsel %vm1075, %v1045, 0
    %vm1121 = vcmask 1044480
    %vm1122 = vcmask 1045504
    %v1123 = vsel %vm1121, 4294967295, 65535
    %v1124 = vsel %vm1122, %v1123, 0
    %v1126 = vand.u32 %v1070, %v1124
    %1128 = vmatprep.subr.bf16.mxu0 0
    %1129 = vmatpush1.bf16.msra.mxu0 %v1066
    %1130 = vmatprep.subr.bf16.mxu0 0
    %1131 = vmatpush1.bf16.msra.mxu0 %v1067
    %1132 = vmatprep.subr.bf16.mxu0 0
    %1133 = vmatpush1.bf16.msra.mxu0 %v1068
    %1134 = vmatprep.subr.bf16.mxu0 0
    %1135 = vmatpush1.bf16.msra.mxu0 %v1069
    %1136 = vmatprep.subr.bf16.mxu0 0
    %1137 = vmatpush1.bf16.msra.mxu0 %v1126
    %1138 = vmatprep.subr.bf16.mxu0 0
    %1139 = vmatpush1.bf16.msra.mxu0 0
    %1140 = vmatprep.subr.bf16.mxu0 0
    %1141 = vmatpush1.bf16.msra.mxu0 0
    %1142 = vmatprep.subr.bf16.mxu0 0
    %1143 = vmatpush1.bf16.msra.mxu0 0
    %1144 = vmatprep.subr.bf16.mxu0 0
    %1145 = vmatpush1.bf16.msra.mxu0 0
    %1146 = vmatprep.subr.bf16.mxu0 0
    %1147 = vmatpush1.bf16.msra.mxu0 0
    %1148 = vmatprep.subr.bf16.mxu0 0
    %1149 = vmatpush1.bf16.msra.mxu0 0
    %1150 = vmatprep.subr.bf16.mxu0 0
    %1151 = vmatpush1.bf16.msra.mxu0 0
    %1152 = vmatprep.subr.bf16.mxu0 0
    %1153 = vmatpush1.bf16.msra.mxu0 0
    %1154 = vmatprep.subr.bf16.mxu0 0
    %1155 = vmatpush1.bf16.msra.mxu0 0
    %1156 = vmatprep.subr.bf16.mxu0 0
    %1157 = vmatpush1.bf16.msra.mxu0 0
    %1158 = vmatprep.subr.bf16.mxu0 0
    %1159 = vmatpush1.bf16.msra.mxu0 0
    %1160 = vmatprep.mubr.bf16.mxu0 0
    %1161 = vmatmul.mubr.bf16.gmra.mrb[0].mxu0 %v1077
    %v1162 = vpop.f32.mrb[0].mxu0
    %v1163 = vadd.f32 %v941, %v1162
    %v1164 = vpop.f32.mrb[0].mxu0
    %v1165 = vpop.f32.mrb[0].mxu0
    %v1166 = vadd.f32 %v942, %v1165
    %v1167 = vpop.f32.mrb[0].mxu0
    %1168 = vmatprep.mubr.bf16.mxu0 0
    %1169 = vmatmul.mubr.bf16.gmra.mrb[0].mxu0 %v1080
    %v1170 = vpop.f32.mrb[0].mxu0
    %v1171 = vadd.f32 %v943, %v1170
    %v1172 = vpop.f32.mrb[0].mxu0
    %v1173 = vpop.f32.mrb[0].mxu0
    %v1174 = vadd.f32 %v944, %v1173
    %v1175 = vpop.f32.mrb[0].mxu0
    %1176 = vmatprep.mubr.bf16.mxu0 0
    %1177 = vmatmul.mubr.bf16.gmra.mrb[0].mxu0 %v1083
    %v1178 = vpop.f32.mrb[0].mxu0
    %v1179 = vadd.f32 %v945, %v1178
    %v1180 = vpop.f32.mrb[0].mxu0
    %v1181 = vpop.f32.mrb[0].mxu0
    %v1182 = vadd.f32 %v946, %v1181
    %v1183 = vpop.f32.mrb[0].mxu0
    %1184 = vmatprep.mubr.bf16.mxu0 0
    %1185 = vmatmul.mubr.bf16.gmra.mrb[0].mxu0 %v1086
    %v1186 = vpop.f32.mrb[0].mxu0
    %v1187 = vadd.f32 %v947, %v1186
    %v1188 = vpop.f32.mrb[0].mxu0
    %v1189 = vpop.f32.mrb[0].mxu0
    %v1190 = vadd.f32 %v948, %v1189
    %v1191 = vpop.f32.mrb[0].mxu0
    %1192 = vmatprep.mubr.bf16.mxu0 0
    %1193 = vmatmul.mubr.bf16.gmra.mrb[0].mxu0 %v1089
    %v1194 = vpop.f32.mrb[0].mxu0
    %v1195 = vadd.f32 %v949, %v1194
    %v1196 = vpop.f32.mrb[0].mxu0
    %v1197 = vpop.f32.mrb[0].mxu0
    %v1198 = vadd.f32 %v950, %v1197
    %v1199 = vpop.f32.mrb[0].mxu0
    %1200 = vmatprep.mubr.bf16.mxu0 0
    %1201 = vmatmul.mubr.bf16.gmra.mrb[0].mxu0 %v1092
    %v1202 = vpop.f32.mrb[0].mxu0
    %v1203 = vadd.f32 %v951, %v1202
    %v1204 = vpop.f32.mrb[0].mxu0
    %v1205 = vpop.f32.mrb[0].mxu0
    %v1206 = vadd.f32 %v952, %v1205
    %v1207 = vpop.f32.mrb[0].mxu0
    %1208 = vmatprep.mubr.bf16.mxu0 0
    %1209 = vmatmul.mubr.bf16.gmra.mrb[0].mxu0 %v1095
    %v1210 = vpop.f32.mrb[0].mxu0
    %v1211 = vadd.f32 %v953, %v1210
    %v1212 = vpop.f32.mrb[0].mxu0
    %v1213 = vpop.f32.mrb[0].mxu0
    %v1214 = vadd.f32 %v954, %v1213
    %v1215 = vpop.f32.mrb[0].mxu0
    %1216 = vmatprep.mubr.bf16.mxu0 0
    %1217 = vmatmul.mubr.bf16.gmra.mrb[0].mxu0 %v1098
    %v1218 = vpop.f32.mrb[0].mxu0
    %v1219 = vadd.f32 %v955, %v1218
    %v1220 = vpop.f32.mrb[0].mxu0
    %v1221 = vpop.f32.mrb[0].mxu0
    %v1222 = vadd.f32 %v956, %v1221
    %v1223 = vpop.f32.mrb[0].mxu0
    %1224 = vmatprep.mubr.bf16.mxu0 0
    %1225 = vmatmul.mubr.bf16.gmra.mrb[0].mxu0 %v1101
    %v1226 = vpop.f32.mrb[0].mxu0
    %v1227 = vadd.f32 %v957, %v1226
    %v1228 = vpop.f32.mrb[0].mxu0
    %v1229 = vpop.f32.mrb[0].mxu0
    %v1230 = vadd.f32 %v958, %v1229
    %v1231 = vpop.f32.mrb[0].mxu0
    %1232 = vmatprep.mubr.bf16.mxu0 0
    %1233 = vmatmul.mubr.bf16.gmra.mrb[0].mxu0 %v1104
    %v1234 = vpop.f32.mrb[0].mxu0
    %v1235 = vadd.f32 %v959, %v1234
    %v1236 = vpop.f32.mrb[0].mxu0
    %v1237 = vpop.f32.mrb[0].mxu0
    %v1238 = vadd.f32 %v960, %v1237
    %v1239 = vpop.f32.mrb[0].mxu0
    %1240 = vmatprep.mubr.bf16.mxu0 0
    %1241 = vmatmul.mubr.bf16.gmra.mrb[0].mxu0 %v1107
    %v1242 = vpop.f32.mrb[0].mxu0
    %v1243 = vadd.f32 %v961, %v1242
    %v1244 = vpop.f32.mrb[0].mxu0
    %v1245 = vpop.f32.mrb[0].mxu0
    %v1246 = vadd.f32 %v962, %v1245
    %v1247 = vpop.f32.mrb[0].mxu0
    %1248 = vmatprep.mubr.bf16.mxu0 0
    %1249 = vmatmul.mubr.bf16.gmra.mrb[0].mxu0 %v1110
    %v1250 = vpop.f32.mrb[0].mxu0
    %v1251 = vadd.f32 %v963, %v1250
    %v1252 = vpop.f32.mrb[0].mxu0
    %v1253 = vpop.f32.mrb[0].mxu0
    %v1254 = vadd.f32 %v964, %v1253
    %v1255 = vpop.f32.mrb[0].mxu0
    %1256 = vmatprep.mubr.bf16.mxu0 0
    %1257 = vmatmul.mubr.bf16.gmra.mrb[0].mxu0 %v1113
    %v1258 = vpop.f32.mrb[0].mxu0
    %v1259 = vadd.f32 %v965, %v1258
    %v1260 = vpop.f32.mrb[0].mxu0
    %v1261 = vpop.f32.mrb[0].mxu0
    %v1262 = vadd.f32 %v966, %v1261
    %v1263 = vpop.f32.mrb[0].mxu0
    %1264 = vmatprep.mubr.bf16.mxu0 0
    %1265 = vmatmul.mubr.bf16.gmra.mrb[0].mxu0 %v1116
    %v1266 = vpop.f32.mrb[0].mxu0
    %v1267 = vadd.f32 %v967, %v1266
    %v1268 = vpop.f32.mrb[0].mxu0
    %v1269 = vpop.f32.mrb[0].mxu0
    %v1270 = vadd.f32 %v968, %v1269
    %v1271 = vpop.f32.mrb[0].mxu0
    %1272 = vmatprep.mubr.bf16.mxu0 0
    %1273 = vmatmul.mubr.bf16.gmra.mrb[0].mxu0 %v1119
    %v1274 = vpop.f32.mrb[0].mxu0
    %v1275 = vadd.f32 %v969, %v1274
    %v1276 = vpop.f32.mrb[0].mxu0
    %v1277 = vpop.f32.mrb[0].mxu0
    %v1278 = vadd.f32 %v970, %v1277
    %v1279 = vpop.f32.mrb[0].mxu0
    %1280 = vdwg.mxu0
    %v1281 = vld [vmem:[%s3] sm:$0x1]
    %v1282 = vld [vmem:[%s4] sm:$0x1]
    %vm1283 = vcmask 867328
    %v1285 = vsel %vm1283, 1.0, 0
    %vm1287 = vcmask 1041408
    %v1289 = vsel %vm1287, %v1278, 0
    %1291 = vmatprep.subr.mxu0 0.0
    %1292 = vmatpush1.msra.mxu0 %v1163
    %1293 = vmatprep.subr.mxu0 0.0
    %1294 = vmatpush1.msra.mxu0 %v1166
    %1295 = vmatprep.subr.mxu0 0.0
    %1296 = vmatpush1.msra.mxu0 %v1171
    %1297 = vmatprep.subr.mxu0 0.0
    %1298 = vmatpush1.msra.mxu0 %v1174
    %1299 = vmatprep.subr.mxu0 0.0
    %1300 = vmatpush1.msra.mxu0 %v1179
    %1301 = vmatprep.subr.mxu0 0.0
    %1302 = vmatpush1.msra.mxu0 %v1182
    %1303 = vmatprep.subr.mxu0 0.0
    %1304 = vmatpush1.msra.mxu0 %v1187
    %1305 = vmatprep.subr.mxu0 0.0
    %1306 = vmatpush1.msra.mxu0 %v1190
    %1307 = vmatprep.subr.mxu0 0.0
    %1308 = vmatpush1.msra.mxu0 %v1195
    %1309 = vmatprep.subr.mxu0 0.0
    %1310 = vmatpush1.msra.mxu0 %v1198
    %1311 = vmatprep.subr.mxu0 0.0
    %1312 = vmatpush1.msra.mxu0 %v1203
    %1313 = vmatprep.subr.mxu0 0.0
    %1314 = vmatpush1.msra.mxu0 %v1206
    %1315 = vmatprep.subr.mxu0 0.0
    %1316 = vmatpush1.msra.mxu0 %v1211
    %1317 = vmatprep.subr.mxu0 0.0
    %1318 = vmatpush1.msra.mxu0 %v1214
    %1319 = vmatprep.subr.mxu0 0.0
    %1320 = vmatpush1.msra.mxu0 %v1219
    %1321 = vmatprep.subr.mxu0 0.0
    %1322 = vmatpush1.msra.mxu0 %v1222
    %1323 = vmatprep.subr.mxu0 0.0
    %1324 = vmatpush1.msra.mxu0 %v1227
    %1325 = vmatprep.subr.mxu0 0.0
    %1326 = vmatpush1.msra.mxu0 %v1230
    %1327 = vmatprep.subr.mxu0 0.0
    %1328 = vmatpush1.msra.mxu0 %v1235
    %1329 = vmatprep.subr.mxu0 0.0
    %1330 = vmatpush1.msra.mxu0 %v1238
    %1331 = vmatprep.subr.mxu0 0.0
    %1332 = vmatpush1.msra.mxu0 %v1243
    %1333 = vmatprep.subr.mxu0 0.0
    %1334 = vmatpush1.msra.mxu0 %v1246
    %1335 = vmatprep.subr.mxu0 0.0
    %1336 = vmatpush1.msra.mxu0 %v1251
    %1337 = vmatprep.subr.mxu0 0.0
    %1338 = vmatpush1.msra.mxu0 %v1254
    %1339 = vmatprep.subr.mxu0 0.0
    %1340 = vmatpush1.msra.mxu0 %v1259
    %1341 = vmatprep.subr.mxu0 0.0
    %1342 = vmatpush1.msra.mxu0 %v1262
    %1343 = vmatprep.subr.mxu0 0.0
    %1344 = vmatpush1.msra.mxu0 %v1267
    %1345 = vmatprep.subr.mxu0 0.0
    %1346 = vmatpush1.msra.mxu0 %v1270
    %1347 = vmatprep.subr.mxu0 0.0
    %1348 = vmatpush1.msra.mxu0 %v1275
    %1349 = vmatprep.subr.mxu0 0.0
    %1350 = vmatpush1.msra.mxu0 %v1289
    %1351 = vmatprep.subr.mxu0 0.0
    %1352 = vmatpush1.msra.mxu0 0.0
    %1353 = vmatprep.subr.mxu0 0.0
    %1354 = vmatpush1.msra.mxu0 0.0
    %1355 = vmatprep.mubr.f32.mxu0 %v1285
    %1356 = vmatmul.mubr.f32.gmra.mrb[0].mxu0 1.0
    %v1357 = vpop.f32.mrb[0].mxu0
    %v1358 = vadd.f32 0.0, %v1357
    %v1359 = vpop.f32.mrb[0].mxu0
    %1360 = vdwg.mxu0
    %v1361 = vmul.f32 %v1358, 0.0042735045
    %v1362 = vmul.f32 %v1163, %v1163
    %v1363 = vmul.f32 %v1166, %v1166
    %v1364 = vmul.f32 %v1171, %v1171
    %v1365 = vmul.f32 %v1174, %v1174
    %v1366 = vmul.f32 %v1179, %v1179
    %v1367 = vmul.f32 %v1182, %v1182
    %v1368 = vmul.f32 %v1187, %v1187
    %v1369 = vmul.f32 %v1190, %v1190
    %v1370 = vmul.f32 %v1195, %v1195
    %v1371 = vmul.f32 %v1198, %v1198
    %v1372 = vmul.f32 %v1203, %v1203
    %v1373 = vmul.f32 %v1206, %v1206
    %v1374 = vmul.f32 %v1211, %v1211
    %v1375 = vmul.f32 %v1214, %v1214
    %v1376 = vmul.f32 %v1219, %v1219
    %v1377 = vmul.f32 %v1222, %v1222
    %v1378 = vmul.f32 %v1227, %v1227
    %v1379 = vmul.f32 %v1230, %v1230
    %v1380 = vmul.f32 %v1235, %v1235
    %v1381 = vmul.f32 %v1238, %v1238
    %v1382 = vmul.f32 %v1243, %v1243
    %v1383 = vmul.f32 %v1246, %v1246
    %v1384 = vmul.f32 %v1251, %v1251
    %v1385 = vmul.f32 %v1254, %v1254
    %v1386 = vmul.f32 %v1259, %v1259
    %v1387 = vmul.f32 %v1262, %v1262
    %v1388 = vmul.f32 %v1267, %v1267
    %v1389 = vmul.f32 %v1270, %v1270
    %v1390 = vmul.f32 %v1275, %v1275
    %v1391 = vmul.f32 %v1278, %v1278
    %v1393 = vsel %vm1287, %v1391, 0
    %1395 = vmatprep.subr.mxu0 0.0
    %1396 = vmatpush1.msra.mxu0 %v1362
    %1397 = vmatprep.subr.mxu0 0.0
    %1398 = vmatpush1.msra.mxu0 %v1363
    %1399 = vmatprep.subr.mxu0 0.0
    %1400 = vmatpush1.msra.mxu0 %v1364
    %1401 = vmatprep.subr.mxu0 0.0
    %1402 = vmatpush1.msra.mxu0 %v1365
    %1403 = vmatprep.subr.mxu0 0.0
    %1404 = vmatpush1.msra.mxu0 %v1366
    %1405 = vmatprep.subr.mxu0 0.0
    %1406 = vmatpush1.msra.mxu0 %v1367
    %1407 = vmatprep.subr.mxu0 0.0
    %1408 = vmatpush1.msra.mxu0 %v1368
    %1409 = vmatprep.subr.mxu0 0.0
    %1410 = vmatpush1.msra.mxu0 %v1369
    %1411 = vmatprep.subr.mxu0 0.0
    %1412 = vmatpush1.msra.mxu0 %v1370
    %1413 = vmatprep.subr.mxu0 0.0
    %1414 = vmatpush1.msra.mxu0 %v1371
    %1415 = vmatprep.subr.mxu0 0.0
    %1416 = vmatpush1.msra.mxu0 %v1372
    %1417 = vmatprep.subr.mxu0 0.0
    %1418 = vmatpush1.msra.mxu0 %v1373
    %1419 = vmatprep.subr.mxu0 0.0
    %1420 = vmatpush1.msra.mxu0 %v1374
    %1421 = vmatprep.subr.mxu0 0.0
    %1422 = vmatpush1.msra.mxu0 %v1375
    %1423 = vmatprep.subr.mxu0 0.0
    %1424 = vmatpush1.msra.mxu0 %v1376
    %1425 = vmatprep.subr.mxu0 0.0
    %1426 = vmatpush1.msra.mxu0 %v1377
    %1427 = vmatprep.subr.mxu0 0.0
    %1428 = vmatpush1.msra.mxu0 %v1378
    %1429 = vmatprep.subr.mxu0 0.0
    %1430 = vmatpush1.msra.mxu0 %v1379
    %1431 = vmatprep.subr.mxu0 0.0
    %1432 = vmatpush1.msra.mxu0 %v1380
    %1433 = vmatprep.subr.mxu0 0.0
    %1434 = vmatpush1.msra.mxu0 %v1381
    %1435 = vmatprep.subr.mxu0 0.0
    %1436 = vmatpush1.msra.mxu0 %v1382
    %1437 = vmatprep.subr.mxu0 0.0
    %1438 = vmatpush1.msra.mxu0 %v1383
    %1439 = vmatprep.subr.mxu0 0.0
    %1440 = vmatpush1.msra.mxu0 %v1384
    %1441 = vmatprep.subr.mxu0 0.0
    %1442 = vmatpush1.msra.mxu0 %v1385
    %1443 = vmatprep.subr.mxu0 0.0
    %1444 = vmatpush1.msra.mxu0 %v1386
    %1445 = vmatprep.subr.mxu0 0.0
    %1446 = vmatpush1.msra.mxu0 %v1387
    %1447 = vmatprep.subr.mxu0 0.0
    %1448 = vmatpush1.msra.mxu0 %v1388
    %1449 = vmatprep.subr.mxu0 0.0
    %1450 = vmatpush1.msra.mxu0 %v1389
    %1451 = vmatprep.subr.mxu0 0.0
    %1452 = vmatpush1.msra.mxu0 %v1390
    %1453 = vmatprep.subr.mxu0 0.0
    %1454 = vmatpush1.msra.mxu0 %v1393
    %1455 = vmatprep.subr.mxu0 0.0
    %1456 = vmatpush1.msra.mxu0 0.0
    %1457 = vmatprep.subr.mxu0 0.0
    %1458 = vmatpush1.msra.mxu0 0.0
    %1459 = vmatprep.mubr.f32.mxu0 %v1285
    %1460 = vmatmul.mubr.f32.gmra.mrb[0].mxu0 1.0
    %v1461 = vpop.f32.mrb[0].mxu0
    %v1462 = vadd.f32 0.0, %v1461
    %v1463 = vpop.f32.mrb[0].mxu0
    %1464 = vdwg.mxu0
    %v1465 = vmul.f32 %v1462, 0.0042735045
    %v1466 = vmul.f32 %v1361, %v1361
    %v1467 = vsub.f32 %v1465, %v1466
    %v1468 = vadd.f32 %v1467, 1e-05
    %v1469 = vrsqrt.pop %v1468
    %v1470 = vmul.f32 %v1469, %v1281
    %v1471 = vlaneseq
    %v1472 = vshrl.u32 %v1471, 7
    %v1473 = vsub.s32 0, %v1472
    %v1474 = vrot.slane %v1361, %v1473
    %v1475 = vsub.f32 %v1163, %v1474
    %v1476 = vsub.f32 %v1166, %v1474
    %v1477 = vsub.f32 %v1171, %v1474
    %v1478 = vsub.f32 %v1174, %v1474
    %v1479 = vsub.f32 %v1179, %v1474
    %v1480 = vsub.f32 %v1182, %v1474
    %v1481 = vsub.f32 %v1187, %v1474
    %v1482 = vsub.f32 %v1190, %v1474
    %v1483 = vsub.f32 %v1195, %v1474
    %v1484 = vsub.f32 %v1198, %v1474
    %v1485 = vsub.f32 %v1203, %v1474
    %v1486 = vsub.f32 %v1206, %v1474
    %v1487 = vsub.f32 %v1211, %v1474
    %v1488 = vsub.f32 %v1214, %v1474
    %v1489 = vsub.f32 %v1219, %v1474
    %v1490 = vsub.f32 %v1222, %v1474
    %v1491 = vsub.f32 %v1227, %v1474
    %v1492 = vsub.f32 %v1230, %v1474
    %v1493 = vsub.f32 %v1235, %v1474
    %v1494 = vsub.f32 %v1238, %v1474
    %v1495 = vsub.f32 %v1243, %v1474
    %v1496 = vsub.f32 %v1246, %v1474
    %v1497 = vsub.f32 %v1251, %v1474
    %v1498 = vsub.f32 %v1254, %v1474
    %v1499 = vsub.f32 %v1259, %v1474
    %v1500 = vsub.f32 %v1262, %v1474
    %v1501 = vsub.f32 %v1267, %v1474
    %v1502 = vsub.f32 %v1270, %v1474
    %v1503 = vsub.f32 %v1275, %v1474
    %v1504 = vsub.f32 %v1278, %v1474
    %v1505 = vlaneseq
    %v1506 = vshrl.u32 %v1505, 7
    %v1507 = vsub.s32 0, %v1506
    %v1508 = vrot.slane %v1470, %v1507
    %v1509 = vmul.f32 %v1475, %v1508
    %v1510 = vmul.f32 %v1476, %v1508
    %v1511 = vmul.f32 %v1477, %v1508
    %v1512 = vmul.f32 %v1478, %v1508
    %v1513 = vmul.f32 %v1479, %v1508
    %v1514 = vmul.f32 %v1480, %v1508
    %v1515 = vmul.f32 %v1481, %v1508
    %v1516 = vmul.f32 %v1482, %v1508
    %v1517 = vmul.f32 %v1483, %v1508
    %v1518 = vmul.f32 %v1484, %v1508
    %v1519 = vmul.f32 %v1485, %v1508
    %v1520 = vmul.f32 %v1486, %v1508
    %v1521 = vmul.f32 %v1487, %v1508
    %v1522 = vmul.f32 %v1488, %v1508
    %v1523 = vmul.f32 %v1489, %v1508
    %v1524 = vmul.f32 %v1490, %v1508
    %v1525 = vmul.f32 %v1491, %v1508
    %v1526 = vmul.f32 %v1492, %v1508
    %v1527 = vmul.f32 %v1493, %v1508
    %v1528 = vmul.f32 %v1494, %v1508
    %v1529 = vmul.f32 %v1495, %v1508
    %v1530 = vmul.f32 %v1496, %v1508
    %v1531 = vmul.f32 %v1497, %v1508
    %v1532 = vmul.f32 %v1498, %v1508
    %v1533 = vmul.f32 %v1499, %v1508
    %v1534 = vmul.f32 %v1500, %v1508
    %v1535 = vmul.f32 %v1501, %v1508
    %v1536 = vmul.f32 %v1502, %v1508
    %v1537 = vmul.f32 %v1503, %v1508
    %v1538 = vmul.f32 %v1504, %v1508
    %v1540 = vlaneseq
    %v1541 = vshrl.u32 %v1540, 7
    %v1542 = vsub.s32 0, %v1541
    %v1543 = vrot.slane %v1282, %v1542
    %v1545 = vadd.f32 %v1509, %v1543
    %v1546 = vadd.f32 %v1510, %v1543
    %v1547 = vadd.f32 %v1511, %v1543
    %v1548 = vadd.f32 %v1512, %v1543
    %v1549 = vadd.f32 %v1513, %v1543
    %v1550 = vadd.f32 %v1514, %v1543
    %v1551 = vadd.f32 %v1515, %v1543
    %v1552 = vadd.f32 %v1516, %v1543
    %v1553 = vadd.f32 %v1517, %v1543
    %v1554 = vadd.f32 %v1518, %v1543
    %v1555 = vadd.f32 %v1519, %v1543
    %v1556 = vadd.f32 %v1520, %v1543
    %v1557 = vadd.f32 %v1521, %v1543
    %v1558 = vadd.f32 %v1522, %v1543
    %v1559 = vadd.f32 %v1523, %v1543
    %v1560 = vadd.f32 %v1524, %v1543
    %v1561 = vadd.f32 %v1525, %v1543
    %v1562 = vadd.f32 %v1526, %v1543
    %v1563 = vadd.f32 %v1527, %v1543
    %v1564 = vadd.f32 %v1528, %v1543
    %v1565 = vadd.f32 %v1529, %v1543
    %v1566 = vadd.f32 %v1530, %v1543
    %v1567 = vadd.f32 %v1531, %v1543
    %v1568 = vadd.f32 %v1532, %v1543
    %v1569 = vadd.f32 %v1533, %v1543
    %v1570 = vadd.f32 %v1534, %v1543
    %v1571 = vadd.f32 %v1535, %v1543
    %v1572 = vadd.f32 %v1536, %v1543
    %v1573 = vadd.f32 %v1537, %v1543
    %v1574 = vadd.f32 %v1538, %v1543
    %v1575 = vmax.f32 %v1545, 0.0
    %v1576 = vmax.f32 %v1546, 0.0
    %v1577 = vmax.f32 %v1547, 0.0
    %v1578 = vmax.f32 %v1548, 0.0
    %v1579 = vmax.f32 %v1549, 0.0
    %v1580 = vmax.f32 %v1550, 0.0
    %v1581 = vmax.f32 %v1551, 0.0
    %v1582 = vmax.f32 %v1552, 0.0
    %v1583 = vmax.f32 %v1553, 0.0
    %v1584 = vmax.f32 %v1554, 0.0
    %v1585 = vmax.f32 %v1555, 0.0
    %v1586 = vmax.f32 %v1556, 0.0
    %v1587 = vmax.f32 %v1557, 0.0
    %v1588 = vmax.f32 %v1558, 0.0
    %v1589 = vmax.f32 %v1559, 0.0
    %v1590 = vmax.f32 %v1560, 0.0
    %v1591 = vmax.f32 %v1561, 0.0
    %v1592 = vmax.f32 %v1562, 0.0
    %v1593 = vmax.f32 %v1563, 0.0
    %v1594 = vmax.f32 %v1564, 0.0
    %v1595 = vmax.f32 %v1565, 0.0
    %v1596 = vmax.f32 %v1566, 0.0
    %v1597 = vmax.f32 %v1567, 0.0
    %v1598 = vmax.f32 %v1568, 0.0
    %v1599 = vmax.f32 %v1569, 0.0
    %v1600 = vmax.f32 %v1570, 0.0
    %v1601 = vmax.f32 %v1571, 0.0
    %v1602 = vmax.f32 %v1572, 0.0
    %v1603 = vmax.f32 %v1573, 0.0
    %v1604 = vmax.f32 %v1574, 0.0
    %v1605 = vpack.c.bf16 %v1576, %v1575
    %v1606 = vpack.c.bf16 %v1578, %v1577
    %v1607 = vpack.c.bf16 %v1580, %v1579
    %v1608 = vpack.c.bf16 %v1582, %v1581
    %v1609 = vpack.c.bf16 %v1584, %v1583
    %v1610 = vpack.c.bf16 %v1586, %v1585
    %v1611 = vpack.c.bf16 %v1588, %v1587
    %v1612 = vpack.c.bf16 %v1590, %v1589
    %v1613 = vpack.c.bf16 %v1592, %v1591
    %v1614 = vpack.c.bf16 %v1594, %v1593
    %v1615 = vpack.c.bf16 %v1596, %v1595
    %v1616 = vpack.c.bf16 %v1598, %v1597
    %v1617 = vpack.c.bf16 %v1600, %v1599
    %v1618 = vpack.c.bf16 %v1602, %v1601
    %v1619 = vpack.c.bf16 %v1604, %v1603
    %s1620 = smul.u32 4, 184
    %s1621 = smul.u32 %s1620, 2
    %s1622 = sshll.u32 %s1621, 4
    %1623 = dma.done [#allocation4], %s1622
    %s1624 = smul.u32 4, 392
    %s1625 = smul.u32 %s1624, 1
    %s1626 = sshll.u32 %s1625, 4
    %1627 = dma.done %s468, %s1626
    %v1628 = vld [vmem:[#allocation2] sm:$0xff]
    %v1629 = vld [vmem:[#allocation2 + $0x8] sm:$0xff]
    %v1630 = vld [vmem:[#allocation2 + $0x10] sm:$0xff]
    %v1631 = vld [vmem:[#allocation2 + $0x18] sm:$0xff]
    %v1632 = vld [vmem:[#allocation2 + $0x20] sm:$0xff]
    %v1633 = vld [vmem:[#allocation2 + $0x28] sm:$0xff]
    %v1634 = vld [vmem:[#allocation2 + $0x30] sm:$0xff]
    %v1635 = vld [vmem:[#allocation2 + $0x38] sm:$0xff]
    %v1636 = vld [vmem:[#allocation2 + $0x40] sm:$0xff]
    %v1637 = vld [vmem:[#allocation2 + $0x48] sm:$0xff]
    %v1638 = vld [vmem:[#allocation2 + $0x50] sm:$0xff]
    %v1639 = vld [vmem:[#allocation2 + $0x58] sm:$0xff]
    %v1640 = vld [vmem:[#allocation2 + $0x60] sm:$0xff]
    %v1641 = vld [vmem:[#allocation2 + $0x68] sm:$0xff]
    %v1642 = vld [vmem:[#allocation2 + $0x70] sm:$0xff]
    %v1643 = vld [vmem:[#allocation2 + $0x78] sm:$0xff]
    %v1644 = vld [vmem:[#allocation2 + $0x80] sm:$0xff]
    %v1645 = vld [vmem:[#allocation2 + $0x88] sm:$0xff]
    %v1646 = vld [vmem:[#allocation2 + $0x90] sm:$0xff]
    %v1647 = vld [vmem:[#allocation2 + $0x98] sm:$0xff]
    %v1648 = vld [vmem:[#allocation2 + $0xa0] sm:$0xff]
    %v1649 = vld [vmem:[#allocation2 + $0xa8] sm:$0xff]
    %v1650 = vld [vmem:[#allocation2 + $0xb0] sm:$0xff]
    %v1651 = vld [vmem:[#allocation2 + $0xb8] sm:$0xff]
    %v1652 = vld [vmem:[#allocation2 + $0xc0] sm:$0xff]
    %v1653 = vld [vmem:[#allocation2 + $0xc8] sm:$0xff]
    %v1654 = vld [vmem:[#allocation2 + $0xd0] sm:$0xff]
    %v1655 = vld [vmem:[#allocation2 + $0xd8] sm:$0xff]
    %v1656 = vld [vmem:[#allocation2 + $0xe0] sm:$0xff]
    %v1657 = vld [vmem:[#allocation2 + $0xe8] sm:$0xff]
    %v1658 = vld [vmem:[#allocation2 + $0xf0] sm:$0xff]
    %v1659 = vld [vmem:[#allocation2 + $0xf8] sm:$0xff]
    %v1660 = vld [vmem:[#allocation2 + $0x100] sm:$0xff]
    %v1661 = vld [vmem:[#allocation2 + $0x108] sm:$0xff]
    %v1662 = vld [vmem:[#allocation2 + $0x110] sm:$0xff]
    %v1663 = vld [vmem:[#allocation2 + $0x118] sm:$0xff]
    %v1664 = vld [vmem:[#allocation2 + $0x120] sm:$0xff]
    %v1665 = vld [vmem:[#allocation2 + $0x128] sm:$0xff]
    %v1666 = vld [vmem:[#allocation2 + $0x130] sm:$0xff]
    %v1667 = vld [vmem:[#allocation2 + $0x138] sm:$0xff]
    %v1668 = vld [vmem:[#allocation2 + $0x140] sm:$0xff]
    %v1669 = vld [vmem:[#allocation2 + $0x148] sm:$0xff]
    %v1670 = vld [vmem:[#allocation2 + $0x150] sm:$0xff]
    %v1671 = vld [vmem:[#allocation2 + $0x158] sm:$0xff]
    %v1672 = vld [vmem:[#allocation2 + $0x160] sm:$0xff]
    %v1673 = vld [vmem:[#allocation2 + $0x168] sm:$0xff]
    %v1674 = vld [vmem:[#allocation2 + $0x170] sm:$0xff]
    %v1675 = vld [vmem:[#allocation2 + $0x178] sm:$0xff]
    %v1676 = vld [vmem:[#allocation2 + $0x180] sm:$0xff]
    %v1677 = vld [vmem:[#allocation2 + $0x188] sm:$0xff]
    %v1678 = vld [vmem:[#allocation2 + $0x190] sm:$0xff]
    %v1679 = vld [vmem:[#allocation2 + $0x198] sm:$0xff]
    %v1680 = vld [vmem:[#allocation2 + $0x1a0] sm:$0xff]
    %v1681 = vld [vmem:[#allocation2 + $0x1a8] sm:$0xff]
    %v1682 = vld [vmem:[#allocation2 + $0x1b0] sm:$0xff]
    %v1683 = vld [vmem:[#allocation2 + $0x1b8] sm:$0xff]
    %v1684 = vld [vmem:[#allocation2 + $0x1c0] sm:$0xff]
    %v1685 = vld [vmem:[#allocation2 + $0x1c8] sm:$0xff]
    %v1686 = vld [vmem:[#allocation2 + $0x1d0] sm:$0xff]
    %v1687 = vld [vmem:[#allocation2 + $0x1d8] sm:$0xff]
    %v1688 = vld [vmem:[#allocation2 + $0x1e0] sm:$0xff]
    %v1689 = vld [vmem:[#allocation2 + $0x1e8] sm:$0xff]
    %v1690 = vld [vmem:[#allocation2 + $0x1f0] sm:$0xff]
    %v1691 = vld [vmem:[#allocation2 + $0x1f8] sm:$0xff]
    %v1692 = vld [vmem:[#allocation2 + $0x200] sm:$0xff]
    %v1693 = vld [vmem:[#allocation2 + $0x208] sm:$0xff]
    %v1694 = vld [vmem:[#allocation2 + $0x210] sm:$0xff]
    %v1695 = vld [vmem:[#allocation2 + $0x218] sm:$0xff]
    %v1696 = vld [vmem:[#allocation2 + $0x220] sm:$0xff]
    %v1697 = vld [vmem:[#allocation2 + $0x228] sm:$0xff]
    %v1698 = vld [vmem:[#allocation2 + $0x230] sm:$0xff]
    %v1699 = vld [vmem:[#allocation2 + $0x238] sm:$0xff]
    %v1700 = vld [vmem:[#allocation2 + $0x240] sm:$0xff]
    %v1701 = vld [vmem:[#allocation2 + $0x248] sm:$0xff]
    %v1702 = vld [vmem:[#allocation2 + $0x250] sm:$0xff]
    %v1703 = vld [vmem:[#allocation2 + $0x258] sm:$0xff]
    %v1704 = vld [vmem:[#allocation2 + $0x260] sm:$0xff]
    %v1705 = vld [vmem:[#allocation2 + $0x268] sm:$0xff]
    %v1706 = vld [vmem:[#allocation2 + $0x270] sm:$0xff]
    %v1707 = vld [vmem:[#allocation2 + $0x278] sm:$0xff]
    %v1708 = vld [vmem:[#allocation2 + $0x280] sm:$0xff]
    %v1709 = vld [vmem:[#allocation2 + $0x288] sm:$0xff]
    %v1710 = vld [vmem:[#allocation2 + $0x290] sm:$0xff]
    %v1711 = vld [vmem:[#allocation2 + $0x298] sm:$0xff]
    %v1712 = vld [vmem:[#allocation2 + $0x2a0] sm:$0xff]
    %v1713 = vld [vmem:[#allocation2 + $0x2a8] sm:$0xff]
    %v1714 = vld [vmem:[#allocation2 + $0x2b0] sm:$0xff]
    %v1715 = vld [vmem:[#allocation2 + $0x2b8] sm:$0xff]
    %v1716 = vld [vmem:[#allocation2 + $0x2c0] sm:$0xff]
    %v1717 = vld [vmem:[#allocation2 + $0x2c8] sm:$0xff]
    %v1718 = vld [vmem:[#allocation2 + $0x2d0] sm:$0xff]
    %v1719 = vld [vmem:[#allocation2 + $0x2d8] sm:$0xff]
    %v1720 = vld [vmem:[#allocation2 + $0x2e0] sm:$0xff]
    %v1721 = vld [vmem:[#allocation2 + $0x2e8] sm:$0xff]
    %v1722 = vld [vmem:[#allocation2 + $0x2f0] sm:$0xff]
    %v1723 = vld [vmem:[#allocation2 + $0x2f8] sm:$0xff]
    %v1724 = vld [vmem:[#allocation2 + $0x300] sm:$0xff]
    %v1725 = vld [vmem:[#allocation2 + $0x308] sm:$0xff]
    %v1726 = vld [vmem:[#allocation2 + $0x310] sm:$0xff]
    %v1727 = vld [vmem:[#allocation2 + $0x318] sm:$0xff]
    %v1728 = vld [vmem:[#allocation2 + $0x320] sm:$0xff]
    %v1729 = vld [vmem:[#allocation2 + $0x328] sm:$0xff]
    %v1730 = vld [vmem:[#allocation2 + $0x330] sm:$0xff]
    %v1731 = vld [vmem:[#allocation2 + $0x338] sm:$0xff]
    %v1732 = vld [vmem:[#allocation2 + $0x340] sm:$0xff]
    %v1733 = vld [vmem:[#allocation2 + $0x348] sm:$0xff]
    %v1734 = vld [vmem:[#allocation2 + $0x350] sm:$0xff]
    %v1735 = vld [vmem:[#allocation2 + $0x358] sm:$0xff]
    %v1736 = vld [vmem:[#allocation2 + $0x360] sm:$0xff]
    %v1737 = vld [vmem:[#allocation2 + $0x368] sm:$0xff]
    %v1738 = vld [vmem:[#allocation2 + $0x370] sm:$0xff]
    %v1739 = vld [vmem:[#allocation2 + $0x378] sm:$0xff]
    %v1740 = vld [vmem:[#allocation2 + $0x380] sm:$0xff]
    %v1741 = vld [vmem:[#allocation2 + $0x388] sm:$0xff]
    %v1742 = vld [vmem:[#allocation2 + $0x390] sm:$0xff]
    %v1743 = vld [vmem:[#allocation2 + $0x398] sm:$0xff]
    %v1744 = vld [vmem:[#allocation2 + $0x3a0] sm:$0xff]
    %v1745 = vld [vmem:[#allocation2 + $0x3a8] sm:$0xff]
    %v1746 = vld [vmem:[#allocation2 + $0x3b0] sm:$0xff]
    %v1747 = vld [vmem:[#allocation2 + $0x3b8] sm:$0xff]
    %v1748 = vld [vmem:[#allocation2 + $0x3c0] sm:$0xff]
    %v1749 = vld [vmem:[#allocation2 + $0x3c8] sm:$0xff]
    %v1750 = vld [vmem:[#allocation2 + $0x3d0] sm:$0xff]
    %v1751 = vld [vmem:[#allocation2 + $0x3d8] sm:$0xff]
    %v1752 = vld [vmem:[#allocation2 + $0x3e0] sm:$0xff]
    %v1753 = vld [vmem:[#allocation2 + $0x3e8] sm:$0xff]
    %v1754 = vld [vmem:[#allocation2 + $0x3f0] sm:$0xff]
    %v1755 = vld [vmem:[#allocation2 + $0x3f8] sm:$0xff]
    %v1756 = vld [vmem:[#allocation2 + $0x400] sm:$0xff]
    %v1757 = vld [vmem:[#allocation2 + $0x408] sm:$0xff]
    %v1758 = vld [vmem:[#allocation2 + $0x410] sm:$0xff]
    %v1759 = vld [vmem:[#allocation2 + $0x418] sm:$0xff]
    %v1760 = vld [vmem:[#allocation2 + $0x420] sm:$0xff]
    %v1761 = vld [vmem:[#allocation2 + $0x428] sm:$0xff]
    %v1762 = vld [vmem:[#allocation2 + $0x430] sm:$0xff]
    %v1763 = vld [vmem:[#allocation2 + $0x438] sm:$0xff]
    %v1764 = vld [vmem:[#allocation2 + $0x440] sm:$0xff]
    %v1765 = vld [vmem:[#allocation2 + $0x448] sm:$0xff]
    %v1766 = vld [vmem:[#allocation2 + $0x450] sm:$0xff]
    %v1767 = vld [vmem:[#allocation2 + $0x458] sm:$0xff]
    %v1768 = vld [vmem:[#allocation2 + $0x460] sm:$0xff]
    %v1769 = vld [vmem:[#allocation2 + $0x468] sm:$0xff]
    %v1770 = vld [vmem:[#allocation2 + $0x470] sm:$0xff]
    %v1771 = vld [vmem:[#allocation2 + $0x478] sm:$0xff]
    %v1772 = vld [vmem:[#allocation2 + $0x480] sm:$0xff]
    %v1773 = vld [vmem:[#allocation2 + $0x488] sm:$0xff]
    %v1774 = vld [vmem:[#allocation2 + $0x490] sm:$0xff]
    %v1775 = vld [vmem:[#allocation2 + $0x498] sm:$0xff]
    %v1776 = vld [vmem:[#allocation2 + $0x4a0] sm:$0xff]
    %v1777 = vld [vmem:[#allocation2 + $0x4a8] sm:$0xff]
    %v1778 = vld [vmem:[#allocation2 + $0x4b0] sm:$0xff]
    %v1779 = vld [vmem:[#allocation2 + $0x4b8] sm:$0xff]
    %v1780 = vld [vmem:[#allocation2 + $0x4c0] sm:$0xff]
    %v1781 = vld [vmem:[#allocation2 + $0x4c8] sm:$0xff]
    %v1782 = vld [vmem:[#allocation2 + $0x4d0] sm:$0xff]
    %v1783 = vld [vmem:[#allocation2 + $0x4d8] sm:$0xff]
    %v1784 = vld [vmem:[#allocation2 + $0x4e0] sm:$0xff]
    %v1785 = vld [vmem:[#allocation2 + $0x4e8] sm:$0xff]
    %v1786 = vld [vmem:[#allocation2 + $0x4f0] sm:$0xff]
    %v1787 = vld [vmem:[#allocation2 + $0x4f8] sm:$0xff]
    %v1788 = vld [vmem:[#allocation2 + $0x500] sm:$0xff]
    %v1789 = vld [vmem:[#allocation2 + $0x508] sm:$0xff]
    %v1790 = vld [vmem:[#allocation2 + $0x510] sm:$0xff]
    %v1791 = vld [vmem:[#allocation2 + $0x518] sm:$0xff]
    %v1792 = vld [vmem:[#allocation2 + $0x520] sm:$0xff]
    %v1793 = vld [vmem:[#allocation2 + $0x528] sm:$0xff]
    %v1794 = vld [vmem:[#allocation2 + $0x530] sm:$0xff]
    %v1795 = vld [vmem:[#allocation2 + $0x538] sm:$0xff]
    %v1796 = vld [vmem:[#allocation2 + $0x540] sm:$0xff]
    %v1797 = vld [vmem:[#allocation2 + $0x548] sm:$0xff]
    %v1798 = vld [vmem:[#allocation2 + $0x550] sm:$0xff]
    %v1799 = vld [vmem:[#allocation2 + $0x558] sm:$0xff]
    %v1800 = vld [vmem:[#allocation2 + $0x560] sm:$0xff]
    %v1801 = vld [vmem:[#allocation2 + $0x568] sm:$0xff]
    %v1802 = vld [vmem:[#allocation2 + $0x570] sm:$0xff]
    %v1803 = vld [vmem:[#allocation2 + $0x578] sm:$0xff]
    %v1804 = vld [vmem:[#allocation2 + $0x580] sm:$0xff]
    %v1805 = vld [vmem:[#allocation2 + $0x588] sm:$0xff]
    %v1806 = vld [vmem:[#allocation2 + $0x590] sm:$0xff]
    %v1807 = vld [vmem:[#allocation2 + $0x598] sm:$0xff]
    %v1808 = vld [vmem:[#allocation2 + $0x5a0] sm:$0xff]
    %v1809 = vld [vmem:[#allocation2 + $0x5a8] sm:$0xff]
    %v1810 = vld [vmem:[#allocation2 + $0x5b0] sm:$0xff]
    %v1811 = vld [vmem:[#allocation2 + $0x5b8] sm:$0x77]
    %v1996 = vunpack.c.l.b16 %v1628
    %v1997 = vunpack.c.h.b16 %v1628
    %v1998 = vunpack.c.l.b16 %v1629
    %v1999 = vunpack.c.h.b16 %v1629
    %v2000 = vunpack.c.l.b16 %v1630
    %v2001 = vunpack.c.h.b16 %v1630
    %v2002 = vunpack.c.l.b16 %v1631
    %v2003 = vunpack.c.h.b16 %v1631
    %v2004 = vunpack.c.l.b16 %v1632
    %v2005 = vunpack.c.h.b16 %v1632
    %v2006 = vunpack.c.l.b16 %v1633
    %v2007 = vunpack.c.h.b16 %v1633
    %v2008 = vunpack.c.l.b16 %v1634
    %v2009 = vunpack.c.h.b16 %v1634
    %v2010 = vunpack.c.l.b16 %v1635
    %v2011 = vunpack.c.h.b16 %v1635
    %v2012 = vunpack.c.l.b16 %v1636
    %v2013 = vunpack.c.h.b16 %v1636
    %v2014 = vunpack.c.l.b16 %v1637
    %v2015 = vunpack.c.h.b16 %v1637
    %v2016 = vunpack.c.l.b16 %v1638
    %v2017 = vunpack.c.h.b16 %v1638
    %v2018 = vunpack.c.l.b16 %v1639
    %v2019 = vunpack.c.h.b16 %v1639
    %v2020 = vunpack.c.l.b16 %v1640
    %v2021 = vunpack.c.h.b16 %v1640
    %v2022 = vunpack.c.l.b16 %v1641
    %v2023 = vunpack.c.h.b16 %v1641
    %v2024 = vunpack.c.l.b16 %v1642
    %v2025 = vunpack.c.h.b16 %v1642
    %v2026 = vunpack.c.l.b16 %v1643
    %v2027 = vunpack.c.h.b16 %v1643
    %v2028 = vunpack.c.l.b16 %v1644
    %v2029 = vunpack.c.h.b16 %v1644
    %v2030 = vunpack.c.l.b16 %v1645
    %v2031 = vunpack.c.h.b16 %v1645
    %v2032 = vunpack.c.l.b16 %v1646
    %v2033 = vunpack.c.h.b16 %v1646
    %v2034 = vunpack.c.l.b16 %v1647
    %v2035 = vunpack.c.h.b16 %v1647
    %v2036 = vunpack.c.l.b16 %v1648
    %v2037 = vunpack.c.h.b16 %v1648
    %v2038 = vunpack.c.l.b16 %v1649
    %v2039 = vunpack.c.h.b16 %v1649
    %v2040 = vunpack.c.l.b16 %v1650
    %v2041 = vunpack.c.h.b16 %v1650
    %v2042 = vunpack.c.l.b16 %v1651
    %v2043 = vunpack.c.h.b16 %v1651
    %v2044 = vunpack.c.l.b16 %v1652
    %v2045 = vunpack.c.h.b16 %v1652
    %v2046 = vunpack.c.l.b16 %v1653
    %v2047 = vunpack.c.h.b16 %v1653
    %v2048 = vunpack.c.l.b16 %v1654
    %v2049 = vunpack.c.h.b16 %v1654
    %v2050 = vunpack.c.l.b16 %v1655
    %v2051 = vunpack.c.h.b16 %v1655
    %v2052 = vunpack.c.l.b16 %v1656
    %v2053 = vunpack.c.h.b16 %v1656
    %v2054 = vunpack.c.l.b16 %v1657
    %v2055 = vunpack.c.h.b16 %v1657
    %v2056 = vunpack.c.l.b16 %v1658
    %v2057 = vunpack.c.h.b16 %v1658
    %v2058 = vunpack.c.l.b16 %v1659
    %v2059 = vunpack.c.h.b16 %v1659
    %v2060 = vunpack.c.l.b16 %v1660
    %v2061 = vunpack.c.h.b16 %v1660
    %v2062 = vunpack.c.l.b16 %v1661
    %v2063 = vunpack.c.h.b16 %v1661
    %v2064 = vunpack.c.l.b16 %v1662
    %v2065 = vunpack.c.h.b16 %v1662
    %v2066 = vunpack.c.l.b16 %v1663
    %v2067 = vunpack.c.h.b16 %v1663
    %v2068 = vunpack.c.l.b16 %v1664
    %v2069 = vunpack.c.h.b16 %v1664
    %v2070 = vunpack.c.l.b16 %v1665
    %v2071 = vunpack.c.h.b16 %v1665
    %v2072 = vunpack.c.l.b16 %v1666
    %v2073 = vunpack.c.h.b16 %v1666
    %v2074 = vunpack.c.l.b16 %v1667
    %v2075 = vunpack.c.h.b16 %v1667
    %v2076 = vunpack.c.l.b16 %v1668
    %v2077 = vunpack.c.h.b16 %v1668
    %v2078 = vunpack.c.l.b16 %v1669
    %v2079 = vunpack.c.h.b16 %v1669
    %v2080 = vunpack.c.l.b16 %v1670
    %v2081 = vunpack.c.h.b16 %v1670
    %v2082 = vunpack.c.l.b16 %v1671
    %v2083 = vunpack.c.h.b16 %v1671
    %v2084 = vunpack.c.l.b16 %v1672
    %v2085 = vunpack.c.h.b16 %v1672
    %v2086 = vunpack.c.l.b16 %v1673
    %v2087 = vunpack.c.h.b16 %v1673
    %v2088 = vunpack.c.l.b16 %v1674
    %v2089 = vunpack.c.h.b16 %v1674
    %v2090 = vunpack.c.l.b16 %v1675
    %v2091 = vunpack.c.h.b16 %v1675
    %v2092 = vunpack.c.l.b16 %v1676
    %v2093 = vunpack.c.h.b16 %v1676
    %v2094 = vunpack.c.l.b16 %v1677
    %v2095 = vunpack.c.h.b16 %v1677
    %v2096 = vunpack.c.l.b16 %v1678
    %v2097 = vunpack.c.h.b16 %v1678
    %v2098 = vunpack.c.l.b16 %v1679
    %v2099 = vunpack.c.h.b16 %v1679
    %v2100 = vunpack.c.l.b16 %v1680
    %v2101 = vunpack.c.h.b16 %v1680
    %v2102 = vunpack.c.l.b16 %v1681
    %v2103 = vunpack.c.h.b16 %v1681
    %v2104 = vunpack.c.l.b16 %v1682
    %v2105 = vunpack.c.h.b16 %v1682
    %v2106 = vunpack.c.l.b16 %v1683
    %v2107 = vunpack.c.h.b16 %v1683
    %v2108 = vunpack.c.l.b16 %v1684
    %v2109 = vunpack.c.h.b16 %v1684
    %v2110 = vunpack.c.l.b16 %v1685
    %v2111 = vunpack.c.h.b16 %v1685
    %v2112 = vunpack.c.l.b16 %v1686
    %v2113 = vunpack.c.h.b16 %v1686
    %v2114 = vunpack.c.l.b16 %v1687
    %v2115 = vunpack.c.h.b16 %v1687
    %v2116 = vunpack.c.l.b16 %v1688
    %v2117 = vunpack.c.h.b16 %v1688
    %v2118 = vunpack.c.l.b16 %v1689
    %v2119 = vunpack.c.h.b16 %v1689
    %v2120 = vunpack.c.l.b16 %v1690
    %v2121 = vunpack.c.h.b16 %v1690
    %v2122 = vunpack.c.l.b16 %v1691
    %v2123 = vunpack.c.h.b16 %v1691
    %v2124 = vunpack.c.l.b16 %v1692
    %v2125 = vunpack.c.h.b16 %v1692
    %v2126 = vunpack.c.l.b16 %v1693
    %v2127 = vunpack.c.h.b16 %v1693
    %v2128 = vunpack.c.l.b16 %v1694
    %v2129 = vunpack.c.h.b16 %v1694
    %v2130 = vunpack.c.l.b16 %v1695
    %v2131 = vunpack.c.h.b16 %v1695
    %v2132 = vunpack.c.l.b16 %v1696
    %v2133 = vunpack.c.h.b16 %v1696
    %v2134 = vunpack.c.l.b16 %v1697
    %v2135 = vunpack.c.h.b16 %v1697
    %v2136 = vunpack.c.l.b16 %v1698
    %v2137 = vunpack.c.h.b16 %v1698
    %v2138 = vunpack.c.l.b16 %v1699
    %v2139 = vunpack.c.h.b16 %v1699
    %v2140 = vunpack.c.l.b16 %v1700
    %v2141 = vunpack.c.h.b16 %v1700
    %v2142 = vunpack.c.l.b16 %v1701
    %v2143 = vunpack.c.h.b16 %v1701
    %v2144 = vunpack.c.l.b16 %v1702
    %v2145 = vunpack.c.h.b16 %v1702
    %v2146 = vunpack.c.l.b16 %v1703
    %v2147 = vunpack.c.h.b16 %v1703
    %v2148 = vunpack.c.l.b16 %v1704
    %v2149 = vunpack.c.h.b16 %v1704
    %v2150 = vunpack.c.l.b16 %v1705
    %v2151 = vunpack.c.h.b16 %v1705
    %v2152 = vunpack.c.l.b16 %v1706
    %v2153 = vunpack.c.h.b16 %v1706
    %v2154 = vunpack.c.l.b16 %v1707
    %v2155 = vunpack.c.h.b16 %v1707
    %v2156 = vunpack.c.l.b16 %v1708
    %v2157 = vunpack.c.h.b16 %v1708
    %v2158 = vunpack.c.l.b16 %v1709
    %v2159 = vunpack.c.h.b16 %v1709
    %v2160 = vunpack.c.l.b16 %v1710
    %v2161 = vunpack.c.h.b16 %v1710
    %v2162 = vunpack.c.l.b16 %v1711
    %v2163 = vunpack.c.h.b16 %v1711
    %v2164 = vunpack.c.l.b16 %v1712
    %v2165 = vunpack.c.h.b16 %v1712
    %v2166 = vunpack.c.l.b16 %v1713
    %v2167 = vunpack.c.h.b16 %v1713
    %v2168 = vunpack.c.l.b16 %v1714
    %v2169 = vunpack.c.h.b16 %v1714
    %v2170 = vunpack.c.l.b16 %v1715
    %v2171 = vunpack.c.h.b16 %v1715
    %v2172 = vunpack.c.l.b16 %v1716
    %v2173 = vunpack.c.h.b16 %v1716
    %v2174 = vunpack.c.l.b16 %v1717
    %v2175 = vunpack.c.h.b16 %v1717
    %v2176 = vunpack.c.l.b16 %v1718
    %v2177 = vunpack.c.h.b16 %v1718
    %v2178 = vunpack.c.l.b16 %v1719
    %v2179 = vunpack.c.h.b16 %v1719
    %v2180 = vunpack.c.l.b16 %v1720
    %v2181 = vunpack.c.h.b16 %v1720
    %v2182 = vunpack.c.l.b16 %v1721
    %v2183 = vunpack.c.h.b16 %v1721
    %v2184 = vunpack.c.l.b16 %v1722
    %v2185 = vunpack.c.h.b16 %v1722
    %v2186 = vunpack.c.l.b16 %v1723
    %v2187 = vunpack.c.h.b16 %v1723
    %v2188 = vunpack.c.l.b16 %v1724
    %v2189 = vunpack.c.h.b16 %v1724
    %v2190 = vunpack.c.l.b16 %v1725
    %v2191 = vunpack.c.h.b16 %v1725
    %v2192 = vunpack.c.l.b16 %v1726
    %v2193 = vunpack.c.h.b16 %v1726
    %v2194 = vunpack.c.l.b16 %v1727
    %v2195 = vunpack.c.h.b16 %v1727
    %v2196 = vunpack.c.l.b16 %v1728
    %v2197 = vunpack.c.h.b16 %v1728
    %v2198 = vunpack.c.l.b16 %v1729
    %v2199 = vunpack.c.h.b16 %v1729
    %v2200 = vunpack.c.l.b16 %v1730
    %v2201 = vunpack.c.h.b16 %v1730
    %v2202 = vunpack.c.l.b16 %v1731
    %v2203 = vunpack.c.h.b16 %v1731
    %v2204 = vunpack.c.l.b16 %v1732
    %v2205 = vunpack.c.h.b16 %v1732
    %v2206 = vunpack.c.l.b16 %v1733
    %v2207 = vunpack.c.h.b16 %v1733
    %v2208 = vunpack.c.l.b16 %v1734
    %v2209 = vunpack.c.h.b16 %v1734
    %v2210 = vunpack.c.l.b16 %v1735
    %v2211 = vunpack.c.h.b16 %v1735
    %v2212 = vunpack.c.l.b16 %v1736
    %v2213 = vunpack.c.h.b16 %v1736
    %v2214 = vunpack.c.l.b16 %v1737
    %v2215 = vunpack.c.h.b16 %v1737
    %v2216 = vunpack.c.l.b16 %v1738
    %v2217 = vunpack.c.h.b16 %v1738
    %v2218 = vunpack.c.l.b16 %v1739
    %v2219 = vunpack.c.h.b16 %v1739
    %v2220 = vunpack.c.l.b16 %v1740
    %v2221 = vunpack.c.h.b16 %v1740
    %v2222 = vunpack.c.l.b16 %v1741
    %v2223 = vunpack.c.h.b16 %v1741
    %v2224 = vunpack.c.l.b16 %v1742
    %v2225 = vunpack.c.h.b16 %v1742
    %v2226 = vunpack.c.l.b16 %v1743
    %v2227 = vunpack.c.h.b16 %v1743
    %v2228 = vunpack.c.l.b16 %v1744
    %v2229 = vunpack.c.h.b16 %v1744
    %v2230 = vunpack.c.l.b16 %v1745
    %v2231 = vunpack.c.h.b16 %v1745
    %v2232 = vunpack.c.l.b16 %v1746
    %v2233 = vunpack.c.h.b16 %v1746
    %v2234 = vunpack.c.l.b16 %v1747
    %v2235 = vunpack.c.h.b16 %v1747
    %v2236 = vunpack.c.l.b16 %v1748
    %v2237 = vunpack.c.h.b16 %v1748
    %v2238 = vunpack.c.l.b16 %v1749
    %v2239 = vunpack.c.h.b16 %v1749
    %v2240 = vunpack.c.l.b16 %v1750
    %v2241 = vunpack.c.h.b16 %v1750
    %v2242 = vunpack.c.l.b16 %v1751
    %v2243 = vunpack.c.h.b16 %v1751
    %v2244 = vunpack.c.l.b16 %v1752
    %v2245 = vunpack.c.h.b16 %v1752
    %v2246 = vunpack.c.l.b16 %v1753
    %v2247 = vunpack.c.h.b16 %v1753
    %v2248 = vunpack.c.l.b16 %v1754
    %v2249 = vunpack.c.h.b16 %v1754
    %v2250 = vunpack.c.l.b16 %v1755
    %v2251 = vunpack.c.h.b16 %v1755
    %v2252 = vunpack.c.l.b16 %v1756
    %v2253 = vunpack.c.h.b16 %v1756
    %v2254 = vunpack.c.l.b16 %v1757
    %v2255 = vunpack.c.h.b16 %v1757
    %v2256 = vunpack.c.l.b16 %v1758
    %v2257 = vunpack.c.h.b16 %v1758
    %v2258 = vunpack.c.l.b16 %v1759
    %v2259 = vunpack.c.h.b16 %v1759
    %v2260 = vunpack.c.l.b16 %v1760
    %v2261 = vunpack.c.h.b16 %v1760
    %v2262 = vunpack.c.l.b16 %v1761
    %v2263 = vunpack.c.h.b16 %v1761
    %v2264 = vunpack.c.l.b16 %v1762
    %v2265 = vunpack.c.h.b16 %v1762
    %v2266 = vunpack.c.l.b16 %v1763
    %v2267 = vunpack.c.h.b16 %v1763
    %v2268 = vunpack.c.l.b16 %v1764
    %v2269 = vunpack.c.h.b16 %v1764
    %v2270 = vunpack.c.l.b16 %v1765
    %v2271 = vunpack.c.h.b16 %v1765
    %v2272 = vunpack.c.l.b16 %v1766
    %v2273 = vunpack.c.h.b16 %v1766
    %v2274 = vunpack.c.l.b16 %v1767
    %v2275 = vunpack.c.h.b16 %v1767
    %v2276 = vunpack.c.l.b16 %v1768
    %v2277 = vunpack.c.h.b16 %v1768
    %v2278 = vunpack.c.l.b16 %v1769
    %v2279 = vunpack.c.h.b16 %v1769
    %v2280 = vunpack.c.l.b16 %v1770
    %v2281 = vunpack.c.h.b16 %v1770
    %v2282 = vunpack.c.l.b16 %v1771
    %v2283 = vunpack.c.h.b16 %v1771
    %v2284 = vunpack.c.l.b16 %v1772
    %v2285 = vunpack.c.h.b16 %v1772
    %v2286 = vunpack.c.l.b16 %v1773
    %v2287 = vunpack.c.h.b16 %v1773
    %v2288 = vunpack.c.l.b16 %v1774
    %v2289 = vunpack.c.h.b16 %v1774
    %v2290 = vunpack.c.l.b16 %v1775
    %v2291 = vunpack.c.h.b16 %v1775
    %v2292 = vunpack.c.l.b16 %v1776
    %v2293 = vunpack.c.h.b16 %v1776
    %v2294 = vunpack.c.l.b16 %v1777
    %v2295 = vunpack.c.h.b16 %v1777
    %v2296 = vunpack.c.l.b16 %v1778
    %v2297 = vunpack.c.h.b16 %v1778
    %v2298 = vunpack.c.l.b16 %v1779
    %v2299 = vunpack.c.h.b16 %v1779
    %v2300 = vunpack.c.l.b16 %v1780
    %v2301 = vunpack.c.h.b16 %v1780
    %v2302 = vunpack.c.l.b16 %v1781
    %v2303 = vunpack.c.h.b16 %v1781
    %v2304 = vunpack.c.l.b16 %v1782
    %v2305 = vunpack.c.h.b16 %v1782
    %v2306 = vunpack.c.l.b16 %v1783
    %v2307 = vunpack.c.h.b16 %v1783
    %v2308 = vunpack.c.l.b16 %v1784
    %v2309 = vunpack.c.h.b16 %v1784
    %v2310 = vunpack.c.l.b16 %v1785
    %v2311 = vunpack.c.h.b16 %v1785
    %v2312 = vunpack.c.l.b16 %v1786
    %v2313 = vunpack.c.h.b16 %v1786
    %v2314 = vunpack.c.l.b16 %v1787
    %v2315 = vunpack.c.h.b16 %v1787
    %v2316 = vunpack.c.l.b16 %v1788
    %v2317 = vunpack.c.h.b16 %v1788
    %v2318 = vunpack.c.l.b16 %v1789
    %v2319 = vunpack.c.h.b16 %v1789
    %v2320 = vunpack.c.l.b16 %v1790
    %v2321 = vunpack.c.h.b16 %v1790
    %v2322 = vunpack.c.l.b16 %v1791
    %v2323 = vunpack.c.h.b16 %v1791
    %v2324 = vunpack.c.l.b16 %v1792
    %v2325 = vunpack.c.h.b16 %v1792
    %v2326 = vunpack.c.l.b16 %v1793
    %v2327 = vunpack.c.h.b16 %v1793
    %v2328 = vunpack.c.l.b16 %v1794
    %v2329 = vunpack.c.h.b16 %v1794
    %v2330 = vunpack.c.l.b16 %v1795
    %v2331 = vunpack.c.h.b16 %v1795
    %v2332 = vunpack.c.l.b16 %v1796
    %v2333 = vunpack.c.h.b16 %v1796
    %v2334 = vunpack.c.l.b16 %v1797
    %v2335 = vunpack.c.h.b16 %v1797
    %v2336 = vunpack.c.l.b16 %v1798
    %v2337 = vunpack.c.h.b16 %v1798
    %v2338 = vunpack.c.l.b16 %v1799
    %v2339 = vunpack.c.h.b16 %v1799
    %v2340 = vunpack.c.l.b16 %v1800
    %v2341 = vunpack.c.h.b16 %v1800
    %v2342 = vunpack.c.l.b16 %v1801
    %v2343 = vunpack.c.h.b16 %v1801
    %v2344 = vunpack.c.l.b16 %v1802
    %v2345 = vunpack.c.h.b16 %v1802
    %v2346 = vunpack.c.l.b16 %v1803
    %v2347 = vunpack.c.h.b16 %v1803
    %v2348 = vunpack.c.l.b16 %v1804
    %v2349 = vunpack.c.h.b16 %v1804
    %v2350 = vunpack.c.l.b16 %v1805
    %v2351 = vunpack.c.h.b16 %v1805
    %v2352 = vunpack.c.l.b16 %v1806
    %v2353 = vunpack.c.h.b16 %v1806
    %v2354 = vunpack.c.l.b16 %v1807
    %v2355 = vunpack.c.h.b16 %v1807
    %v2356 = vunpack.c.l.b16 %v1808
    %v2357 = vunpack.c.h.b16 %v1808
    %v2358 = vunpack.c.l.b16 %v1809
    %v2359 = vunpack.c.h.b16 %v1809
    %v2360 = vunpack.c.l.b16 %v1810
    %v2361 = vunpack.c.h.b16 %v1810
    %v2362 = vunpack.c.l.b16 %v1811
    %v2363 = vunpack.c.h.b16 %v1811
    %v2364 = vpack.c.b16 %v1998, %v1996
    %v2365 = vpack.c.b16 %v1999, %v1997
    %v2366 = vpack.c.b16 %v2002, %v2000
    %v2367 = vpack.c.b16 %v2003, %v2001
    %v2368 = vpack.c.b16 %v2006, %v2004
    %v2369 = vpack.c.b16 %v2007, %v2005
    %v2370 = vpack.c.b16 %v2010, %v2008
    %v2371 = vpack.c.b16 %v2011, %v2009
    %v2372 = vpack.c.b16 %v2014, %v2012
    %v2373 = vpack.c.b16 %v2015, %v2013
    %v2374 = vpack.c.b16 %v2018, %v2016
    %v2375 = vpack.c.b16 %v2019, %v2017
    %v2376 = vpack.c.b16 %v2022, %v2020
    %v2377 = vpack.c.b16 %v2023, %v2021
    %v2378 = vpack.c.b16 %v2026, %v2024
    %v2379 = vpack.c.b16 %v2027, %v2025
    %v2380 = vpack.c.b16 %v2030, %v2028
    %v2381 = vpack.c.b16 %v2031, %v2029
    %v2382 = vpack.c.b16 %v2034, %v2032
    %v2383 = vpack.c.b16 %v2035, %v2033
    %v2384 = vpack.c.b16 %v2038, %v2036
    %v2385 = vpack.c.b16 %v2039, %v2037
    %v2386 = vpack.c.b16 %v2042, %v2040
    %v2387 = vpack.c.b16 %v2043, %v2041
    %v2388 = vpack.c.b16 %v2046, %v2044
    %v2389 = vpack.c.b16 %v2047, %v2045
    %v2390 = vpack.c.b16 %v2050, %v2048
    %v2391 = vpack.c.b16 %v2051, %v2049
    %v2392 = vpack.c.b16 %v2054, %v2052
    %v2393 = vpack.c.b16 %v2055, %v2053
    %v2394 = vpack.c.b16 %v2058, %v2056
    %v2395 = vpack.c.b16 %v2059, %v2057
    %v2396 = vpack.c.b16 %v2062, %v2060
    %v2397 = vpack.c.b16 %v2063, %v2061
    %v2398 = vpack.c.b16 %v2066, %v2064
    %v2399 = vpack.c.b16 %v2067, %v2065
    %v2400 = vpack.c.b16 %v2070, %v2068
    %v2401 = vpack.c.b16 %v2071, %v2069
    %v2402 = vpack.c.b16 %v2074, %v2072
    %v2403 = vpack.c.b16 %v2075, %v2073
    %v2404 = vpack.c.b16 %v2078, %v2076
    %v2405 = vpack.c.b16 %v2079, %v2077
    %v2406 = vpack.c.b16 %v2082, %v2080
    %v2407 = vpack.c.b16 %v2083, %v2081
    %v2408 = vpack.c.b16 %v2086, %v2084
    %v2409 = vpack.c.b16 %v2087, %v2085
    %v2410 = vpack.c.b16 %v2090, %v2088
    %v2411 = vpack.c.b16 %v2091, %v2089
    %v2412 = vpack.c.b16 %v2094, %v2092
    %v2413 = vpack.c.b16 %v2095, %v2093
    %v2414 = vpack.c.b16 %v2098, %v2096
    %v2415 = vpack.c.b16 %v2099, %v2097
    %v2416 = vpack.c.b16 %v2102, %v2100
    %v2417 = vpack.c.b16 %v2103, %v2101
    %v2418 = vpack.c.b16 %v2106, %v2104
    %v2419 = vpack.c.b16 %v2107, %v2105
    %v2420 = vpack.c.b16 %v2110, %v2108
    %v2421 = vpack.c.b16 %v2111, %v2109
    %v2422 = vpack.c.b16 %v2114, %v2112
    %v2423 = vpack.c.b16 %v2115, %v2113
    %v2424 = vpack.c.b16 %v2118, %v2116
    %v2425 = vpack.c.b16 %v2119, %v2117
    %v2426 = vpack.c.b16 %v2122, %v2120
    %v2427 = vpack.c.b16 %v2123, %v2121
    %v2428 = vpack.c.b16 %v2126, %v2124
    %v2429 = vpack.c.b16 %v2127, %v2125
    %v2430 = vpack.c.b16 %v2130, %v2128
    %v2431 = vpack.c.b16 %v2131, %v2129
    %v2432 = vpack.c.b16 %v2134, %v2132
    %v2433 = vpack.c.b16 %v2135, %v2133
    %v2434 = vpack.c.b16 %v2138, %v2136
    %v2435 = vpack.c.b16 %v2139, %v2137
    %v2436 = vpack.c.b16 %v2142, %v2140
    %v2437 = vpack.c.b16 %v2143, %v2141
    %v2438 = vpack.c.b16 %v2146, %v2144
    %v2439 = vpack.c.b16 %v2147, %v2145
    %v2440 = vpack.c.b16 %v2150, %v2148
    %v2441 = vpack.c.b16 %v2151, %v2149
    %v2442 = vpack.c.b16 %v2154, %v2152
    %v2443 = vpack.c.b16 %v2155, %v2153
    %v2444 = vpack.c.b16 %v2158, %v2156
    %v2445 = vpack.c.b16 %v2159, %v2157
    %v2446 = vpack.c.b16 %v2162, %v2160
    %v2447 = vpack.c.b16 %v2163, %v2161
    %v2448 = vpack.c.b16 %v2166, %v2164
    %v2449 = vpack.c.b16 %v2167, %v2165
    %v2450 = vpack.c.b16 %v2170, %v2168
    %v2451 = vpack.c.b16 %v2171, %v2169
    %v2452 = vpack.c.b16 %v2174, %v2172
    %v2453 = vpack.c.b16 %v2175, %v2173
    %v2454 = vpack.c.b16 %v2178, %v2176
    %v2455 = vpack.c.b16 %v2179, %v2177
    %v2456 = vpack.c.b16 %v2182, %v2180
    %v2457 = vpack.c.b16 %v2183, %v2181
    %v2458 = vpack.c.b16 %v2186, %v2184
    %v2459 = vpack.c.b16 %v2187, %v2185
    %v2460 = vpack.c.b16 %v2190, %v2188
    %v2461 = vpack.c.b16 %v2191, %v2189
    %v2462 = vpack.c.b16 %v2194, %v2192
    %v2463 = vpack.c.b16 %v2195, %v2193
    %v2464 = vpack.c.b16 %v2198, %v2196
    %v2465 = vpack.c.b16 %v2199, %v2197
    %v2466 = vpack.c.b16 %v2202, %v2200
    %v2467 = vpack.c.b16 %v2203, %v2201
    %v2468 = vpack.c.b16 %v2206, %v2204
    %v2469 = vpack.c.b16 %v2207, %v2205
    %v2470 = vpack.c.b16 %v2210, %v2208
    %v2471 = vpack.c.b16 %v2211, %v2209
    %v2472 = vpack.c.b16 %v2214, %v2212
    %v2473 = vpack.c.b16 %v2215, %v2213
    %v2474 = vpack.c.b16 %v2218, %v2216
    %v2475 = vpack.c.b16 %v2219, %v2217
    %v2476 = vpack.c.b16 %v2222, %v2220
    %v2477 = vpack.c.b16 %v2223, %v2221
    %v2478 = vpack.c.b16 %v2226, %v2224
    %v2479 = vpack.c.b16 %v2227, %v2225
    %v2480 = vpack.c.b16 %v2230, %v2228
    %v2481 = vpack.c.b16 %v2231, %v2229
    %v2482 = vpack.c.b16 %v2234, %v2232
    %v2483 = vpack.c.b16 %v2235, %v2233
    %v2484 = vpack.c.b16 %v2238, %v2236
    %v2485 = vpack.c.b16 %v2239, %v2237
    %v2486 = vpack.c.b16 %v2242, %v2240
    %v2487 = vpack.c.b16 %v2243, %v2241
    %v2488 = vpack.c.b16 %v2246, %v2244
    %v2489 = vpack.c.b16 %v2247, %v2245
    %v2490 = vpack.c.b16 %v2250, %v2248
    %v2491 = vpack.c.b16 %v2251, %v2249
    %v2492 = vpack.c.b16 %v2254, %v2252
    %v2493 = vpack.c.b16 %v2255, %v2253
    %v2494 = vpack.c.b16 %v2258, %v2256
    %v2495 = vpack.c.b16 %v2259, %v2257
    %v2496 = vpack.c.b16 %v2262, %v2260
    %v2497 = vpack.c.b16 %v2263, %v2261
    %v2498 = vpack.c.b16 %v2266, %v2264
    %v2499 = vpack.c.b16 %v2267, %v2265
    %v2500 = vpack.c.b16 %v2270, %v2268
    %v2501 = vpack.c.b16 %v2271, %v2269
    %v2502 = vpack.c.b16 %v2274, %v2272
    %v2503 = vpack.c.b16 %v2275, %v2273
    %v2504 = vpack.c.b16 %v2278, %v2276
    %v2505 = vpack.c.b16 %v2279, %v2277
    %v2506 = vpack.c.b16 %v2282, %v2280
    %v2507 = vpack.c.b16 %v2283, %v2281
    %v2508 = vpack.c.b16 %v2286, %v2284
    %v2509 = vpack.c.b16 %v2287, %v2285
    %v2510 = vpack.c.b16 %v2290, %v2288
    %v2511 = vpack.c.b16 %v2291, %v2289
    %v2512 = vpack.c.b16 %v2294, %v2292
    %v2513 = vpack.c.b16 %v2295, %v2293
    %v2514 = vpack.c.b16 %v2298, %v2296
    %v2515 = vpack.c.b16 %v2299, %v2297
    %v2516 = vpack.c.b16 %v2302, %v2300
    %v2517 = vpack.c.b16 %v2303, %v2301
    %v2518 = vpack.c.b16 %v2306, %v2304
    %v2519 = vpack.c.b16 %v2307, %v2305
    %v2520 = vpack.c.b16 %v2310, %v2308
    %v2521 = vpack.c.b16 %v2311, %v2309
    %v2522 = vpack.c.b16 %v2314, %v2312
    %v2523 = vpack.c.b16 %v2315, %v2313
    %v2524 = vpack.c.b16 %v2318, %v2316
    %v2525 = vpack.c.b16 %v2319, %v2317
    %v2526 = vpack.c.b16 %v2322, %v2320
    %v2527 = vpack.c.b16 %v2323, %v2321
    %v2528 = vpack.c.b16 %v2326, %v2324
    %v2529 = vpack.c.b16 %v2327, %v2325
    %v2530 = vpack.c.b16 %v2330, %v2328
    %v2531 = vpack.c.b16 %v2331, %v2329
    %v2532 = vpack.c.b16 %v2334, %v2332
    %v2533 = vpack.c.b16 %v2335, %v2333
    %v2534 = vpack.c.b16 %v2338, %v2336
    %v2535 = vpack.c.b16 %v2339, %v2337
    %v2536 = vpack.c.b16 %v2342, %v2340
    %v2537 = vpack.c.b16 %v2343, %v2341
    %v2538 = vpack.c.b16 %v2346, %v2344
    %v2539 = vpack.c.b16 %v2347, %v2345
    %v2540 = vpack.c.b16 %v2350, %v2348
    %v2541 = vpack.c.b16 %v2351, %v2349
    %v2542 = vpack.c.b16 %v2354, %v2352
    %v2543 = vpack.c.b16 %v2355, %v2353
    %v2544 = vpack.c.b16 %v2358, %v2356
    %v2545 = vpack.c.b16 %v2359, %v2357
    %v2546 = vpack.c.b16 %v2362, %v2360
    %v2547 = vpack.c.b16 %v2363, %v2361
    %v2641 = vsel %vm1283, %v2365, 0
    %v2644 = vsel %vm1283, %v2367, 0
    %v2647 = vsel %vm1283, %v2369, 0
    %v2650 = vsel %vm1283, %v2371, 0
    %v2653 = vsel %vm1283, %v2373, 0
    %v2656 = vsel %vm1283, %v2375, 0
    %v2659 = vsel %vm1283, %v2377, 0
    %v2662 = vsel %vm1283, %v2379, 0
    %v2665 = vsel %vm1283, %v2381, 0
    %v2668 = vsel %vm1283, %v2383, 0
    %v2671 = vsel %vm1283, %v2385, 0
    %v2674 = vsel %vm1283, %v2387, 0
    %v2677 = vsel %vm1283, %v2389, 0
    %v2680 = vsel %vm1283, %v2391, 0
    %v2683 = vsel %vm1283, %v2393, 0
    %v2686 = vsel %vm1283, %v2395, 0
    %v2689 = vsel %vm1283, %v2397, 0
    %v2692 = vsel %vm1283, %v2399, 0
    %v2695 = vsel %vm1283, %v2401, 0
    %v2698 = vsel %vm1283, %v2403, 0
    %v2701 = vsel %vm1283, %v2405, 0
    %v2704 = vsel %vm1283, %v2407, 0
    %v2707 = vsel %vm1283, %v2409, 0
    %v2710 = vsel %vm1283, %v2411, 0
    %v2713 = vsel %vm1283, %v2413, 0
    %v2716 = vsel %vm1283, %v2415, 0
    %v2719 = vsel %vm1283, %v2417, 0
    %v2722 = vsel %vm1283, %v2419, 0
    %v2725 = vsel %vm1283, %v2421, 0
    %v2728 = vsel %vm1283, %v2423, 0
    %v2731 = vsel %vm1283, %v2425, 0
    %v2734 = vsel %vm1283, %v2427, 0
    %v2737 = vsel %vm1283, %v2429, 0
    %v2740 = vsel %vm1283, %v2431, 0
    %v2743 = vsel %vm1283, %v2433, 0
    %v2746 = vsel %vm1283, %v2435, 0
    %v2749 = vsel %vm1283, %v2437, 0
    %v2752 = vsel %vm1283, %v2439, 0
    %v2755 = vsel %vm1283, %v2441, 0
    %v2758 = vsel %vm1283, %v2443, 0
    %v2761 = vsel %vm1283, %v2445, 0
    %v2764 = vsel %vm1283, %v2447, 0
    %v2767 = vsel %vm1283, %v2449, 0
    %v2770 = vsel %vm1283, %v2451, 0
    %v2773 = vsel %vm1283, %v2453, 0
    %v2776 = vsel %vm1283, %v2455, 0
    %v2779 = vsel %vm1283, %v2457, 0
    %v2782 = vsel %vm1283, %v2459, 0
    %v2785 = vsel %vm1283, %v2461, 0
    %v2788 = vsel %vm1283, %v2463, 0
    %v2791 = vsel %vm1283, %v2465, 0
    %v2794 = vsel %vm1283, %v2467, 0
    %v2797 = vsel %vm1283, %v2469, 0
    %v2800 = vsel %vm1283, %v2471, 0
    %v2803 = vsel %vm1283, %v2473, 0
    %v2806 = vsel %vm1283, %v2475, 0
    %v2809 = vsel %vm1283, %v2477, 0
    %v2812 = vsel %vm1283, %v2479, 0
    %v2815 = vsel %vm1283, %v2481, 0
    %v2818 = vsel %vm1283, %v2483, 0
    %v2821 = vsel %vm1283, %v2485, 0
    %v2824 = vsel %vm1283, %v2487, 0
    %v2827 = vsel %vm1283, %v2489, 0
    %v2830 = vsel %vm1283, %v2491, 0
    %v2833 = vsel %vm1283, %v2493, 0
    %v2836 = vsel %vm1283, %v2495, 0
    %v2839 = vsel %vm1283, %v2497, 0
    %v2842 = vsel %vm1283, %v2499, 0
    %v2845 = vsel %vm1283, %v2501, 0
    %v2848 = vsel %vm1283, %v2503, 0
    %v2851 = vsel %vm1283, %v2505, 0
    %v2854 = vsel %vm1283, %v2507, 0
    %v2857 = vsel %vm1283, %v2509, 0
    %v2860 = vsel %vm1283, %v2511, 0
    %v2863 = vsel %vm1283, %v2513, 0
    %v2866 = vsel %vm1283, %v2515, 0
    %v2869 = vsel %vm1283, %v2517, 0
    %v2872 = vsel %vm1283, %v2519, 0
    %v2875 = vsel %vm1283, %v2521, 0
    %v2878 = vsel %vm1283, %v2523, 0
    %v2881 = vsel %vm1283, %v2525, 0
    %v2884 = vsel %vm1283, %v2527, 0
    %v2887 = vsel %vm1283, %v2529, 0
    %v2890 = vsel %vm1283, %v2531, 0
    %v2893 = vsel %vm1283, %v2533, 0
    %v2896 = vsel %vm1283, %v2535, 0
    %v2899 = vsel %vm1283, %v2537, 0
    %v2902 = vsel %vm1283, %v2539, 0
    %v2905 = vsel %vm1283, %v2541, 0
    %v2908 = vsel %vm1283, %v2543, 0
    %v2911 = vsel %vm1283, %v2545, 0
    %v2914 = vsel %vm1283, %v2547, 0
    %v2917 = vsel %vm1121, %v1619, 0
    %2919 = vmatprep.subr.bf16.mxu0 0
    %2920 = vmatpush1.bf16.msra.mxu0 %v1605
    %2921 = vmatprep.subr.bf16.mxu0 0
    %2922 = vmatpush1.bf16.msra.mxu0 %v1606
    %2923 = vmatprep.subr.bf16.mxu0 0
    %2924 = vmatpush1.bf16.msra.mxu0 %v1607
    %2925 = vmatprep.subr.bf16.mxu0 0
    %2926 = vmatpush1.bf16.msra.mxu0 %v1608
    %2927 = vmatprep.subr.bf16.mxu0 0
    %2928 = vmatpush1.bf16.msra.mxu0 %v1609
    %2929 = vmatprep.subr.bf16.mxu0 0
    %2930 = vmatpush1.bf16.msra.mxu0 %v1610
    %2931 = vmatprep.subr.bf16.mxu0 0
    %2932 = vmatpush1.bf16.msra.mxu0 %v1611
    %2933 = vmatprep.subr.bf16.mxu0 0
    %2934 = vmatpush1.bf16.msra.mxu0 %v1612
    %2935 = vmatprep.subr.bf16.mxu0 0
    %2936 = vmatpush1.bf16.msra.mxu0 %v1613
    %2937 = vmatprep.subr.bf16.mxu0 0
    %2938 = vmatpush1.bf16.msra.mxu0 %v1614
    %2939 = vmatprep.subr.bf16.mxu0 0
    %2940 = vmatpush1.bf16.msra.mxu0 %v1615
    %2941 = vmatprep.subr.bf16.mxu0 0
    %2942 = vmatpush1.bf16.msra.mxu0 %v1616
    %2943 = vmatprep.subr.bf16.mxu0 0
    %2944 = vmatpush1.bf16.msra.mxu0 %v1617
    %2945 = vmatprep.subr.bf16.mxu0 0
    %2946 = vmatpush1.bf16.msra.mxu0 %v1618
    %2947 = vmatprep.subr.bf16.mxu0 0
    %2948 = vmatpush1.bf16.msra.mxu0 %v2917
    %2949 = vmatprep.subr.bf16.mxu0 0
    %2950 = vmatpush1.bf16.msra.mxu0 0
    %2951 = vmatprep.mubr.bf16.mxu0 %v2641
    %2952 = vmatmul.mubr.bf16.gmra.mrb[0].mxu0 %v2364
    %v2953 = vpop.f32.mrb[0].mxu0
    %v2954 = vadd.f32 0.0, %v2953
    %v2955 = vpop.f32.mrb[0].mxu0
    %v2956 = vpop.f32.mrb[0].mxu0
    %v2957 = vadd.f32 0.0, %v2956
    %v2958 = vpop.f32.mrb[0].mxu0
    %2959 = vmatprep.mubr.bf16.mxu0 %v2644
    %2960 = vmatmul.mubr.bf16.gmra.mrb[0].mxu0 %v2366
    %v2961 = vpop.f32.mrb[0].mxu0
    %v2962 = vadd.f32 0.0, %v2961
    %v2963 = vpop.f32.mrb[0].mxu0
    %v2964 = vpop.f32.mrb[0].mxu0
    %v2965 = vadd.f32 0.0, %v2964
    %v2966 = vpop.f32.mrb[0].mxu0
    %2967 = vmatprep.mubr.bf16.mxu0 %v2647
    %2968 = vmatmul.mubr.bf16.gmra.mrb[0].mxu0 %v2368
    %v2969 = vpop.f32.mrb[0].mxu0
    %v2970 = vadd.f32 0.0, %v2969
    %v2971 = vpop.f32.mrb[0].mxu0
    %v2972 = vpop.f32.mrb[0].mxu0
    %v2973 = vadd.f32 0.0, %v2972
    %v2974 = vpop.f32.mrb[0].mxu0
    %2975 = vmatprep.mubr.bf16.mxu0 %v2650
    %2976 = vmatmul.mubr.bf16.gmra.mrb[0].mxu0 %v2370
    %v2977 = vpop.f32.mrb[0].mxu0
    %v2978 = vadd.f32 0.0, %v2977
    %v2979 = vpop.f32.mrb[0].mxu0
    %v2980 = vpop.f32.mrb[0].mxu0
    %v2981 = vadd.f32 0.0, %v2980
    %v2982 = vpop.f32.mrb[0].mxu0
    %2983 = vmatprep.mubr.bf16.mxu0 %v2653
    %2984 = vmatmul.mubr.bf16.gmra.mrb[0].mxu0 %v2372
    %v2985 = vpop.f32.mrb[0].mxu0
    %v2986 = vadd.f32 0.0, %v2985
    %v2987 = vpop.f32.mrb[0].mxu0
    %v2988 = vpop.f32.mrb[0].mxu0
    %v2989 = vadd.f32 0.0, %v2988
    %v2990 = vpop.f32.mrb[0].mxu0
    %2991 = vmatprep.mubr.bf16.mxu0 %v2656
    %2992 = vmatmul.mubr.bf16.gmra.mrb[0].mxu0 %v2374
    %v2993 = vpop.f32.mrb[0].mxu0
    %v2994 = vadd.f32 0.0, %v2993
    %v2995 = vpop.f32.mrb[0].mxu0
    %v2996 = vpop.f32.mrb[0].mxu0
    %v2997 = vadd.f32 0.0, %v2996
    %v2998 = vpop.f32.mrb[0].mxu0
    %2999 = vmatprep.mubr.bf16.mxu0 %v2659
    %3000 = vmatmul.mubr.bf16.gmra.mrb[0].mxu0 %v2376
    %v3001 = vpop.f32.mrb[0].mxu0
    %v3002 = vadd.f32 0.0, %v3001
    %v3003 = vpop.f32.mrb[0].mxu0
    %v3004 = vpop.f32.mrb[0].mxu0
    %v3005 = vadd.f32 0.0, %v3004
    %v3006 = vpop.f32.mrb[0].mxu0
    %3007 = vmatprep.mubr.bf16.mxu0 %v2662
    %3008 = vmatmul.mubr.bf16.gmra.mrb[0].mxu0 %v2378
    %v3009 = vpop.f32.mrb[0].mxu0
    %v3010 = vadd.f32 0.0, %v3009
    %v3011 = vpop.f32.mrb[0].mxu0
    %v3012 = vpop.f32.mrb[0].mxu0
    %v3013 = vadd.f32 0.0, %v3012
    %v3014 = vpop.f32.mrb[0].mxu0
    %3015 = vmatprep.mubr.bf16.mxu0 %v2665
    %3016 = vmatmul.mubr.bf16.gmra.mrb[0].mxu0 %v2380
    %v3017 = vpop.f32.mrb[0].mxu0
    %v3018 = vadd.f32 0.0, %v3017
    %v3019 = vpop.f32.mrb[0].mxu0
    %v3020 = vpop.f32.mrb[0].mxu0
    %v3021 = vadd.f32 0.0, %v3020
    %v3022 = vpop.f32.mrb[0].mxu0
    %3023 = vmatprep.mubr.bf16.mxu0 %v2668
    %3024 = vmatmul.mubr.bf16.gmra.mrb[0].mxu0 %v2382
    %v3025 = vpop.f32.mrb[0].mxu0
    %v3026 = vadd.f32 0.0, %v3025
    %v3027 = vpop.f32.mrb[0].mxu0
    %v3028 = vpop.f32.mrb[0].mxu0
    %v3029 = vadd.f32 0.0, %v3028
    %v3030 = vpop.f32.mrb[0].mxu0
    %3031 = vmatprep.mubr.bf16.mxu0 %v2671
    %3032 = vmatmul.mubr.bf16.gmra.mrb[0].mxu0 %v2384
    %v3033 = vpop.f32.mrb[0].mxu0
    %v3034 = vadd.f32 0.0, %v3033
    %v3035 = vpop.f32.mrb[0].mxu0
    %v3036 = vpop.f32.mrb[0].mxu0
    %v3037 = vadd.f32 0.0, %v3036
    %v3038 = vpop.f32.mrb[0].mxu0
    %3039 = vmatprep.mubr.bf16.mxu0 %v2674
    %3040 = vmatmul.mubr.bf16.gmra.mrb[0].mxu0 %v2386
    %v3041 = vpop.f32.mrb[0].mxu0
    %v3042 = vadd.f32 0.0, %v3041
    %v3043 = vpop.f32.mrb[0].mxu0
    %v3044 = vpop.f32.mrb[0].mxu0
    %v3045 = vadd.f32 0.0, %v3044
    %v3046 = vpop.f32.mrb[0].mxu0
    %3047 = vmatprep.mubr.bf16.mxu0 %v2677
    %3048 = vmatmul.mubr.bf16.gmra.mrb[0].mxu0 %v2388
    %v3049 = vpop.f32.mrb[0].mxu0
    %v3050 = vadd.f32 0.0, %v3049
    %v3051 = vpop.f32.mrb[0].mxu0
    %v3052 = vpop.f32.mrb[0].mxu0
    %v3053 = vadd.f32 0.0, %v3052
    %v3054 = vpop.f32.mrb[0].mxu0
    %3055 = vmatprep.mubr.bf16.mxu0 %v2680
    %3056 = vmatmul.mubr.bf16.gmra.mrb[0].mxu0 %v2390
    %v3057 = vpop.f32.mrb[0].mxu0
    %v3058 = vadd.f32 0.0, %v3057
    %v3059 = vpop.f32.mrb[0].mxu0
    %v3060 = vpop.f32.mrb[0].mxu0
    %v3061 = vadd.f32 0.0, %v3060
    %v3062 = vpop.f32.mrb[0].mxu0
    %3063 = vmatprep.mubr.bf16.mxu0 %v2683
    %3064 = vmatmul.mubr.bf16.gmra.mrb[0].mxu0 %v2392
    %v3065 = vpop.f32.mrb[0].mxu0
    %v3066 = vadd.f32 0.0, %v3065
    %v3067 = vpop.f32.mrb[0].mxu0
    %v3068 = vpop.f32.mrb[0].mxu0
    %v3069 = vadd.f32 0.0, %v3068
    %v3070 = vpop.f32.mrb[0].mxu0
    %3071 = vmatprep.mubr.bf16.mxu0 %v2686
    %3072 = vmatmul.mubr.bf16.gmra.mrb[0].mxu0 %v2394
    %v3073 = vpop.f32.mrb[0].mxu0
    %v3074 = vadd.f32 0.0, %v3073
    %v3075 = vpop.f32.mrb[0].mxu0
    %v3076 = vpop.f32.mrb[0].mxu0
    %v3077 = vadd.f32 0.0, %v3076
    %v3078 = vpop.f32.mrb[0].mxu0
    %3079 = vmatprep.mubr.bf16.mxu0 %v2689
    %3080 = vmatmul.mubr.bf16.gmra.mrb[0].mxu0 %v2396
    %v3081 = vpop.f32.mrb[0].mxu0
    %v3082 = vadd.f32 0.0, %v3081
    %v3083 = vpop.f32.mrb[0].mxu0
    %v3084 = vpop.f32.mrb[0].mxu0
    %v3085 = vadd.f32 0.0, %v3084
    %v3086 = vpop.f32.mrb[0].mxu0
    %3087 = vmatprep.mubr.bf16.mxu0 %v2692
    %3088 = vmatmul.mubr.bf16.gmra.mrb[0].mxu0 %v2398
    %v3089 = vpop.f32.mrb[0].mxu0
    %v3090 = vadd.f32 0.0, %v3089
    %v3091 = vpop.f32.mrb[0].mxu0
    %v3092 = vpop.f32.mrb[0].mxu0
    %v3093 = vadd.f32 0.0, %v3092
    %v3094 = vpop.f32.mrb[0].mxu0
    %3095 = vmatprep.mubr.bf16.mxu0 %v2695
    %3096 = vmatmul.mubr.bf16.gmra.mrb[0].mxu0 %v2400
    %v3097 = vpop.f32.mrb[0].mxu0
    %v3098 = vadd.f32 0.0, %v3097
    %v3099 = vpop.f32.mrb[0].mxu0
    %v3100 = vpop.f32.mrb[0].mxu0
    %v3101 = vadd.f32 0.0, %v3100
    %v3102 = vpop.f32.mrb[0].mxu0
    %3103 = vmatprep.mubr.bf16.mxu0 %v2698
    %3104 = vmatmul.mubr.bf16.gmra.mrb[0].mxu0 %v2402
    %v3105 = vpop.f32.mrb[0].mxu0
    %v3106 = vadd.f32 0.0, %v3105
    %v3107 = vpop.f32.mrb[0].mxu0
    %v3108 = vpop.f32.mrb[0].mxu0
    %v3109 = vadd.f32 0.0, %v3108
    %v3110 = vpop.f32.mrb[0].mxu0
    %3111 = vmatprep.mubr.bf16.mxu0 %v2701
    %3112 = vmatmul.mubr.bf16.gmra.mrb[0].mxu0 %v2404
    %v3113 = vpop.f32.mrb[0].mxu0
    %v3114 = vadd.f32 0.0, %v3113
    %v3115 = vpop.f32.mrb[0].mxu0
    %v3116 = vpop.f32.mrb[0].mxu0
    %v3117 = vadd.f32 0.0, %v3116
    %v3118 = vpop.f32.mrb[0].mxu0
    %3119 = vmatprep.mubr.bf16.mxu0 %v2704
    %3120 = vmatmul.mubr.bf16.gmra.mrb[0].mxu0 %v2406
    %v3121 = vpop.f32.mrb[0].mxu0
    %v3122 = vadd.f32 0.0, %v3121
    %v3123 = vpop.f32.mrb[0].mxu0
    %v3124 = vpop.f32.mrb[0].mxu0
    %v3125 = vadd.f32 0.0, %v3124
    %v3126 = vpop.f32.mrb[0].mxu0
    %3127 = vmatprep.mubr.bf16.mxu0 %v2707
    %3128 = vmatmul.mubr.bf16.gmra.mrb[0].mxu0 %v2408
    %v3129 = vpop.f32.mrb[0].mxu0
    %v3130 = vadd.f32 0.0, %v3129
    %v3131 = vpop.f32.mrb[0].mxu0
    %v3132 = vpop.f32.mrb[0].mxu0
    %v3133 = vadd.f32 0.0, %v3132
    %v3134 = vpop.f32.mrb[0].mxu0
    %3135 = vmatprep.mubr.bf16.mxu0 %v2710
    %3136 = vmatmul.mubr.bf16.gmra.mrb[0].mxu0 %v2410
    %v3137 = vpop.f32.mrb[0].mxu0
    %v3138 = vadd.f32 0.0, %v3137
    %v3139 = vpop.f32.mrb[0].mxu0
    %v3140 = vpop.f32.mrb[0].mxu0
    %v3141 = vadd.f32 0.0, %v3140
    %v3142 = vpop.f32.mrb[0].mxu0
    %3143 = vmatprep.mubr.bf16.mxu0 %v2713
    %3144 = vmatmul.mubr.bf16.gmra.mrb[0].mxu0 %v2412
    %v3145 = vpop.f32.mrb[0].mxu0
    %v3146 = vadd.f32 0.0, %v3145
    %v3147 = vpop.f32.mrb[0].mxu0
    %v3148 = vpop.f32.mrb[0].mxu0
    %v3149 = vadd.f32 0.0, %v3148
    %v3150 = vpop.f32.mrb[0].mxu0
    %3151 = vmatprep.mubr.bf16.mxu0 %v2716
    %3152 = vmatmul.mubr.bf16.gmra.mrb[0].mxu0 %v2414
    %v3153 = vpop.f32.mrb[0].mxu0
    %v3154 = vadd.f32 0.0, %v3153
    %v3155 = vpop.f32.mrb[0].mxu0
    %v3156 = vpop.f32.mrb[0].mxu0
    %v3157 = vadd.f32 0.0, %v3156
    %v3158 = vpop.f32.mrb[0].mxu0
    %3159 = vmatprep.mubr.bf16.mxu0 %v2719
    %3160 = vmatmul.mubr.bf16.gmra.mrb[0].mxu0 %v2416
    %v3161 = vpop.f32.mrb[0].mxu0
    %v3162 = vadd.f32 0.0, %v3161
    %v3163 = vpop.f32.mrb[0].mxu0
    %v3164 = vpop.f32.mrb[0].mxu0
    %v3165 = vadd.f32 0.0, %v3164
    %v3166 = vpop.f32.mrb[0].mxu0
    %3167 = vmatprep.mubr.bf16.mxu0 %v2722
    %3168 = vmatmul.mubr.bf16.gmra.mrb[0].mxu0 %v2418
    %v3169 = vpop.f32.mrb[0].mxu0
    %v3170 = vadd.f32 0.0, %v3169
    %v3171 = vpop.f32.mrb[0].mxu0
    %v3172 = vpop.f32.mrb[0].mxu0
    %v3173 = vadd.f32 0.0, %v3172
    %v3174 = vpop.f32.mrb[0].mxu0
    %3175 = vmatprep.mubr.bf16.mxu0 %v2725
    %3176 = vmatmul.mubr.bf16.gmra.mrb[0].mxu0 %v2420
    %v3177 = vpop.f32.mrb[0].mxu0
    %v3178 = vadd.f32 0.0, %v3177
    %v3179 = vpop.f32.mrb[0].mxu0
    %v3180 = vpop.f32.mrb[0].mxu0
    %v3181 = vadd.f32 0.0, %v3180
    %v3182 = vpop.f32.mrb[0].mxu0
    %3183 = vmatprep.mubr.bf16.mxu0 %v2728
    %3184 = vmatmul.mubr.bf16.gmra.mrb[0].mxu0 %v2422
    %v3185 = vpop.f32.mrb[0].mxu0
    %v3186 = vadd.f32 0.0, %v3185
    %v3187 = vpop.f32.mrb[0].mxu0
    %v3188 = vpop.f32.mrb[0].mxu0
    %v3189 = vadd.f32 0.0, %v3188
    %v3190 = vpop.f32.mrb[0].mxu0
    %3191 = vmatprep.mubr.bf16.mxu0 %v2731
    %3192 = vmatmul.mubr.bf16.gmra.mrb[0].mxu0 %v2424
    %v3193 = vpop.f32.mrb[0].mxu0
    %v3194 = vadd.f32 0.0, %v3193
    %v3195 = vpop.f32.mrb[0].mxu0
    %v3196 = vpop.f32.mrb[0].mxu0
    %v3197 = vadd.f32 0.0, %v3196
    %v3198 = vpop.f32.mrb[0].mxu0
    %3199 = vmatprep.mubr.bf16.mxu0 %v2734
    %3200 = vmatmul.mubr.bf16.gmra.mrb[0].mxu0 %v2426
    %v3201 = vpop.f32.mrb[0].mxu0
    %v3202 = vadd.f32 0.0, %v3201
    %v3203 = vpop.f32.mrb[0].mxu0
    %v3204 = vpop.f32.mrb[0].mxu0
    %v3205 = vadd.f32 0.0, %v3204
    %v3206 = vpop.f32.mrb[0].mxu0
    %3207 = vmatprep.mubr.bf16.mxu0 %v2737
    %3208 = vmatmul.mubr.bf16.gmra.mrb[0].mxu0 %v2428
    %v3209 = vpop.f32.mrb[0].mxu0
    %v3210 = vadd.f32 0.0, %v3209
    %v3211 = vpop.f32.mrb[0].mxu0
    %v3212 = vpop.f32.mrb[0].mxu0
    %v3213 = vadd.f32 0.0, %v3212
    %v3214 = vpop.f32.mrb[0].mxu0
    %3215 = vmatprep.mubr.bf16.mxu0 %v2740
    %3216 = vmatmul.mubr.bf16.gmra.mrb[0].mxu0 %v2430
    %v3217 = vpop.f32.mrb[0].mxu0
    %v3218 = vadd.f32 0.0, %v3217
    %v3219 = vpop.f32.mrb[0].mxu0
    %v3220 = vpop.f32.mrb[0].mxu0
    %v3221 = vadd.f32 0.0, %v3220
    %v3222 = vpop.f32.mrb[0].mxu0
    %3223 = vmatprep.mubr.bf16.mxu0 %v2743
    %3224 = vmatmul.mubr.bf16.gmra.mrb[0].mxu0 %v2432
    %v3225 = vpop.f32.mrb[0].mxu0
    %v3226 = vadd.f32 0.0, %v3225
    %v3227 = vpop.f32.mrb[0].mxu0
    %v3228 = vpop.f32.mrb[0].mxu0
    %v3229 = vadd.f32 0.0, %v3228
    %v3230 = vpop.f32.mrb[0].mxu0
    %3231 = vmatprep.mubr.bf16.mxu0 %v2746
    %3232 = vmatmul.mubr.bf16.gmra.mrb[0].mxu0 %v2434
    %v3233 = vpop.f32.mrb[0].mxu0
    %v3234 = vadd.f32 0.0, %v3233
    %v3235 = vpop.f32.mrb[0].mxu0
    %v3236 = vpop.f32.mrb[0].mxu0
    %v3237 = vadd.f32 0.0, %v3236
    %v3238 = vpop.f32.mrb[0].mxu0
    %3239 = vmatprep.mubr.bf16.mxu0 %v2749
    %3240 = vmatmul.mubr.bf16.gmra.mrb[0].mxu0 %v2436
    %v3241 = vpop.f32.mrb[0].mxu0
    %v3242 = vadd.f32 0.0, %v3241
    %v3243 = vpop.f32.mrb[0].mxu0
    %v3244 = vpop.f32.mrb[0].mxu0
    %v3245 = vadd.f32 0.0, %v3244
    %v3246 = vpop.f32.mrb[0].mxu0
    %3247 = vmatprep.mubr.bf16.mxu0 %v2752
    %3248 = vmatmul.mubr.bf16.gmra.mrb[0].mxu0 %v2438
    %v3249 = vpop.f32.mrb[0].mxu0
    %v3250 = vadd.f32 0.0, %v3249
    %v3251 = vpop.f32.mrb[0].mxu0
    %v3252 = vpop.f32.mrb[0].mxu0
    %v3253 = vadd.f32 0.0, %v3252
    %v3254 = vpop.f32.mrb[0].mxu0
    %3255 = vmatprep.mubr.bf16.mxu0 %v2755
    %3256 = vmatmul.mubr.bf16.gmra.mrb[0].mxu0 %v2440
    %v3257 = vpop.f32.mrb[0].mxu0
    %v3258 = vadd.f32 0.0, %v3257
    %v3259 = vpop.f32.mrb[0].mxu0
    %v3260 = vpop.f32.mrb[0].mxu0
    %v3261 = vadd.f32 0.0, %v3260
    %v3262 = vpop.f32.mrb[0].mxu0
    %3263 = vmatprep.mubr.bf16.mxu0 %v2758
    %3264 = vmatmul.mubr.bf16.gmra.mrb[0].mxu0 %v2442
    %v3265 = vpop.f32.mrb[0].mxu0
    %v3266 = vadd.f32 0.0, %v3265
    %v3267 = vpop.f32.mrb[0].mxu0
    %v3268 = vpop.f32.mrb[0].mxu0
    %v3269 = vadd.f32 0.0, %v3268
    %v3270 = vpop.f32.mrb[0].mxu0
    %3271 = vmatprep.mubr.bf16.mxu0 %v2761
    %3272 = vmatmul.mubr.bf16.gmra.mrb[0].mxu0 %v2444
    %v3273 = vpop.f32.mrb[0].mxu0
    %v3274 = vadd.f32 0.0, %v3273
    %v3275 = vpop.f32.mrb[0].mxu0
    %v3276 = vpop.f32.mrb[0].mxu0
    %v3277 = vadd.f32 0.0, %v3276
    %v3278 = vpop.f32.mrb[0].mxu0
    %3279 = vmatprep.mubr.bf16.mxu0 %v2764
    %3280 = vmatmul.mubr.bf16.gmra.mrb[0].mxu0 %v2446
    %v3281 = vpop.f32.mrb[0].mxu0
    %v3282 = vadd.f32 0.0, %v3281
    %v3283 = vpop.f32.mrb[0].mxu0
    %v3284 = vpop.f32.mrb[0].mxu0
    %v3285 = vadd.f32 0.0, %v3284
    %v3286 = vpop.f32.mrb[0].mxu0
    %3287 = vmatprep.mubr.bf16.mxu0 %v2767
    %3288 = vmatmul.mubr.bf16.gmra.mrb[0].mxu0 %v2448
    %v3289 = vpop.f32.mrb[0].mxu0
    %v3290 = vadd.f32 0.0, %v3289
    %v3291 = vpop.f32.mrb[0].mxu0
    %v3292 = vpop.f32.mrb[0].mxu0
    %v3293 = vadd.f32 0.0, %v3292
    %v3294 = vpop.f32.mrb[0].mxu0
    %3295 = vmatprep.mubr.bf16.mxu0 %v2770
    %3296 = vmatmul.mubr.bf16.gmra.mrb[0].mxu0 %v2450
    %v3297 = vpop.f32.mrb[0].mxu0
    %v3298 = vadd.f32 0.0, %v3297
    %v3299 = vpop.f32.mrb[0].mxu0
    %v3300 = vpop.f32.mrb[0].mxu0
    %v3301 = vadd.f32 0.0, %v3300
    %v3302 = vpop.f32.mrb[0].mxu0
    %3303 = vmatprep.mubr.bf16.mxu0 %v2773
    %3304 = vmatmul.mubr.bf16.gmra.mrb[0].mxu0 %v2452
    %v3305 = vpop.f32.mrb[0].mxu0
    %v3306 = vadd.f32 0.0, %v3305
    %v3307 = vpop.f32.mrb[0].mxu0
    %v3308 = vpop.f32.mrb[0].mxu0
    %v3309 = vadd.f32 0.0, %v3308
    %v3310 = vpop.f32.mrb[0].mxu0
    %3311 = vmatprep.mubr.bf16.mxu0 %v2776
    %3312 = vmatmul.mubr.bf16.gmra.mrb[0].mxu0 %v2454
    %v3313 = vpop.f32.mrb[0].mxu0
    %v3314 = vadd.f32 0.0, %v3313
    %v3315 = vpop.f32.mrb[0].mxu0
    %v3316 = vpop.f32.mrb[0].mxu0
    %v3317 = vadd.f32 0.0, %v3316
    %v3318 = vpop.f32.mrb[0].mxu0
    %3319 = vmatprep.mubr.bf16.mxu0 %v2779
    %3320 = vmatmul.mubr.bf16.gmra.mrb[0].mxu0 %v2456
    %v3321 = vpop.f32.mrb[0].mxu0
    %v3322 = vadd.f32 0.0, %v3321
    %v3323 = vpop.f32.mrb[0].mxu0
    %v3324 = vpop.f32.mrb[0].mxu0
    %v3325 = vadd.f32 0.0, %v3324
    %v3326 = vpop.f32.mrb[0].mxu0
    %3327 = vmatprep.mubr.bf16.mxu0 %v2782
    %3328 = vmatmul.mubr.bf16.gmra.mrb[0].mxu0 %v2458
    %v3329 = vpop.f32.mrb[0].mxu0
    %v3330 = vadd.f32 0.0, %v3329
    %v3331 = vpop.f32.mrb[0].mxu0
    %v3332 = vpop.f32.mrb[0].mxu0
    %v3333 = vadd.f32 0.0, %v3332
    %v3334 = vpop.f32.mrb[0].mxu0
    %3335 = vmatprep.mubr.bf16.mxu0 %v2785
    %3336 = vmatmul.mubr.bf16.gmra.mrb[0].mxu0 %v2460
    %v3337 = vpop.f32.mrb[0].mxu0
    %v3338 = vadd.f32 0.0, %v3337
    %v3339 = vpop.f32.mrb[0].mxu0
    %v3340 = vpop.f32.mrb[0].mxu0
    %v3341 = vadd.f32 0.0, %v3340
    %v3342 = vpop.f32.mrb[0].mxu0
    %3343 = vmatprep.mubr.bf16.mxu0 %v2788
    %3344 = vmatmul.mubr.bf16.gmra.mrb[0].mxu0 %v2462
    %v3345 = vpop.f32.mrb[0].mxu0
    %v3346 = vadd.f32 0.0, %v3345
    %v3347 = vpop.f32.mrb[0].mxu0
    %v3348 = vpop.f32.mrb[0].mxu0
    %v3349 = vadd.f32 0.0, %v3348
    %v3350 = vpop.f32.mrb[0].mxu0
    %3351 = vmatprep.mubr.bf16.mxu0 %v2791
    %3352 = vmatmul.mubr.bf16.gmra.mrb[0].mxu0 %v2464
    %v3353 = vpop.f32.mrb[0].mxu0
    %v3354 = vadd.f32 0.0, %v3353
    %v3355 = vpop.f32.mrb[0].mxu0
    %v3356 = vpop.f32.mrb[0].mxu0
    %v3357 = vadd.f32 0.0, %v3356
    %v3358 = vpop.f32.mrb[0].mxu0
    %3359 = vmatprep.mubr.bf16.mxu0 %v2794
    %3360 = vmatmul.mubr.bf16.gmra.mrb[0].mxu0 %v2466
    %v3361 = vpop.f32.mrb[0].mxu0
    %v3362 = vadd.f32 0.0, %v3361
    %v3363 = vpop.f32.mrb[0].mxu0
    %v3364 = vpop.f32.mrb[0].mxu0
    %v3365 = vadd.f32 0.0, %v3364
    %v3366 = vpop.f32.mrb[0].mxu0
    %3367 = vmatprep.mubr.bf16.mxu0 %v2797
    %3368 = vmatmul.mubr.bf16.gmra.mrb[0].mxu0 %v2468
    %v3369 = vpop.f32.mrb[0].mxu0
    %v3370 = vadd.f32 0.0, %v3369
    %v3371 = vpop.f32.mrb[0].mxu0
    %v3372 = vpop.f32.mrb[0].mxu0
    %v3373 = vadd.f32 0.0, %v3372
    %v3374 = vpop.f32.mrb[0].mxu0
    %3375 = vmatprep.mubr.bf16.mxu0 %v2800
    %3376 = vmatmul.mubr.bf16.gmra.mrb[0].mxu0 %v2470
    %v3377 = vpop.f32.mrb[0].mxu0
    %v3378 = vadd.f32 0.0, %v3377
    %v3379 = vpop.f32.mrb[0].mxu0
    %v3380 = vpop.f32.mrb[0].mxu0
    %v3381 = vadd.f32 0.0, %v3380
    %v3382 = vpop.f32.mrb[0].mxu0
    %3383 = vmatprep.mubr.bf16.mxu0 %v2803
    %3384 = vmatmul.mubr.bf16.gmra.mrb[0].mxu0 %v2472
    %v3385 = vpop.f32.mrb[0].mxu0
    %v3386 = vadd.f32 0.0, %v3385
    %v3387 = vpop.f32.mrb[0].mxu0
    %v3388 = vpop.f32.mrb[0].mxu0
    %v3389 = vadd.f32 0.0, %v3388
    %v3390 = vpop.f32.mrb[0].mxu0
    %3391 = vmatprep.mubr.bf16.mxu0 %v2806
    %3392 = vmatmul.mubr.bf16.gmra.mrb[0].mxu0 %v2474
    %v3393 = vpop.f32.mrb[0].mxu0
    %v3394 = vadd.f32 0.0, %v3393
    %v3395 = vpop.f32.mrb[0].mxu0
    %v3396 = vpop.f32.mrb[0].mxu0
    %v3397 = vadd.f32 0.0, %v3396
    %v3398 = vpop.f32.mrb[0].mxu0
    %3399 = vmatprep.mubr.bf16.mxu0 %v2809
    %3400 = vmatmul.mubr.bf16.gmra.mrb[0].mxu0 %v2476
    %v3401 = vpop.f32.mrb[0].mxu0
    %v3402 = vadd.f32 0.0, %v3401
    %v3403 = vpop.f32.mrb[0].mxu0
    %v3404 = vpop.f32.mrb[0].mxu0
    %v3405 = vadd.f32 0.0, %v3404
    %v3406 = vpop.f32.mrb[0].mxu0
    %3407 = vmatprep.mubr.bf16.mxu0 %v2812
    %3408 = vmatmul.mubr.bf16.gmra.mrb[0].mxu0 %v2478
    %v3409 = vpop.f32.mrb[0].mxu0
    %v3410 = vadd.f32 0.0, %v3409
    %v3411 = vpop.f32.mrb[0].mxu0
    %v3412 = vpop.f32.mrb[0].mxu0
    %v3413 = vadd.f32 0.0, %v3412
    %v3414 = vpop.f32.mrb[0].mxu0
    %3415 = vmatprep.mubr.bf16.mxu0 %v2815
    %3416 = vmatmul.mubr.bf16.gmra.mrb[0].mxu0 %v2480
    %v3417 = vpop.f32.mrb[0].mxu0
    %v3418 = vadd.f32 0.0, %v3417
    %v3419 = vpop.f32.mrb[0].mxu0
    %v3420 = vpop.f32.mrb[0].mxu0
    %v3421 = vadd.f32 0.0, %v3420
    %v3422 = vpop.f32.mrb[0].mxu0
    %3423 = vmatprep.mubr.bf16.mxu0 %v2818
    %3424 = vmatmul.mubr.bf16.gmra.mrb[0].mxu0 %v2482
    %v3425 = vpop.f32.mrb[0].mxu0
    %v3426 = vadd.f32 0.0, %v3425
    %v3427 = vpop.f32.mrb[0].mxu0
    %v3428 = vpop.f32.mrb[0].mxu0
    %v3429 = vadd.f32 0.0, %v3428
    %v3430 = vpop.f32.mrb[0].mxu0
    %3431 = vmatprep.mubr.bf16.mxu0 %v2821
    %3432 = vmatmul.mubr.bf16.gmra.mrb[0].mxu0 %v2484
    %v3433 = vpop.f32.mrb[0].mxu0
    %v3434 = vadd.f32 0.0, %v3433
    %v3435 = vpop.f32.mrb[0].mxu0
    %v3436 = vpop.f32.mrb[0].mxu0
    %v3437 = vadd.f32 0.0, %v3436
    %v3438 = vpop.f32.mrb[0].mxu0
    %3439 = vmatprep.mubr.bf16.mxu0 %v2824
    %3440 = vmatmul.mubr.bf16.gmra.mrb[0].mxu0 %v2486
    %v3441 = vpop.f32.mrb[0].mxu0
    %v3442 = vadd.f32 0.0, %v3441
    %v3443 = vpop.f32.mrb[0].mxu0
    %v3444 = vpop.f32.mrb[0].mxu0
    %v3445 = vadd.f32 0.0, %v3444
    %v3446 = vpop.f32.mrb[0].mxu0
    %3447 = vmatprep.mubr.bf16.mxu0 %v2827
    %3448 = vmatmul.mubr.bf16.gmra.mrb[0].mxu0 %v2488
    %v3449 = vpop.f32.mrb[0].mxu0
    %v3450 = vadd.f32 0.0, %v3449
    %v3451 = vpop.f32.mrb[0].mxu0
    %v3452 = vpop.f32.mrb[0].mxu0
    %v3453 = vadd.f32 0.0, %v3452
    %v3454 = vpop.f32.mrb[0].mxu0
    %3455 = vmatprep.mubr.bf16.mxu0 %v2830
    %3456 = vmatmul.mubr.bf16.gmra.mrb[0].mxu0 %v2490
    %v3457 = vpop.f32.mrb[0].mxu0
    %v3458 = vadd.f32 0.0, %v3457
    %v3459 = vpop.f32.mrb[0].mxu0
    %v3460 = vpop.f32.mrb[0].mxu0
    %v3461 = vadd.f32 0.0, %v3460
    %v3462 = vpop.f32.mrb[0].mxu0
    %3463 = vmatprep.mubr.bf16.mxu0 %v2833
    %3464 = vmatmul.mubr.bf16.gmra.mrb[0].mxu0 %v2492
    %v3465 = vpop.f32.mrb[0].mxu0
    %v3466 = vadd.f32 0.0, %v3465
    %v3467 = vpop.f32.mrb[0].mxu0
    %v3468 = vpop.f32.mrb[0].mxu0
    %v3469 = vadd.f32 0.0, %v3468
    %v3470 = vpop.f32.mrb[0].mxu0
    %3471 = vmatprep.mubr.bf16.mxu0 %v2836
    %3472 = vmatmul.mubr.bf16.gmra.mrb[0].mxu0 %v2494
    %v3473 = vpop.f32.mrb[0].mxu0
    %v3474 = vadd.f32 0.0, %v3473
    %v3475 = vpop.f32.mrb[0].mxu0
    %v3476 = vpop.f32.mrb[0].mxu0
    %v3477 = vadd.f32 0.0, %v3476
    %v3478 = vpop.f32.mrb[0].mxu0
    %3479 = vmatprep.mubr.bf16.mxu0 %v2839
    %3480 = vmatmul.mubr.bf16.gmra.mrb[0].mxu0 %v2496
    %v3481 = vpop.f32.mrb[0].mxu0
    %v3482 = vadd.f32 0.0, %v3481
    %v3483 = vpop.f32.mrb[0].mxu0
    %v3484 = vpop.f32.mrb[0].mxu0
    %v3485 = vadd.f32 0.0, %v3484
    %v3486 = vpop.f32.mrb[0].mxu0
    %3487 = vmatprep.mubr.bf16.mxu0 %v2842
    %3488 = vmatmul.mubr.bf16.gmra.mrb[0].mxu0 %v2498
    %v3489 = vpop.f32.mrb[0].mxu0
    %v3490 = vadd.f32 0.0, %v3489
    %v3491 = vpop.f32.mrb[0].mxu0
    %v3492 = vpop.f32.mrb[0].mxu0
    %v3493 = vadd.f32 0.0, %v3492
    %v3494 = vpop.f32.mrb[0].mxu0
    %3495 = vmatprep.mubr.bf16.mxu0 %v2845
    %3496 = vmatmul.mubr.bf16.gmra.mrb[0].mxu0 %v2500
    %v3497 = vpop.f32.mrb[0].mxu0
    %v3498 = vadd.f32 0.0, %v3497
    %v3499 = vpop.f32.mrb[0].mxu0
    %v3500 = vpop.f32.mrb[0].mxu0
    %v3501 = vadd.f32 0.0, %v3500
    %v3502 = vpop.f32.mrb[0].mxu0
    %3503 = vmatprep.mubr.bf16.mxu0 %v2848
    %3504 = vmatmul.mubr.bf16.gmra.mrb[0].mxu0 %v2502
    %v3505 = vpop.f32.mrb[0].mxu0
    %v3506 = vadd.f32 0.0, %v3505
    %v3507 = vpop.f32.mrb[0].mxu0
    %v3508 = vpop.f32.mrb[0].mxu0
    %v3509 = vadd.f32 0.0, %v3508
    %v3510 = vpop.f32.mrb[0].mxu0
    %3511 = vmatprep.mubr.bf16.mxu0 %v2851
    %3512 = vmatmul.mubr.bf16.gmra.mrb[0].mxu0 %v2504
    %v3513 = vpop.f32.mrb[0].mxu0
    %v3514 = vadd.f32 0.0, %v3513
    %v3515 = vpop.f32.mrb[0].mxu0
    %v3516 = vpop.f32.mrb[0].mxu0
    %v3517 = vadd.f32 0.0, %v3516
    %v3518 = vpop.f32.mrb[0].mxu0
    %3519 = vmatprep.mubr.bf16.mxu0 %v2854
    %3520 = vmatmul.mubr.bf16.gmra.mrb[0].mxu0 %v2506
    %v3521 = vpop.f32.mrb[0].mxu0
    %v3522 = vadd.f32 0.0, %v3521
    %v3523 = vpop.f32.mrb[0].mxu0
    %v3524 = vpop.f32.mrb[0].mxu0
    %v3525 = vadd.f32 0.0, %v3524
    %v3526 = vpop.f32.mrb[0].mxu0
    %3527 = vmatprep.mubr.bf16.mxu0 %v2857
    %3528 = vmatmul.mubr.bf16.gmra.mrb[0].mxu0 %v2508
    %v3529 = vpop.f32.mrb[0].mxu0
    %v3530 = vadd.f32 0.0, %v3529
    %v3531 = vpop.f32.mrb[0].mxu0
    %v3532 = vpop.f32.mrb[0].mxu0
    %v3533 = vadd.f32 0.0, %v3532
    %v3534 = vpop.f32.mrb[0].mxu0
    %3535 = vmatprep.mubr.bf16.mxu0 %v2860
    %3536 = vmatmul.mubr.bf16.gmra.mrb[0].mxu0 %v2510
    %v3537 = vpop.f32.mrb[0].mxu0
    %v3538 = vadd.f32 0.0, %v3537
    %v3539 = vpop.f32.mrb[0].mxu0
    %v3540 = vpop.f32.mrb[0].mxu0
    %v3541 = vadd.f32 0.0, %v3540
    %v3542 = vpop.f32.mrb[0].mxu0
    %3543 = vmatprep.mubr.bf16.mxu0 %v2863
    %3544 = vmatmul.mubr.bf16.gmra.mrb[0].mxu0 %v2512
    %v3545 = vpop.f32.mrb[0].mxu0
    %v3546 = vadd.f32 0.0, %v3545
    %v3547 = vpop.f32.mrb[0].mxu0
    %v3548 = vpop.f32.mrb[0].mxu0
    %v3549 = vadd.f32 0.0, %v3548
    %v3550 = vpop.f32.mrb[0].mxu0
    %3551 = vmatprep.mubr.bf16.mxu0 %v2866
    %3552 = vmatmul.mubr.bf16.gmra.mrb[0].mxu0 %v2514
    %v3553 = vpop.f32.mrb[0].mxu0
    %v3554 = vadd.f32 0.0, %v3553
    %v3555 = vpop.f32.mrb[0].mxu0
    %v3556 = vpop.f32.mrb[0].mxu0
    %v3557 = vadd.f32 0.0, %v3556
    %v3558 = vpop.f32.mrb[0].mxu0
    %3559 = vmatprep.mubr.bf16.mxu0 %v2869
    %3560 = vmatmul.mubr.bf16.gmra.mrb[0].mxu0 %v2516
    %v3561 = vpop.f32.mrb[0].mxu0
    %v3562 = vadd.f32 0.0, %v3561
    %v3563 = vpop.f32.mrb[0].mxu0
    %v3564 = vpop.f32.mrb[0].mxu0
    %v3565 = vadd.f32 0.0, %v3564
    %v3566 = vpop.f32.mrb[0].mxu0
    %3567 = vmatprep.mubr.bf16.mxu0 %v2872
    %3568 = vmatmul.mubr.bf16.gmra.mrb[0].mxu0 %v2518
    %v3569 = vpop.f32.mrb[0].mxu0
    %v3570 = vadd.f32 0.0, %v3569
    %v3571 = vpop.f32.mrb[0].mxu0
    %v3572 = vpop.f32.mrb[0].mxu0
    %v3573 = vadd.f32 0.0, %v3572
    %v3574 = vpop.f32.mrb[0].mxu0
    %3575 = vmatprep.mubr.bf16.mxu0 %v2875
    %3576 = vmatmul.mubr.bf16.gmra.mrb[0].mxu0 %v2520
    %v3577 = vpop.f32.mrb[0].mxu0
    %v3578 = vadd.f32 0.0, %v3577
    %v3579 = vpop.f32.mrb[0].mxu0
    %v3580 = vpop.f32.mrb[0].mxu0
    %v3581 = vadd.f32 0.0, %v3580
    %v3582 = vpop.f32.mrb[0].mxu0
    %3583 = vmatprep.mubr.bf16.mxu0 %v2878
    %3584 = vmatmul.mubr.bf16.gmra.mrb[0].mxu0 %v2522
    %v3585 = vpop.f32.mrb[0].mxu0
    %v3586 = vadd.f32 0.0, %v3585
    %v3587 = vpop.f32.mrb[0].mxu0
    %v3588 = vpop.f32.mrb[0].mxu0
    %v3589 = vadd.f32 0.0, %v3588
    %v3590 = vpop.f32.mrb[0].mxu0
    %3591 = vmatprep.mubr.bf16.mxu0 %v2881
    %3592 = vmatmul.mubr.bf16.gmra.mrb[0].mxu0 %v2524
    %v3593 = vpop.f32.mrb[0].mxu0
    %v3594 = vadd.f32 0.0, %v3593
    %v3595 = vpop.f32.mrb[0].mxu0
    %v3596 = vpop.f32.mrb[0].mxu0
    %v3597 = vadd.f32 0.0, %v3596
    %v3598 = vpop.f32.mrb[0].mxu0
    %3599 = vmatprep.mubr.bf16.mxu0 %v2884
    %3600 = vmatmul.mubr.bf16.gmra.mrb[0].mxu0 %v2526
    %v3601 = vpop.f32.mrb[0].mxu0
    %v3602 = vadd.f32 0.0, %v3601
    %v3603 = vpop.f32.mrb[0].mxu0
    %v3604 = vpop.f32.mrb[0].mxu0
    %v3605 = vadd.f32 0.0, %v3604
    %v3606 = vpop.f32.mrb[0].mxu0
    %3607 = vmatprep.mubr.bf16.mxu0 %v2887
    %3608 = vmatmul.mubr.bf16.gmra.mrb[0].mxu0 %v2528
    %v3609 = vpop.f32.mrb[0].mxu0
    %v3610 = vadd.f32 0.0, %v3609
    %v3611 = vpop.f32.mrb[0].mxu0
    %v3612 = vpop.f32.mrb[0].mxu0
    %v3613 = vadd.f32 0.0, %v3612
    %v3614 = vpop.f32.mrb[0].mxu0
    %3615 = vmatprep.mubr.bf16.mxu0 %v2890
    %3616 = vmatmul.mubr.bf16.gmra.mrb[0].mxu0 %v2530
    %v3617 = vpop.f32.mrb[0].mxu0
    %v3618 = vadd.f32 0.0, %v3617
    %v3619 = vpop.f32.mrb[0].mxu0
    %v3620 = vpop.f32.mrb[0].mxu0
    %v3621 = vadd.f32 0.0, %v3620
    %v3622 = vpop.f32.mrb[0].mxu0
    %3623 = vmatprep.mubr.bf16.mxu0 %v2893
    %3624 = vmatmul.mubr.bf16.gmra.mrb[0].mxu0 %v2532
    %v3625 = vpop.f32.mrb[0].mxu0
    %v3626 = vadd.f32 0.0, %v3625
    %v3627 = vpop.f32.mrb[0].mxu0
    %v3628 = vpop.f32.mrb[0].mxu0
    %v3629 = vadd.f32 0.0, %v3628
    %v3630 = vpop.f32.mrb[0].mxu0
    %3631 = vmatprep.mubr.bf16.mxu0 %v2896
    %3632 = vmatmul.mubr.bf16.gmra.mrb[0].mxu0 %v2534
    %v3633 = vpop.f32.mrb[0].mxu0
    %v3634 = vadd.f32 0.0, %v3633
    %v3635 = vpop.f32.mrb[0].mxu0
    %v3636 = vpop.f32.mrb[0].mxu0
    %v3637 = vadd.f32 0.0, %v3636
    %v3638 = vpop.f32.mrb[0].mxu0
    %3639 = vmatprep.mubr.bf16.mxu0 %v2899
    %3640 = vmatmul.mubr.bf16.gmra.mrb[0].mxu0 %v2536
    %v3641 = vpop.f32.mrb[0].mxu0
    %v3642 = vadd.f32 0.0, %v3641
    %v3643 = vpop.f32.mrb[0].mxu0
    %v3644 = vpop.f32.mrb[0].mxu0
    %v3645 = vadd.f32 0.0, %v3644
    %v3646 = vpop.f32.mrb[0].mxu0
    %3647 = vmatprep.mubr.bf16.mxu0 %v2902
    %3648 = vmatmul.mubr.bf16.gmra.mrb[0].mxu0 %v2538
    %v3649 = vpop.f32.mrb[0].mxu0
    %v3650 = vadd.f32 0.0, %v3649
    %v3651 = vpop.f32.mrb[0].mxu0
    %v3652 = vpop.f32.mrb[0].mxu0
    %v3653 = vadd.f32 0.0, %v3652
    %v3654 = vpop.f32.mrb[0].mxu0
    %3655 = vmatprep.mubr.bf16.mxu0 %v2905
    %3656 = vmatmul.mubr.bf16.gmra.mrb[0].mxu0 %v2540
    %v3657 = vpop.f32.mrb[0].mxu0
    %v3658 = vadd.f32 0.0, %v3657
    %v3659 = vpop.f32.mrb[0].mxu0
    %v3660 = vpop.f32.mrb[0].mxu0
    %v3661 = vadd.f32 0.0, %v3660
    %v3662 = vpop.f32.mrb[0].mxu0
    %3663 = vmatprep.mubr.bf16.mxu0 %v2908
    %3664 = vmatmul.mubr.bf16.gmra.mrb[0].mxu0 %v2542
    %v3665 = vpop.f32.mrb[0].mxu0
    %v3666 = vadd.f32 0.0, %v3665
    %v3667 = vpop.f32.mrb[0].mxu0
    %v3668 = vpop.f32.mrb[0].mxu0
    %v3669 = vadd.f32 0.0, %v3668
    %v3670 = vpop.f32.mrb[0].mxu0
    %3671 = vmatprep.mubr.bf16.mxu0 %v2911
    %3672 = vmatmul.mubr.bf16.gmra.mrb[0].mxu0 %v2544
    %v3673 = vpop.f32.mrb[0].mxu0
    %v3674 = vadd.f32 0.0, %v3673
    %v3675 = vpop.f32.mrb[0].mxu0
    %v3676 = vpop.f32.mrb[0].mxu0
    %v3677 = vadd.f32 0.0, %v3676
    %v3678 = vpop.f32.mrb[0].mxu0
    %3679 = vmatprep.mubr.bf16.mxu0 %v2914
    %3680 = vmatmul.mubr.bf16.gmra.mrb[0].mxu0 %v2546
    %v3681 = vpop.f32.mrb[0].mxu0
    %v3682 = vadd.f32 0.0, %v3681
    %v3683 = vpop.f32.mrb[0].mxu0
    %v3684 = vpop.f32.mrb[0].mxu0
    %v3685 = vadd.f32 0.0, %v3684
    %v3686 = vpop.f32.mrb[0].mxu0
    %3687 = vdwg.mxu0
    %v3688 = vpack.c.bf16 %v2957, %v2954
    %v3689 = vpack.c.bf16 %v2965, %v2962
    %v3690 = vpack.c.bf16 %v2973, %v2970
    %v3691 = vpack.c.bf16 %v2981, %v2978
    %v3692 = vpack.c.bf16 %v2989, %v2986
    %v3693 = vpack.c.bf16 %v2997, %v2994
    %v3694 = vpack.c.bf16 %v3005, %v3002
    %v3695 = vpack.c.bf16 %v3013, %v3010
    %v3696 = vpack.c.bf16 %v3021, %v3018
    %v3697 = vpack.c.bf16 %v3029, %v3026
    %v3698 = vpack.c.bf16 %v3037, %v3034
    %v3699 = vpack.c.bf16 %v3045, %v3042
    %v3700 = vpack.c.bf16 %v3053, %v3050
    %v3701 = vpack.c.bf16 %v3061, %v3058
    %v3702 = vpack.c.bf16 %v3069, %v3066
    %v3703 = vpack.c.bf16 %v3077, %v3074
    %v3704 = vpack.c.bf16 %v3085, %v3082
    %v3705 = vpack.c.bf16 %v3093, %v3090
    %v3706 = vpack.c.bf16 %v3101, %v3098
    %v3707 = vpack.c.bf16 %v3109, %v3106
    %v3708 = vpack.c.bf16 %v3117, %v3114
    %v3709 = vpack.c.bf16 %v3125, %v3122
    %v3710 = vpack.c.bf16 %v3133, %v3130
    %v3711 = vpack.c.bf16 %v3141, %v3138
    %v3712 = vpack.c.bf16 %v3149, %v3146
    %v3713 = vpack.c.bf16 %v3157, %v3154
    %v3714 = vpack.c.bf16 %v3165, %v3162
    %v3715 = vpack.c.bf16 %v3173, %v3170
    %v3716 = vpack.c.bf16 %v3181, %v3178
    %v3717 = vpack.c.bf16 %v3189, %v3186
    %v3718 = vpack.c.bf16 %v3197, %v3194
    %v3719 = vpack.c.bf16 %v3205, %v3202
    %v3720 = vpack.c.bf16 %v3213, %v3210
    %v3721 = vpack.c.bf16 %v3221, %v3218
    %v3722 = vpack.c.bf16 %v3229, %v3226
    %v3723 = vpack.c.bf16 %v3237, %v3234
    %v3724 = vpack.c.bf16 %v3245, %v3242
    %v3725 = vpack.c.bf16 %v3253, %v3250
    %v3726 = vpack.c.bf16 %v3261, %v3258
    %v3727 = vpack.c.bf16 %v3269, %v3266
    %v3728 = vpack.c.bf16 %v3277, %v3274
    %v3729 = vpack.c.bf16 %v3285, %v3282
    %v3730 = vpack.c.bf16 %v3293, %v3290
    %v3731 = vpack.c.bf16 %v3301, %v3298
    %v3732 = vpack.c.bf16 %v3309, %v3306
    %v3733 = vpack.c.bf16 %v3317, %v3314
    %v3734 = vpack.c.bf16 %v3325, %v3322
    %v3735 = vpack.c.bf16 %v3333, %v3330
    %v3736 = vpack.c.bf16 %v3341, %v3338
    %v3737 = vpack.c.bf16 %v3349, %v3346
    %v3738 = vpack.c.bf16 %v3357, %v3354
    %v3739 = vpack.c.bf16 %v3365, %v3362
    %v3740 = vpack.c.bf16 %v3373, %v3370
    %v3741 = vpack.c.bf16 %v3381, %v3378
    %v3742 = vpack.c.bf16 %v3389, %v3386
    %v3743 = vpack.c.bf16 %v3397, %v3394
    %v3744 = vpack.c.bf16 %v3405, %v3402
    %v3745 = vpack.c.bf16 %v3413, %v3410
    %v3746 = vpack.c.bf16 %v3421, %v3418
    %v3747 = vpack.c.bf16 %v3429, %v3426
    %v3748 = vpack.c.bf16 %v3437, %v3434
    %v3749 = vpack.c.bf16 %v3445, %v3442
    %v3750 = vpack.c.bf16 %v3453, %v3450
    %v3751 = vpack.c.bf16 %v3461, %v3458
    %v3752 = vpack.c.bf16 %v3469, %v3466
    %v3753 = vpack.c.bf16 %v3477, %v3474
    %v3754 = vpack.c.bf16 %v3485, %v3482
    %v3755 = vpack.c.bf16 %v3493, %v3490
    %v3756 = vpack.c.bf16 %v3501, %v3498
    %v3757 = vpack.c.bf16 %v3509, %v3506
    %v3758 = vpack.c.bf16 %v3517, %v3514
    %v3759 = vpack.c.bf16 %v3525, %v3522
    %v3760 = vpack.c.bf16 %v3533, %v3530
    %v3761 = vpack.c.bf16 %v3541, %v3538
    %v3762 = vpack.c.bf16 %v3549, %v3546
    %v3763 = vpack.c.bf16 %v3557, %v3554
    %v3764 = vpack.c.bf16 %v3565, %v3562
    %v3765 = vpack.c.bf16 %v3573, %v3570
    %v3766 = vpack.c.bf16 %v3581, %v3578
    %v3767 = vpack.c.bf16 %v3589, %v3586
    %v3768 = vpack.c.bf16 %v3597, %v3594
    %v3769 = vpack.c.bf16 %v3605, %v3602
    %v3770 = vpack.c.bf16 %v3613, %v3610
    %v3771 = vpack.c.bf16 %v3621, %v3618
    %v3772 = vpack.c.bf16 %v3629, %v3626
    %v3773 = vpack.c.bf16 %v3637, %v3634
    %v3774 = vpack.c.bf16 %v3645, %v3642
    %v3775 = vpack.c.bf16 %v3653, %v3650
    %v3776 = vpack.c.bf16 %v3661, %v3658
    %v3777 = vpack.c.bf16 %v3669, %v3666
    %v3778 = vpack.c.bf16 %v3677, %v3674
    %v3779 = vpack.c.bf16 %v3685, %v3682
    %v3780 = vld [vmem:[#allocation3] sm:$0xff]
    %v3781 = vld [vmem:[#allocation3 + $0x8] sm:$0xff]
    %v3782 = vld [vmem:[#allocation3 + $0x10] sm:$0xff]
    %v3783 = vld [vmem:[#allocation3 + $0x18] sm:$0xff]
    %v3784 = vld [vmem:[#allocation3 + $0x20] sm:$0xff]
    %v3785 = vld [vmem:[#allocation3 + $0x28] sm:$0xff]
    %v3786 = vld [vmem:[#allocation3 + $0x30] sm:$0xff]
    %v3787 = vld [vmem:[#allocation3 + $0x38] sm:$0xff]
    %v3788 = vld [vmem:[#allocation3 + $0x40] sm:$0xff]
    %v3789 = vld [vmem:[#allocation3 + $0x48] sm:$0xff]
    %v3790 = vld [vmem:[#allocation3 + $0x50] sm:$0xff]
    %v3791 = vld [vmem:[#allocation3 + $0x58] sm:$0xff]
    %v3792 = vld [vmem:[#allocation3 + $0x60] sm:$0xff]
    %v3793 = vld [vmem:[#allocation3 + $0x68] sm:$0xff]
    %v3794 = vld [vmem:[#allocation3 + $0x70] sm:$0xff]
    %v3795 = vld [vmem:[#allocation3 + $0x78] sm:$0xff]
    %v3796 = vld [vmem:[#allocation3 + $0x80] sm:$0xff]
    %v3797 = vld [vmem:[#allocation3 + $0x88] sm:$0xff]
    %v3798 = vld [vmem:[#allocation3 + $0x90] sm:$0xff]
    %v3799 = vld [vmem:[#allocation3 + $0x98] sm:$0xff]
    %v3800 = vld [vmem:[#allocation3 + $0xa0] sm:$0xff]
    %v3801 = vld [vmem:[#allocation3 + $0xa8] sm:$0xff]
    %v3802 = vld [vmem:[#allocation3 + $0xb0] sm:$0xff]
    %v3803 = vld [vmem:[#allocation3 + $0xb8] sm:$0xff]
    %v3804 = vld [vmem:[#allocation3 + $0xc0] sm:$0xff]
    %v3805 = vld [vmem:[#allocation3 + $0xc8] sm:$0xff]
    %v3806 = vld [vmem:[#allocation3 + $0xd0] sm:$0xff]
    %v3807 = vld [vmem:[#allocation3 + $0xd8] sm:$0xff]
    %v3808 = vld [vmem:[#allocation3 + $0xe0] sm:$0xff]
    %v3809 = vld [vmem:[#allocation3 + $0xe8] sm:$0xff]
    %v3810 = vld [vmem:[#allocation3 + $0xf0] sm:$0xff]
    %v3811 = vld [vmem:[#allocation3 + $0xf8] sm:$0xff]
    %v3812 = vld [vmem:[#allocation3 + $0x100] sm:$0xff]
    %v3813 = vld [vmem:[#allocation3 + $0x108] sm:$0xff]
    %v3814 = vld [vmem:[#allocation3 + $0x110] sm:$0xff]
    %v3815 = vld [vmem:[#allocation3 + $0x118] sm:$0xff]
    %v3816 = vld [vmem:[#allocation3 + $0x120] sm:$0xff]
    %v3817 = vld [vmem:[#allocation3 + $0x128] sm:$0xff]
    %v3818 = vld [vmem:[#allocation3 + $0x130] sm:$0xff]
    %v3819 = vld [vmem:[#allocation3 + $0x138] sm:$0xff]
    %v3820 = vld [vmem:[#allocation3 + $0x140] sm:$0xff]
    %v3821 = vld [vmem:[#allocation3 + $0x148] sm:$0xff]
    %v3822 = vld [vmem:[#allocation3 + $0x150] sm:$0xff]
    %v3823 = vld [vmem:[#allocation3 + $0x158] sm:$0xff]
    %v3824 = vld [vmem:[#allocation3 + $0x160] sm:$0xff]
    %v3825 = vld [vmem:[#allocation3 + $0x168] sm:$0xff]
    %v3826 = vld [vmem:[#allocation3 + $0x170] sm:$0xff]
    %v3827 = vld [vmem:[#allocation3 + $0x178] sm:$0xff]
    %v3828 = vld [vmem:[#allocation3 + $0x180] sm:$0xff]
    %v3829 = vld [vmem:[#allocation3 + $0x188] sm:$0xff]
    %v3830 = vld [vmem:[#allocation3 + $0x190] sm:$0xff]
    %v3831 = vld [vmem:[#allocation3 + $0x198] sm:$0xff]
    %v3832 = vld [vmem:[#allocation3 + $0x1a0] sm:$0xff]
    %v3833 = vld [vmem:[#allocation3 + $0x1a8] sm:$0xff]
    %v3834 = vld [vmem:[#allocation3 + $0x1b0] sm:$0xff]
    %v3835 = vld [vmem:[#allocation3 + $0x1b8] sm:$0xff]
    %v3836 = vld [vmem:[#allocation3 + $0x1c0] sm:$0xff]
    %v3837 = vld [vmem:[#allocation3 + $0x1c8] sm:$0xff]
    %v3838 = vld [vmem:[#allocation3 + $0x1d0] sm:$0xff]
    %v3839 = vld [vmem:[#allocation3 + $0x1d8] sm:$0xff]
    %v3840 = vld [vmem:[#allocation3 + $0x1e0] sm:$0xff]
    %v3841 = vld [vmem:[#allocation3 + $0x1e8] sm:$0xff]
    %v3842 = vld [vmem:[#allocation3 + $0x1f0] sm:$0xff]
    %v3843 = vld [vmem:[#allocation3 + $0x1f8] sm:$0xff]
    %v3844 = vld [vmem:[#allocation3 + $0x200] sm:$0xff]
    %v3845 = vld [vmem:[#allocation3 + $0x208] sm:$0xff]
    %v3846 = vld [vmem:[#allocation3 + $0x210] sm:$0xff]
    %v3847 = vld [vmem:[#allocation3 + $0x218] sm:$0xff]
    %v3848 = vld [vmem:[#allocation3 + $0x220] sm:$0xff]
    %v3849 = vld [vmem:[#allocation3 + $0x228] sm:$0xff]
    %v3850 = vld [vmem:[#allocation3 + $0x230] sm:$0xff]
    %v3851 = vld [vmem:[#allocation3 + $0x238] sm:$0xff]
    %v3852 = vld [vmem:[#allocation3 + $0x240] sm:$0xff]
    %v3853 = vld [vmem:[#allocation3 + $0x248] sm:$0xff]
    %v3854 = vld [vmem:[#allocation3 + $0x250] sm:$0xff]
    %v3855 = vld [vmem:[#allocation3 + $0x258] sm:$0xff]
    %v3856 = vld [vmem:[#allocation3 + $0x260] sm:$0xff]
    %v3857 = vld [vmem:[#allocation3 + $0x268] sm:$0xff]
    %v3858 = vld [vmem:[#allocation3 + $0x270] sm:$0xff]
    %v3859 = vld [vmem:[#allocation3 + $0x278] sm:$0xff]
    %v3860 = vld [vmem:[#allocation3 + $0x280] sm:$0xff]
    %v3861 = vld [vmem:[#allocation3 + $0x288] sm:$0xff]
    %v3862 = vld [vmem:[#allocation3 + $0x290] sm:$0xff]
    %v3863 = vld [vmem:[#allocation3 + $0x298] sm:$0xff]
    %v3864 = vld [vmem:[#allocation3 + $0x2a0] sm:$0xff]
    %v3865 = vld [vmem:[#allocation3 + $0x2a8] sm:$0xff]
    %v3866 = vld [vmem:[#allocation3 + $0x2b0] sm:$0xff]
    %v3867 = vld [vmem:[#allocation3 + $0x2b8] sm:$0xff]
    %v3868 = vld [vmem:[#allocation3 + $0x2c0] sm:$0xff]
    %v3869 = vld [vmem:[#allocation3 + $0x2c8] sm:$0xff]
    %v3870 = vld [vmem:[#allocation3 + $0x2d0] sm:$0xff]
    %v3871 = vld [vmem:[#allocation3 + $0x2d8] sm:$0xff]
    %v3872 = vld [vmem:[#allocation3 + $0x2e0] sm:$0xff]
    %v3873 = vld [vmem:[#allocation3 + $0x2e8] sm:$0xff]
    %v3874 = vld [vmem:[#allocation3 + $0x2f0] sm:$0xff]
    %v3875 = vld [vmem:[#allocation3 + $0x2f8] sm:$0xff]
    %v3876 = vld [vmem:[#allocation3 + $0x300] sm:$0xff]
    %v3877 = vld [vmem:[#allocation3 + $0x308] sm:$0xff]
    %v3878 = vld [vmem:[#allocation3 + $0x310] sm:$0xff]
    %v3879 = vld [vmem:[#allocation3 + $0x318] sm:$0xff]
    %v3880 = vld [vmem:[#allocation3 + $0x320] sm:$0xff]
    %v3881 = vld [vmem:[#allocation3 + $0x328] sm:$0xff]
    %v3882 = vld [vmem:[#allocation3 + $0x330] sm:$0xff]
    %v3883 = vld [vmem:[#allocation3 + $0x338] sm:$0xff]
    %v3884 = vld [vmem:[#allocation3 + $0x340] sm:$0xff]
    %v3885 = vld [vmem:[#allocation3 + $0x348] sm:$0xff]
    %v3886 = vld [vmem:[#allocation3 + $0x350] sm:$0xff]
    %v3887 = vld [vmem:[#allocation3 + $0x358] sm:$0xff]
    %v3888 = vld [vmem:[#allocation3 + $0x360] sm:$0xff]
    %v3889 = vld [vmem:[#allocation3 + $0x368] sm:$0xff]
    %v3890 = vld [vmem:[#allocation3 + $0x370] sm:$0xff]
    %v3891 = vld [vmem:[#allocation3 + $0x378] sm:$0xff]
    %v3892 = vld [vmem:[#allocation3 + $0x380] sm:$0xff]
    %v3893 = vld [vmem:[#allocation3 + $0x388] sm:$0xff]
    %v3894 = vld [vmem:[#allocation3 + $0x390] sm:$0xff]
    %v3895 = vld [vmem:[#allocation3 + $0x398] sm:$0xff]
    %v3896 = vld [vmem:[#allocation3 + $0x3a0] sm:$0xff]
    %v3897 = vld [vmem:[#allocation3 + $0x3a8] sm:$0xff]
    %v3898 = vld [vmem:[#allocation3 + $0x3b0] sm:$0xff]
    %v3899 = vld [vmem:[#allocation3 + $0x3b8] sm:$0xff]
    %v3900 = vld [vmem:[#allocation3 + $0x3c0] sm:$0xff]
    %v3901 = vld [vmem:[#allocation3 + $0x3c8] sm:$0xff]
    %v3902 = vld [vmem:[#allocation3 + $0x3d0] sm:$0xff]
    %v3903 = vld [vmem:[#allocation3 + $0x3d8] sm:$0xff]
    %v3904 = vld [vmem:[#allocation3 + $0x3e0] sm:$0xff]
    %v3905 = vld [vmem:[#allocation3 + $0x3e8] sm:$0xff]
    %v3906 = vld [vmem:[#allocation3 + $0x3f0] sm:$0xff]
    %v3907 = vld [vmem:[#allocation3 + $0x3f8] sm:$0xff]
    %v3908 = vld [vmem:[#allocation3 + $0x400] sm:$0xff]
    %v3909 = vld [vmem:[#allocation3 + $0x408] sm:$0xff]
    %v3910 = vld [vmem:[#allocation3 + $0x410] sm:$0xff]
    %v3911 = vld [vmem:[#allocation3 + $0x418] sm:$0xff]
    %v3912 = vld [vmem:[#allocation3 + $0x420] sm:$0xff]
    %v3913 = vld [vmem:[#allocation3 + $0x428] sm:$0xff]
    %v3914 = vld [vmem:[#allocation3 + $0x430] sm:$0xff]
    %v3915 = vld [vmem:[#allocation3 + $0x438] sm:$0xff]
    %v3916 = vld [vmem:[#allocation3 + $0x440] sm:$0xff]
    %v3917 = vld [vmem:[#allocation3 + $0x448] sm:$0xff]
    %v3918 = vld [vmem:[#allocation3 + $0x450] sm:$0xff]
    %v3919 = vld [vmem:[#allocation3 + $0x458] sm:$0xff]
    %v3920 = vld [vmem:[#allocation3 + $0x460] sm:$0xff]
    %v3921 = vld [vmem:[#allocation3 + $0x468] sm:$0xff]
    %v3922 = vld [vmem:[#allocation3 + $0x470] sm:$0xff]
    %v3923 = vld [vmem:[#allocation3 + $0x478] sm:$0xff]
    %v3924 = vld [vmem:[#allocation3 + $0x480] sm:$0xff]
    %v3925 = vld [vmem:[#allocation3 + $0x488] sm:$0xff]
    %v3926 = vld [vmem:[#allocation3 + $0x490] sm:$0xff]
    %v3927 = vld [vmem:[#allocation3 + $0x498] sm:$0xff]
    %v3928 = vld [vmem:[#allocation3 + $0x4a0] sm:$0xff]
    %v3929 = vld [vmem:[#allocation3 + $0x4a8] sm:$0xff]
    %v3930 = vld [vmem:[#allocation3 + $0x4b0] sm:$0xff]
    %v3931 = vld [vmem:[#allocation3 + $0x4b8] sm:$0xff]
    %v3932 = vld [vmem:[#allocation3 + $0x4c0] sm:$0xff]
    %v3933 = vld [vmem:[#allocation3 + $0x4c8] sm:$0xff]
    %v3934 = vld [vmem:[#allocation3 + $0x4d0] sm:$0xff]
    %v3935 = vld [vmem:[#allocation3 + $0x4d8] sm:$0xff]
    %v3936 = vld [vmem:[#allocation3 + $0x4e0] sm:$0xff]
    %v3937 = vld [vmem:[#allocation3 + $0x4e8] sm:$0xff]
    %v3938 = vld [vmem:[#allocation3 + $0x4f0] sm:$0xff]
    %v3939 = vld [vmem:[#allocation3 + $0x4f8] sm:$0xff]
    %v3940 = vld [vmem:[#allocation3 + $0x500] sm:$0xff]
    %v3941 = vld [vmem:[#allocation3 + $0x508] sm:$0xff]
    %v3942 = vld [vmem:[#allocation3 + $0x510] sm:$0xff]
    %v3943 = vld [vmem:[#allocation3 + $0x518] sm:$0xff]
    %v3944 = vld [vmem:[#allocation3 + $0x520] sm:$0xff]
    %v3945 = vld [vmem:[#allocation3 + $0x528] sm:$0xff]
    %v3946 = vld [vmem:[#allocation3 + $0x530] sm:$0xff]
    %v3947 = vld [vmem:[#allocation3 + $0x538] sm:$0xff]
    %v3948 = vld [vmem:[#allocation3 + $0x540] sm:$0xff]
    %v3949 = vld [vmem:[#allocation3 + $0x548] sm:$0xff]
    %v3950 = vld [vmem:[#allocation3 + $0x550] sm:$0xff]
    %v3951 = vld [vmem:[#allocation3 + $0x558] sm:$0xff]
    %v3952 = vld [vmem:[#allocation3 + $0x560] sm:$0xff]
    %v3953 = vld [vmem:[#allocation3 + $0x568] sm:$0xff]
    %v3954 = vld [vmem:[#allocation3 + $0x570] sm:$0xff]
    %v3955 = vld [vmem:[#allocation3 + $0x578] sm:$0xff]
    %v3956 = vld [vmem:[#allocation3 + $0x580] sm:$0xff]
    %v3957 = vld [vmem:[#allocation3 + $0x588] sm:$0xff]
    %v3958 = vld [vmem:[#allocation3 + $0x590] sm:$0xff]
    %v3959 = vld [vmem:[#allocation3 + $0x598] sm:$0xff]
    %v3960 = vld [vmem:[#allocation3 + $0x5a0] sm:$0xff]
    %v3961 = vld [vmem:[#allocation3 + $0x5a8] sm:$0xff]
    %v3962 = vld [vmem:[#allocation3 + $0x5b0] sm:$0xff]
    %v3963 = vld [vmem:[#allocation3 + $0x5b8] sm:$0xff]
    %v3964 = vld [vmem:[#allocation3 + $0x5c0] sm:$0xff]
    %v3965 = vld [vmem:[#allocation3 + $0x5c8] sm:$0xff]
    %v3966 = vld [vmem:[#allocation3 + $0x5d0] sm:$0xff]
    %v3967 = vld [vmem:[#allocation3 + $0x5d8] sm:$0xff]
    %v3968 = vld [vmem:[#allocation3 + $0x5e0] sm:$0xff]
    %v3969 = vld [vmem:[#allocation3 + $0x5e8] sm:$0xff]
    %v3970 = vld [vmem:[#allocation3 + $0x5f0] sm:$0xff]
    %v3971 = vld [vmem:[#allocation3 + $0x5f8] sm:$0xff]
    %v3972 = vld [vmem:[#allocation3 + $0x600] sm:$0xff]
    %v3973 = vld [vmem:[#allocation3 + $0x608] sm:$0xff]
    %v3974 = vld [vmem:[#allocation3 + $0x610] sm:$0xff]
    %v3975 = vld [vmem:[#allocation3 + $0x618] sm:$0xff]
    %vm3979 = vcmask 1040384
    %v3980 = vrot.slane %v3689, 7
    %v3981 = vrot.slane %v3690, 7
    %v3982 = vsel %vm3979, %v3980, %v3981
    %v3983 = vrot.slane %v3691, 7
    %v3984 = vsel %vm3979, %v3981, %v3983
    %vm3985 = vcmask 523264
    %v3987 = vsel %vm3985, %v3982, 0
    %v3990 = vsel %vm3985, %v3984, 0
    %3992 = vmatprep.subr.bf16.mxu0 0
    %3993 = vmatpush1.bf16.msra.mxu0 %v3784
    %3994 = vmatprep.subr.bf16.mxu0 0
    %3995 = vmatpush1.bf16.msra.mxu0 %v3785
    %3996 = vmatprep.subr.bf16.mxu0 0
    %3997 = vmatpush1.bf16.msra.mxu0 %v3786
    %3998 = vmatprep.subr.bf16.mxu0 0
    %3999 = vmatpush1.bf16.msra.mxu0 %v3787
    %4000 = vmatprep.subr.bf16.mxu0 0
    %4001 = vmatpush1.bf16.msra.mxu0 0
    %4002 = vmatprep.subr.bf16.mxu0 0
    %4003 = vmatpush1.bf16.msra.mxu0 0
    %4004 = vmatprep.subr.bf16.mxu0 0
    %4005 = vmatpush1.bf16.msra.mxu0 0
    %4006 = vmatprep.subr.bf16.mxu0 0
    %4007 = vmatpush1.bf16.msra.mxu0 0
    %4008 = vmatprep.subr.bf16.mxu0 0
    %4009 = vmatpush1.bf16.msra.mxu0 0
    %4010 = vmatprep.subr.bf16.mxu0 0
    %4011 = vmatpush1.bf16.msra.mxu0 0
    %4012 = vmatprep.subr.bf16.mxu0 0
    %4013 = vmatpush1.bf16.msra.mxu0 0
    %4014 = vmatprep.subr.bf16.mxu0 0
    %4015 = vmatpush1.bf16.msra.mxu0 0
    %4016 = vmatprep.subr.bf16.mxu0 0
    %4017 = vmatpush1.bf16.msra.mxu0 0
    %4018 = vmatprep.subr.bf16.mxu0 0
    %4019 = vmatpush1.bf16.msra.mxu0 0
    %4020 = vmatprep.subr.bf16.mxu0 0
    %4021 = vmatpush1.bf16.msra.mxu0 0
    %4022 = vmatprep.subr.bf16.mxu0 0
    %4023 = vmatpush1.bf16.msra.mxu0 0
    %4024 = vmatprep.mubr.bf16.mxu0 0
    %4025 = vmatmul.mubr.bf16.gmra.mrb[0].mxu0 %v3987
    %v4026 = vpop.f32.mrb[0].mxu0
    %v4027 = vadd.f32 0.0, %v4026
    %v4028 = vpop.f32.mrb[0].mxu0
    %v4029 = vpop.f32.mrb[0].mxu0
    %v4030 = vadd.f32 0.0, %v4029
    %v4031 = vpop.f32.mrb[0].mxu0
    %4032 = vmatprep.mubr.bf16.mxu0 0
    %4033 = vmatmul.mubr.bf16.gmra.mrb[0].mxu0 %v3990
    %v4034 = vpop.f32.mrb[0].mxu0
    %v4035 = vadd.f32 0.0, %v4034
    %v4036 = vpop.f32.mrb[0].mxu0
    %v4037 = vpop.f32.mrb[0].mxu0
    %v4038 = vadd.f32 0.0, %v4037
    %v4039 = vpop.f32.mrb[0].mxu0
    %4040 = vdwg.mxu0
    %vm4044 = vcmask 1042432
    %v4045 = vrot.slane %v3693, 5
    %v4046 = vrot.slane %v3694, 5
    %v4047 = vsel %vm4044, %v4045, %v4046
    %v4048 = vrot.slane %v3695, 5
    %v4049 = vsel %vm4044, %v4046, %v4048
    %v4051 = vsel %vm3985, %v4047, 0
    %v4054 = vsel %vm3985, %v4049, 0
    %4056 = vmatprep.subr.bf16.mxu0 0
    %4057 = vmatpush1.bf16.msra.mxu0 %v3792
    %4058 = vmatprep.subr.bf16.mxu0 0
    %4059 = vmatpush1.bf16.msra.mxu0 %v3793
    %4060 = vmatprep.subr.bf16.mxu0 0
    %4061 = vmatpush1.bf16.msra.mxu0 %v3794
    %4062 = vmatprep.subr.bf16.mxu0 0
    %4063 = vmatpush1.bf16.msra.mxu0 %v3795
    %4064 = vmatprep.subr.bf16.mxu0 0
    %4065 = vmatpush1.bf16.msra.mxu0 0
    %4066 = vmatprep.subr.bf16.mxu0 0
    %4067 = vmatpush1.bf16.msra.mxu0 0
    %4068 = vmatprep.subr.bf16.mxu0 0
    %4069 = vmatpush1.bf16.msra.mxu0 0
    %4070 = vmatprep.subr.bf16.mxu0 0
    %4071 = vmatpush1.bf16.msra.mxu0 0
    %4072 = vmatprep.subr.bf16.mxu0 0
    %4073 = vmatpush1.bf16.msra.mxu0 0
    %4074 = vmatprep.subr.bf16.mxu0 0
    %4075 = vmatpush1.bf16.msra.mxu0 0
    %4076 = vmatprep.subr.bf16.mxu0 0
    %4077 = vmatpush1.bf16.msra.mxu0 0
    %4078 = vmatprep.subr.bf16.mxu0 0
    %4079 = vmatpush1.bf16.msra.mxu0 0
    %4080 = vmatprep.subr.bf16.mxu0 0
    %4081 = vmatpush1.bf16.msra.mxu0 0
    %4082 = vmatprep.subr.bf16.mxu0 0
    %4083 = vmatpush1.bf16.msra.mxu0 0
    %4084 = vmatprep.subr.bf16.mxu0 0
    %4085 = vmatpush1.bf16.msra.mxu0 0
    %4086 = vmatprep.subr.bf16.mxu0 0
    %4087 = vmatpush1.bf16.msra.mxu0 0
    %4088 = vmatprep.mubr.bf16.mxu0 0
    %4089 = vmatmul.mubr.bf16.gmra.mrb[0].mxu0 %v4051
    %v4090 = vpop.f32.mrb[0].mxu0
    %v4091 = vadd.f32 0.0, %v4090
    %v4092 = vpop.f32.mrb[0].mxu0
    %v4093 = vpop.f32.mrb[0].mxu0
    %v4094 = vadd.f32 0.0, %v4093
    %v4095 = vpop.f32.mrb[0].mxu0
    %4096 = vmatprep.mubr.bf16.mxu0 0
    %4097 = vmatmul.mubr.bf16.gmra.mrb[0].mxu0 %v4054
    %v4098 = vpop.f32.mrb[0].mxu0
    %v4099 = vadd.f32 0.0, %v4098
    %v4100 = vpop.f32.mrb[0].mxu0
    %v4101 = vpop.f32.mrb[0].mxu0
    %v4102 = vadd.f32 0.0, %v4101
    %v4103 = vpop.f32.mrb[0].mxu0
    %4104 = vdwg.mxu0
    %vm4108 = vcmask 1044480
    %v4109 = vrot.slane %v3697, 3
    %v4110 = vrot.slane %v3698, 3
    %v4111 = vsel %vm4108, %v4109, %v4110
    %v4112 = vrot.slane %v3699, 3
    %v4113 = vsel %vm4108, %v4110, %v4112
    %v4115 = vsel %vm3985, %v4111, 0
    %v4118 = vsel %vm3985, %v4113, 0
    %4120 = vmatprep.subr.bf16.mxu0 0
    %4121 = vmatpush1.bf16.msra.mxu0 %v3800
    %4122 = vmatprep.subr.bf16.mxu0 0
    %4123 = vmatpush1.bf16.msra.mxu0 %v3801
    %4124 = vmatprep.subr.bf16.mxu0 0
    %4125 = vmatpush1.bf16.msra.mxu0 %v3802
    %4126 = vmatprep.subr.bf16.mxu0 0
    %4127 = vmatpush1.bf16.msra.mxu0 %v3803
    %4128 = vmatprep.subr.bf16.mxu0 0
    %4129 = vmatpush1.bf16.msra.mxu0 0
    %4130 = vmatprep.subr.bf16.mxu0 0
    %4131 = vmatpush1.bf16.msra.mxu0 0
    %4132 = vmatprep.subr.bf16.mxu0 0
    %4133 = vmatpush1.bf16.msra.mxu0 0
    %4134 = vmatprep.subr.bf16.mxu0 0
    %4135 = vmatpush1.bf16.msra.mxu0 0
    %4136 = vmatprep.subr.bf16.mxu0 0
    %4137 = vmatpush1.bf16.msra.mxu0 0
    %4138 = vmatprep.subr.bf16.mxu0 0
    %4139 = vmatpush1.bf16.msra.mxu0 0
    %4140 = vmatprep.subr.bf16.mxu0 0
    %4141 = vmatpush1.bf16.msra.mxu0 0
    %4142 = vmatprep.subr.bf16.mxu0 0
    %4143 = vmatpush1.bf16.msra.mxu0 0
    %4144 = vmatprep.subr.bf16.mxu0 0
    %4145 = vmatpush1.bf16.msra.mxu0 0
    %4146 = vmatprep.subr.bf16.mxu0 0
    %4147 = vmatpush1.bf16.msra.mxu0 0
    %4148 = vmatprep.subr.bf16.mxu0 0
    %4149 = vmatpush1.bf16.msra.mxu0 0
    %4150 = vmatprep.subr.bf16.mxu0 0
    %4151 = vmatpush1.bf16.msra.mxu0 0
    %4152 = vmatprep.mubr.bf16.mxu0 0
    %4153 = vmatmul.mubr.bf16.gmra.mrb[0].mxu0 %v4115
    %v4154 = vpop.f32.mrb[0].mxu0
    %v4155 = vadd.f32 0.0, %v4154
    %v4156 = vpop.f32.mrb[0].mxu0
    %v4157 = vpop.f32.mrb[0].mxu0
    %v4158 = vadd.f32 0.0, %v4157
    %v4159 = vpop.f32.mrb[0].mxu0
    %4160 = vmatprep.mubr.bf16.mxu0 0
    %4161 = vmatmul.mubr.bf16.gmra.mrb[0].mxu0 %v4118
    %v4162 = vpop.f32.mrb[0].mxu0
    %v4163 = vadd.f32 0.0, %v4162
    %v4164 = vpop.f32.mrb[0].mxu0
    %v4165 = vpop.f32.mrb[0].mxu0
    %v4166 = vadd.f32 0.0, %v4165
    %v4167 = vpop.f32.mrb[0].mxu0
    %4168 = vdwg.mxu0
    %vm4171 = vcmask 1046528
    %v4172 = vrot.slane %v3701, 1
    %v4173 = vrot.slane %v3702, 1
    %v4174 = vsel %vm4171, %v4172, %v4173
    %v4176 = vsel %vm3985, %v4174, 0
    %v4179 = vsel %vm3985, %v4173, 0
    %4181 = vmatprep.subr.bf16.mxu0 0
    %4182 = vmatpush1.bf16.msra.mxu0 %v3808
    %4183 = vmatprep.subr.bf16.mxu0 0
    %4184 = vmatpush1.bf16.msra.mxu0 %v3809
    %4185 = vmatprep.subr.bf16.mxu0 0
    %4186 = vmatpush1.bf16.msra.mxu0 %v3810
    %4187 = vmatprep.subr.bf16.mxu0 0
    %4188 = vmatpush1.bf16.msra.mxu0 %v3811
    %4189 = vmatprep.subr.bf16.mxu0 0
    %4190 = vmatpush1.bf16.msra.mxu0 0
    %4191 = vmatprep.subr.bf16.mxu0 0
    %4192 = vmatpush1.bf16.msra.mxu0 0
    %4193 = vmatprep.subr.bf16.mxu0 0
    %4194 = vmatpush1.bf16.msra.mxu0 0
    %4195 = vmatprep.subr.bf16.mxu0 0
    %4196 = vmatpush1.bf16.msra.mxu0 0
    %4197 = vmatprep.subr.bf16.mxu0 0
    %4198 = vmatpush1.bf16.msra.mxu0 0
    %4199 = vmatprep.subr.bf16.mxu0 0
    %4200 = vmatpush1.bf16.msra.mxu0 0
    %4201 = vmatprep.subr.bf16.mxu0 0
    %4202 = vmatpush1.bf16.msra.mxu0 0
    %4203 = vmatprep.subr.bf16.mxu0 0
    %4204 = vmatpush1.bf16.msra.mxu0 0
    %4205 = vmatprep.subr.bf16.mxu0 0
    %4206 = vmatpush1.bf16.msra.mxu0 0
    %4207 = vmatprep.subr.bf16.mxu0 0
    %4208 = vmatpush1.bf16.msra.mxu0 0
    %4209 = vmatprep.subr.bf16.mxu0 0
    %4210 = vmatpush1.bf16.msra.mxu0 0
    %4211 = vmatprep.subr.bf16.mxu0 0
    %4212 = vmatpush1.bf16.msra.mxu0 0
    %4213 = vmatprep.mubr.bf16.mxu0 0
    %4214 = vmatmul.mubr.bf16.gmra.mrb[0].mxu0 %v4176
    %v4215 = vpop.f32.mrb[0].mxu0
    %v4216 = vadd.f32 0.0, %v4215
    %v4217 = vpop.f32.mrb[0].mxu0
    %v4218 = vpop.f32.mrb[0].mxu0
    %v4219 = vadd.f32 0.0, %v4218
    %v4220 = vpop.f32.mrb[0].mxu0
    %4221 = vmatprep.mubr.bf16.mxu0 0
    %4222 = vmatmul.mubr.bf16.gmra.mrb[0].mxu0 %v4179
    %v4223 = vpop.f32.mrb[0].mxu0
    %v4224 = vadd.f32 0.0, %v4223
    %v4225 = vpop.f32.mrb[0].mxu0
    %v4226 = vpop.f32.mrb[0].mxu0
    %v4227 = vadd.f32 0.0, %v4226
    %v4228 = vpop.f32.mrb[0].mxu0
    %4229 = vdwg.mxu0
    %v4233 = vrot.slane %v3704, 7
    %v4234 = vrot.slane %v3705, 7
    %v4235 = vsel %vm3979, %v4233, %v4234
    %v4236 = vrot.slane %v3706, 7
    %v4237 = vsel %vm3979, %v4234, %v4236
    %v4239 = vsel %vm3985, %v4235, 0
    %v4242 = vsel %vm3985, %v4237, 0
    %4244 = vmatprep.subr.bf16.mxu0 0
    %4245 = vmatpush1.bf16.msra.mxu0 %v3816
    %4246 = vmatprep.subr.bf16.mxu0 0
    %4247 = vmatpush1.bf16.msra.mxu0 %v3817
    %4248 = vmatprep.subr.bf16.mxu0 0
    %4249 = vmatpush1.bf16.msra.mxu0 %v3818
    %4250 = vmatprep.subr.bf16.mxu0 0
    %4251 = vmatpush1.bf16.msra.mxu0 %v3819
    %4252 = vmatprep.subr.bf16.mxu0 0
    %4253 = vmatpush1.bf16.msra.mxu0 0
    %4254 = vmatprep.subr.bf16.mxu0 0
    %4255 = vmatpush1.bf16.msra.mxu0 0
    %4256 = vmatprep.subr.bf16.mxu0 0
    %4257 = vmatpush1.bf16.msra.mxu0 0
    %4258 = vmatprep.subr.bf16.mxu0 0
    %4259 = vmatpush1.bf16.msra.mxu0 0
    %4260 = vmatprep.subr.bf16.mxu0 0
    %4261 = vmatpush1.bf16.msra.mxu0 0
    %4262 = vmatprep.subr.bf16.mxu0 0
    %4263 = vmatpush1.bf16.msra.mxu0 0
    %4264 = vmatprep.subr.bf16.mxu0 0
    %4265 = vmatpush1.bf16.msra.mxu0 0
    %4266 = vmatprep.subr.bf16.mxu0 0
    %4267 = vmatpush1.bf16.msra.mxu0 0
    %4268 = vmatprep.subr.bf16.mxu0 0
    %4269 = vmatpush1.bf16.msra.mxu0 0
    %4270 = vmatprep.subr.bf16.mxu0 0
    %4271 = vmatpush1.bf16.msra.mxu0 0
    %4272 = vmatprep.subr.bf16.mxu0 0
    %4273 = vmatpush1.bf16.msra.mxu0 0
    %4274 = vmatprep.subr.bf16.mxu0 0
    %4275 = vmatpush1.bf16.msra.mxu0 0
    %4276 = vmatprep.mubr.bf16.mxu0 0
    %4277 = vmatmul.mubr.bf16.gmra.mrb[0].mxu0 %v4239
    %v4278 = vpop.f32.mrb[0].mxu0
    %v4279 = vadd.f32 0.0, %v4278
    %v4280 = vpop.f32.mrb[0].mxu0
    %v4281 = vpop.f32.mrb[0].mxu0
    %v4282 = vadd.f32 0.0, %v4281
    %v4283 = vpop.f32.mrb[0].mxu0
    %4284 = vmatprep.mubr.bf16.mxu0 0
    %4285 = vmatmul.mubr.bf16.gmra.mrb[0].mxu0 %v4242
    %v4286 = vpop.f32.mrb[0].mxu0
    %v4287 = vadd.f32 0.0, %v4286
    %v4288 = vpop.f32.mrb[0].mxu0
    %v4289 = vpop.f32.mrb[0].mxu0
    %v4290 = vadd.f32 0.0, %v4289
    %v4291 = vpop.f32.mrb[0].mxu0
    %4292 = vdwg.mxu0
    %v4296 = vrot.slane %v3708, 5
    %v4297 = vrot.slane %v3709, 5
    %v4298 = vsel %vm4044, %v4296, %v4297
    %v4299 = vrot.slane %v3710, 5
    %v4300 = vsel %vm4044, %v4297, %v4299
    %v4302 = vsel %vm3985, %v4298, 0
    %v4305 = vsel %vm3985, %v4300, 0
    %4307 = vmatprep.subr.bf16.mxu0 0
    %4308 = vmatpush1.bf16.msra.mxu0 %v3824
    %4309 = vmatprep.subr.bf16.mxu0 0
    %4310 = vmatpush1.bf16.msra.mxu0 %v3825
    %4311 = vmatprep.subr.bf16.mxu0 0
    %4312 = vmatpush1.bf16.msra.mxu0 %v3826
    %4313 = vmatprep.subr.bf16.mxu0 0
    %4314 = vmatpush1.bf16.msra.mxu0 %v3827
    %4315 = vmatprep.subr.bf16.mxu0 0
    %4316 = vmatpush1.bf16.msra.mxu0 0
    %4317 = vmatprep.subr.bf16.mxu0 0
    %4318 = vmatpush1.bf16.msra.mxu0 0
    %4319 = vmatprep.subr.bf16.mxu0 0
    %4320 = vmatpush1.bf16.msra.mxu0 0
    %4321 = vmatprep.subr.bf16.mxu0 0
    %4322 = vmatpush1.bf16.msra.mxu0 0
    %4323 = vmatprep.subr.bf16.mxu0 0
    %4324 = vmatpush1.bf16.msra.mxu0 0
    %4325 = vmatprep.subr.bf16.mxu0 0
    %4326 = vmatpush1.bf16.msra.mxu0 0
    %4327 = vmatprep.subr.bf16.mxu0 0
    %4328 = vmatpush1.bf16.msra.mxu0 0
    %4329 = vmatprep.subr.bf16.mxu0 0
    %4330 = vmatpush1.bf16.msra.mxu0 0
    %4331 = vmatprep.subr.bf16.mxu0 0
    %4332 = vmatpush1.bf16.msra.mxu0 0
    %4333 = vmatprep.subr.bf16.mxu0 0
    %4334 = vmatpush1.bf16.msra.mxu0 0
    %4335 = vmatprep.subr.bf16.mxu0 0
    %4336 = vmatpush1.bf16.msra.mxu0 0
    %4337 = vmatprep.subr.bf16.mxu0 0
    %4338 = vmatpush1.bf16.msra.mxu0 0
    %4339 = vmatprep.mubr.bf16.mxu0 0
    %4340 = vmatmul.mubr.bf16.gmra.mrb[0].mxu0 %v4302
    %v4341 = vpop.f32.mrb[0].mxu0
    %v4342 = vadd.f32 0.0, %v4341
    %v4343 = vpop.f32.mrb[0].mxu0
    %v4344 = vpop.f32.mrb[0].mxu0
    %v4345 = vadd.f32 0.0, %v4344
    %v4346 = vpop.f32.mrb[0].mxu0
    %4347 = vmatprep.mubr.bf16.mxu0 0
    %4348 = vmatmul.mubr.bf16.gmra.mrb[0].mxu0 %v4305
    %v4349 = vpop.f32.mrb[0].mxu0
    %v4350 = vadd.f32 0.0, %v4349
    %v4351 = vpop.f32.mrb[0].mxu0
    %v4352 = vpop.f32.mrb[0].mxu0
    %v4353 = vadd.f32 0.0, %v4352
    %v4354 = vpop.f32.mrb[0].mxu0
    %4355 = vdwg.mxu0
    %v4359 = vrot.slane %v3712, 3
    %v4360 = vrot.slane %v3713, 3
    %v4361 = vsel %vm4108, %v4359, %v4360
    %v4362 = vrot.slane %v3714, 3
    %v4363 = vsel %vm4108, %v4360, %v4362
    %v4365 = vsel %vm3985, %v4361, 0
    %v4368 = vsel %vm3985, %v4363, 0
    %4370 = vmatprep.subr.bf16.mxu0 0
    %4371 = vmatpush1.bf16.msra.mxu0 %v3832
    %4372 = vmatprep.subr.bf16.mxu0 0
    %4373 = vmatpush1.bf16.msra.mxu0 %v3833
    %4374 = vmatprep.subr.bf16.mxu0 0
    %4375 = vmatpush1.bf16.msra.mxu0 %v3834
    %4376 = vmatprep.subr.bf16.mxu0 0
    %4377 = vmatpush1.bf16.msra.mxu0 %v3835
    %4378 = vmatprep.subr.bf16.mxu0 0
    %4379 = vmatpush1.bf16.msra.mxu0 0
    %4380 = vmatprep.subr.bf16.mxu0 0
    %4381 = vmatpush1.bf16.msra.mxu0 0
    %4382 = vmatprep.subr.bf16.mxu0 0
    %4383 = vmatpush1.bf16.msra.mxu0 0
    %4384 = vmatprep.subr.bf16.mxu0 0
    %4385 = vmatpush1.bf16.msra.mxu0 0
    %4386 = vmatprep.subr.bf16.mxu0 0
    %4387 = vmatpush1.bf16.msra.mxu0 0
    %4388 = vmatprep.subr.bf16.mxu0 0
    %4389 = vmatpush1.bf16.msra.mxu0 0
    %4390 = vmatprep.subr.bf16.mxu0 0
    %4391 = vmatpush1.bf16.msra.mxu0 0
    %4392 = vmatprep.subr.bf16.mxu0 0
    %4393 = vmatpush1.bf16.msra.mxu0 0
    %4394 = vmatprep.subr.bf16.mxu0 0
    %4395 = vmatpush1.bf16.msra.mxu0 0
    %4396 = vmatprep.subr.bf16.mxu0 0
    %4397 = vmatpush1.bf16.msra.mxu0 0
    %4398 = vmatprep.subr.bf16.mxu0 0
    %4399 = vmatpush1.bf16.msra.mxu0 0
    %4400 = vmatprep.subr.bf16.mxu0 0
    %4401 = vmatpush1.bf16.msra.mxu0 0
    %4402 = vmatprep.mubr.bf16.mxu0 0
    %4403 = vmatmul.mubr.bf16.gmra.mrb[0].mxu0 %v4365
    %v4404 = vpop.f32.mrb[0].mxu0
    %v4405 = vadd.f32 0.0, %v4404
    %v4406 = vpop.f32.mrb[0].mxu0
    %v4407 = vpop.f32.mrb[0].mxu0
    %v4408 = vadd.f32 0.0, %v4407
    %v4409 = vpop.f32.mrb[0].mxu0
    %4410 = vmatprep.mubr.bf16.mxu0 0
    %4411 = vmatmul.mubr.bf16.gmra.mrb[0].mxu0 %v4368
    %v4412 = vpop.f32.mrb[0].mxu0
    %v4413 = vadd.f32 0.0, %v4412
    %v4414 = vpop.f32.mrb[0].mxu0
    %v4415 = vpop.f32.mrb[0].mxu0
    %v4416 = vadd.f32 0.0, %v4415
    %v4417 = vpop.f32.mrb[0].mxu0
    %4418 = vdwg.mxu0
    %v4421 = vrot.slane %v3716, 1
    %v4422 = vrot.slane %v3717, 1
    %v4423 = vsel %vm4171, %v4421, %v4422
    %v4425 = vsel %vm3985, %v4423, 0
    %v4428 = vsel %vm3985, %v4422, 0
    %4430 = vmatprep.subr.bf16.mxu0 0
    %4431 = vmatpush1.bf16.msra.mxu0 %v3840
    %4432 = vmatprep.subr.bf16.mxu0 0
    %4433 = vmatpush1.bf16.msra.mxu0 %v3841
    %4434 = vmatprep.subr.bf16.mxu0 0
    %4435 = vmatpush1.bf16.msra.mxu0 %v3842
    %4436 = vmatprep.subr.bf16.mxu0 0
    %4437 = vmatpush1.bf16.msra.mxu0 %v3843
    %4438 = vmatprep.subr.bf16.mxu0 0
    %4439 = vmatpush1.bf16.msra.mxu0 0
    %4440 = vmatprep.subr.bf16.mxu0 0
    %4441 = vmatpush1.bf16.msra.mxu0 0
    %4442 = vmatprep.subr.bf16.mxu0 0
    %4443 = vmatpush1.bf16.msra.mxu0 0
    %4444 = vmatprep.subr.bf16.mxu0 0
    %4445 = vmatpush1.bf16.msra.mxu0 0
    %4446 = vmatprep.subr.bf16.mxu0 0
    %4447 = vmatpush1.bf16.msra.mxu0 0
    %4448 = vmatprep.subr.bf16.mxu0 0
    %4449 = vmatpush1.bf16.msra.mxu0 0
    %4450 = vmatprep.subr.bf16.mxu0 0
    %4451 = vmatpush1.bf16.msra.mxu0 0
    %4452 = vmatprep.subr.bf16.mxu0 0
    %4453 = vmatpush1.bf16.msra.mxu0 0
    %4454 = vmatprep.subr.bf16.mxu0 0
    %4455 = vmatpush1.bf16.msra.mxu0 0
    %4456 = vmatprep.subr.bf16.mxu0 0
    %4457 = vmatpush1.bf16.msra.mxu0 0
    %4458 = vmatprep.subr.bf16.mxu0 0
    %4459 = vmatpush1.bf16.msra.mxu0 0
    %4460 = vmatprep.subr.bf16.mxu0 0
    %4461 = vmatpush1.bf16.msra.mxu0 0
    %4462 = vmatprep.mubr.bf16.mxu0 0
    %4463 = vmatmul.mubr.bf16.gmra.mrb[0].mxu0 %v4425
    %v4464 = vpop.f32.mrb[0].mxu0
    %v4465 = vadd.f32 0.0, %v4464
    %v4466 = vpop.f32.mrb[0].mxu0
    %v4467 = vpop.f32.mrb[0].mxu0
    %v4468 = vadd.f32 0.0, %v4467
    %v4469 = vpop.f32.mrb[0].mxu0
    %4470 = vmatprep.mubr.bf16.mxu0 0
    %4471 = vmatmul.mubr.bf16.gmra.mrb[0].mxu0 %v4428
    %v4472 = vpop.f32.mrb[0].mxu0
    %v4473 = vadd.f32 0.0, %v4472
    %v4474 = vpop.f32.mrb[0].mxu0
    %v4475 = vpop.f32.mrb[0].mxu0
    %v4476 = vadd.f32 0.0, %v4475
    %v4477 = vpop.f32.mrb[0].mxu0
    %4478 = vdwg.mxu0
    %v4482 = vrot.slane %v3719, 7
    %v4483 = vrot.slane %v3720, 7
    %v4484 = vsel %vm3979, %v4482, %v4483
    %v4485 = vrot.slane %v3721, 7
    %v4486 = vsel %vm3979, %v4483, %v4485
    %v4488 = vsel %vm3985, %v4484, 0
    %v4491 = vsel %vm3985, %v4486, 0
    %4493 = vmatprep.subr.bf16.mxu0 0
    %4494 = vmatpush1.bf16.msra.mxu0 %v3848
    %4495 = vmatprep.subr.bf16.mxu0 0
    %4496 = vmatpush1.bf16.msra.mxu0 %v3849
    %4497 = vmatprep.subr.bf16.mxu0 0
    %4498 = vmatpush1.bf16.msra.mxu0 %v3850
    %4499 = vmatprep.subr.bf16.mxu0 0
    %4500 = vmatpush1.bf16.msra.mxu0 %v3851
    %4501 = vmatprep.subr.bf16.mxu0 0
    %4502 = vmatpush1.bf16.msra.mxu0 0
    %4503 = vmatprep.subr.bf16.mxu0 0
    %4504 = vmatpush1.bf16.msra.mxu0 0
    %4505 = vmatprep.subr.bf16.mxu0 0
    %4506 = vmatpush1.bf16.msra.mxu0 0
    %4507 = vmatprep.subr.bf16.mxu0 0
    %4508 = vmatpush1.bf16.msra.mxu0 0
    %4509 = vmatprep.subr.bf16.mxu0 0
    %4510 = vmatpush1.bf16.msra.mxu0 0
    %4511 = vmatprep.subr.bf16.mxu0 0
    %4512 = vmatpush1.bf16.msra.mxu0 0
    %4513 = vmatprep.subr.bf16.mxu0 0
    %4514 = vmatpush1.bf16.msra.mxu0 0
    %4515 = vmatprep.subr.bf16.mxu0 0
    %4516 = vmatpush1.bf16.msra.mxu0 0
    %4517 = vmatprep.subr.bf16.mxu0 0
    %4518 = vmatpush1.bf16.msra.mxu0 0
    %4519 = vmatprep.subr.bf16.mxu0 0
    %4520 = vmatpush1.bf16.msra.mxu0 0
    %4521 = vmatprep.subr.bf16.mxu0 0
    %4522 = vmatpush1.bf16.msra.mxu0 0
    %4523 = vmatprep.subr.bf16.mxu0 0
    %4524 = vmatpush1.bf16.msra.mxu0 0
    %4525 = vmatprep.mubr.bf16.mxu0 0
    %4526 = vmatmul.mubr.bf16.gmra.mrb[0].mxu0 %v4488
    %v4527 = vpop.f32.mrb[0].mxu0
    %v4528 = vadd.f32 0.0, %v4527
    %v4529 = vpop.f32.mrb[0].mxu0
    %v4530 = vpop.f32.mrb[0].mxu0
    %v4531 = vadd.f32 0.0, %v4530
    %v4532 = vpop.f32.mrb[0].mxu0
    %4533 = vmatprep.mubr.bf16.mxu0 0
    %4534 = vmatmul.mubr.bf16.gmra.mrb[0].mxu0 %v4491
    %v4535 = vpop.f32.mrb[0].mxu0
    %v4536 = vadd.f32 0.0, %v4535
    %v4537 = vpop.f32.mrb[0].mxu0
    %v4538 = vpop.f32.mrb[0].mxu0
    %v4539 = vadd.f32 0.0, %v4538
    %v4540 = vpop.f32.mrb[0].mxu0
    %4541 = vdwg.mxu0
    %v4545 = vrot.slane %v3723, 5
    %v4546 = vrot.slane %v3724, 5
    %v4547 = vsel %vm4044, %v4545, %v4546
    %v4548 = vrot.slane %v3725, 5
    %v4549 = vsel %vm4044, %v4546, %v4548
    %v4551 = vsel %vm3985, %v4547, 0
    %v4554 = vsel %vm3985, %v4549, 0
    %4556 = vmatprep.subr.bf16.mxu0 0
    %4557 = vmatpush1.bf16.msra.mxu0 %v3856
    %4558 = vmatprep.subr.bf16.mxu0 0
    %4559 = vmatpush1.bf16.msra.mxu0 %v3857
    %4560 = vmatprep.subr.bf16.mxu0 0
    %4561 = vmatpush1.bf16.msra.mxu0 %v3858
    %4562 = vmatprep.subr.bf16.mxu0 0
    %4563 = vmatpush1.bf16.msra.mxu0 %v3859
    %4564 = vmatprep.subr.bf16.mxu0 0
    %4565 = vmatpush1.bf16.msra.mxu0 0
    %4566 = vmatprep.subr.bf16.mxu0 0
    %4567 = vmatpush1.bf16.msra.mxu0 0
    %4568 = vmatprep.subr.bf16.mxu0 0
    %4569 = vmatpush1.bf16.msra.mxu0 0
    %4570 = vmatprep.subr.bf16.mxu0 0
    %4571 = vmatpush1.bf16.msra.mxu0 0
    %4572 = vmatprep.subr.bf16.mxu0 0
    %4573 = vmatpush1.bf16.msra.mxu0 0
    %4574 = vmatprep.subr.bf16.mxu0 0
    %4575 = vmatpush1.bf16.msra.mxu0 0
    %4576 = vmatprep.subr.bf16.mxu0 0
    %4577 = vmatpush1.bf16.msra.mxu0 0
    %4578 = vmatprep.subr.bf16.mxu0 0
    %4579 = vmatpush1.bf16.msra.mxu0 0
    %4580 = vmatprep.subr.bf16.mxu0 0
    %4581 = vmatpush1.bf16.msra.mxu0 0
    %4582 = vmatprep.subr.bf16.mxu0 0
    %4583 = vmatpush1.bf16.msra.mxu0 0
    %4584 = vmatprep.subr.bf16.mxu0 0
    %4585 = vmatpush1.bf16.msra.mxu0 0
    %4586 = vmatprep.subr.bf16.mxu0 0
    %4587 = vmatpush1.bf16.msra.mxu0 0
    %4588 = vmatprep.mubr.bf16.mxu0 0
    %4589 = vmatmul.mubr.bf16.gmra.mrb[0].mxu0 %v4551
    %v4590 = vpop.f32.mrb[0].mxu0
    %v4591 = vadd.f32 0.0, %v4590
    %v4592 = vpop.f32.mrb[0].mxu0
    %v4593 = vpop.f32.mrb[0].mxu0
    %v4594 = vadd.f32 0.0, %v4593
    %v4595 = vpop.f32.mrb[0].mxu0
    %4596 = vmatprep.mubr.bf16.mxu0 0
    %4597 = vmatmul.mubr.bf16.gmra.mrb[0].mxu0 %v4554
    %v4598 = vpop.f32.mrb[0].mxu0
    %v4599 = vadd.f32 0.0, %v4598
    %v4600 = vpop.f32.mrb[0].mxu0
    %v4601 = vpop.f32.mrb[0].mxu0
    %v4602 = vadd.f32 0.0, %v4601
    %v4603 = vpop.f32.mrb[0].mxu0
    %4604 = vdwg.mxu0
    %v4608 = vrot.slane %v3727, 3
    %v4609 = vrot.slane %v3728, 3
    %v4610 = vsel %vm4108, %v4608, %v4609
    %v4611 = vrot.slane %v3729, 3
    %v4612 = vsel %vm4108, %v4609, %v4611
    %v4614 = vsel %vm3985, %v4610, 0
    %v4617 = vsel %vm3985, %v4612, 0
    %4619 = vmatprep.subr.bf16.mxu0 0
    %4620 = vmatpush1.bf16.msra.mxu0 %v3864
    %4621 = vmatprep.subr.bf16.mxu0 0
    %4622 = vmatpush1.bf16.msra.mxu0 %v3865
    %4623 = vmatprep.subr.bf16.mxu0 0
    %4624 = vmatpush1.bf16.msra.mxu0 %v3866
    %4625 = vmatprep.subr.bf16.mxu0 0
    %4626 = vmatpush1.bf16.msra.mxu0 %v3867
    %4627 = vmatprep.subr.bf16.mxu0 0
    %4628 = vmatpush1.bf16.msra.mxu0 0
    %4629 = vmatprep.subr.bf16.mxu0 0
    %4630 = vmatpush1.bf16.msra.mxu0 0
    %4631 = vmatprep.subr.bf16.mxu0 0
    %4632 = vmatpush1.bf16.msra.mxu0 0
    %4633 = vmatprep.subr.bf16.mxu0 0
    %4634 = vmatpush1.bf16.msra.mxu0 0
    %4635 = vmatprep.subr.bf16.mxu0 0
    %4636 = vmatpush1.bf16.msra.mxu0 0
    %4637 = vmatprep.subr.bf16.mxu0 0
    %4638 = vmatpush1.bf16.msra.mxu0 0
    %4639 = vmatprep.subr.bf16.mxu0 0
    %4640 = vmatpush1.bf16.msra.mxu0 0
    %4641 = vmatprep.subr.bf16.mxu0 0
    %4642 = vmatpush1.bf16.msra.mxu0 0
    %4643 = vmatprep.subr.bf16.mxu0 0
    %4644 = vmatpush1.bf16.msra.mxu0 0
    %4645 = vmatprep.subr.bf16.mxu0 0
    %4646 = vmatpush1.bf16.msra.mxu0 0
    %4647 = vmatprep.subr.bf16.mxu0 0
    %4648 = vmatpush1.bf16.msra.mxu0 0
    %4649 = vmatprep.subr.bf16.mxu0 0
    %4650 = vmatpush1.bf16.msra.mxu0 0
    %4651 = vmatprep.mubr.bf16.mxu0 0
    %4652 = vmatmul.mubr.bf16.gmra.mrb[0].mxu0 %v4614
    %v4653 = vpop.f32.mrb[0].mxu0
    %v4654 = vadd.f32 0.0, %v4653
    %v4655 = vpop.f32.mrb[0].mxu0
    %v4656 = vpop.f32.mrb[0].mxu0
    %v4657 = vadd.f32 0.0, %v4656
    %v4658 = vpop.f32.mrb[0].mxu0
    %4659 = vmatprep.mubr.bf16.mxu0 0
    %4660 = vmatmul.mubr.bf16.gmra.mrb[0].mxu0 %v4617
    %v4661 = vpop.f32.mrb[0].mxu0
    %v4662 = vadd.f32 0.0, %v4661
    %v4663 = vpop.f32.mrb[0].mxu0
    %v4664 = vpop.f32.mrb[0].mxu0
    %v4665 = vadd.f32 0.0, %v4664
    %v4666 = vpop.f32.mrb[0].mxu0
    %4667 = vdwg.mxu0
    %v4670 = vrot.slane %v3731, 1
    %v4671 = vrot.slane %v3732, 1
    %v4672 = vsel %vm4171, %v4670, %v4671
    %v4674 = vsel %vm3985, %v4672, 0
    %v4677 = vsel %vm3985, %v4671, 0
    %4679 = vmatprep.subr.bf16.mxu0 0
    %4680 = vmatpush1.bf16.msra.mxu0 %v3872
    %4681 = vmatprep.subr.bf16.mxu0 0
    %4682 = vmatpush1.bf16.msra.mxu0 %v3873
    %4683 = vmatprep.subr.bf16.mxu0 0
    %4684 = vmatpush1.bf16.msra.mxu0 %v3874
    %4685 = vmatprep.subr.bf16.mxu0 0
    %4686 = vmatpush1.bf16.msra.mxu0 %v3875
    %4687 = vmatprep.subr.bf16.mxu0 0
    %4688 = vmatpush1.bf16.msra.mxu0 0
    %4689 = vmatprep.subr.bf16.mxu0 0
    %4690 = vmatpush1.bf16.msra.mxu0 0
    %4691 = vmatprep.subr.bf16.mxu0 0
    %4692 = vmatpush1.bf16.msra.mxu0 0
    %4693 = vmatprep.subr.bf16.mxu0 0
    %4694 = vmatpush1.bf16.msra.mxu0 0
    %4695 = vmatprep.subr.bf16.mxu0 0
    %4696 = vmatpush1.bf16.msra.mxu0 0
    %4697 = vmatprep.subr.bf16.mxu0 0
    %4698 = vmatpush1.bf16.msra.mxu0 0
    %4699 = vmatprep.subr.bf16.mxu0 0
    %4700 = vmatpush1.bf16.msra.mxu0 0
    %4701 = vmatprep.subr.bf16.mxu0 0
    %4702 = vmatpush1.bf16.msra.mxu0 0
    %4703 = vmatprep.subr.bf16.mxu0 0
    %4704 = vmatpush1.bf16.msra.mxu0 0
    %4705 = vmatprep.subr.bf16.mxu0 0
    %4706 = vmatpush1.bf16.msra.mxu0 0
    %4707 = vmatprep.subr.bf16.mxu0 0
    %4708 = vmatpush1.bf16.msra.mxu0 0
    %4709 = vmatprep.subr.bf16.mxu0 0
    %4710 = vmatpush1.bf16.msra.mxu0 0
    %4711 = vmatprep.mubr.bf16.mxu0 0
    %4712 = vmatmul.mubr.bf16.gmra.mrb[0].mxu0 %v4674
    %v4713 = vpop.f32.mrb[0].mxu0
    %v4714 = vadd.f32 0.0, %v4713
    %v4715 = vpop.f32.mrb[0].mxu0
    %v4716 = vpop.f32.mrb[0].mxu0
    %v4717 = vadd.f32 0.0, %v4716
    %v4718 = vpop.f32.mrb[0].mxu0
    %4719 = vmatprep.mubr.bf16.mxu0 0
    %4720 = vmatmul.mubr.bf16.gmra.mrb[0].mxu0 %v4677
    %v4721 = vpop.f32.mrb[0].mxu0
    %v4722 = vadd.f32 0.0, %v4721
    %v4723 = vpop.f32.mrb[0].mxu0
    %v4724 = vpop.f32.mrb[0].mxu0
    %v4725 = vadd.f32 0.0, %v4724
    %v4726 = vpop.f32.mrb[0].mxu0
    %4727 = vdwg.mxu0
    %v4731 = vrot.slane %v3734, 7
    %v4732 = vrot.slane %v3735, 7
    %v4733 = vsel %vm3979, %v4731, %v4732
    %v4734 = vrot.slane %v3736, 7
    %v4735 = vsel %vm3979, %v4732, %v4734
    %v4737 = vsel %vm3985, %v4733, 0
    %v4740 = vsel %vm3985, %v4735, 0
    %4742 = vmatprep.subr.bf16.mxu0 0
    %4743 = vmatpush1.bf16.msra.mxu0 %v3880
    %4744 = vmatprep.subr.bf16.mxu0 0
    %4745 = vmatpush1.bf16.msra.mxu0 %v3881
    %4746 = vmatprep.subr.bf16.mxu0 0
    %4747 = vmatpush1.bf16.msra.mxu0 %v3882
    %4748 = vmatprep.subr.bf16.mxu0 0
    %4749 = vmatpush1.bf16.msra.mxu0 %v3883
    %4750 = vmatprep.subr.bf16.mxu0 0
    %4751 = vmatpush1.bf16.msra.mxu0 0
    %4752 = vmatprep.subr.bf16.mxu0 0
    %4753 = vmatpush1.bf16.msra.mxu0 0
    %4754 = vmatprep.subr.bf16.mxu0 0
    %4755 = vmatpush1.bf16.msra.mxu0 0
    %4756 = vmatprep.subr.bf16.mxu0 0
    %4757 = vmatpush1.bf16.msra.mxu0 0
    %4758 = vmatprep.subr.bf16.mxu0 0
    %4759 = vmatpush1.bf16.msra.mxu0 0
    %4760 = vmatprep.subr.bf16.mxu0 0
    %4761 = vmatpush1.bf16.msra.mxu0 0
    %4762 = vmatprep.subr.bf16.mxu0 0
    %4763 = vmatpush1.bf16.msra.mxu0 0
    %4764 = vmatprep.subr.bf16.mxu0 0
    %4765 = vmatpush1.bf16.msra.mxu0 0
    %4766 = vmatprep.subr.bf16.mxu0 0
    %4767 = vmatpush1.bf16.msra.mxu0 0
    %4768 = vmatprep.subr.bf16.mxu0 0
    %4769 = vmatpush1.bf16.msra.mxu0 0
    %4770 = vmatprep.subr.bf16.mxu0 0
    %4771 = vmatpush1.bf16.msra.mxu0 0
    %4772 = vmatprep.subr.bf16.mxu0 0
    %4773 = vmatpush1.bf16.msra.mxu0 0
    %4774 = vmatprep.mubr.bf16.mxu0 0
    %4775 = vmatmul.mubr.bf16.gmra.mrb[0].mxu0 %v4737
    %v4776 = vpop.f32.mrb[0].mxu0
    %v4777 = vadd.f32 0.0, %v4776
    %v4778 = vpop.f32.mrb[0].mxu0
    %v4779 = vpop.f32.mrb[0].mxu0
    %v4780 = vadd.f32 0.0, %v4779
    %v4781 = vpop.f32.mrb[0].mxu0
    %4782 = vmatprep.mubr.bf16.mxu0 0
    %4783 = vmatmul.mubr.bf16.gmra.mrb[0].mxu0 %v4740
    %v4784 = vpop.f32.mrb[0].mxu0
    %v4785 = vadd.f32 0.0, %v4784
    %v4786 = vpop.f32.mrb[0].mxu0
    %v4787 = vpop.f32.mrb[0].mxu0
    %v4788 = vadd.f32 0.0, %v4787
    %v4789 = vpop.f32.mrb[0].mxu0
    %4790 = vdwg.mxu0
    %v4794 = vrot.slane %v3738, 5
    %v4795 = vrot.slane %v3739, 5
    %v4796 = vsel %vm4044, %v4794, %v4795
    %v4797 = vrot.slane %v3740, 5
    %v4798 = vsel %vm4044, %v4795, %v4797
    %v4800 = vsel %vm3985, %v4796, 0
    %v4803 = vsel %vm3985, %v4798, 0
    %4805 = vmatprep.subr.bf16.mxu0 0
    %4806 = vmatpush1.bf16.msra.mxu0 %v3888
    %4807 = vmatprep.subr.bf16.mxu0 0
    %4808 = vmatpush1.bf16.msra.mxu0 %v3889
    %4809 = vmatprep.subr.bf16.mxu0 0
    %4810 = vmatpush1.bf16.msra.mxu0 %v3890
    %4811 = vmatprep.subr.bf16.mxu0 0
    %4812 = vmatpush1.bf16.msra.mxu0 %v3891
    %4813 = vmatprep.subr.bf16.mxu0 0
    %4814 = vmatpush1.bf16.msra.mxu0 0
    %4815 = vmatprep.subr.bf16.mxu0 0
    %4816 = vmatpush1.bf16.msra.mxu0 0
    %4817 = vmatprep.subr.bf16.mxu0 0
    %4818 = vmatpush1.bf16.msra.mxu0 0
    %4819 = vmatprep.subr.bf16.mxu0 0
    %4820 = vmatpush1.bf16.msra.mxu0 0
    %4821 = vmatprep.subr.bf16.mxu0 0
    %4822 = vmatpush1.bf16.msra.mxu0 0
    %4823 = vmatprep.subr.bf16.mxu0 0
    %4824 = vmatpush1.bf16.msra.mxu0 0
    %4825 = vmatprep.subr.bf16.mxu0 0
    %4826 = vmatpush1.bf16.msra.mxu0 0
    %4827 = vmatprep.subr.bf16.mxu0 0
    %4828 = vmatpush1.bf16.msra.mxu0 0
    %4829 = vmatprep.subr.bf16.mxu0 0
    %4830 = vmatpush1.bf16.msra.mxu0 0
    %4831 = vmatprep.subr.bf16.mxu0 0
    %4832 = vmatpush1.bf16.msra.mxu0 0
    %4833 = vmatprep.subr.bf16.mxu0 0
    %4834 = vmatpush1.bf16.msra.mxu0 0
    %4835 = vmatprep.subr.bf16.mxu0 0
    %4836 = vmatpush1.bf16.msra.mxu0 0
    %4837 = vmatprep.mubr.bf16.mxu0 0
    %4838 = vmatmul.mubr.bf16.gmra.mrb[0].mxu0 %v4800
    %v4839 = vpop.f32.mrb[0].mxu0
    %v4840 = vadd.f32 0.0, %v4839
    %v4841 = vpop.f32.mrb[0].mxu0
    %v4842 = vpop.f32.mrb[0].mxu0
    %v4843 = vadd.f32 0.0, %v4842
    %v4844 = vpop.f32.mrb[0].mxu0
    %4845 = vmatprep.mubr.bf16.mxu0 0
    %4846 = vmatmul.mubr.bf16.gmra.mrb[0].mxu0 %v4803
    %v4847 = vpop.f32.mrb[0].mxu0
    %v4848 = vadd.f32 0.0, %v4847
    %v4849 = vpop.f32.mrb[0].mxu0
    %v4850 = vpop.f32.mrb[0].mxu0
    %v4851 = vadd.f32 0.0, %v4850
    %v4852 = vpop.f32.mrb[0].mxu0
    %4853 = vdwg.mxu0
    %v4857 = vrot.slane %v3742, 3
    %v4858 = vrot.slane %v3743, 3
    %v4859 = vsel %vm4108, %v4857, %v4858
    %v4860 = vrot.slane %v3744, 3
    %v4861 = vsel %vm4108, %v4858, %v4860
    %v4863 = vsel %vm3985, %v4859, 0
    %v4866 = vsel %vm3985, %v4861, 0
    %4868 = vmatprep.subr.bf16.mxu0 0
    %4869 = vmatpush1.bf16.msra.mxu0 %v3896
    %4870 = vmatprep.subr.bf16.mxu0 0
    %4871 = vmatpush1.bf16.msra.mxu0 %v3897
    %4872 = vmatprep.subr.bf16.mxu0 0
    %4873 = vmatpush1.bf16.msra.mxu0 %v3898
    %4874 = vmatprep.subr.bf16.mxu0 0
    %4875 = vmatpush1.bf16.msra.mxu0 %v3899
    %4876 = vmatprep.subr.bf16.mxu0 0
    %4877 = vmatpush1.bf16.msra.mxu0 0
    %4878 = vmatprep.subr.bf16.mxu0 0
    %4879 = vmatpush1.bf16.msra.mxu0 0
    %4880 = vmatprep.subr.bf16.mxu0 0
    %4881 = vmatpush1.bf16.msra.mxu0 0
    %4882 = vmatprep.subr.bf16.mxu0 0
    %4883 = vmatpush1.bf16.msra.mxu0 0
    %4884 = vmatprep.subr.bf16.mxu0 0
    %4885 = vmatpush1.bf16.msra.mxu0 0
    %4886 = vmatprep.subr.bf16.mxu0 0
    %4887 = vmatpush1.bf16.msra.mxu0 0
    %4888 = vmatprep.subr.bf16.mxu0 0
    %4889 = vmatpush1.bf16.msra.mxu0 0
    %4890 = vmatprep.subr.bf16.mxu0 0
    %4891 = vmatpush1.bf16.msra.mxu0 0
    %4892 = vmatprep.subr.bf16.mxu0 0
    %4893 = vmatpush1.bf16.msra.mxu0 0
    %4894 = vmatprep.subr.bf16.mxu0 0
    %4895 = vmatpush1.bf16.msra.mxu0 0
    %4896 = vmatprep.subr.bf16.mxu0 0
    %4897 = vmatpush1.bf16.msra.mxu0 0
    %4898 = vmatprep.subr.bf16.mxu0 0
    %4899 = vmatpush1.bf16.msra.mxu0 0
    %4900 = vmatprep.mubr.bf16.mxu0 0
    %4901 = vmatmul.mubr.bf16.gmra.mrb[0].mxu0 %v4863
    %v4902 = vpop.f32.mrb[0].mxu0
    %v4903 = vadd.f32 0.0, %v4902
    %v4904 = vpop.f32.mrb[0].mxu0
    %v4905 = vpop.f32.mrb[0].mxu0
    %v4906 = vadd.f32 0.0, %v4905
    %v4907 = vpop.f32.mrb[0].mxu0
    %4908 = vmatprep.mubr.bf16.mxu0 0
    %4909 = vmatmul.mubr.bf16.gmra.mrb[0].mxu0 %v4866
    %v4910 = vpop.f32.mrb[0].mxu0
    %v4911 = vadd.f32 0.0, %v4910
    %v4912 = vpop.f32.mrb[0].mxu0
    %v4913 = vpop.f32.mrb[0].mxu0
    %v4914 = vadd.f32 0.0, %v4913
    %v4915 = vpop.f32.mrb[0].mxu0
    %4916 = vdwg.mxu0
    %v4919 = vrot.slane %v3746, 1
    %v4920 = vrot.slane %v3747, 1
    %v4921 = vsel %vm4171, %v4919, %v4920
    %v4923 = vsel %vm3985, %v4921, 0
    %v4926 = vsel %vm3985, %v4920, 0
    %4928 = vmatprep.subr.bf16.mxu0 0
    %4929 = vmatpush1.bf16.msra.mxu0 %v3904
    %4930 = vmatprep.subr.bf16.mxu0 0
    %4931 = vmatpush1.bf16.msra.mxu0 %v3905
    %4932 = vmatprep.subr.bf16.mxu0 0
    %4933 = vmatpush1.bf16.msra.mxu0 %v3906
    %4934 = vmatprep.subr.bf16.mxu0 0
    %4935 = vmatpush1.bf16.msra.mxu0 %v3907
    %4936 = vmatprep.subr.bf16.mxu0 0
    %4937 = vmatpush1.bf16.msra.mxu0 0
    %4938 = vmatprep.subr.bf16.mxu0 0
    %4939 = vmatpush1.bf16.msra.mxu0 0
    %4940 = vmatprep.subr.bf16.mxu0 0
    %4941 = vmatpush1.bf16.msra.mxu0 0
    %4942 = vmatprep.subr.bf16.mxu0 0
    %4943 = vmatpush1.bf16.msra.mxu0 0
    %4944 = vmatprep.subr.bf16.mxu0 0
    %4945 = vmatpush1.bf16.msra.mxu0 0
    %4946 = vmatprep.subr.bf16.mxu0 0
    %4947 = vmatpush1.bf16.msra.mxu0 0
    %4948 = vmatprep.subr.bf16.mxu0 0
    %4949 = vmatpush1.bf16.msra.mxu0 0
    %4950 = vmatprep.subr.bf16.mxu0 0
    %4951 = vmatpush1.bf16.msra.mxu0 0
    %4952 = vmatprep.subr.bf16.mxu0 0
    %4953 = vmatpush1.bf16.msra.mxu0 0
    %4954 = vmatprep.subr.bf16.mxu0 0
    %4955 = vmatpush1.bf16.msra.mxu0 0
    %4956 = vmatprep.subr.bf16.mxu0 0
    %4957 = vmatpush1.bf16.msra.mxu0 0
    %4958 = vmatprep.subr.bf16.mxu0 0
    %4959 = vmatpush1.bf16.msra.mxu0 0
    %4960 = vmatprep.mubr.bf16.mxu0 0
    %4961 = vmatmul.mubr.bf16.gmra.mrb[0].mxu0 %v4923
    %v4962 = vpop.f32.mrb[0].mxu0
    %v4963 = vadd.f32 0.0, %v4962
    %v4964 = vpop.f32.mrb[0].mxu0
    %v4965 = vpop.f32.mrb[0].mxu0
    %v4966 = vadd.f32 0.0, %v4965
    %v4967 = vpop.f32.mrb[0].mxu0
    %4968 = vmatprep.mubr.bf16.mxu0 0
    %4969 = vmatmul.mubr.bf16.gmra.mrb[0].mxu0 %v4926
    %v4970 = vpop.f32.mrb[0].mxu0
    %v4971 = vadd.f32 0.0, %v4970
    %v4972 = vpop.f32.mrb[0].mxu0
    %v4973 = vpop.f32.mrb[0].mxu0
    %v4974 = vadd.f32 0.0, %v4973
    %v4975 = vpop.f32.mrb[0].mxu0
    %4976 = vdwg.mxu0
    %v4980 = vrot.slane %v3749, 7
    %v4981 = vrot.slane %v3750, 7
    %v4982 = vsel %vm3979, %v4980, %v4981
    %v4983 = vrot.slane %v3751, 7
    %v4984 = vsel %vm3979, %v4981, %v4983
    %v4986 = vsel %vm3985, %v4982, 0
    %v4989 = vsel %vm3985, %v4984, 0
    %4991 = vmatprep.subr.bf16.mxu0 0
    %4992 = vmatpush1.bf16.msra.mxu0 %v3912
    %4993 = vmatprep.subr.bf16.mxu0 0
    %4994 = vmatpush1.bf16.msra.mxu0 %v3913
    %4995 = vmatprep.subr.bf16.mxu0 0
    %4996 = vmatpush1.bf16.msra.mxu0 %v3914
    %4997 = vmatprep.subr.bf16.mxu0 0
    %4998 = vmatpush1.bf16.msra.mxu0 %v3915
    %4999 = vmatprep.subr.bf16.mxu0 0
    %5000 = vmatpush1.bf16.msra.mxu0 0
    %5001 = vmatprep.subr.bf16.mxu0 0
    %5002 = vmatpush1.bf16.msra.mxu0 0
    %5003 = vmatprep.subr.bf16.mxu0 0
    %5004 = vmatpush1.bf16.msra.mxu0 0
    %5005 = vmatprep.subr.bf16.mxu0 0
    %5006 = vmatpush1.bf16.msra.mxu0 0
    %5007 = vmatprep.subr.bf16.mxu0 0
    %5008 = vmatpush1.bf16.msra.mxu0 0
    %5009 = vmatprep.subr.bf16.mxu0 0
    %5010 = vmatpush1.bf16.msra.mxu0 0
    %5011 = vmatprep.subr.bf16.mxu0 0
    %5012 = vmatpush1.bf16.msra.mxu0 0
    %5013 = vmatprep.subr.bf16.mxu0 0
    %5014 = vmatpush1.bf16.msra.mxu0 0
    %5015 = vmatprep.subr.bf16.mxu0 0
    %5016 = vmatpush1.bf16.msra.mxu0 0
    %5017 = vmatprep.subr.bf16.mxu0 0
    %5018 = vmatpush1.bf16.msra.mxu0 0
    %5019 = vmatprep.subr.bf16.mxu0 0
    %5020 = vmatpush1.bf16.msra.mxu0 0
    %5021 = vmatprep.subr.bf16.mxu0 0
    %5022 = vmatpush1.bf16.msra.mxu0 0
    %5023 = vmatprep.mubr.bf16.mxu0 0
    %5024 = vmatmul.mubr.bf16.gmra.mrb[0].mxu0 %v4986
    %v5025 = vpop.f32.mrb[0].mxu0
    %v5026 = vadd.f32 0.0, %v5025
    %v5027 = vpop.f32.mrb[0].mxu0
    %v5028 = vpop.f32.mrb[0].mxu0
    %v5029 = vadd.f32 0.0, %v5028
    %v5030 = vpop.f32.mrb[0].mxu0
    %5031 = vmatprep.mubr.bf16.mxu0 0
    %5032 = vmatmul.mubr.bf16.gmra.mrb[0].mxu0 %v4989
    %v5033 = vpop.f32.mrb[0].mxu0
    %v5034 = vadd.f32 0.0, %v5033
    %v5035 = vpop.f32.mrb[0].mxu0
    %v5036 = vpop.f32.mrb[0].mxu0
    %v5037 = vadd.f32 0.0, %v5036
    %v5038 = vpop.f32.mrb[0].mxu0
    %5039 = vdwg.mxu0
    %v5043 = vrot.slane %v3753, 5
    %v5044 = vrot.slane %v3754, 5
    %v5045 = vsel %vm4044, %v5043, %v5044
    %v5046 = vrot.slane %v3755, 5
    %v5047 = vsel %vm4044, %v5044, %v5046
    %v5049 = vsel %vm3985, %v5045, 0
    %v5052 = vsel %vm3985, %v5047, 0
    %5054 = vmatprep.subr.bf16.mxu0 0
    %5055 = vmatpush1.bf16.msra.mxu0 %v3920
    %5056 = vmatprep.subr.bf16.mxu0 0
    %5057 = vmatpush1.bf16.msra.mxu0 %v3921
    %5058 = vmatprep.subr.bf16.mxu0 0
    %5059 = vmatpush1.bf16.msra.mxu0 %v3922
    %5060 = vmatprep.subr.bf16.mxu0 0
    %5061 = vmatpush1.bf16.msra.mxu0 %v3923
    %5062 = vmatprep.subr.bf16.mxu0 0
    %5063 = vmatpush1.bf16.msra.mxu0 0
    %5064 = vmatprep.subr.bf16.mxu0 0
    %5065 = vmatpush1.bf16.msra.mxu0 0
    %5066 = vmatprep.subr.bf16.mxu0 0
    %5067 = vmatpush1.bf16.msra.mxu0 0
    %5068 = vmatprep.subr.bf16.mxu0 0
    %5069 = vmatpush1.bf16.msra.mxu0 0
    %5070 = vmatprep.subr.bf16.mxu0 0
    %5071 = vmatpush1.bf16.msra.mxu0 0
    %5072 = vmatprep.subr.bf16.mxu0 0
    %5073 = vmatpush1.bf16.msra.mxu0 0
    %5074 = vmatprep.subr.bf16.mxu0 0
    %5075 = vmatpush1.bf16.msra.mxu0 0
    %5076 = vmatprep.subr.bf16.mxu0 0
    %5077 = vmatpush1.bf16.msra.mxu0 0
    %5078 = vmatprep.subr.bf16.mxu0 0
    %5079 = vmatpush1.bf16.msra.mxu0 0
    %5080 = vmatprep.subr.bf16.mxu0 0
    %5081 = vmatpush1.bf16.msra.mxu0 0
    %5082 = vmatprep.subr.bf16.mxu0 0
    %5083 = vmatpush1.bf16.msra.mxu0 0
    %5084 = vmatprep.subr.bf16.mxu0 0
    %5085 = vmatpush1.bf16.msra.mxu0 0
    %5086 = vmatprep.mubr.bf16.mxu0 0
    %5087 = vmatmul.mubr.bf16.gmra.mrb[0].mxu0 %v5049
    %v5088 = vpop.f32.mrb[0].mxu0
    %v5089 = vadd.f32 0.0, %v5088
    %v5090 = vpop.f32.mrb[0].mxu0
    %v5091 = vpop.f32.mrb[0].mxu0
    %v5092 = vadd.f32 0.0, %v5091
    %v5093 = vpop.f32.mrb[0].mxu0
    %5094 = vmatprep.mubr.bf16.mxu0 0
    %5095 = vmatmul.mubr.bf16.gmra.mrb[0].mxu0 %v5052
    %v5096 = vpop.f32.mrb[0].mxu0
    %v5097 = vadd.f32 0.0, %v5096
    %v5098 = vpop.f32.mrb[0].mxu0
    %v5099 = vpop.f32.mrb[0].mxu0
    %v5100 = vadd.f32 0.0, %v5099
    %v5101 = vpop.f32.mrb[0].mxu0
    %5102 = vdwg.mxu0
    %v5106 = vrot.slane %v3757, 3
    %v5107 = vrot.slane %v3758, 3
    %v5108 = vsel %vm4108, %v5106, %v5107
    %v5109 = vrot.slane %v3759, 3
    %v5110 = vsel %vm4108, %v5107, %v5109
    %v5112 = vsel %vm3985, %v5108, 0
    %v5115 = vsel %vm3985, %v5110, 0
    %5117 = vmatprep.subr.bf16.mxu0 0
    %5118 = vmatpush1.bf16.msra.mxu0 %v3928
    %5119 = vmatprep.subr.bf16.mxu0 0
    %5120 = vmatpush1.bf16.msra.mxu0 %v3929
    %5121 = vmatprep.subr.bf16.mxu0 0
    %5122 = vmatpush1.bf16.msra.mxu0 %v3930
    %5123 = vmatprep.subr.bf16.mxu0 0
    %5124 = vmatpush1.bf16.msra.mxu0 %v3931
    %5125 = vmatprep.subr.bf16.mxu0 0
    %5126 = vmatpush1.bf16.msra.mxu0 0
    %5127 = vmatprep.subr.bf16.mxu0 0
    %5128 = vmatpush1.bf16.msra.mxu0 0
    %5129 = vmatprep.subr.bf16.mxu0 0
    %5130 = vmatpush1.bf16.msra.mxu0 0
    %5131 = vmatprep.subr.bf16.mxu0 0
    %5132 = vmatpush1.bf16.msra.mxu0 0
    %5133 = vmatprep.subr.bf16.mxu0 0
    %5134 = vmatpush1.bf16.msra.mxu0 0
    %5135 = vmatprep.subr.bf16.mxu0 0
    %5136 = vmatpush1.bf16.msra.mxu0 0
    %5137 = vmatprep.subr.bf16.mxu0 0
    %5138 = vmatpush1.bf16.msra.mxu0 0
    %5139 = vmatprep.subr.bf16.mxu0 0
    %5140 = vmatpush1.bf16.msra.mxu0 0
    %5141 = vmatprep.subr.bf16.mxu0 0
    %5142 = vmatpush1.bf16.msra.mxu0 0
    %5143 = vmatprep.subr.bf16.mxu0 0
    %5144 = vmatpush1.bf16.msra.mxu0 0
    %5145 = vmatprep.subr.bf16.mxu0 0
    %5146 = vmatpush1.bf16.msra.mxu0 0
    %5147 = vmatprep.subr.bf16.mxu0 0
    %5148 = vmatpush1.bf16.msra.mxu0 0
    %5149 = vmatprep.mubr.bf16.mxu0 0
    %5150 = vmatmul.mubr.bf16.gmra.mrb[0].mxu0 %v5112
    %v5151 = vpop.f32.mrb[0].mxu0
    %v5152 = vadd.f32 0.0, %v5151
    %v5153 = vpop.f32.mrb[0].mxu0
    %v5154 = vpop.f32.mrb[0].mxu0
    %v5155 = vadd.f32 0.0, %v5154
    %v5156 = vpop.f32.mrb[0].mxu0
    %5157 = vmatprep.mubr.bf16.mxu0 0
    %5158 = vmatmul.mubr.bf16.gmra.mrb[0].mxu0 %v5115
    %v5159 = vpop.f32.mrb[0].mxu0
    %v5160 = vadd.f32 0.0, %v5159
    %v5161 = vpop.f32.mrb[0].mxu0
    %v5162 = vpop.f32.mrb[0].mxu0
    %v5163 = vadd.f32 0.0, %v5162
    %v5164 = vpop.f32.mrb[0].mxu0
    %5165 = vdwg.mxu0
    %v5168 = vrot.slane %v3761, 1
    %v5169 = vrot.slane %v3762, 1
    %v5170 = vsel %vm4171, %v5168, %v5169
    %v5172 = vsel %vm3985, %v5170, 0
    %v5175 = vsel %vm3985, %v5169, 0
    %5177 = vmatprep.subr.bf16.mxu0 0
    %5178 = vmatpush1.bf16.msra.mxu0 %v3936
    %5179 = vmatprep.subr.bf16.mxu0 0
    %5180 = vmatpush1.bf16.msra.mxu0 %v3937
    %5181 = vmatprep.subr.bf16.mxu0 0
    %5182 = vmatpush1.bf16.msra.mxu0 %v3938
    %5183 = vmatprep.subr.bf16.mxu0 0
    %5184 = vmatpush1.bf16.msra.mxu0 %v3939
    %5185 = vmatprep.subr.bf16.mxu0 0
    %5186 = vmatpush1.bf16.msra.mxu0 0
    %5187 = vmatprep.subr.bf16.mxu0 0
    %5188 = vmatpush1.bf16.msra.mxu0 0
    %5189 = vmatprep.subr.bf16.mxu0 0
    %5190 = vmatpush1.bf16.msra.mxu0 0
    %5191 = vmatprep.subr.bf16.mxu0 0
    %5192 = vmatpush1.bf16.msra.mxu0 0
    %5193 = vmatprep.subr.bf16.mxu0 0
    %5194 = vmatpush1.bf16.msra.mxu0 0
    %5195 = vmatprep.subr.bf16.mxu0 0
    %5196 = vmatpush1.bf16.msra.mxu0 0
    %5197 = vmatprep.subr.bf16.mxu0 0
    %5198 = vmatpush1.bf16.msra.mxu0 0
    %5199 = vmatprep.subr.bf16.mxu0 0
    %5200 = vmatpush1.bf16.msra.mxu0 0
    %5201 = vmatprep.subr.bf16.mxu0 0
    %5202 = vmatpush1.bf16.msra.mxu0 0
    %5203 = vmatprep.subr.bf16.mxu0 0
    %5204 = vmatpush1.bf16.msra.mxu0 0
    %5205 = vmatprep.subr.bf16.mxu0 0
    %5206 = vmatpush1.bf16.msra.mxu0 0
    %5207 = vmatprep.subr.bf16.mxu0 0
    %5208 = vmatpush1.bf16.msra.mxu0 0
    %5209 = vmatprep.mubr.bf16.mxu0 0
    %5210 = vmatmul.mubr.bf16.gmra.mrb[0].mxu0 %v5172
    %v5211 = vpop.f32.mrb[0].mxu0
    %v5212 = vadd.f32 0.0, %v5211
    %v5213 = vpop.f32.mrb[0].mxu0
    %v5214 = vpop.f32.mrb[0].mxu0
    %v5215 = vadd.f32 0.0, %v5214
    %v5216 = vpop.f32.mrb[0].mxu0
    %5217 = vmatprep.mubr.bf16.mxu0 0
    %5218 = vmatmul.mubr.bf16.gmra.mrb[0].mxu0 %v5175
    %v5219 = vpop.f32.mrb[0].mxu0
    %v5220 = vadd.f32 0.0, %v5219
    %v5221 = vpop.f32.mrb[0].mxu0
    %v5222 = vpop.f32.mrb[0].mxu0
    %v5223 = vadd.f32 0.0, %v5222
    %v5224 = vpop.f32.mrb[0].mxu0
    %5225 = vdwg.mxu0
    %v5229 = vrot.slane %v3764, 7
    %v5230 = vrot.slane %v3765, 7
    %v5231 = vsel %vm3979, %v5229, %v5230
    %v5232 = vrot.slane %v3766, 7
    %v5233 = vsel %vm3979, %v5230, %v5232
    %v5235 = vsel %vm3985, %v5231, 0
    %v5238 = vsel %vm3985, %v5233, 0
    %5240 = vmatprep.subr.bf16.mxu0 0
    %5241 = vmatpush1.bf16.msra.mxu0 %v3944
    %5242 = vmatprep.subr.bf16.mxu0 0
    %5243 = vmatpush1.bf16.msra.mxu0 %v3945
    %5244 = vmatprep.subr.bf16.mxu0 0
    %5245 = vmatpush1.bf16.msra.mxu0 %v3946
    %5246 = vmatprep.subr.bf16.mxu0 0
    %5247 = vmatpush1.bf16.msra.mxu0 %v3947
    %5248 = vmatprep.subr.bf16.mxu0 0
    %5249 = vmatpush1.bf16.msra.mxu0 0
    %5250 = vmatprep.subr.bf16.mxu0 0
    %5251 = vmatpush1.bf16.msra.mxu0 0
    %5252 = vmatprep.subr.bf16.mxu0 0
    %5253 = vmatpush1.bf16.msra.mxu0 0
    %5254 = vmatprep.subr.bf16.mxu0 0
    %5255 = vmatpush1.bf16.msra.mxu0 0
    %5256 = vmatprep.subr.bf16.mxu0 0
    %5257 = vmatpush1.bf16.msra.mxu0 0
    %5258 = vmatprep.subr.bf16.mxu0 0
    %5259 = vmatpush1.bf16.msra.mxu0 0
    %5260 = vmatprep.subr.bf16.mxu0 0
    %5261 = vmatpush1.bf16.msra.mxu0 0
    %5262 = vmatprep.subr.bf16.mxu0 0
    %5263 = vmatpush1.bf16.msra.mxu0 0
    %5264 = vmatprep.subr.bf16.mxu0 0
    %5265 = vmatpush1.bf16.msra.mxu0 0
    %5266 = vmatprep.subr.bf16.mxu0 0
    %5267 = vmatpush1.bf16.msra.mxu0 0
    %5268 = vmatprep.subr.bf16.mxu0 0
    %5269 = vmatpush1.bf16.msra.mxu0 0
    %5270 = vmatprep.subr.bf16.mxu0 0
    %5271 = vmatpush1.bf16.msra.mxu0 0
    %5272 = vmatprep.mubr.bf16.mxu0 0
    %5273 = vmatmul.mubr.bf16.gmra.mrb[0].mxu0 %v5235
    %v5274 = vpop.f32.mrb[0].mxu0
    %v5275 = vadd.f32 0.0, %v5274
    %v5276 = vpop.f32.mrb[0].mxu0
    %v5277 = vpop.f32.mrb[0].mxu0
    %v5278 = vadd.f32 0.0, %v5277
    %v5279 = vpop.f32.mrb[0].mxu0
    %5280 = vmatprep.mubr.bf16.mxu0 0
    %5281 = vmatmul.mubr.bf16.gmra.mrb[0].mxu0 %v5238
    %v5282 = vpop.f32.mrb[0].mxu0
    %v5283 = vadd.f32 0.0, %v5282
    %v5284 = vpop.f32.mrb[0].mxu0
    %v5285 = vpop.f32.mrb[0].mxu0
    %v5286 = vadd.f32 0.0, %v5285
    %v5287 = vpop.f32.mrb[0].mxu0
    %5288 = vdwg.mxu0
    %v5292 = vrot.slane %v3768, 5
    %v5293 = vrot.slane %v3769, 5
    %v5294 = vsel %vm4044, %v5292, %v5293
    %v5295 = vrot.slane %v3770, 5
    %v5296 = vsel %vm4044, %v5293, %v5295
    %v5298 = vsel %vm3985, %v5294, 0
    %v5301 = vsel %vm3985, %v5296, 0
    %5303 = vmatprep.subr.bf16.mxu0 0
    %5304 = vmatpush1.bf16.msra.mxu0 %v3952
    %5305 = vmatprep.subr.bf16.mxu0 0
    %5306 = vmatpush1.bf16.msra.mxu0 %v3953
    %5307 = vmatprep.subr.bf16.mxu0 0
    %5308 = vmatpush1.bf16.msra.mxu0 %v3954
    %5309 = vmatprep.subr.bf16.mxu0 0
    %5310 = vmatpush1.bf16.msra.mxu0 %v3955
    %5311 = vmatprep.subr.bf16.mxu0 0
    %5312 = vmatpush1.bf16.msra.mxu0 0
    %5313 = vmatprep.subr.bf16.mxu0 0
    %5314 = vmatpush1.bf16.msra.mxu0 0
    %5315 = vmatprep.subr.bf16.mxu0 0
    %5316 = vmatpush1.bf16.msra.mxu0 0
    %5317 = vmatprep.subr.bf16.mxu0 0
    %5318 = vmatpush1.bf16.msra.mxu0 0
    %5319 = vmatprep.subr.bf16.mxu0 0
    %5320 = vmatpush1.bf16.msra.mxu0 0
    %5321 = vmatprep.subr.bf16.mxu0 0
    %5322 = vmatpush1.bf16.msra.mxu0 0
    %5323 = vmatprep.subr.bf16.mxu0 0
    %5324 = vmatpush1.bf16.msra.mxu0 0
    %5325 = vmatprep.subr.bf16.mxu0 0
    %5326 = vmatpush1.bf16.msra.mxu0 0
    %5327 = vmatprep.subr.bf16.mxu0 0
    %5328 = vmatpush1.bf16.msra.mxu0 0
    %5329 = vmatprep.subr.bf16.mxu0 0
    %5330 = vmatpush1.bf16.msra.mxu0 0
    %5331 = vmatprep.subr.bf16.mxu0 0
    %5332 = vmatpush1.bf16.msra.mxu0 0
    %5333 = vmatprep.subr.bf16.mxu0 0
    %5334 = vmatpush1.bf16.msra.mxu0 0
    %5335 = vmatprep.mubr.bf16.mxu0 0
    %5336 = vmatmul.mubr.bf16.gmra.mrb[0].mxu0 %v5298
    %v5337 = vpop.f32.mrb[0].mxu0
    %v5338 = vadd.f32 0.0, %v5337
    %v5339 = vpop.f32.mrb[0].mxu0
    %v5340 = vpop.f32.mrb[0].mxu0
    %v5341 = vadd.f32 0.0, %v5340
    %v5342 = vpop.f32.mrb[0].mxu0
    %5343 = vmatprep.mubr.bf16.mxu0 0
    %5344 = vmatmul.mubr.bf16.gmra.mrb[0].mxu0 %v5301
    %v5345 = vpop.f32.mrb[0].mxu0
    %v5346 = vadd.f32 0.0, %v5345
    %v5347 = vpop.f32.mrb[0].mxu0
    %v5348 = vpop.f32.mrb[0].mxu0
    %v5349 = vadd.f32 0.0, %v5348
    %v5350 = vpop.f32.mrb[0].mxu0
    %5351 = vdwg.mxu0
    %v5355 = vrot.slane %v3772, 3
    %v5356 = vrot.slane %v3773, 3
    %v5357 = vsel %vm4108, %v5355, %v5356
    %v5358 = vrot.slane %v3774, 3
    %v5359 = vsel %vm4108, %v5356, %v5358
    %v5361 = vsel %vm3985, %v5357, 0
    %v5364 = vsel %vm3985, %v5359, 0
    %5366 = vmatprep.subr.bf16.mxu0 0
    %5367 = vmatpush1.bf16.msra.mxu0 %v3960
    %5368 = vmatprep.subr.bf16.mxu0 0
    %5369 = vmatpush1.bf16.msra.mxu0 %v3961
    %5370 = vmatprep.subr.bf16.mxu0 0
    %5371 = vmatpush1.bf16.msra.mxu0 %v3962
    %5372 = vmatprep.subr.bf16.mxu0 0
    %5373 = vmatpush1.bf16.msra.mxu0 %v3963
    %5374 = vmatprep.subr.bf16.mxu0 0
    %5375 = vmatpush1.bf16.msra.mxu0 0
    %5376 = vmatprep.subr.bf16.mxu0 0
    %5377 = vmatpush1.bf16.msra.mxu0 0
    %5378 = vmatprep.subr.bf16.mxu0 0
    %5379 = vmatpush1.bf16.msra.mxu0 0
    %5380 = vmatprep.subr.bf16.mxu0 0
    %5381 = vmatpush1.bf16.msra.mxu0 0
    %5382 = vmatprep.subr.bf16.mxu0 0
    %5383 = vmatpush1.bf16.msra.mxu0 0
    %5384 = vmatprep.subr.bf16.mxu0 0
    %5385 = vmatpush1.bf16.msra.mxu0 0
    %5386 = vmatprep.subr.bf16.mxu0 0
    %5387 = vmatpush1.bf16.msra.mxu0 0
    %5388 = vmatprep.subr.bf16.mxu0 0
    %5389 = vmatpush1.bf16.msra.mxu0 0
    %5390 = vmatprep.subr.bf16.mxu0 0
    %5391 = vmatpush1.bf16.msra.mxu0 0
    %5392 = vmatprep.subr.bf16.mxu0 0
    %5393 = vmatpush1.bf16.msra.mxu0 0
    %5394 = vmatprep.subr.bf16.mxu0 0
    %5395 = vmatpush1.bf16.msra.mxu0 0
    %5396 = vmatprep.subr.bf16.mxu0 0
    %5397 = vmatpush1.bf16.msra.mxu0 0
    %5398 = vmatprep.mubr.bf16.mxu0 0
    %5399 = vmatmul.mubr.bf16.gmra.mrb[0].mxu0 %v5361
    %v5400 = vpop.f32.mrb[0].mxu0
    %v5401 = vadd.f32 0.0, %v5400
    %v5402 = vpop.f32.mrb[0].mxu0
    %v5403 = vpop.f32.mrb[0].mxu0
    %v5404 = vadd.f32 0.0, %v5403
    %v5405 = vpop.f32.mrb[0].mxu0
    %5406 = vmatprep.mubr.bf16.mxu0 0
    %5407 = vmatmul.mubr.bf16.gmra.mrb[0].mxu0 %v5364
    %v5408 = vpop.f32.mrb[0].mxu0
    %v5409 = vadd.f32 0.0, %v5408
    %v5410 = vpop.f32.mrb[0].mxu0
    %v5411 = vpop.f32.mrb[0].mxu0
    %v5412 = vadd.f32 0.0, %v5411
    %v5413 = vpop.f32.mrb[0].mxu0
    %5414 = vdwg.mxu0
    %v5417 = vrot.slane %v3776, 1
    %v5418 = vrot.slane %v3777, 1
    %v5419 = vsel %vm4171, %v5417, %v5418
    %v5421 = vsel %vm3985, %v5419, 0
    %v5424 = vsel %vm3985, %v5418, 0
    %5426 = vmatprep.subr.bf16.mxu0 0
    %5427 = vmatpush1.bf16.msra.mxu0 %v3968
    %5428 = vmatprep.subr.bf16.mxu0 0
    %5429 = vmatpush1.bf16.msra.mxu0 %v3969
    %5430 = vmatprep.subr.bf16.mxu0 0
    %5431 = vmatpush1.bf16.msra.mxu0 %v3970
    %5432 = vmatprep.subr.bf16.mxu0 0
    %5433 = vmatpush1.bf16.msra.mxu0 %v3971
    %5434 = vmatprep.subr.bf16.mxu0 0
    %5435 = vmatpush1.bf16.msra.mxu0 0
    %5436 = vmatprep.subr.bf16.mxu0 0
    %5437 = vmatpush1.bf16.msra.mxu0 0
    %5438 = vmatprep.subr.bf16.mxu0 0
    %5439 = vmatpush1.bf16.msra.mxu0 0
    %5440 = vmatprep.subr.bf16.mxu0 0
    %5441 = vmatpush1.bf16.msra.mxu0 0
    %5442 = vmatprep.subr.bf16.mxu0 0
    %5443 = vmatpush1.bf16.msra.mxu0 0
    %5444 = vmatprep.subr.bf16.mxu0 0
    %5445 = vmatpush1.bf16.msra.mxu0 0
    %5446 = vmatprep.subr.bf16.mxu0 0
    %5447 = vmatpush1.bf16.msra.mxu0 0
    %5448 = vmatprep.subr.bf16.mxu0 0
    %5449 = vmatpush1.bf16.msra.mxu0 0
    %5450 = vmatprep.subr.bf16.mxu0 0
    %5451 = vmatpush1.bf16.msra.mxu0 0
    %5452 = vmatprep.subr.bf16.mxu0 0
    %5453 = vmatpush1.bf16.msra.mxu0 0
    %5454 = vmatprep.subr.bf16.mxu0 0
    %5455 = vmatpush1.bf16.msra.mxu0 0
    %5456 = vmatprep.subr.bf16.mxu0 0
    %5457 = vmatpush1.bf16.msra.mxu0 0
    %5458 = vmatprep.mubr.bf16.mxu0 0
    %5459 = vmatmul.mubr.bf16.gmra.mrb[0].mxu0 %v5421
    %v5460 = vpop.f32.mrb[0].mxu0
    %v5461 = vadd.f32 0.0, %v5460
    %v5462 = vpop.f32.mrb[0].mxu0
    %v5463 = vpop.f32.mrb[0].mxu0
    %v5464 = vadd.f32 0.0, %v5463
    %v5465 = vpop.f32.mrb[0].mxu0
    %5466 = vmatprep.mubr.bf16.mxu0 0
    %5467 = vmatmul.mubr.bf16.gmra.mrb[0].mxu0 %v5424
    %v5468 = vpop.f32.mrb[0].mxu0
    %v5469 = vadd.f32 0.0, %v5468
    %v5470 = vpop.f32.mrb[0].mxu0
    %v5471 = vpop.f32.mrb[0].mxu0
    %v5472 = vadd.f32 0.0, %v5471
    %v5473 = vpop.f32.mrb[0].mxu0
    %5474 = vdwg.mxu0
    %v5476 = vsel %vm3985, %v3778, 0
    %v5479 = vsel %vm3985, %v3779, 0
    %5481 = vmatprep.subr.bf16.mxu0 0
    %5482 = vmatpush1.bf16.msra.mxu0 %v3972
    %5483 = vmatprep.subr.bf16.mxu0 0
    %5484 = vmatpush1.bf16.msra.mxu0 %v3973
    %5485 = vmatprep.subr.bf16.mxu0 0
    %5486 = vmatpush1.bf16.msra.mxu0 %v3974
    %5487 = vmatprep.subr.bf16.mxu0 0
    %5488 = vmatpush1.bf16.msra.mxu0 %v3975
    %5489 = vmatprep.subr.bf16.mxu0 0
    %5490 = vmatpush1.bf16.msra.mxu0 0
    %5491 = vmatprep.subr.bf16.mxu0 0
    %5492 = vmatpush1.bf16.msra.mxu0 0
    %5493 = vmatprep.subr.bf16.mxu0 0
    %5494 = vmatpush1.bf16.msra.mxu0 0
    %5495 = vmatprep.subr.bf16.mxu0 0
    %5496 = vmatpush1.bf16.msra.mxu0 0
    %5497 = vmatprep.subr.bf16.mxu0 0
    %5498 = vmatpush1.bf16.msra.mxu0 0
    %5499 = vmatprep.subr.bf16.mxu0 0
    %5500 = vmatpush1.bf16.msra.mxu0 0
    %5501 = vmatprep.subr.bf16.mxu0 0
    %5502 = vmatpush1.bf16.msra.mxu0 0
    %5503 = vmatprep.subr.bf16.mxu0 0
    %5504 = vmatpush1.bf16.msra.mxu0 0
    %5505 = vmatprep.subr.bf16.mxu0 0
    %5506 = vmatpush1.bf16.msra.mxu0 0
    %5507 = vmatprep.subr.bf16.mxu0 0
    %5508 = vmatpush1.bf16.msra.mxu0 0
    %5509 = vmatprep.subr.bf16.mxu0 0
    %5510 = vmatpush1.bf16.msra.mxu0 0
    %5511 = vmatprep.subr.bf16.mxu0 0
    %5512 = vmatpush1.bf16.msra.mxu0 0
    %5513 = vmatprep.mubr.bf16.mxu0 0
    %5514 = vmatmul.mubr.bf16.gmra.mrb[0].mxu0 %v5476
    %v5515 = vpop.f32.mrb[0].mxu0
    %v5516 = vadd.f32 0.0, %v5515
    %v5517 = vpop.f32.mrb[0].mxu0
    %v5518 = vpop.f32.mrb[0].mxu0
    %v5519 = vadd.f32 0.0, %v5518
    %v5520 = vpop.f32.mrb[0].mxu0
    %5521 = vmatprep.mubr.bf16.mxu0 0
    %5522 = vmatmul.mubr.bf16.gmra.mrb[0].mxu0 %v5479
    %v5523 = vpop.f32.mrb[0].mxu0
    %v5524 = vadd.f32 0.0, %v5523
    %v5525 = vpop.f32.mrb[0].mxu0
    %v5526 = vpop.f32.mrb[0].mxu0
    %v5527 = vadd.f32 0.0, %v5526
    %v5528 = vpop.f32.mrb[0].mxu0
    %5529 = vdwg.mxu0
    %v5531 = vsel %vm3985, %v3688, 0
    %v5534 = vsel %vm3985, %v3689, 0
    %5536 = vmatprep.subr.bf16.mxu0 0
    %5537 = vmatpush1.bf16.msra.mxu0 %v3780
    %5538 = vmatprep.subr.bf16.mxu0 0
    %5539 = vmatpush1.bf16.msra.mxu0 %v3781
    %5540 = vmatprep.subr.bf16.mxu0 0
    %5541 = vmatpush1.bf16.msra.mxu0 %v3782
    %5542 = vmatprep.subr.bf16.mxu0 0
    %5543 = vmatpush1.bf16.msra.mxu0 %v3783
    %5544 = vmatprep.subr.bf16.mxu0 0
    %5545 = vmatpush1.bf16.msra.mxu0 0
    %5546 = vmatprep.subr.bf16.mxu0 0
    %5547 = vmatpush1.bf16.msra.mxu0 0
    %5548 = vmatprep.subr.bf16.mxu0 0
    %5549 = vmatpush1.bf16.msra.mxu0 0
    %5550 = vmatprep.subr.bf16.mxu0 0
    %5551 = vmatpush1.bf16.msra.mxu0 0
    %5552 = vmatprep.subr.bf16.mxu0 0
    %5553 = vmatpush1.bf16.msra.mxu0 0
    %5554 = vmatprep.subr.bf16.mxu0 0
    %5555 = vmatpush1.bf16.msra.mxu0 0
    %5556 = vmatprep.subr.bf16.mxu0 0
    %5557 = vmatpush1.bf16.msra.mxu0 0
    %5558 = vmatprep.subr.bf16.mxu0 0
    %5559 = vmatpush1.bf16.msra.mxu0 0
    %5560 = vmatprep.subr.bf16.mxu0 0
    %5561 = vmatpush1.bf16.msra.mxu0 0
    %5562 = vmatprep.subr.bf16.mxu0 0
    %5563 = vmatpush1.bf16.msra.mxu0 0
    %5564 = vmatprep.subr.bf16.mxu0 0
    %5565 = vmatpush1.bf16.msra.mxu0 0
    %5566 = vmatprep.subr.bf16.mxu0 0
    %5567 = vmatpush1.bf16.msra.mxu0 0
    %5568 = vmatprep.mubr.bf16.mxu0 0
    %5569 = vmatmul.mubr.bf16.gmra.mrb[0].mxu0 %v5531
    %v5570 = vpop.f32.mrb[0].mxu0
    %v5571 = vadd.f32 %v4027, %v5570
    %v5572 = vpop.f32.mrb[0].mxu0
    %v5573 = vpop.f32.mrb[0].mxu0
    %v5574 = vadd.f32 %v4030, %v5573
    %v5575 = vpop.f32.mrb[0].mxu0
    %5576 = vmatprep.mubr.bf16.mxu0 0
    %5577 = vmatmul.mubr.bf16.gmra.mrb[0].mxu0 %v5534
    %v5578 = vpop.f32.mrb[0].mxu0
    %v5579 = vadd.f32 %v4035, %v5578
    %v5580 = vpop.f32.mrb[0].mxu0
    %v5581 = vpop.f32.mrb[0].mxu0
    %v5582 = vadd.f32 %v4038, %v5581
    %v5583 = vpop.f32.mrb[0].mxu0
    %5584 = vdwg.mxu0
    %vm5586 = vcmask 1041408
    %v5587 = vrot.slane %v3691, 6
    %v5588 = vrot.slane %v3692, 6
    %v5589 = vsel %vm5586, %v5587, %v5588
    %v5590 = vrot.slane %v3693, 6
    %v5591 = vsel %vm5586, %v5588, %v5590
    %v5593 = vsel %vm3985, %v5589, 0
    %v5596 = vsel %vm3985, %v5591, 0
    %5598 = vmatprep.subr.bf16.mxu0 0
    %5599 = vmatpush1.bf16.msra.mxu0 %v3788
    %5600 = vmatprep.subr.bf16.mxu0 0
    %5601 = vmatpush1.bf16.msra.mxu0 %v3789
    %5602 = vmatprep.subr.bf16.mxu0 0
    %5603 = vmatpush1.bf16.msra.mxu0 %v3790
    %5604 = vmatprep.subr.bf16.mxu0 0
    %5605 = vmatpush1.bf16.msra.mxu0 %v3791
    %5606 = vmatprep.subr.bf16.mxu0 0
    %5607 = vmatpush1.bf16.msra.mxu0 0
    %5608 = vmatprep.subr.bf16.mxu0 0
    %5609 = vmatpush1.bf16.msra.mxu0 0
    %5610 = vmatprep.subr.bf16.mxu0 0
    %5611 = vmatpush1.bf16.msra.mxu0 0
    %5612 = vmatprep.subr.bf16.mxu0 0
    %5613 = vmatpush1.bf16.msra.mxu0 0
    %5614 = vmatprep.subr.bf16.mxu0 0
    %5615 = vmatpush1.bf16.msra.mxu0 0
    %5616 = vmatprep.subr.bf16.mxu0 0
    %5617 = vmatpush1.bf16.msra.mxu0 0
    %5618 = vmatprep.subr.bf16.mxu0 0
    %5619 = vmatpush1.bf16.msra.mxu0 0
    %5620 = vmatprep.subr.bf16.mxu0 0
    %5621 = vmatpush1.bf16.msra.mxu0 0
    %5622 = vmatprep.subr.bf16.mxu0 0
    %5623 = vmatpush1.bf16.msra.mxu0 0
    %5624 = vmatprep.subr.bf16.mxu0 0
    %5625 = vmatpush1.bf16.msra.mxu0 0
    %5626 = vmatprep.subr.bf16.mxu0 0
    %5627 = vmatpush1.bf16.msra.mxu0 0
    %5628 = vmatprep.subr.bf16.mxu0 0
    %5629 = vmatpush1.bf16.msra.mxu0 0
    %5630 = vmatprep.mubr.bf16.mxu0 0
    %5631 = vmatmul.mubr.bf16.gmra.mrb[0].mxu0 %v5593
    %v5632 = vpop.f32.mrb[0].mxu0
    %v5633 = vadd.f32 %v4091, %v5632
    %v5634 = vpop.f32.mrb[0].mxu0
    %v5635 = vpop.f32.mrb[0].mxu0
    %v5636 = vadd.f32 %v4094, %v5635
    %v5637 = vpop.f32.mrb[0].mxu0
    %5638 = vmatprep.mubr.bf16.mxu0 0
    %5639 = vmatmul.mubr.bf16.gmra.mrb[0].mxu0 %v5596
    %v5640 = vpop.f32.mrb[0].mxu0
    %v5641 = vadd.f32 %v4099, %v5640
    %v5642 = vpop.f32.mrb[0].mxu0
    %v5643 = vpop.f32.mrb[0].mxu0
    %v5644 = vadd.f32 %v4102, %v5643
    %v5645 = vpop.f32.mrb[0].mxu0
    %5646 = vdwg.mxu0
    %vm5648 = vcmask 1043456
    %v5649 = vrot.slane %v3695, 4
    %v5650 = vrot.slane %v3696, 4
    %v5651 = vsel %vm5648, %v5649, %v5650
    %v5652 = vrot.slane %v3697, 4
    %v5653 = vsel %vm5648, %v5650, %v5652
    %v5655 = vsel %vm3985, %v5651, 0
    %v5658 = vsel %vm3985, %v5653, 0
    %5660 = vmatprep.subr.bf16.mxu0 0
    %5661 = vmatpush1.bf16.msra.mxu0 %v3796
    %5662 = vmatprep.subr.bf16.mxu0 0
    %5663 = vmatpush1.bf16.msra.mxu0 %v3797
    %5664 = vmatprep.subr.bf16.mxu0 0
    %5665 = vmatpush1.bf16.msra.mxu0 %v3798
    %5666 = vmatprep.subr.bf16.mxu0 0
    %5667 = vmatpush1.bf16.msra.mxu0 %v3799
    %5668 = vmatprep.subr.bf16.mxu0 0
    %5669 = vmatpush1.bf16.msra.mxu0 0
    %5670 = vmatprep.subr.bf16.mxu0 0
    %5671 = vmatpush1.bf16.msra.mxu0 0
    %5672 = vmatprep.subr.bf16.mxu0 0
    %5673 = vmatpush1.bf16.msra.mxu0 0
    %5674 = vmatprep.subr.bf16.mxu0 0
    %5675 = vmatpush1.bf16.msra.mxu0 0
    %5676 = vmatprep.subr.bf16.mxu0 0
    %5677 = vmatpush1.bf16.msra.mxu0 0
    %5678 = vmatprep.subr.bf16.mxu0 0
    %5679 = vmatpush1.bf16.msra.mxu0 0
    %5680 = vmatprep.subr.bf16.mxu0 0
    %5681 = vmatpush1.bf16.msra.mxu0 0
    %5682 = vmatprep.subr.bf16.mxu0 0
    %5683 = vmatpush1.bf16.msra.mxu0 0
    %5684 = vmatprep.subr.bf16.mxu0 0
    %5685 = vmatpush1.bf16.msra.mxu0 0
    %5686 = vmatprep.subr.bf16.mxu0 0
    %5687 = vmatpush1.bf16.msra.mxu0 0
    %5688 = vmatprep.subr.bf16.mxu0 0
    %5689 = vmatpush1.bf16.msra.mxu0 0
    %5690 = vmatprep.subr.bf16.mxu0 0
    %5691 = vmatpush1.bf16.msra.mxu0 0
    %5692 = vmatprep.mubr.bf16.mxu0 0
    %5693 = vmatmul.mubr.bf16.gmra.mrb[0].mxu0 %v5655
    %v5694 = vpop.f32.mrb[0].mxu0
    %v5695 = vadd.f32 %v4155, %v5694
    %v5696 = vpop.f32.mrb[0].mxu0
    %v5697 = vpop.f32.mrb[0].mxu0
    %v5698 = vadd.f32 %v4158, %v5697
    %v5699 = vpop.f32.mrb[0].mxu0
    %5700 = vmatprep.mubr.bf16.mxu0 0
    %5701 = vmatmul.mubr.bf16.gmra.mrb[0].mxu0 %v5658
    %v5702 = vpop.f32.mrb[0].mxu0
    %v5703 = vadd.f32 %v4163, %v5702
    %v5704 = vpop.f32.mrb[0].mxu0
    %v5705 = vpop.f32.mrb[0].mxu0
    %v5706 = vadd.f32 %v4166, %v5705
    %v5707 = vpop.f32.mrb[0].mxu0
    %5708 = vdwg.mxu0
    %vm5710 = vcmask 1045504
    %v5711 = vrot.slane %v3699, 2
    %v5712 = vrot.slane %v3700, 2
    %v5713 = vsel %vm5710, %v5711, %v5712
    %v5714 = vrot.slane %v3701, 2
    %v5715 = vsel %vm5710, %v5712, %v5714
    %v5717 = vsel %vm3985, %v5713, 0
    %v5720 = vsel %vm3985, %v5715, 0
    %5722 = vmatprep.subr.bf16.mxu0 0
    %5723 = vmatpush1.bf16.msra.mxu0 %v3804
    %5724 = vmatprep.subr.bf16.mxu0 0
    %5725 = vmatpush1.bf16.msra.mxu0 %v3805
    %5726 = vmatprep.subr.bf16.mxu0 0
    %5727 = vmatpush1.bf16.msra.mxu0 %v3806
    %5728 = vmatprep.subr.bf16.mxu0 0
    %5729 = vmatpush1.bf16.msra.mxu0 %v3807
    %5730 = vmatprep.subr.bf16.mxu0 0
    %5731 = vmatpush1.bf16.msra.mxu0 0
    %5732 = vmatprep.subr.bf16.mxu0 0
    %5733 = vmatpush1.bf16.msra.mxu0 0
    %5734 = vmatprep.subr.bf16.mxu0 0
    %5735 = vmatpush1.bf16.msra.mxu0 0
    %5736 = vmatprep.subr.bf16.mxu0 0
    %5737 = vmatpush1.bf16.msra.mxu0 0
    %5738 = vmatprep.subr.bf16.mxu0 0
    %5739 = vmatpush1.bf16.msra.mxu0 0
    %5740 = vmatprep.subr.bf16.mxu0 0
    %5741 = vmatpush1.bf16.msra.mxu0 0
    %5742 = vmatprep.subr.bf16.mxu0 0
    %5743 = vmatpush1.bf16.msra.mxu0 0
    %5744 = vmatprep.subr.bf16.mxu0 0
    %5745 = vmatpush1.bf16.msra.mxu0 0
    %5746 = vmatprep.subr.bf16.mxu0 0
    %5747 = vmatpush1.bf16.msra.mxu0 0
    %5748 = vmatprep.subr.bf16.mxu0 0
    %5749 = vmatpush1.bf16.msra.mxu0 0
    %5750 = vmatprep.subr.bf16.mxu0 0
    %5751 = vmatpush1.bf16.msra.mxu0 0
    %5752 = vmatprep.subr.bf16.mxu0 0
    %5753 = vmatpush1.bf16.msra.mxu0 0
    %5754 = vmatprep.mubr.bf16.mxu0 0
    %5755 = vmatmul.mubr.bf16.gmra.mrb[0].mxu0 %v5717
    %v5756 = vpop.f32.mrb[0].mxu0
    %v5757 = vadd.f32 %v4216, %v5756
    %v5758 = vpop.f32.mrb[0].mxu0
    %v5759 = vpop.f32.mrb[0].mxu0
    %v5760 = vadd.f32 %v4219, %v5759
    %v5761 = vpop.f32.mrb[0].mxu0
    %5762 = vmatprep.mubr.bf16.mxu0 0
    %5763 = vmatmul.mubr.bf16.gmra.mrb[0].mxu0 %v5720
    %v5764 = vpop.f32.mrb[0].mxu0
    %v5765 = vadd.f32 %v4224, %v5764
    %v5766 = vpop.f32.mrb[0].mxu0
    %v5767 = vpop.f32.mrb[0].mxu0
    %v5768 = vadd.f32 %v4227, %v5767
    %v5769 = vpop.f32.mrb[0].mxu0
    %5770 = vdwg.mxu0
    %v5772 = vsel %vm3985, %v3703, 0
    %v5775 = vsel %vm3985, %v3704, 0
    %5777 = vmatprep.subr.bf16.mxu0 0
    %5778 = vmatpush1.bf16.msra.mxu0 %v3812
    %5779 = vmatprep.subr.bf16.mxu0 0
    %5780 = vmatpush1.bf16.msra.mxu0 %v3813
    %5781 = vmatprep.subr.bf16.mxu0 0
    %5782 = vmatpush1.bf16.msra.mxu0 %v3814
    %5783 = vmatprep.subr.bf16.mxu0 0
    %5784 = vmatpush1.bf16.msra.mxu0 %v3815
    %5785 = vmatprep.subr.bf16.mxu0 0
    %5786 = vmatpush1.bf16.msra.mxu0 0
    %5787 = vmatprep.subr.bf16.mxu0 0
    %5788 = vmatpush1.bf16.msra.mxu0 0
    %5789 = vmatprep.subr.bf16.mxu0 0
    %5790 = vmatpush1.bf16.msra.mxu0 0
    %5791 = vmatprep.subr.bf16.mxu0 0
    %5792 = vmatpush1.bf16.msra.mxu0 0
    %5793 = vmatprep.subr.bf16.mxu0 0
    %5794 = vmatpush1.bf16.msra.mxu0 0
    %5795 = vmatprep.subr.bf16.mxu0 0
    %5796 = vmatpush1.bf16.msra.mxu0 0
    %5797 = vmatprep.subr.bf16.mxu0 0
    %5798 = vmatpush1.bf16.msra.mxu0 0
    %5799 = vmatprep.subr.bf16.mxu0 0
    %5800 = vmatpush1.bf16.msra.mxu0 0
    %5801 = vmatprep.subr.bf16.mxu0 0
    %5802 = vmatpush1.bf16.msra.mxu0 0
    %5803 = vmatprep.subr.bf16.mxu0 0
    %5804 = vmatpush1.bf16.msra.mxu0 0
    %5805 = vmatprep.subr.bf16.mxu0 0
    %5806 = vmatpush1.bf16.msra.mxu0 0
    %5807 = vmatprep.subr.bf16.mxu0 0
    %5808 = vmatpush1.bf16.msra.mxu0 0
    %5809 = vmatprep.mubr.bf16.mxu0 0
    %5810 = vmatmul.mubr.bf16.gmra.mrb[0].mxu0 %v5772
    %v5811 = vpop.f32.mrb[0].mxu0
    %v5812 = vadd.f32 %v4279, %v5811
    %v5813 = vpop.f32.mrb[0].mxu0
    %v5814 = vpop.f32.mrb[0].mxu0
    %v5815 = vadd.f32 %v4282, %v5814
    %v5816 = vpop.f32.mrb[0].mxu0
    %5817 = vmatprep.mubr.bf16.mxu0 0
    %5818 = vmatmul.mubr.bf16.gmra.mrb[0].mxu0 %v5775
    %v5819 = vpop.f32.mrb[0].mxu0
    %v5820 = vadd.f32 %v4287, %v5819
    %v5821 = vpop.f32.mrb[0].mxu0
    %v5822 = vpop.f32.mrb[0].mxu0
    %v5823 = vadd.f32 %v4290, %v5822
    %v5824 = vpop.f32.mrb[0].mxu0
    %5825 = vdwg.mxu0
    %v5827 = vrot.slane %v3706, 6
    %v5828 = vrot.slane %v3707, 6
    %v5829 = vsel %vm5586, %v5827, %v5828
    %v5830 = vrot.slane %v3708, 6
    %v5831 = vsel %vm5586, %v5828, %v5830
    %v5833 = vsel %vm3985, %v5829, 0
    %v5836 = vsel %vm3985, %v5831, 0
    %5838 = vmatprep.subr.bf16.mxu0 0
    %5839 = vmatpush1.bf16.msra.mxu0 %v3820
    %5840 = vmatprep.subr.bf16.mxu0 0
    %5841 = vmatpush1.bf16.msra.mxu0 %v3821
    %5842 = vmatprep.subr.bf16.mxu0 0
    %5843 = vmatpush1.bf16.msra.mxu0 %v3822
    %5844 = vmatprep.subr.bf16.mxu0 0
    %5845 = vmatpush1.bf16.msra.mxu0 %v3823
    %5846 = vmatprep.subr.bf16.mxu0 0
    %5847 = vmatpush1.bf16.msra.mxu0 0
    %5848 = vmatprep.subr.bf16.mxu0 0
    %5849 = vmatpush1.bf16.msra.mxu0 0
    %5850 = vmatprep.subr.bf16.mxu0 0
    %5851 = vmatpush1.bf16.msra.mxu0 0
    %5852 = vmatprep.subr.bf16.mxu0 0
    %5853 = vmatpush1.bf16.msra.mxu0 0
    %5854 = vmatprep.subr.bf16.mxu0 0
    %5855 = vmatpush1.bf16.msra.mxu0 0
    %5856 = vmatprep.subr.bf16.mxu0 0
    %5857 = vmatpush1.bf16.msra.mxu0 0
    %5858 = vmatprep.subr.bf16.mxu0 0
    %5859 = vmatpush1.bf16.msra.mxu0 0
    %5860 = vmatprep.subr.bf16.mxu0 0
    %5861 = vmatpush1.bf16.msra.mxu0 0
    %5862 = vmatprep.subr.bf16.mxu0 0
    %5863 = vmatpush1.bf16.msra.mxu0 0
    %5864 = vmatprep.subr.bf16.mxu0 0
    %5865 = vmatpush1.bf16.msra.mxu0 0
    %5866 = vmatprep.subr.bf16.mxu0 0
    %5867 = vmatpush1.bf16.msra.mxu0 0
    %5868 = vmatprep.subr.bf16.mxu0 0
    %5869 = vmatpush1.bf16.msra.mxu0 0
    %5870 = vmatprep.mubr.bf16.mxu0 0
    %5871 = vmatmul.mubr.bf16.gmra.mrb[0].mxu0 %v5833
    %v5872 = vpop.f32.mrb[0].mxu0
    %v5873 = vadd.f32 %v4342, %v5872
    %v5874 = vpop.f32.mrb[0].mxu0
    %v5875 = vpop.f32.mrb[0].mxu0
    %v5876 = vadd.f32 %v4345, %v5875
    %v5877 = vpop.f32.mrb[0].mxu0
    %5878 = vmatprep.mubr.bf16.mxu0 0
    %5879 = vmatmul.mubr.bf16.gmra.mrb[0].mxu0 %v5836
    %v5880 = vpop.f32.mrb[0].mxu0
    %v5881 = vadd.f32 %v4350, %v5880
    %v5882 = vpop.f32.mrb[0].mxu0
    %v5883 = vpop.f32.mrb[0].mxu0
    %v5884 = vadd.f32 %v4353, %v5883
    %v5885 = vpop.f32.mrb[0].mxu0
    %5886 = vdwg.mxu0
    %v5888 = vrot.slane %v3710, 4
    %v5889 = vrot.slane %v3711, 4
    %v5890 = vsel %vm5648, %v5888, %v5889
    %v5891 = vrot.slane %v3712, 4
    %v5892 = vsel %vm5648, %v5889, %v5891
    %v5894 = vsel %vm3985, %v5890, 0
    %v5897 = vsel %vm3985, %v5892, 0
    %5899 = vmatprep.subr.bf16.mxu0 0
    %5900 = vmatpush1.bf16.msra.mxu0 %v3828
    %5901 = vmatprep.subr.bf16.mxu0 0
    %5902 = vmatpush1.bf16.msra.mxu0 %v3829
    %5903 = vmatprep.subr.bf16.mxu0 0
    %5904 = vmatpush1.bf16.msra.mxu0 %v3830
    %5905 = vmatprep.subr.bf16.mxu0 0
    %5906 = vmatpush1.bf16.msra.mxu0 %v3831
    %5907 = vmatprep.subr.bf16.mxu0 0
    %5908 = vmatpush1.bf16.msra.mxu0 0
    %5909 = vmatprep.subr.bf16.mxu0 0
    %5910 = vmatpush1.bf16.msra.mxu0 0
    %5911 = vmatprep.subr.bf16.mxu0 0
    %5912 = vmatpush1.bf16.msra.mxu0 0
    %5913 = vmatprep.subr.bf16.mxu0 0
    %5914 = vmatpush1.bf16.msra.mxu0 0
    %5915 = vmatprep.subr.bf16.mxu0 0
    %5916 = vmatpush1.bf16.msra.mxu0 0
    %5917 = vmatprep.subr.bf16.mxu0 0
    %5918 = vmatpush1.bf16.msra.mxu0 0
    %5919 = vmatprep.subr.bf16.mxu0 0
    %5920 = vmatpush1.bf16.msra.mxu0 0
    %5921 = vmatprep.subr.bf16.mxu0 0
    %5922 = vmatpush1.bf16.msra.mxu0 0
    %5923 = vmatprep.subr.bf16.mxu0 0
    %5924 = vmatpush1.bf16.msra.mxu0 0
    %5925 = vmatprep.subr.bf16.mxu0 0
    %5926 = vmatpush1.bf16.msra.mxu0 0
    %5927 = vmatprep.subr.bf16.mxu0 0
    %5928 = vmatpush1.bf16.msra.mxu0 0
    %5929 = vmatprep.subr.bf16.mxu0 0
    %5930 = vmatpush1.bf16.msra.mxu0 0
    %5931 = vmatprep.mubr.bf16.mxu0 0
    %5932 = vmatmul.mubr.bf16.gmra.mrb[0].mxu0 %v5894
    %v5933 = vpop.f32.mrb[0].mxu0
    %v5934 = vadd.f32 %v4405, %v5933
    %v5935 = vpop.f32.mrb[0].mxu0
    %v5936 = vpop.f32.mrb[0].mxu0
    %v5937 = vadd.f32 %v4408, %v5936
    %v5938 = vpop.f32.mrb[0].mxu0
    %5939 = vmatprep.mubr.bf16.mxu0 0
    %5940 = vmatmul.mubr.bf16.gmra.mrb[0].mxu0 %v5897
    %v5941 = vpop.f32.mrb[0].mxu0
    %v5942 = vadd.f32 %v4413, %v5941
    %v5943 = vpop.f32.mrb[0].mxu0
    %v5944 = vpop.f32.mrb[0].mxu0
    %v5945 = vadd.f32 %v4416, %v5944
    %v5946 = vpop.f32.mrb[0].mxu0
    %5947 = vdwg.mxu0
    %v5949 = vrot.slane %v3714, 2
    %v5950 = vrot.slane %v3715, 2
    %v5951 = vsel %vm5710, %v5949, %v5950
    %v5952 = vrot.slane %v3716, 2
    %v5953 = vsel %vm5710, %v5950, %v5952
    %v5955 = vsel %vm3985, %v5951, 0
    %v5958 = vsel %vm3985, %v5953, 0
    %5960 = vmatprep.subr.bf16.mxu0 0
    %5961 = vmatpush1.bf16.msra.mxu0 %v3836
    %5962 = vmatprep.subr.bf16.mxu0 0
    %5963 = vmatpush1.bf16.msra.mxu0 %v3837
    %5964 = vmatprep.subr.bf16.mxu0 0
    %5965 = vmatpush1.bf16.msra.mxu0 %v3838
    %5966 = vmatprep.subr.bf16.mxu0 0
    %5967 = vmatpush1.bf16.msra.mxu0 %v3839
    %5968 = vmatprep.subr.bf16.mxu0 0
    %5969 = vmatpush1.bf16.msra.mxu0 0
    %5970 = vmatprep.subr.bf16.mxu0 0
    %5971 = vmatpush1.bf16.msra.mxu0 0
    %5972 = vmatprep.subr.bf16.mxu0 0
    %5973 = vmatpush1.bf16.msra.mxu0 0
    %5974 = vmatprep.subr.bf16.mxu0 0
    %5975 = vmatpush1.bf16.msra.mxu0 0
    %5976 = vmatprep.subr.bf16.mxu0 0
    %5977 = vmatpush1.bf16.msra.mxu0 0
    %5978 = vmatprep.subr.bf16.mxu0 0
    %5979 = vmatpush1.bf16.msra.mxu0 0
    %5980 = vmatprep.subr.bf16.mxu0 0
    %5981 = vmatpush1.bf16.msra.mxu0 0
    %5982 = vmatprep.subr.bf16.mxu0 0
    %5983 = vmatpush1.bf16.msra.mxu0 0
    %5984 = vmatprep.subr.bf16.mxu0 0
    %5985 = vmatpush1.bf16.msra.mxu0 0
    %5986 = vmatprep.subr.bf16.mxu0 0
    %5987 = vmatpush1.bf16.msra.mxu0 0
    %5988 = vmatprep.subr.bf16.mxu0 0
    %5989 = vmatpush1.bf16.msra.mxu0 0
    %5990 = vmatprep.subr.bf16.mxu0 0
    %5991 = vmatpush1.bf16.msra.mxu0 0
    %5992 = vmatprep.mubr.bf16.mxu0 0
    %5993 = vmatmul.mubr.bf16.gmra.mrb[0].mxu0 %v5955
    %v5994 = vpop.f32.mrb[0].mxu0
    %v5995 = vadd.f32 %v4465, %v5994
    %v5996 = vpop.f32.mrb[0].mxu0
    %v5997 = vpop.f32.mrb[0].mxu0
    %v5998 = vadd.f32 %v4468, %v5997
    %v5999 = vpop.f32.mrb[0].mxu0
    %6000 = vmatprep.mubr.bf16.mxu0 0
    %6001 = vmatmul.mubr.bf16.gmra.mrb[0].mxu0 %v5958
    %v6002 = vpop.f32.mrb[0].mxu0
    %v6003 = vadd.f32 %v4473, %v6002
    %v6004 = vpop.f32.mrb[0].mxu0
    %v6005 = vpop.f32.mrb[0].mxu0
    %v6006 = vadd.f32 %v4476, %v6005
    %v6007 = vpop.f32.mrb[0].mxu0
    %6008 = vdwg.mxu0
    %v6010 = vsel %vm3985, %v3718, 0
    %v6013 = vsel %vm3985, %v3719, 0
    %6015 = vmatprep.subr.bf16.mxu0 0
    %6016 = vmatpush1.bf16.msra.mxu0 %v3844
    %6017 = vmatprep.subr.bf16.mxu0 0
    %6018 = vmatpush1.bf16.msra.mxu0 %v3845
    %6019 = vmatprep.subr.bf16.mxu0 0
    %6020 = vmatpush1.bf16.msra.mxu0 %v3846
    %6021 = vmatprep.subr.bf16.mxu0 0
    %6022 = vmatpush1.bf16.msra.mxu0 %v3847
    %6023 = vmatprep.subr.bf16.mxu0 0
    %6024 = vmatpush1.bf16.msra.mxu0 0
    %6025 = vmatprep.subr.bf16.mxu0 0
    %6026 = vmatpush1.bf16.msra.mxu0 0
    %6027 = vmatprep.subr.bf16.mxu0 0
    %6028 = vmatpush1.bf16.msra.mxu0 0
    %6029 = vmatprep.subr.bf16.mxu0 0
    %6030 = vmatpush1.bf16.msra.mxu0 0
    %6031 = vmatprep.subr.bf16.mxu0 0
    %6032 = vmatpush1.bf16.msra.mxu0 0
    %6033 = vmatprep.subr.bf16.mxu0 0
    %6034 = vmatpush1.bf16.msra.mxu0 0
    %6035 = vmatprep.subr.bf16.mxu0 0
    %6036 = vmatpush1.bf16.msra.mxu0 0
    %6037 = vmatprep.subr.bf16.mxu0 0
    %6038 = vmatpush1.bf16.msra.mxu0 0
    %6039 = vmatprep.subr.bf16.mxu0 0
    %6040 = vmatpush1.bf16.msra.mxu0 0
    %6041 = vmatprep.subr.bf16.mxu0 0
    %6042 = vmatpush1.bf16.msra.mxu0 0
    %6043 = vmatprep.subr.bf16.mxu0 0
    %6044 = vmatpush1.bf16.msra.mxu0 0
    %6045 = vmatprep.subr.bf16.mxu0 0
    %6046 = vmatpush1.bf16.msra.mxu0 0
    %6047 = vmatprep.mubr.bf16.mxu0 0
    %6048 = vmatmul.mubr.bf16.gmra.mrb[0].mxu0 %v6010
    %v6049 = vpop.f32.mrb[0].mxu0
    %v6050 = vadd.f32 %v4528, %v6049
    %v6051 = vpop.f32.mrb[0].mxu0
    %v6052 = vpop.f32.mrb[0].mxu0
    %v6053 = vadd.f32 %v4531, %v6052
    %v6054 = vpop.f32.mrb[0].mxu0
    %6055 = vmatprep.mubr.bf16.mxu0 0
    %6056 = vmatmul.mubr.bf16.gmra.mrb[0].mxu0 %v6013
    %v6057 = vpop.f32.mrb[0].mxu0
    %v6058 = vadd.f32 %v4536, %v6057
    %v6059 = vpop.f32.mrb[0].mxu0
    %v6060 = vpop.f32.mrb[0].mxu0
    %v6061 = vadd.f32 %v4539, %v6060
    %v6062 = vpop.f32.mrb[0].mxu0
    %6063 = vdwg.mxu0
    %v6065 = vrot.slane %v3721, 6
    %v6066 = vrot.slane %v3722, 6
    %v6067 = vsel %vm5586, %v6065, %v6066
    %v6068 = vrot.slane %v3723, 6
    %v6069 = vsel %vm5586, %v6066, %v6068
    %v6071 = vsel %vm3985, %v6067, 0
    %v6074 = vsel %vm3985, %v6069, 0
    %6076 = vmatprep.subr.bf16.mxu0 0
    %6077 = vmatpush1.bf16.msra.mxu0 %v3852
    %6078 = vmatprep.subr.bf16.mxu0 0
    %6079 = vmatpush1.bf16.msra.mxu0 %v3853
    %6080 = vmatprep.subr.bf16.mxu0 0
    %6081 = vmatpush1.bf16.msra.mxu0 %v3854
    %6082 = vmatprep.subr.bf16.mxu0 0
    %6083 = vmatpush1.bf16.msra.mxu0 %v3855
    %6084 = vmatprep.subr.bf16.mxu0 0
    %6085 = vmatpush1.bf16.msra.mxu0 0
    %6086 = vmatprep.subr.bf16.mxu0 0
    %6087 = vmatpush1.bf16.msra.mxu0 0
    %6088 = vmatprep.subr.bf16.mxu0 0
    %6089 = vmatpush1.bf16.msra.mxu0 0
    %6090 = vmatprep.subr.bf16.mxu0 0
    %6091 = vmatpush1.bf16.msra.mxu0 0
    %6092 = vmatprep.subr.bf16.mxu0 0
    %6093 = vmatpush1.bf16.msra.mxu0 0
    %6094 = vmatprep.subr.bf16.mxu0 0
    %6095 = vmatpush1.bf16.msra.mxu0 0
    %6096 = vmatprep.subr.bf16.mxu0 0
    %6097 = vmatpush1.bf16.msra.mxu0 0
    %6098 = vmatprep.subr.bf16.mxu0 0
    %6099 = vmatpush1.bf16.msra.mxu0 0
    %6100 = vmatprep.subr.bf16.mxu0 0
    %6101 = vmatpush1.bf16.msra.mxu0 0
    %6102 = vmatprep.subr.bf16.mxu0 0
    %6103 = vmatpush1.bf16.msra.mxu0 0
    %6104 = vmatprep.subr.bf16.mxu0 0
    %6105 = vmatpush1.bf16.msra.mxu0 0
    %6106 = vmatprep.subr.bf16.mxu0 0
    %6107 = vmatpush1.bf16.msra.mxu0 0
    %6108 = vmatprep.mubr.bf16.mxu0 0
    %6109 = vmatmul.mubr.bf16.gmra.mrb[0].mxu0 %v6071
    %v6110 = vpop.f32.mrb[0].mxu0
    %v6111 = vadd.f32 %v4591, %v6110
    %v6112 = vpop.f32.mrb[0].mxu0
    %v6113 = vpop.f32.mrb[0].mxu0
    %v6114 = vadd.f32 %v4594, %v6113
    %v6115 = vpop.f32.mrb[0].mxu0
    %6116 = vmatprep.mubr.bf16.mxu0 0
    %6117 = vmatmul.mubr.bf16.gmra.mrb[0].mxu0 %v6074
    %v6118 = vpop.f32.mrb[0].mxu0
    %v6119 = vadd.f32 %v4599, %v6118
    %v6120 = vpop.f32.mrb[0].mxu0
    %v6121 = vpop.f32.mrb[0].mxu0
    %v6122 = vadd.f32 %v4602, %v6121
    %v6123 = vpop.f32.mrb[0].mxu0
    %6124 = vdwg.mxu0
    %v6126 = vrot.slane %v3725, 4
    %v6127 = vrot.slane %v3726, 4
    %v6128 = vsel %vm5648, %v6126, %v6127
    %v6129 = vrot.slane %v3727, 4
    %v6130 = vsel %vm5648, %v6127, %v6129
    %v6132 = vsel %vm3985, %v6128, 0
    %v6135 = vsel %vm3985, %v6130, 0
    %6137 = vmatprep.subr.bf16.mxu0 0
    %6138 = vmatpush1.bf16.msra.mxu0 %v3860
    %6139 = vmatprep.subr.bf16.mxu0 0
    %6140 = vmatpush1.bf16.msra.mxu0 %v3861
    %6141 = vmatprep.subr.bf16.mxu0 0
    %6142 = vmatpush1.bf16.msra.mxu0 %v3862
    %6143 = vmatprep.subr.bf16.mxu0 0
    %6144 = vmatpush1.bf16.msra.mxu0 %v3863
    %6145 = vmatprep.subr.bf16.mxu0 0
    %6146 = vmatpush1.bf16.msra.mxu0 0
    %6147 = vmatprep.subr.bf16.mxu0 0
    %6148 = vmatpush1.bf16.msra.mxu0 0
    %6149 = vmatprep.subr.bf16.mxu0 0
    %6150 = vmatpush1.bf16.msra.mxu0 0
    %6151 = vmatprep.subr.bf16.mxu0 0
    %6152 = vmatpush1.bf16.msra.mxu0 0
    %6153 = vmatprep.subr.bf16.mxu0 0
    %6154 = vmatpush1.bf16.msra.mxu0 0
    %6155 = vmatprep.subr.bf16.mxu0 0
    %6156 = vmatpush1.bf16.msra.mxu0 0
    %6157 = vmatprep.subr.bf16.mxu0 0
    %6158 = vmatpush1.bf16.msra.mxu0 0
    %6159 = vmatprep.subr.bf16.mxu0 0
    %6160 = vmatpush1.bf16.msra.mxu0 0
    %6161 = vmatprep.subr.bf16.mxu0 0
    %6162 = vmatpush1.bf16.msra.mxu0 0
    %6163 = vmatprep.subr.bf16.mxu0 0
    %6164 = vmatpush1.bf16.msra.mxu0 0
    %6165 = vmatprep.subr.bf16.mxu0 0
    %6166 = vmatpush1.bf16.msra.mxu0 0
    %6167 = vmatprep.subr.bf16.mxu0 0
    %6168 = vmatpush1.bf16.msra.mxu0 0
    %6169 = vmatprep.mubr.bf16.mxu0 0
    %6170 = vmatmul.mubr.bf16.gmra.mrb[0].mxu0 %v6132
    %v6171 = vpop.f32.mrb[0].mxu0
    %v6172 = vadd.f32 %v4654, %v6171
    %v6173 = vpop.f32.mrb[0].mxu0
    %v6174 = vpop.f32.mrb[0].mxu0
    %v6175 = vadd.f32 %v4657, %v6174
    %v6176 = vpop.f32.mrb[0].mxu0
    %6177 = vmatprep.mubr.bf16.mxu0 0
    %6178 = vmatmul.mubr.bf16.gmra.mrb[0].mxu0 %v6135
    %v6179 = vpop.f32.mrb[0].mxu0
    %v6180 = vadd.f32 %v4662, %v6179
    %v6181 = vpop.f32.mrb[0].mxu0
    %v6182 = vpop.f32.mrb[0].mxu0
    %v6183 = vadd.f32 %v4665, %v6182
    %v6184 = vpop.f32.mrb[0].mxu0
    %6185 = vdwg.mxu0
    %v6187 = vrot.slane %v3729, 2
    %v6188 = vrot.slane %v3730, 2
    %v6189 = vsel %vm5710, %v6187, %v6188
    %v6190 = vrot.slane %v3731, 2
    %v6191 = vsel %vm5710, %v6188, %v6190
    %v6193 = vsel %vm3985, %v6189, 0
    %v6196 = vsel %vm3985, %v6191, 0
    %6198 = vmatprep.subr.bf16.mxu0 0
    %6199 = vmatpush1.bf16.msra.mxu0 %v3868
    %6200 = vmatprep.subr.bf16.mxu0 0
    %6201 = vmatpush1.bf16.msra.mxu0 %v3869
    %6202 = vmatprep.subr.bf16.mxu0 0
    %6203 = vmatpush1.bf16.msra.mxu0 %v3870
    %6204 = vmatprep.subr.bf16.mxu0 0
    %6205 = vmatpush1.bf16.msra.mxu0 %v3871
    %6206 = vmatprep.subr.bf16.mxu0 0
    %6207 = vmatpush1.bf16.msra.mxu0 0
    %6208 = vmatprep.subr.bf16.mxu0 0
    %6209 = vmatpush1.bf16.msra.mxu0 0
    %6210 = vmatprep.subr.bf16.mxu0 0
    %6211 = vmatpush1.bf16.msra.mxu0 0
    %6212 = vmatprep.subr.bf16.mxu0 0
    %6213 = vmatpush1.bf16.msra.mxu0 0
    %6214 = vmatprep.subr.bf16.mxu0 0
    %6215 = vmatpush1.bf16.msra.mxu0 0
    %6216 = vmatprep.subr.bf16.mxu0 0
    %6217 = vmatpush1.bf16.msra.mxu0 0
    %6218 = vmatprep.subr.bf16.mxu0 0
    %6219 = vmatpush1.bf16.msra.mxu0 0
    %6220 = vmatprep.subr.bf16.mxu0 0
    %6221 = vmatpush1.bf16.msra.mxu0 0
    %6222 = vmatprep.subr.bf16.mxu0 0
    %6223 = vmatpush1.bf16.msra.mxu0 0
    %6224 = vmatprep.subr.bf16.mxu0 0
    %6225 = vmatpush1.bf16.msra.mxu0 0
    %6226 = vmatprep.subr.bf16.mxu0 0
    %6227 = vmatpush1.bf16.msra.mxu0 0
    %6228 = vmatprep.subr.bf16.mxu0 0
    %6229 = vmatpush1.bf16.msra.mxu0 0
    %6230 = vmatprep.mubr.bf16.mxu0 0
    %6231 = vmatmul.mubr.bf16.gmra.mrb[0].mxu0 %v6193
    %v6232 = vpop.f32.mrb[0].mxu0
    %v6233 = vadd.f32 %v4714, %v6232
    %v6234 = vpop.f32.mrb[0].mxu0
    %v6235 = vpop.f32.mrb[0].mxu0
    %v6236 = vadd.f32 %v4717, %v6235
    %v6237 = vpop.f32.mrb[0].mxu0
    %6238 = vmatprep.mubr.bf16.mxu0 0
    %6239 = vmatmul.mubr.bf16.gmra.mrb[0].mxu0 %v6196
    %v6240 = vpop.f32.mrb[0].mxu0
    %v6241 = vadd.f32 %v4722, %v6240
    %v6242 = vpop.f32.mrb[0].mxu0
    %v6243 = vpop.f32.mrb[0].mxu0
    %v6244 = vadd.f32 %v4725, %v6243
    %v6245 = vpop.f32.mrb[0].mxu0
    %6246 = vdwg.mxu0
    %v6248 = vsel %vm3985, %v3733, 0
    %v6251 = vsel %vm3985, %v3734, 0
    %6253 = vmatprep.subr.bf16.mxu0 0
    %6254 = vmatpush1.bf16.msra.mxu0 %v3876
    %6255 = vmatprep.subr.bf16.mxu0 0
    %6256 = vmatpush1.bf16.msra.mxu0 %v3877
    %6257 = vmatprep.subr.bf16.mxu0 0
    %6258 = vmatpush1.bf16.msra.mxu0 %v3878
    %6259 = vmatprep.subr.bf16.mxu0 0
    %6260 = vmatpush1.bf16.msra.mxu0 %v3879
    %6261 = vmatprep.subr.bf16.mxu0 0
    %6262 = vmatpush1.bf16.msra.mxu0 0
    %6263 = vmatprep.subr.bf16.mxu0 0
    %6264 = vmatpush1.bf16.msra.mxu0 0
    %6265 = vmatprep.subr.bf16.mxu0 0
    %6266 = vmatpush1.bf16.msra.mxu0 0
    %6267 = vmatprep.subr.bf16.mxu0 0
    %6268 = vmatpush1.bf16.msra.mxu0 0
    %6269 = vmatprep.subr.bf16.mxu0 0
    %6270 = vmatpush1.bf16.msra.mxu0 0
    %6271 = vmatprep.subr.bf16.mxu0 0
    %6272 = vmatpush1.bf16.msra.mxu0 0
    %6273 = vmatprep.subr.bf16.mxu0 0
    %6274 = vmatpush1.bf16.msra.mxu0 0
    %6275 = vmatprep.subr.bf16.mxu0 0
    %6276 = vmatpush1.bf16.msra.mxu0 0
    %6277 = vmatprep.subr.bf16.mxu0 0
    %6278 = vmatpush1.bf16.msra.mxu0 0
    %6279 = vmatprep.subr.bf16.mxu0 0
    %6280 = vmatpush1.bf16.msra.mxu0 0
    %6281 = vmatprep.subr.bf16.mxu0 0
    %6282 = vmatpush1.bf16.msra.mxu0 0
    %6283 = vmatprep.subr.bf16.mxu0 0
    %6284 = vmatpush1.bf16.msra.mxu0 0
    %6285 = vmatprep.mubr.bf16.mxu0 0
    %6286 = vmatmul.mubr.bf16.gmra.mrb[0].mxu0 %v6248
    %v6287 = vpop.f32.mrb[0].mxu0
    %v6288 = vadd.f32 %v4777, %v6287
    %v6289 = vpop.f32.mrb[0].mxu0
    %v6290 = vpop.f32.mrb[0].mxu0
    %v6291 = vadd.f32 %v4780, %v6290
    %v6292 = vpop.f32.mrb[0].mxu0
    %6293 = vmatprep.mubr.bf16.mxu0 0
    %6294 = vmatmul.mubr.bf16.gmra.mrb[0].mxu0 %v6251
    %v6295 = vpop.f32.mrb[0].mxu0
    %v6296 = vadd.f32 %v4785, %v6295
    %v6297 = vpop.f32.mrb[0].mxu0
    %v6298 = vpop.f32.mrb[0].mxu0
    %v6299 = vadd.f32 %v4788, %v6298
    %v6300 = vpop.f32.mrb[0].mxu0
    %6301 = vdwg.mxu0
    %v6303 = vrot.slane %v3736, 6
    %v6304 = vrot.slane %v3737, 6
    %v6305 = vsel %vm5586, %v6303, %v6304
    %v6306 = vrot.slane %v3738, 6
    %v6307 = vsel %vm5586, %v6304, %v6306
    %v6309 = vsel %vm3985, %v6305, 0
    %v6312 = vsel %vm3985, %v6307, 0
    %6314 = vmatprep.subr.bf16.mxu0 0
    %6315 = vmatpush1.bf16.msra.mxu0 %v3884
    %6316 = vmatprep.subr.bf16.mxu0 0
    %6317 = vmatpush1.bf16.msra.mxu0 %v3885
    %6318 = vmatprep.subr.bf16.mxu0 0
    %6319 = vmatpush1.bf16.msra.mxu0 %v3886
    %6320 = vmatprep.subr.bf16.mxu0 0
    %6321 = vmatpush1.bf16.msra.mxu0 %v3887
    %6322 = vmatprep.subr.bf16.mxu0 0
    %6323 = vmatpush1.bf16.msra.mxu0 0
    %6324 = vmatprep.subr.bf16.mxu0 0
    %6325 = vmatpush1.bf16.msra.mxu0 0
    %6326 = vmatprep.subr.bf16.mxu0 0
    %6327 = vmatpush1.bf16.msra.mxu0 0
    %6328 = vmatprep.subr.bf16.mxu0 0
    %6329 = vmatpush1.bf16.msra.mxu0 0
    %6330 = vmatprep.subr.bf16.mxu0 0
    %6331 = vmatpush1.bf16.msra.mxu0 0
    %6332 = vmatprep.subr.bf16.mxu0 0
    %6333 = vmatpush1.bf16.msra.mxu0 0
    %6334 = vmatprep.subr.bf16.mxu0 0
    %6335 = vmatpush1.bf16.msra.mxu0 0
    %6336 = vmatprep.subr.bf16.mxu0 0
    %6337 = vmatpush1.bf16.msra.mxu0 0
    %6338 = vmatprep.subr.bf16.mxu0 0
    %6339 = vmatpush1.bf16.msra.mxu0 0
    %6340 = vmatprep.subr.bf16.mxu0 0
    %6341 = vmatpush1.bf16.msra.mxu0 0
    %6342 = vmatprep.subr.bf16.mxu0 0
    %6343 = vmatpush1.bf16.msra.mxu0 0
    %6344 = vmatprep.subr.bf16.mxu0 0
    %6345 = vmatpush1.bf16.msra.mxu0 0
    %6346 = vmatprep.mubr.bf16.mxu0 0
    %6347 = vmatmul.mubr.bf16.gmra.mrb[0].mxu0 %v6309
    %v6348 = vpop.f32.mrb[0].mxu0
    %v6349 = vadd.f32 %v4840, %v6348
    %v6350 = vpop.f32.mrb[0].mxu0
    %v6351 = vpop.f32.mrb[0].mxu0
    %v6352 = vadd.f32 %v4843, %v6351
    %v6353 = vpop.f32.mrb[0].mxu0
    %6354 = vmatprep.mubr.bf16.mxu0 0
    %6355 = vmatmul.mubr.bf16.gmra.mrb[0].mxu0 %v6312
    %v6356 = vpop.f32.mrb[0].mxu0
    %v6357 = vadd.f32 %v4848, %v6356
    %v6358 = vpop.f32.mrb[0].mxu0
    %v6359 = vpop.f32.mrb[0].mxu0
    %v6360 = vadd.f32 %v4851, %v6359
    %v6361 = vpop.f32.mrb[0].mxu0
    %6362 = vdwg.mxu0
    %v6364 = vrot.slane %v3740, 4
    %v6365 = vrot.slane %v3741, 4
    %v6366 = vsel %vm5648, %v6364, %v6365
    %v6367 = vrot.slane %v3742, 4
    %v6368 = vsel %vm5648, %v6365, %v6367
    %v6370 = vsel %vm3985, %v6366, 0
    %v6373 = vsel %vm3985, %v6368, 0
    %6375 = vmatprep.subr.bf16.mxu0 0
    %6376 = vmatpush1.bf16.msra.mxu0 %v3892
    %6377 = vmatprep.subr.bf16.mxu0 0
    %6378 = vmatpush1.bf16.msra.mxu0 %v3893
    %6379 = vmatprep.subr.bf16.mxu0 0
    %6380 = vmatpush1.bf16.msra.mxu0 %v3894
    %6381 = vmatprep.subr.bf16.mxu0 0
    %6382 = vmatpush1.bf16.msra.mxu0 %v3895
    %6383 = vmatprep.subr.bf16.mxu0 0
    %6384 = vmatpush1.bf16.msra.mxu0 0
    %6385 = vmatprep.subr.bf16.mxu0 0
    %6386 = vmatpush1.bf16.msra.mxu0 0
    %6387 = vmatprep.subr.bf16.mxu0 0
    %6388 = vmatpush1.bf16.msra.mxu0 0
    %6389 = vmatprep.subr.bf16.mxu0 0
    %6390 = vmatpush1.bf16.msra.mxu0 0
    %6391 = vmatprep.subr.bf16.mxu0 0
    %6392 = vmatpush1.bf16.msra.mxu0 0
    %6393 = vmatprep.subr.bf16.mxu0 0
    %6394 = vmatpush1.bf16.msra.mxu0 0
    %6395 = vmatprep.subr.bf16.mxu0 0
    %6396 = vmatpush1.bf16.msra.mxu0 0
    %6397 = vmatprep.subr.bf16.mxu0 0
    %6398 = vmatpush1.bf16.msra.mxu0 0
    %6399 = vmatprep.subr.bf16.mxu0 0
    %6400 = vmatpush1.bf16.msra.mxu0 0
    %6401 = vmatprep.subr.bf16.mxu0 0
    %6402 = vmatpush1.bf16.msra.mxu0 0
    %6403 = vmatprep.subr.bf16.mxu0 0
    %6404 = vmatpush1.bf16.msra.mxu0 0
    %6405 = vmatprep.subr.bf16.mxu0 0
    %6406 = vmatpush1.bf16.msra.mxu0 0
    %6407 = vmatprep.mubr.bf16.mxu0 0
    %6408 = vmatmul.mubr.bf16.gmra.mrb[0].mxu0 %v6370
    %v6409 = vpop.f32.mrb[0].mxu0
    %v6410 = vadd.f32 %v4903, %v6409
    %v6411 = vpop.f32.mrb[0].mxu0
    %v6412 = vpop.f32.mrb[0].mxu0
    %v6413 = vadd.f32 %v4906, %v6412
    %v6414 = vpop.f32.mrb[0].mxu0
    %6415 = vmatprep.mubr.bf16.mxu0 0
    %6416 = vmatmul.mubr.bf16.gmra.mrb[0].mxu0 %v6373
    %v6417 = vpop.f32.mrb[0].mxu0
    %v6418 = vadd.f32 %v4911, %v6417
    %v6419 = vpop.f32.mrb[0].mxu0
    %v6420 = vpop.f32.mrb[0].mxu0
    %v6421 = vadd.f32 %v4914, %v6420
    %v6422 = vpop.f32.mrb[0].mxu0
    %6423 = vdwg.mxu0
    %v6425 = vrot.slane %v3744, 2
    %v6426 = vrot.slane %v3745, 2
    %v6427 = vsel %vm5710, %v6425, %v6426
    %v6428 = vrot.slane %v3746, 2
    %v6429 = vsel %vm5710, %v6426, %v6428
    %v6431 = vsel %vm3985, %v6427, 0
    %v6434 = vsel %vm3985, %v6429, 0
    %6436 = vmatprep.subr.bf16.mxu0 0
    %6437 = vmatpush1.bf16.msra.mxu0 %v3900
    %6438 = vmatprep.subr.bf16.mxu0 0
    %6439 = vmatpush1.bf16.msra.mxu0 %v3901
    %6440 = vmatprep.subr.bf16.mxu0 0
    %6441 = vmatpush1.bf16.msra.mxu0 %v3902
    %6442 = vmatprep.subr.bf16.mxu0 0
    %6443 = vmatpush1.bf16.msra.mxu0 %v3903
    %6444 = vmatprep.subr.bf16.mxu0 0
    %6445 = vmatpush1.bf16.msra.mxu0 0
    %6446 = vmatprep.subr.bf16.mxu0 0
    %6447 = vmatpush1.bf16.msra.mxu0 0
    %6448 = vmatprep.subr.bf16.mxu0 0
    %6449 = vmatpush1.bf16.msra.mxu0 0
    %6450 = vmatprep.subr.bf16.mxu0 0
    %6451 = vmatpush1.bf16.msra.mxu0 0
    %6452 = vmatprep.subr.bf16.mxu0 0
    %6453 = vmatpush1.bf16.msra.mxu0 0
    %6454 = vmatprep.subr.bf16.mxu0 0
    %6455 = vmatpush1.bf16.msra.mxu0 0
    %6456 = vmatprep.subr.bf16.mxu0 0
    %6457 = vmatpush1.bf16.msra.mxu0 0
    %6458 = vmatprep.subr.bf16.mxu0 0
    %6459 = vmatpush1.bf16.msra.mxu0 0
    %6460 = vmatprep.subr.bf16.mxu0 0
    %6461 = vmatpush1.bf16.msra.mxu0 0
    %6462 = vmatprep.subr.bf16.mxu0 0
    %6463 = vmatpush1.bf16.msra.mxu0 0
    %6464 = vmatprep.subr.bf16.mxu0 0
    %6465 = vmatpush1.bf16.msra.mxu0 0
    %6466 = vmatprep.subr.bf16.mxu0 0
    %6467 = vmatpush1.bf16.msra.mxu0 0
    %6468 = vmatprep.mubr.bf16.mxu0 0
    %6469 = vmatmul.mubr.bf16.gmra.mrb[0].mxu0 %v6431
    %v6470 = vpop.f32.mrb[0].mxu0
    %v6471 = vadd.f32 %v4963, %v6470
    %v6472 = vpop.f32.mrb[0].mxu0
    %v6473 = vpop.f32.mrb[0].mxu0
    %v6474 = vadd.f32 %v4966, %v6473
    %v6475 = vpop.f32.mrb[0].mxu0
    %6476 = vmatprep.mubr.bf16.mxu0 0
    %6477 = vmatmul.mubr.bf16.gmra.mrb[0].mxu0 %v6434
    %v6478 = vpop.f32.mrb[0].mxu0
    %v6479 = vadd.f32 %v4971, %v6478
    %v6480 = vpop.f32.mrb[0].mxu0
    %v6481 = vpop.f32.mrb[0].mxu0
    %v6482 = vadd.f32 %v4974, %v6481
    %v6483 = vpop.f32.mrb[0].mxu0
    %6484 = vdwg.mxu0
    %v6486 = vsel %vm3985, %v3748, 0
    %v6489 = vsel %vm3985, %v3749, 0
    %6491 = vmatprep.subr.bf16.mxu0 0
    %6492 = vmatpush1.bf16.msra.mxu0 %v3908
    %6493 = vmatprep.subr.bf16.mxu0 0
    %6494 = vmatpush1.bf16.msra.mxu0 %v3909
    %6495 = vmatprep.subr.bf16.mxu0 0
    %6496 = vmatpush1.bf16.msra.mxu0 %v3910
    %6497 = vmatprep.subr.bf16.mxu0 0
    %6498 = vmatpush1.bf16.msra.mxu0 %v3911
    %6499 = vmatprep.subr.bf16.mxu0 0
    %6500 = vmatpush1.bf16.msra.mxu0 0
    %6501 = vmatprep.subr.bf16.mxu0 0
    %6502 = vmatpush1.bf16.msra.mxu0 0
    %6503 = vmatprep.subr.bf16.mxu0 0
    %6504 = vmatpush1.bf16.msra.mxu0 0
    %6505 = vmatprep.subr.bf16.mxu0 0
    %6506 = vmatpush1.bf16.msra.mxu0 0
    %6507 = vmatprep.subr.bf16.mxu0 0
    %6508 = vmatpush1.bf16.msra.mxu0 0
    %6509 = vmatprep.subr.bf16.mxu0 0
    %6510 = vmatpush1.bf16.msra.mxu0 0
    %6511 = vmatprep.subr.bf16.mxu0 0
    %6512 = vmatpush1.bf16.msra.mxu0 0
    %6513 = vmatprep.subr.bf16.mxu0 0
    %6514 = vmatpush1.bf16.msra.mxu0 0
    %6515 = vmatprep.subr.bf16.mxu0 0
    %6516 = vmatpush1.bf16.msra.mxu0 0
    %6517 = vmatprep.subr.bf16.mxu0 0
    %6518 = vmatpush1.bf16.msra.mxu0 0
    %6519 = vmatprep.subr.bf16.mxu0 0
    %6520 = vmatpush1.bf16.msra.mxu0 0
    %6521 = vmatprep.subr.bf16.mxu0 0
    %6522 = vmatpush1.bf16.msra.mxu0 0
    %6523 = vmatprep.mubr.bf16.mxu0 0
    %6524 = vmatmul.mubr.bf16.gmra.mrb[0].mxu0 %v6486
    %v6525 = vpop.f32.mrb[0].mxu0
    %v6526 = vadd.f32 %v5026, %v6525
    %v6527 = vpop.f32.mrb[0].mxu0
    %v6528 = vpop.f32.mrb[0].mxu0
    %v6529 = vadd.f32 %v5029, %v6528
    %v6530 = vpop.f32.mrb[0].mxu0
    %6531 = vmatprep.mubr.bf16.mxu0 0
    %6532 = vmatmul.mubr.bf16.gmra.mrb[0].mxu0 %v6489
    %v6533 = vpop.f32.mrb[0].mxu0
    %v6534 = vadd.f32 %v5034, %v6533
    %v6535 = vpop.f32.mrb[0].mxu0
    %v6536 = vpop.f32.mrb[0].mxu0
    %v6537 = vadd.f32 %v5037, %v6536
    %v6538 = vpop.f32.mrb[0].mxu0
    %6539 = vdwg.mxu0
    %v6541 = vrot.slane %v3751, 6
    %v6542 = vrot.slane %v3752, 6
    %v6543 = vsel %vm5586, %v6541, %v6542
    %v6544 = vrot.slane %v3753, 6
    %v6545 = vsel %vm5586, %v6542, %v6544
    %v6547 = vsel %vm3985, %v6543, 0
    %v6550 = vsel %vm3985, %v6545, 0
    %6552 = vmatprep.subr.bf16.mxu0 0
    %6553 = vmatpush1.bf16.msra.mxu0 %v3916
    %6554 = vmatprep.subr.bf16.mxu0 0
    %6555 = vmatpush1.bf16.msra.mxu0 %v3917
    %6556 = vmatprep.subr.bf16.mxu0 0
    %6557 = vmatpush1.bf16.msra.mxu0 %v3918
    %6558 = vmatprep.subr.bf16.mxu0 0
    %6559 = vmatpush1.bf16.msra.mxu0 %v3919
    %6560 = vmatprep.subr.bf16.mxu0 0
    %6561 = vmatpush1.bf16.msra.mxu0 0
    %6562 = vmatprep.subr.bf16.mxu0 0
    %6563 = vmatpush1.bf16.msra.mxu0 0
    %6564 = vmatprep.subr.bf16.mxu0 0
    %6565 = vmatpush1.bf16.msra.mxu0 0
    %6566 = vmatprep.subr.bf16.mxu0 0
    %6567 = vmatpush1.bf16.msra.mxu0 0
    %6568 = vmatprep.subr.bf16.mxu0 0
    %6569 = vmatpush1.bf16.msra.mxu0 0
    %6570 = vmatprep.subr.bf16.mxu0 0
    %6571 = vmatpush1.bf16.msra.mxu0 0
    %6572 = vmatprep.subr.bf16.mxu0 0
    %6573 = vmatpush1.bf16.msra.mxu0 0
    %6574 = vmatprep.subr.bf16.mxu0 0
    %6575 = vmatpush1.bf16.msra.mxu0 0
    %6576 = vmatprep.subr.bf16.mxu0 0
    %6577 = vmatpush1.bf16.msra.mxu0 0
    %6578 = vmatprep.subr.bf16.mxu0 0
    %6579 = vmatpush1.bf16.msra.mxu0 0
    %6580 = vmatprep.subr.bf16.mxu0 0
    %6581 = vmatpush1.bf16.msra.mxu0 0
    %6582 = vmatprep.subr.bf16.mxu0 0
    %6583 = vmatpush1.bf16.msra.mxu0 0
    %6584 = vmatprep.mubr.bf16.mxu0 0
    %6585 = vmatmul.mubr.bf16.gmra.mrb[0].mxu0 %v6547
    %v6586 = vpop.f32.mrb[0].mxu0
    %v6587 = vadd.f32 %v5089, %v6586
    %v6588 = vpop.f32.mrb[0].mxu0
    %v6589 = vpop.f32.mrb[0].mxu0
    %v6590 = vadd.f32 %v5092, %v6589
    %v6591 = vpop.f32.mrb[0].mxu0
    %6592 = vmatprep.mubr.bf16.mxu0 0
    %6593 = vmatmul.mubr.bf16.gmra.mrb[0].mxu0 %v6550
    %v6594 = vpop.f32.mrb[0].mxu0
    %v6595 = vadd.f32 %v5097, %v6594
    %v6596 = vpop.f32.mrb[0].mxu0
    %v6597 = vpop.f32.mrb[0].mxu0
    %v6598 = vadd.f32 %v5100, %v6597
    %v6599 = vpop.f32.mrb[0].mxu0
    %6600 = vdwg.mxu0
    %v6602 = vrot.slane %v3755, 4
    %v6603 = vrot.slane %v3756, 4
    %v6604 = vsel %vm5648, %v6602, %v6603
    %v6605 = vrot.slane %v3757, 4
    %v6606 = vsel %vm5648, %v6603, %v6605
    %v6608 = vsel %vm3985, %v6604, 0
    %v6611 = vsel %vm3985, %v6606, 0
    %6613 = vmatprep.subr.bf16.mxu0 0
    %6614 = vmatpush1.bf16.msra.mxu0 %v3924
    %6615 = vmatprep.subr.bf16.mxu0 0
    %6616 = vmatpush1.bf16.msra.mxu0 %v3925
    %6617 = vmatprep.subr.bf16.mxu0 0
    %6618 = vmatpush1.bf16.msra.mxu0 %v3926
    %6619 = vmatprep.subr.bf16.mxu0 0
    %6620 = vmatpush1.bf16.msra.mxu0 %v3927
    %6621 = vmatprep.subr.bf16.mxu0 0
    %6622 = vmatpush1.bf16.msra.mxu0 0
    %6623 = vmatprep.subr.bf16.mxu0 0
    %6624 = vmatpush1.bf16.msra.mxu0 0
    %6625 = vmatprep.subr.bf16.mxu0 0
    %6626 = vmatpush1.bf16.msra.mxu0 0
    %6627 = vmatprep.subr.bf16.mxu0 0
    %6628 = vmatpush1.bf16.msra.mxu0 0
    %6629 = vmatprep.subr.bf16.mxu0 0
    %6630 = vmatpush1.bf16.msra.mxu0 0
    %6631 = vmatprep.subr.bf16.mxu0 0
    %6632 = vmatpush1.bf16.msra.mxu0 0
    %6633 = vmatprep.subr.bf16.mxu0 0
    %6634 = vmatpush1.bf16.msra.mxu0 0
    %6635 = vmatprep.subr.bf16.mxu0 0
    %6636 = vmatpush1.bf16.msra.mxu0 0
    %6637 = vmatprep.subr.bf16.mxu0 0
    %6638 = vmatpush1.bf16.msra.mxu0 0
    %6639 = vmatprep.subr.bf16.mxu0 0
    %6640 = vmatpush1.bf16.msra.mxu0 0
    %6641 = vmatprep.subr.bf16.mxu0 0
    %6642 = vmatpush1.bf16.msra.mxu0 0
    %6643 = vmatprep.subr.bf16.mxu0 0
    %6644 = vmatpush1.bf16.msra.mxu0 0
    %6645 = vmatprep.mubr.bf16.mxu0 0
    %6646 = vmatmul.mubr.bf16.gmra.mrb[0].mxu0 %v6608
    %v6647 = vpop.f32.mrb[0].mxu0
    %v6648 = vadd.f32 %v5152, %v6647
    %v6649 = vpop.f32.mrb[0].mxu0
    %v6650 = vpop.f32.mrb[0].mxu0
    %v6651 = vadd.f32 %v5155, %v6650
    %v6652 = vpop.f32.mrb[0].mxu0
    %6653 = vmatprep.mubr.bf16.mxu0 0
    %6654 = vmatmul.mubr.bf16.gmra.mrb[0].mxu0 %v6611
    %v6655 = vpop.f32.mrb[0].mxu0
    %v6656 = vadd.f32 %v5160, %v6655
    %v6657 = vpop.f32.mrb[0].mxu0
    %v6658 = vpop.f32.mrb[0].mxu0
    %v6659 = vadd.f32 %v5163, %v6658
    %v6660 = vpop.f32.mrb[0].mxu0
    %6661 = vdwg.mxu0
    %v6663 = vrot.slane %v3759, 2
    %v6664 = vrot.slane %v3760, 2
    %v6665 = vsel %vm5710, %v6663, %v6664
    %v6666 = vrot.slane %v3761, 2
    %v6667 = vsel %vm5710, %v6664, %v6666
    %v6669 = vsel %vm3985, %v6665, 0
    %v6672 = vsel %vm3985, %v6667, 0
    %6674 = vmatprep.subr.bf16.mxu0 0
    %6675 = vmatpush1.bf16.msra.mxu0 %v3932
    %6676 = vmatprep.subr.bf16.mxu0 0
    %6677 = vmatpush1.bf16.msra.mxu0 %v3933
    %6678 = vmatprep.subr.bf16.mxu0 0
    %6679 = vmatpush1.bf16.msra.mxu0 %v3934
    %6680 = vmatprep.subr.bf16.mxu0 0
    %6681 = vmatpush1.bf16.msra.mxu0 %v3935
    %6682 = vmatprep.subr.bf16.mxu0 0
    %6683 = vmatpush1.bf16.msra.mxu0 0
    %6684 = vmatprep.subr.bf16.mxu0 0
    %6685 = vmatpush1.bf16.msra.mxu0 0
    %6686 = vmatprep.subr.bf16.mxu0 0
    %6687 = vmatpush1.bf16.msra.mxu0 0
    %6688 = vmatprep.subr.bf16.mxu0 0
    %6689 = vmatpush1.bf16.msra.mxu0 0
    %6690 = vmatprep.subr.bf16.mxu0 0
    %6691 = vmatpush1.bf16.msra.mxu0 0
    %6692 = vmatprep.subr.bf16.mxu0 0
    %6693 = vmatpush1.bf16.msra.mxu0 0
    %6694 = vmatprep.subr.bf16.mxu0 0
    %6695 = vmatpush1.bf16.msra.mxu0 0
    %6696 = vmatprep.subr.bf16.mxu0 0
    %6697 = vmatpush1.bf16.msra.mxu0 0
    %6698 = vmatprep.subr.bf16.mxu0 0
    %6699 = vmatpush1.bf16.msra.mxu0 0
    %6700 = vmatprep.subr.bf16.mxu0 0
    %6701 = vmatpush1.bf16.msra.mxu0 0
    %6702 = vmatprep.subr.bf16.mxu0 0
    %6703 = vmatpush1.bf16.msra.mxu0 0
    %6704 = vmatprep.subr.bf16.mxu0 0
    %6705 = vmatpush1.bf16.msra.mxu0 0
    %6706 = vmatprep.mubr.bf16.mxu0 0
    %6707 = vmatmul.mubr.bf16.gmra.mrb[0].mxu0 %v6669
    %v6708 = vpop.f32.mrb[0].mxu0
    %v6709 = vadd.f32 %v5212, %v6708
    %v6710 = vpop.f32.mrb[0].mxu0
    %v6711 = vpop.f32.mrb[0].mxu0
    %v6712 = vadd.f32 %v5215, %v6711
    %v6713 = vpop.f32.mrb[0].mxu0
    %6714 = vmatprep.mubr.bf16.mxu0 0
    %6715 = vmatmul.mubr.bf16.gmra.mrb[0].mxu0 %v6672
    %v6716 = vpop.f32.mrb[0].mxu0
    %v6717 = vadd.f32 %v5220, %v6716
    %v6718 = vpop.f32.mrb[0].mxu0
    %v6719 = vpop.f32.mrb[0].mxu0
    %v6720 = vadd.f32 %v5223, %v6719
    %v6721 = vpop.f32.mrb[0].mxu0
    %6722 = vdwg.mxu0
    %v6724 = vsel %vm3985, %v3763, 0
    %v6727 = vsel %vm3985, %v3764, 0
    %6729 = vmatprep.subr.bf16.mxu0 0
    %6730 = vmatpush1.bf16.msra.mxu0 %v3940
    %6731 = vmatprep.subr.bf16.mxu0 0
    %6732 = vmatpush1.bf16.msra.mxu0 %v3941
    %6733 = vmatprep.subr.bf16.mxu0 0
    %6734 = vmatpush1.bf16.msra.mxu0 %v3942
    %6735 = vmatprep.subr.bf16.mxu0 0
    %6736 = vmatpush1.bf16.msra.mxu0 %v3943
    %6737 = vmatprep.subr.bf16.mxu0 0
    %6738 = vmatpush1.bf16.msra.mxu0 0
    %6739 = vmatprep.subr.bf16.mxu0 0
    %6740 = vmatpush1.bf16.msra.mxu0 0
    %6741 = vmatprep.subr.bf16.mxu0 0
    %6742 = vmatpush1.bf16.msra.mxu0 0
    %6743 = vmatprep.subr.bf16.mxu0 0
    %6744 = vmatpush1.bf16.msra.mxu0 0
    %6745 = vmatprep.subr.bf16.mxu0 0
    %6746 = vmatpush1.bf16.msra.mxu0 0
    %6747 = vmatprep.subr.bf16.mxu0 0
    %6748 = vmatpush1.bf16.msra.mxu0 0
    %6749 = vmatprep.subr.bf16.mxu0 0
    %6750 = vmatpush1.bf16.msra.mxu0 0
    %6751 = vmatprep.subr.bf16.mxu0 0
    %6752 = vmatpush1.bf16.msra.mxu0 0
    %6753 = vmatprep.subr.bf16.mxu0 0
    %6754 = vmatpush1.bf16.msra.mxu0 0
    %6755 = vmatprep.subr.bf16.mxu0 0
    %6756 = vmatpush1.bf16.msra.mxu0 0
    %6757 = vmatprep.subr.bf16.mxu0 0
    %6758 = vmatpush1.bf16.msra.mxu0 0
    %6759 = vmatprep.subr.bf16.mxu0 0
    %6760 = vmatpush1.bf16.msra.mxu0 0
    %6761 = vmatprep.mubr.bf16.mxu0 0
    %6762 = vmatmul.mubr.bf16.gmra.mrb[0].mxu0 %v6724
    %v6763 = vpop.f32.mrb[0].mxu0
    %v6764 = vadd.f32 %v5275, %v6763
    %v6765 = vpop.f32.mrb[0].mxu0
    %v6766 = vpop.f32.mrb[0].mxu0
    %v6767 = vadd.f32 %v5278, %v6766
    %v6768 = vpop.f32.mrb[0].mxu0
    %6769 = vmatprep.mubr.bf16.mxu0 0
    %6770 = vmatmul.mubr.bf16.gmra.mrb[0].mxu0 %v6727
    %v6771 = vpop.f32.mrb[0].mxu0
    %v6772 = vadd.f32 %v5283, %v6771
    %v6773 = vpop.f32.mrb[0].mxu0
    %v6774 = vpop.f32.mrb[0].mxu0
    %v6775 = vadd.f32 %v5286, %v6774
    %v6776 = vpop.f32.mrb[0].mxu0
    %6777 = vdwg.mxu0
    %v6779 = vrot.slane %v3766, 6
    %v6780 = vrot.slane %v3767, 6
    %v6781 = vsel %vm5586, %v6779, %v6780
    %v6782 = vrot.slane %v3768, 6
    %v6783 = vsel %vm5586, %v6780, %v6782
    %v6785 = vsel %vm3985, %v6781, 0
    %v6788 = vsel %vm3985, %v6783, 0
    %6790 = vmatprep.subr.bf16.mxu0 0
    %6791 = vmatpush1.bf16.msra.mxu0 %v3948
    %6792 = vmatprep.subr.bf16.mxu0 0
    %6793 = vmatpush1.bf16.msra.mxu0 %v3949
    %6794 = vmatprep.subr.bf16.mxu0 0
    %6795 = vmatpush1.bf16.msra.mxu0 %v3950
    %6796 = vmatprep.subr.bf16.mxu0 0
    %6797 = vmatpush1.bf16.msra.mxu0 %v3951
    %6798 = vmatprep.subr.bf16.mxu0 0
    %6799 = vmatpush1.bf16.msra.mxu0 0
    %6800 = vmatprep.subr.bf16.mxu0 0
    %6801 = vmatpush1.bf16.msra.mxu0 0
    %6802 = vmatprep.subr.bf16.mxu0 0
    %6803 = vmatpush1.bf16.msra.mxu0 0
    %6804 = vmatprep.subr.bf16.mxu0 0
    %6805 = vmatpush1.bf16.msra.mxu0 0
    %6806 = vmatprep.subr.bf16.mxu0 0
    %6807 = vmatpush1.bf16.msra.mxu0 0
    %6808 = vmatprep.subr.bf16.mxu0 0
    %6809 = vmatpush1.bf16.msra.mxu0 0
    %6810 = vmatprep.subr.bf16.mxu0 0
    %6811 = vmatpush1.bf16.msra.mxu0 0
    %6812 = vmatprep.subr.bf16.mxu0 0
    %6813 = vmatpush1.bf16.msra.mxu0 0
    %6814 = vmatprep.subr.bf16.mxu0 0
    %6815 = vmatpush1.bf16.msra.mxu0 0
    %6816 = vmatprep.subr.bf16.mxu0 0
    %6817 = vmatpush1.bf16.msra.mxu0 0
    %6818 = vmatprep.subr.bf16.mxu0 0
    %6819 = vmatpush1.bf16.msra.mxu0 0
    %6820 = vmatprep.subr.bf16.mxu0 0
    %6821 = vmatpush1.bf16.msra.mxu0 0
    %6822 = vmatprep.mubr.bf16.mxu0 0
    %6823 = vmatmul.mubr.bf16.gmra.mrb[0].mxu0 %v6785
    %v6824 = vpop.f32.mrb[0].mxu0
    %v6825 = vadd.f32 %v5338, %v6824
    %v6826 = vpop.f32.mrb[0].mxu0
    %v6827 = vpop.f32.mrb[0].mxu0
    %v6828 = vadd.f32 %v5341, %v6827
    %v6829 = vpop.f32.mrb[0].mxu0
    %6830 = vmatprep.mubr.bf16.mxu0 0
    %6831 = vmatmul.mubr.bf16.gmra.mrb[0].mxu0 %v6788
    %v6832 = vpop.f32.mrb[0].mxu0
    %v6833 = vadd.f32 %v5346, %v6832
    %v6834 = vpop.f32.mrb[0].mxu0
    %v6835 = vpop.f32.mrb[0].mxu0
    %v6836 = vadd.f32 %v5349, %v6835
    %v6837 = vpop.f32.mrb[0].mxu0
    %6838 = vdwg.mxu0
    %v6840 = vrot.slane %v3770, 4
    %v6841 = vrot.slane %v3771, 4
    %v6842 = vsel %vm5648, %v6840, %v6841
    %v6843 = vrot.slane %v3772, 4
    %v6844 = vsel %vm5648, %v6841, %v6843
    %v6846 = vsel %vm3985, %v6842, 0
    %v6849 = vsel %vm3985, %v6844, 0
    %6851 = vmatprep.subr.bf16.mxu0 0
    %6852 = vmatpush1.bf16.msra.mxu0 %v3956
    %6853 = vmatprep.subr.bf16.mxu0 0
    %6854 = vmatpush1.bf16.msra.mxu0 %v3957
    %6855 = vmatprep.subr.bf16.mxu0 0
    %6856 = vmatpush1.bf16.msra.mxu0 %v3958
    %6857 = vmatprep.subr.bf16.mxu0 0
    %6858 = vmatpush1.bf16.msra.mxu0 %v3959
    %6859 = vmatprep.subr.bf16.mxu0 0
    %6860 = vmatpush1.bf16.msra.mxu0 0
    %6861 = vmatprep.subr.bf16.mxu0 0
    %6862 = vmatpush1.bf16.msra.mxu0 0
    %6863 = vmatprep.subr.bf16.mxu0 0
    %6864 = vmatpush1.bf16.msra.mxu0 0
    %6865 = vmatprep.subr.bf16.mxu0 0
    %6866 = vmatpush1.bf16.msra.mxu0 0
    %6867 = vmatprep.subr.bf16.mxu0 0
    %6868 = vmatpush1.bf16.msra.mxu0 0
    %6869 = vmatprep.subr.bf16.mxu0 0
    %6870 = vmatpush1.bf16.msra.mxu0 0
    %6871 = vmatprep.subr.bf16.mxu0 0
    %6872 = vmatpush1.bf16.msra.mxu0 0
    %6873 = vmatprep.subr.bf16.mxu0 0
    %6874 = vmatpush1.bf16.msra.mxu0 0
    %6875 = vmatprep.subr.bf16.mxu0 0
    %6876 = vmatpush1.bf16.msra.mxu0 0
    %6877 = vmatprep.subr.bf16.mxu0 0
    %6878 = vmatpush1.bf16.msra.mxu0 0
    %6879 = vmatprep.subr.bf16.mxu0 0
    %6880 = vmatpush1.bf16.msra.mxu0 0
    %6881 = vmatprep.subr.bf16.mxu0 0
    %6882 = vmatpush1.bf16.msra.mxu0 0
    %6883 = vmatprep.mubr.bf16.mxu0 0
    %6884 = vmatmul.mubr.bf16.gmra.mrb[0].mxu0 %v6846
    %v6885 = vpop.f32.mrb[0].mxu0
    %v6886 = vadd.f32 %v5401, %v6885
    %v6887 = vpop.f32.mrb[0].mxu0
    %v6888 = vpop.f32.mrb[0].mxu0
    %v6889 = vadd.f32 %v5404, %v6888
    %v6890 = vpop.f32.mrb[0].mxu0
    %6891 = vmatprep.mubr.bf16.mxu0 0
    %6892 = vmatmul.mubr.bf16.gmra.mrb[0].mxu0 %v6849
    %v6893 = vpop.f32.mrb[0].mxu0
    %v6894 = vadd.f32 %v5409, %v6893
    %v6895 = vpop.f32.mrb[0].mxu0
    %v6896 = vpop.f32.mrb[0].mxu0
    %v6897 = vadd.f32 %v5412, %v6896
    %v6898 = vpop.f32.mrb[0].mxu0
    %6899 = vdwg.mxu0
    %v6901 = vrot.slane %v3774, 2
    %v6902 = vrot.slane %v3775, 2
    %v6903 = vsel %vm5710, %v6901, %v6902
    %v6904 = vrot.slane %v3776, 2
    %v6905 = vsel %vm5710, %v6902, %v6904
    %v6907 = vsel %vm3985, %v6903, 0
    %v6910 = vsel %vm3985, %v6905, 0
    %6912 = vmatprep.subr.bf16.mxu0 0
    %6913 = vmatpush1.bf16.msra.mxu0 %v3964
    %6914 = vmatprep.subr.bf16.mxu0 0
    %6915 = vmatpush1.bf16.msra.mxu0 %v3965
    %6916 = vmatprep.subr.bf16.mxu0 0
    %6917 = vmatpush1.bf16.msra.mxu0 %v3966
    %6918 = vmatprep.subr.bf16.mxu0 0
    %6919 = vmatpush1.bf16.msra.mxu0 %v3967
    %6920 = vmatprep.subr.bf16.mxu0 0
    %6921 = vmatpush1.bf16.msra.mxu0 0
    %6922 = vmatprep.subr.bf16.mxu0 0
    %6923 = vmatpush1.bf16.msra.mxu0 0
    %6924 = vmatprep.subr.bf16.mxu0 0
    %6925 = vmatpush1.bf16.msra.mxu0 0
    %6926 = vmatprep.subr.bf16.mxu0 0
    %6927 = vmatpush1.bf16.msra.mxu0 0
    %6928 = vmatprep.subr.bf16.mxu0 0
    %6929 = vmatpush1.bf16.msra.mxu0 0
    %6930 = vmatprep.subr.bf16.mxu0 0
    %6931 = vmatpush1.bf16.msra.mxu0 0
    %6932 = vmatprep.subr.bf16.mxu0 0
    %6933 = vmatpush1.bf16.msra.mxu0 0
    %6934 = vmatprep.subr.bf16.mxu0 0
    %6935 = vmatpush1.bf16.msra.mxu0 0
    %6936 = vmatprep.subr.bf16.mxu0 0
    %6937 = vmatpush1.bf16.msra.mxu0 0
    %6938 = vmatprep.subr.bf16.mxu0 0
    %6939 = vmatpush1.bf16.msra.mxu0 0
    %6940 = vmatprep.subr.bf16.mxu0 0
    %6941 = vmatpush1.bf16.msra.mxu0 0
    %6942 = vmatprep.subr.bf16.mxu0 0
    %6943 = vmatpush1.bf16.msra.mxu0 0
    %6944 = vmatprep.mubr.bf16.mxu0 0
    %6945 = vmatmul.mubr.bf16.gmra.mrb[0].mxu0 %v6907
    %v6946 = vpop.f32.mrb[0].mxu0
    %v6947 = vadd.f32 %v5461, %v6946
    %v6948 = vpop.f32.mrb[0].mxu0
    %v6949 = vpop.f32.mrb[0].mxu0
    %v6950 = vadd.f32 %v5464, %v6949
    %v6951 = vpop.f32.mrb[0].mxu0
    %6952 = vmatprep.mubr.bf16.mxu0 0
    %6953 = vmatmul.mubr.bf16.gmra.mrb[0].mxu0 %v6910
    %v6954 = vpop.f32.mrb[0].mxu0
    %v6955 = vadd.f32 %v5469, %v6954
    %v6956 = vpop.f32.mrb[0].mxu0
    %v6957 = vpop.f32.mrb[0].mxu0
    %v6958 = vadd.f32 %v5472, %v6957
    %v6959 = vpop.f32.mrb[0].mxu0
    %6960 = vdwg.mxu0
    %v6961 = vadd.f32 %v5571, %v5633
    %v6962 = vadd.f32 %v5574, %v5636
    %v6963 = vadd.f32 %v5579, %v5641
    %v6964 = vadd.f32 %v5582, %v5644
    %v6965 = vadd.f32 %v5695, %v5757
    %v6966 = vadd.f32 %v5698, %v5760
    %v6967 = vadd.f32 %v5703, %v5765
    %v6968 = vadd.f32 %v5706, %v5768
    %v6969 = vadd.f32 %v5812, %v5873
    %v6970 = vadd.f32 %v5815, %v5876
    %v6971 = vadd.f32 %v5820, %v5881
    %v6972 = vadd.f32 %v5823, %v5884
    %v6973 = vadd.f32 %v5934, %v5995
    %v6974 = vadd.f32 %v5937, %v5998
    %v6975 = vadd.f32 %v5942, %v6003
    %v6976 = vadd.f32 %v5945, %v6006
    %v6977 = vadd.f32 %v6050, %v6111
    %v6978 = vadd.f32 %v6053, %v6114
    %v6979 = vadd.f32 %v6058, %v6119
    %v6980 = vadd.f32 %v6061, %v6122
    %v6981 = vadd.f32 %v6172, %v6233
    %v6982 = vadd.f32 %v6175, %v6236
    %v6983 = vadd.f32 %v6180, %v6241
    %v6984 = vadd.f32 %v6183, %v6244
    %v6985 = vadd.f32 %v6288, %v6349
    %v6986 = vadd.f32 %v6291, %v6352
    %v6987 = vadd.f32 %v6296, %v6357
    %v6988 = vadd.f32 %v6299, %v6360
    %v6989 = vadd.f32 %v6410, %v6471
    %v6990 = vadd.f32 %v6413, %v6474
    %v6991 = vadd.f32 %v6418, %v6479
    %v6992 = vadd.f32 %v6421, %v6482
    %v6993 = vadd.f32 %v6526, %v6587
    %v6994 = vadd.f32 %v6529, %v6590
    %v6995 = vadd.f32 %v6534, %v6595
    %v6996 = vadd.f32 %v6537, %v6598
    %v6997 = vadd.f32 %v6648, %v6709
    %v6998 = vadd.f32 %v6651, %v6712
    %v6999 = vadd.f32 %v6656, %v6717
    %v7000 = vadd.f32 %v6659, %v6720
    %v7001 = vadd.f32 %v6764, %v6825
    %v7002 = vadd.f32 %v6767, %v6828
    %v7003 = vadd.f32 %v6772, %v6833
    %v7004 = vadd.f32 %v6775, %v6836
    %v7005 = vadd.f32 %v6886, %v6947
    %v7006 = vadd.f32 %v6889, %v6950
    %v7007 = vadd.f32 %v6894, %v6955
    %v7008 = vadd.f32 %v6897, %v6958
    %v7009 = vadd.f32 %v6961, %v6965
    %v7010 = vadd.f32 %v6962, %v6966
    %v7011 = vadd.f32 %v6963, %v6967
    %v7012 = vadd.f32 %v6964, %v6968
    %v7013 = vadd.f32 %v6969, %v6973
    %v7014 = vadd.f32 %v6970, %v6974
    %v7015 = vadd.f32 %v6971, %v6975
    %v7016 = vadd.f32 %v6972, %v6976
    %v7017 = vadd.f32 %v6977, %v6981
    %v7018 = vadd.f32 %v6978, %v6982
    %v7019 = vadd.f32 %v6979, %v6983
    %v7020 = vadd.f32 %v6980, %v6984
    %v7021 = vadd.f32 %v6985, %v6989
    %v7022 = vadd.f32 %v6986, %v6990
    %v7023 = vadd.f32 %v6987, %v6991
    %v7024 = vadd.f32 %v6988, %v6992
    %v7025 = vadd.f32 %v6993, %v6997
    %v7026 = vadd.f32 %v6994, %v6998
    %v7027 = vadd.f32 %v6995, %v6999
    %v7028 = vadd.f32 %v6996, %v7000
    %v7029 = vadd.f32 %v7001, %v7005
    %v7030 = vadd.f32 %v7002, %v7006
    %v7031 = vadd.f32 %v7003, %v7007
    %v7032 = vadd.f32 %v7004, %v7008
    %v7033 = vadd.f32 %v7009, %v7013
    %v7034 = vadd.f32 %v7010, %v7014
    %v7035 = vadd.f32 %v7011, %v7015
    %v7036 = vadd.f32 %v7012, %v7016
    %v7037 = vadd.f32 %v7017, %v7021
    %v7038 = vadd.f32 %v7018, %v7022
    %v7039 = vadd.f32 %v7019, %v7023
    %v7040 = vadd.f32 %v7020, %v7024
    %v7041 = vadd.f32 %v7025, %v7029
    %v7042 = vadd.f32 %v7026, %v7030
    %v7043 = vadd.f32 %v7027, %v7031
    %v7044 = vadd.f32 %v7028, %v7032
    %v7045 = vadd.f32 %v7033, %v7037
    %v7046 = vadd.f32 %v7034, %v7038
    %v7047 = vadd.f32 %v7035, %v7039
    %v7048 = vadd.f32 %v7036, %v7040
    %v7049 = vadd.f32 %v7041, %v5516
    %v7050 = vadd.f32 %v7042, %v5519
    %v7051 = vadd.f32 %v7043, %v5524
    %v7052 = vadd.f32 %v7044, %v5527
    %v7053 = vadd.f32 %v7045, %v7049
    %v7054 = vadd.f32 %v7046, %v7050
    %v7055 = vadd.f32 %v7047, %v7051
    %v7056 = vadd.f32 %v7048, %v7052
    %v7057 = vld [vmem:[%s7] sm:$0x1]
    %v7058 = vld [vmem:[%s8] sm:$0x1]
    %vm7059 = vcmask 244736
    %v7060 = vsel %vm7059, 1.0, 0
    %v7063 = vsel %vm1122, %v7056, 0
    %7065 = vmatprep.subr.mxu0 0.0
    %7066 = vmatpush1.msra.mxu0 %v7053
    %7067 = vmatprep.subr.mxu0 0.0
    %7068 = vmatpush1.msra.mxu0 %v7054
    %7069 = vmatprep.subr.mxu0 0.0
    %7070 = vmatpush1.msra.mxu0 %v7055
    %7071 = vmatprep.subr.mxu0 0.0
    %7072 = vmatpush1.msra.mxu0 %v7063
    %7073 = vmatprep.subr.mxu0 0.0
    %7074 = vmatpush1.msra.mxu0 0.0
    %7075 = vmatprep.subr.mxu0 0.0
    %7076 = vmatpush1.msra.mxu0 0.0
    %7077 = vmatprep.subr.mxu0 0.0
    %7078 = vmatpush1.msra.mxu0 0.0
    %7079 = vmatprep.subr.mxu0 0.0
    %7080 = vmatpush1.msra.mxu0 0.0
    %7081 = vmatprep.subr.mxu0 0.0
    %7082 = vmatpush1.msra.mxu0 0.0
    %7083 = vmatprep.subr.mxu0 0.0
    %7084 = vmatpush1.msra.mxu0 0.0
    %7085 = vmatprep.subr.mxu0 0.0
    %7086 = vmatpush1.msra.mxu0 0.0
    %7087 = vmatprep.subr.mxu0 0.0
    %7088 = vmatpush1.msra.mxu0 0.0
    %7089 = vmatprep.subr.mxu0 0.0
    %7090 = vmatpush1.msra.mxu0 0.0
    %7091 = vmatprep.subr.mxu0 0.0
    %7092 = vmatpush1.msra.mxu0 0.0
    %7093 = vmatprep.subr.mxu0 0.0
    %7094 = vmatpush1.msra.mxu0 0.0
    %7095 = vmatprep.subr.mxu0 0.0
    %7096 = vmatpush1.msra.mxu0 0.0
    %7097 = vmatprep.subr.mxu0 0.0
    %7098 = vmatpush1.msra.mxu0 0.0
    %7099 = vmatprep.subr.mxu0 0.0
    %7100 = vmatpush1.msra.mxu0 0.0
    %7101 = vmatprep.subr.mxu0 0.0
    %7102 = vmatpush1.msra.mxu0 0.0
    %7103 = vmatprep.subr.mxu0 0.0
    %7104 = vmatpush1.msra.mxu0 0.0
    %7105 = vmatprep.subr.mxu0 0.0
    %7106 = vmatpush1.msra.mxu0 0.0
    %7107 = vmatprep.subr.mxu0 0.0
    %7108 = vmatpush1.msra.mxu0 0.0
    %7109 = vmatprep.subr.mxu0 0.0
    %7110 = vmatpush1.msra.mxu0 0.0
    %7111 = vmatprep.subr.mxu0 0.0
    %7112 = vmatpush1.msra.mxu0 0.0
    %7113 = vmatprep.subr.mxu0 0.0
    %7114 = vmatpush1.msra.mxu0 0.0
    %7115 = vmatprep.subr.mxu0 0.0
    %7116 = vmatpush1.msra.mxu0 0.0
    %7117 = vmatprep.subr.mxu0 0.0
    %7118 = vmatpush1.msra.mxu0 0.0
    %7119 = vmatprep.subr.mxu0 0.0
    %7120 = vmatpush1.msra.mxu0 0.0
    %7121 = vmatprep.subr.mxu0 0.0
    %7122 = vmatpush1.msra.mxu0 0.0
    %7123 = vmatprep.subr.mxu0 0.0
    %7124 = vmatpush1.msra.mxu0 0.0
    %7125 = vmatprep.subr.mxu0 0.0
    %7126 = vmatpush1.msra.mxu0 0.0
    %7127 = vmatprep.subr.mxu0 0.0
    %7128 = vmatpush1.msra.mxu0 0.0
    %7129 = vmatprep.mubr.f32.mxu0 0.0
    %7130 = vmatmul.mubr.f32.gmra.mrb[0].mxu0 %v7060
    %v7131 = vpop.f32.mrb[0].mxu0
    %v7132 = vadd.f32 0.0, %v7131
    %v7133 = vpop.f32.mrb[0].mxu0
    %7134 = vdwg.mxu0
    %v7135 = vmul.f32 %v7132, 0.033333335
    %v7136 = vmul.f32 %v7053, %v7053
    %v7137 = vmul.f32 %v7054, %v7054
    %v7138 = vmul.f32 %v7055, %v7055
    %v7139 = vmul.f32 %v7056, %v7056
    %v7141 = vsel %vm1122, %v7139, 0
    %7143 = vmatprep.subr.mxu0 0.0
    %7144 = vmatpush1.msra.mxu0 %v7136
    %7145 = vmatprep.subr.mxu0 0.0
    %7146 = vmatpush1.msra.mxu0 %v7137
    %7147 = vmatprep.subr.mxu0 0.0
    %7148 = vmatpush1.msra.mxu0 %v7138
    %7149 = vmatprep.subr.mxu0 0.0
    %7150 = vmatpush1.msra.mxu0 %v7141
    %7151 = vmatprep.subr.mxu0 0.0
    %7152 = vmatpush1.msra.mxu0 0.0
    %7153 = vmatprep.subr.mxu0 0.0
    %7154 = vmatpush1.msra.mxu0 0.0
    %7155 = vmatprep.subr.mxu0 0.0
    %7156 = vmatpush1.msra.mxu0 0.0
    %7157 = vmatprep.subr.mxu0 0.0
    %7158 = vmatpush1.msra.mxu0 0.0
    %7159 = vmatprep.subr.mxu0 0.0
    %7160 = vmatpush1.msra.mxu0 0.0
    %7161 = vmatprep.subr.mxu0 0.0
    %7162 = vmatpush1.msra.mxu0 0.0
    %7163 = vmatprep.subr.mxu0 0.0
    %7164 = vmatpush1.msra.mxu0 0.0
    %7165 = vmatprep.subr.mxu0 0.0
    %7166 = vmatpush1.msra.mxu0 0.0
    %7167 = vmatprep.subr.mxu0 0.0
    %7168 = vmatpush1.msra.mxu0 0.0
    %7169 = vmatprep.subr.mxu0 0.0
    %7170 = vmatpush1.msra.mxu0 0.0
    %7171 = vmatprep.subr.mxu0 0.0
    %7172 = vmatpush1.msra.mxu0 0.0
    %7173 = vmatprep.subr.mxu0 0.0
    %7174 = vmatpush1.msra.mxu0 0.0
    %7175 = vmatprep.subr.mxu0 0.0
    %7176 = vmatpush1.msra.mxu0 0.0
    %7177 = vmatprep.subr.mxu0 0.0
    %7178 = vmatpush1.msra.mxu0 0.0
    %7179 = vmatprep.subr.mxu0 0.0
    %7180 = vmatpush1.msra.mxu0 0.0
    %7181 = vmatprep.subr.mxu0 0.0
    %7182 = vmatpush1.msra.mxu0 0.0
    %7183 = vmatprep.subr.mxu0 0.0
    %7184 = vmatpush1.msra.mxu0 0.0
    %7185 = vmatprep.subr.mxu0 0.0
    %7186 = vmatpush1.msra.mxu0 0.0
    %7187 = vmatprep.subr.mxu0 0.0
    %7188 = vmatpush1.msra.mxu0 0.0
    %7189 = vmatprep.subr.mxu0 0.0
    %7190 = vmatpush1.msra.mxu0 0.0
    %7191 = vmatprep.subr.mxu0 0.0
    %7192 = vmatpush1.msra.mxu0 0.0
    %7193 = vmatprep.subr.mxu0 0.0
    %7194 = vmatpush1.msra.mxu0 0.0
    %7195 = vmatprep.subr.mxu0 0.0
    %7196 = vmatpush1.msra.mxu0 0.0
    %7197 = vmatprep.subr.mxu0 0.0
    %7198 = vmatpush1.msra.mxu0 0.0
    %7199 = vmatprep.subr.mxu0 0.0
    %7200 = vmatpush1.msra.mxu0 0.0
    %7201 = vmatprep.subr.mxu0 0.0
    %7202 = vmatpush1.msra.mxu0 0.0
    %7203 = vmatprep.subr.mxu0 0.0
    %7204 = vmatpush1.msra.mxu0 0.0
    %7205 = vmatprep.subr.mxu0 0.0
    %7206 = vmatpush1.msra.mxu0 0.0
    %7207 = vmatprep.mubr.f32.mxu0 0.0
    %7208 = vmatmul.mubr.f32.gmra.mrb[0].mxu0 %v7060
    %v7209 = vpop.f32.mrb[0].mxu0
    %v7210 = vadd.f32 0.0, %v7209
    %v7211 = vpop.f32.mrb[0].mxu0
    %7212 = vdwg.mxu0
    %v7213 = vmul.f32 %v7210, 0.033333335
    %v7214 = vmul.f32 %v7135, %v7135
    %v7215 = vsub.f32 %v7213, %v7214
    %v7216 = vadd.f32 %v7215, 1e-05
    %v7217 = vrsqrt.pop %v7216
    %v7218 = vmul.f32 %v7217, %v7057
    %v7219 = vlaneseq
    %v7220 = vshrl.u32 %v7219, 7
    %v7221 = vsub.s32 0, %v7220
    %v7222 = vrot.slane %v7135, %v7221
    %v7223 = vsub.f32 %v7053, %v7222
    %v7224 = vsub.f32 %v7054, %v7222
    %v7225 = vsub.f32 %v7055, %v7222
    %v7226 = vsub.f32 %v7056, %v7222
    %v7227 = vlaneseq
    %v7228 = vshrl.u32 %v7227, 7
    %v7229 = vsub.s32 0, %v7228
    %v7230 = vrot.slane %v7218, %v7229
    %v7231 = vmul.f32 %v7223, %v7230
    %v7232 = vmul.f32 %v7224, %v7230
    %v7233 = vmul.f32 %v7225, %v7230
    %v7234 = vmul.f32 %v7226, %v7230
    %v7236 = vlaneseq
    %v7237 = vshrl.u32 %v7236, 7
    %v7238 = vsub.s32 0, %v7237
    %v7239 = vrot.slane %v7058, %v7238
    %v7241 = vadd.f32 %v7231, %v7239
    %v7242 = vadd.f32 %v7232, %v7239
    %v7243 = vadd.f32 %v7233, %v7239
    %v7244 = vadd.f32 %v7234, %v7239
    %v7245 = vmax.f32 %v7241, 0.0
    %v7246 = vmax.f32 %v7242, 0.0
    %v7247 = vmax.f32 %v7243, 0.0
    %v7248 = vmax.f32 %v7244, 0.0
    %v7249 = vpack.c.bf16 %v7246, %v7245
    %v7250 = vpack.c.bf16 %v7248, %v7247
    %v7251 = vld [vmem:[%s9] sm:$0xf]
    %v7252 = vld [vmem:[%s9 + $0x4] sm:$0xf]
    %v7253 = vld [vmem:[%s9 + $0x8] sm:$0xf]
    %v7254 = vld [vmem:[%s9 + $0xc] sm:$0xf]
    %v7255 = vld [vmem:[%s9 + $0x10] sm:$0xf]
    %v7256 = vld [vmem:[%s9 + $0x14] sm:$0xf]
    %v7257 = vld [vmem:[%s9 + $0x18] sm:$0xf]
    %v7258 = vld [vmem:[%s9 + $0x1c] sm:$0xf]
    %v7259 = vld [vmem:[%s9 + $0x20] sm:$0xf]
    %v7260 = vld [vmem:[%s9 + $0x24] sm:$0xf]
    %v7261 = vld [vmem:[%s9 + $0x28] sm:$0xf]
    %v7262 = vld [vmem:[%s9 + $0x2c] sm:$0xf]
    %v7263 = vld [vmem:[%s9 + $0x30] sm:$0x3]
    %v7277 = vunpack.c.l.b16 %v7251
    %v7278 = vunpack.c.l.b16 %v7252
    %v7279 = vunpack.c.l.b16 %v7253
    %v7280 = vunpack.c.l.b16 %v7254
    %v7281 = vunpack.c.l.b16 %v7255
    %v7282 = vunpack.c.l.b16 %v7256
    %v7283 = vunpack.c.l.b16 %v7257
    %v7284 = vunpack.c.l.b16 %v7258
    %v7285 = vunpack.c.l.b16 %v7259
    %v7286 = vunpack.c.l.b16 %v7260
    %v7287 = vunpack.c.l.b16 %v7261
    %v7288 = vunpack.c.l.b16 %v7262
    %v7289 = vunpack.c.l.b16 %v7263
    %v7290 = vpack.c.b16 %v7278, %v7277
    %v7291 = vpack.c.b16 %v7280, %v7279
    %v7292 = vpack.c.b16 %v7282, %v7281
    %v7293 = vpack.c.b16 %v7284, %v7283
    %v7294 = vpack.c.b16 %v7286, %v7285
    %v7295 = vpack.c.b16 %v7288, %v7287
    %v7296 = vpack.c.b16 %v7289, %v7289
    %v7298 = vsel %vm7059, %v7290, 0
    %v7301 = vsel %vm7059, %v7291, 0
    %v7304 = vsel %vm7059, %v7292, 0
    %v7307 = vsel %vm7059, %v7293, 0
    %v7310 = vsel %vm7059, %v7294, 0
    %v7313 = vsel %vm7059, %v7295, 0
    %v7316 = vsel %vm7059, %v7296, 0
    %vm7318 = vcmask 1046528
    %v7320 = vsel %vm7318, %v7250, 0
    %7322 = vmatprep.subr.bf16.mxu0 0
    %7323 = vmatpush1.bf16.msra.mxu0 %v7249
    %7324 = vmatprep.subr.bf16.mxu0 0
    %7325 = vmatpush1.bf16.msra.mxu0 %v7320
    %7326 = vmatprep.subr.bf16.mxu0 0
    %7327 = vmatpush1.bf16.msra.mxu0 0
    %7328 = vmatprep.subr.bf16.mxu0 0
    %7329 = vmatpush1.bf16.msra.mxu0 0
    %7330 = vmatprep.subr.bf16.mxu0 0
    %7331 = vmatpush1.bf16.msra.mxu0 0
    %7332 = vmatprep.subr.bf16.mxu0 0
    %7333 = vmatpush1.bf16.msra.mxu0 0
    %7334 = vmatprep.subr.bf16.mxu0 0
    %7335 = vmatpush1.bf16.msra.mxu0 0
    %7336 = vmatprep.subr.bf16.mxu0 0
    %7337 = vmatpush1.bf16.msra.mxu0 0
    %7338 = vmatprep.subr.bf16.mxu0 0
    %7339 = vmatpush1.bf16.msra.mxu0 0
    %7340 = vmatprep.subr.bf16.mxu0 0
    %7341 = vmatpush1.bf16.msra.mxu0 0
    %7342 = vmatprep.subr.bf16.mxu0 0
    %7343 = vmatpush1.bf16.msra.mxu0 0
    %7344 = vmatprep.subr.bf16.mxu0 0
    %7345 = vmatpush1.bf16.msra.mxu0 0
    %7346 = vmatprep.subr.bf16.mxu0 0
    %7347 = vmatpush1.bf16.msra.mxu0 0
    %7348 = vmatprep.subr.bf16.mxu0 0
    %7349 = vmatpush1.bf16.msra.mxu0 0
    %7350 = vmatprep.subr.bf16.mxu0 0
    %7351 = vmatpush1.bf16.msra.mxu0 0
    %7352 = vmatprep.subr.bf16.mxu0 0
    %7353 = vmatpush1.bf16.msra.mxu0 0
    %7354 = vmatprep.mubr.bf16.mxu0 0
    %7355 = vmatmul.mubr.bf16.gmra.mrb[0].mxu0 %v7298
    %v7356 = vpop.f32.mrb[0].mxu0
    %v7357 = vadd.f32 0.0, %v7356
    %v7358 = vpop.f32.mrb[0].mxu0
    %v7359 = vpop.f32.mrb[0].mxu0
    %v7360 = vadd.f32 0.0, %v7359
    %v7361 = vpop.f32.mrb[0].mxu0
    %7362 = vmatprep.mubr.bf16.mxu0 0
    %7363 = vmatmul.mubr.bf16.gmra.mrb[0].mxu0 %v7301
    %v7364 = vpop.f32.mrb[0].mxu0
    %v7365 = vadd.f32 0.0, %v7364
    %v7366 = vpop.f32.mrb[0].mxu0
    %v7367 = vpop.f32.mrb[0].mxu0
    %v7368 = vadd.f32 0.0, %v7367
    %v7369 = vpop.f32.mrb[0].mxu0
    %7370 = vmatprep.mubr.bf16.mxu0 0
    %7371 = vmatmul.mubr.bf16.gmra.mrb[0].mxu0 %v7304
    %v7372 = vpop.f32.mrb[0].mxu0
    %v7373 = vadd.f32 0.0, %v7372
    %v7374 = vpop.f32.mrb[0].mxu0
    %v7375 = vpop.f32.mrb[0].mxu0
    %v7376 = vadd.f32 0.0, %v7375
    %v7377 = vpop.f32.mrb[0].mxu0
    %7378 = vmatprep.mubr.bf16.mxu0 0
    %7379 = vmatmul.mubr.bf16.gmra.mrb[0].mxu0 %v7307
    %v7380 = vpop.f32.mrb[0].mxu0
    %v7381 = vadd.f32 0.0, %v7380
    %v7382 = vpop.f32.mrb[0].mxu0
    %v7383 = vpop.f32.mrb[0].mxu0
    %v7384 = vadd.f32 0.0, %v7383
    %v7385 = vpop.f32.mrb[0].mxu0
    %7386 = vmatprep.mubr.bf16.mxu0 0
    %7387 = vmatmul.mubr.bf16.gmra.mrb[0].mxu0 %v7310
    %v7388 = vpop.f32.mrb[0].mxu0
    %v7389 = vadd.f32 0.0, %v7388
    %v7390 = vpop.f32.mrb[0].mxu0
    %v7391 = vpop.f32.mrb[0].mxu0
    %v7392 = vadd.f32 0.0, %v7391
    %v7393 = vpop.f32.mrb[0].mxu0
    %7394 = vmatprep.mubr.bf16.mxu0 0
    %7395 = vmatmul.mubr.bf16.gmra.mrb[0].mxu0 %v7313
    %v7396 = vpop.f32.mrb[0].mxu0
    %v7397 = vadd.f32 0.0, %v7396
    %v7398 = vpop.f32.mrb[0].mxu0
    %v7399 = vpop.f32.mrb[0].mxu0
    %v7400 = vadd.f32 0.0, %v7399
    %v7401 = vpop.f32.mrb[0].mxu0
    %7402 = vmatprep.mubr.bf16.mxu0 0
    %7403 = vmatmul.mubr.bf16.gmra.mrb[0].mxu0 %v7316
    %v7404 = vpop.f32.mrb[0].mxu0
    %v7405 = vadd.f32 0.0, %v7404
    %v7406 = vpop.f32.mrb[0].mxu0
    %v7407 = vpop.f32.mrb[0].mxu0
    %v7408 = vpop.f32.mrb[0].mxu0
    %7409 = vdwg.mxu0
    %v7410 = vpack.c.bf16 %v7360, %v7357
    %v7411 = vpack.c.bf16 %v7368, %v7365
    %v7412 = vpack.c.bf16 %v7376, %v7373
    %v7413 = vpack.c.bf16 %v7384, %v7381
    %v7414 = vpack.c.bf16 %v7392, %v7389
    %v7415 = vpack.c.bf16 %v7400, %v7397
    %v7416 = vpack.c.bf16 %v7405, %v7405
    %v7417 = vld [vmem:[%s10] sm:$0xf]
    %v7418 = vld [vmem:[%s10 + $0x4] sm:$0xf]
    %v7419 = vld [vmem:[%s10 + $0x8] sm:$0xf]
    %v7420 = vld [vmem:[%s10 + $0xc] sm:$0xf]
    %v7421 = vld [vmem:[%s10 + $0x10] sm:$0xf]
    %v7422 = vld [vmem:[%s10 + $0x14] sm:$0xf]
    %v7423 = vld [vmem:[%s10 + $0x18] sm:$0xf]
    %v7424 = vld [vmem:[%s10 + $0x1c] sm:$0xf]
    %v7425 = vld [vmem:[%s10 + $0x20] sm:$0xf]
    %v7426 = vld [vmem:[%s10 + $0x24] sm:$0xf]
    %v7427 = vld [vmem:[%s10 + $0x28] sm:$0xf]
    %v7428 = vld [vmem:[%s10 + $0x2c] sm:$0xf]
    %v7429 = vld [vmem:[%s10 + $0x30] sm:$0xf]
    %v7430 = vld [vmem:[%s10 + $0x34] sm:$0xf]
    %v7431 = vld [vmem:[%s10 + $0x38] sm:$0xf]
    %v7432 = vld [vmem:[%s10 + $0x3c] sm:$0xf]
    %v7433 = vld [vmem:[%s10 + $0x40] sm:$0xf]
    %v7434 = vld [vmem:[%s10 + $0x44] sm:$0xf]
    %v7435 = vld [vmem:[%s10 + $0x48] sm:$0xf]
    %v7436 = vld [vmem:[%s10 + $0x4c] sm:$0xf]
    %v7437 = vld [vmem:[%s10 + $0x50] sm:$0xf]
    %v7438 = vld [vmem:[%s10 + $0x54] sm:$0xf]
    %v7439 = vld [vmem:[%s10 + $0x58] sm:$0xf]
    %v7440 = vld [vmem:[%s10 + $0x5c] sm:$0xf]
    %v7441 = vld [vmem:[%s10 + $0x60] sm:$0xf]
    %v7442 = vld [vmem:[%s10 + $0x64] sm:$0xf]
    %v7443 = vld [vmem:[%s10 + $0x68] sm:$0xf]
    %v7444 = vld [vmem:[%s10 + $0x6c] sm:$0xf]
    %v7445 = vld [vmem:[%s10 + $0x70] sm:$0xf]
    %v7446 = vld [vmem:[%s10 + $0x74] sm:$0xf]
    %v7447 = vld [vmem:[%s10 + $0x78] sm:$0xf]
    %v7448 = vld [vmem:[%s10 + $0x7c] sm:$0xf]
    %v7449 = vld [vmem:[%s10 + $0x80] sm:$0xf]
    %v7450 = vld [vmem:[%s10 + $0x84] sm:$0xf]
    %v7451 = vld [vmem:[%s10 + $0x88] sm:$0xf]
    %v7452 = vld [vmem:[%s10 + $0x8c] sm:$0xf]
    %v7453 = vld [vmem:[%s10 + $0x90] sm:$0xf]
    %v7454 = vld [vmem:[%s10 + $0x94] sm:$0xf]
    %v7455 = vld [vmem:[%s10 + $0x98] sm:$0xf]
    %v7456 = vld [vmem:[%s10 + $0x9c] sm:$0xf]
    %v7457 = vld [vmem:[%s10 + $0xa0] sm:$0xf]
    %v7458 = vld [vmem:[%s10 + $0xa4] sm:$0xf]
    %v7459 = vld [vmem:[%s10 + $0xa8] sm:$0xf]
    %v7460 = vld [vmem:[%s10 + $0xac] sm:$0xf]
    %v7461 = vld [vmem:[%s10 + $0xb0] sm:$0xf]
    %v7462 = vld [vmem:[%s10 + $0xb4] sm:$0xf]
    %v7463 = vld [vmem:[%s10 + $0xb8] sm:$0xf]
    %v7464 = vld [vmem:[%s10 + $0xbc] sm:$0xf]
    %v7465 = vld [vmem:[%s10 + $0xc0] sm:$0xf]
    %v7466 = vld [vmem:[%s10 + $0xc4] sm:$0xf]
    %v7467 = vld [vmem:[%s10 + $0xc8] sm:$0xf]
    %v7468 = vld [vmem:[%s10 + $0xcc] sm:$0xf]
    %v7469 = vld [vmem:[%s10 + $0xd0] sm:$0xf]
    %v7470 = vld [vmem:[%s10 + $0xd4] sm:$0xf]
    %v7471 = vld [vmem:[%s10 + $0xd8] sm:$0xf]
    %v7472 = vld [vmem:[%s10 + $0xdc] sm:$0xf]
    %v7473 = vld [vmem:[%s10 + $0xe0] sm:$0xf]
    %v7474 = vld [vmem:[%s10 + $0xe4] sm:$0xf]
    %v7475 = vld [vmem:[%s10 + $0xe8] sm:$0xf]
    %v7476 = vld [vmem:[%s10 + $0xec] sm:$0xf]
    %v7477 = vld [vmem:[%s10 + $0xf0] sm:$0xf]
    %v7478 = vld [vmem:[%s10 + $0xf4] sm:$0xf]
    %v7479 = vld [vmem:[%s10 + $0xf8] sm:$0xf]
    %v7480 = vld [vmem:[%s10 + $0xfc] sm:$0xf]
    %v7481 = vld [vmem:[%s10 + $0x100] sm:$0xf]
    %v7482 = vld [vmem:[%s10 + $0x104] sm:$0xf]
    %v7483 = vld [vmem:[%s10 + $0x108] sm:$0xf]
    %v7484 = vld [vmem:[%s10 + $0x10c] sm:$0xf]
    %v7485 = vld [vmem:[%s10 + $0x110] sm:$0xf]
    %v7486 = vld [vmem:[%s10 + $0x114] sm:$0xf]
    %v7487 = vld [vmem:[%s10 + $0x118] sm:$0xf]
    %v7488 = vld [vmem:[%s10 + $0x11c] sm:$0xf]
    %v7489 = vld [vmem:[%s10 + $0x120] sm:$0xf]
    %v7490 = vld [vmem:[%s10 + $0x124] sm:$0xf]
    %v7491 = vld [vmem:[%s10 + $0x128] sm:$0xf]
    %v7492 = vld [vmem:[%s10 + $0x12c] sm:$0xf]
    %v7493 = vld [vmem:[%s10 + $0x130] sm:$0xf]
    %v7494 = vld [vmem:[%s10 + $0x134] sm:$0xf]
    %v7495 = vld [vmem:[%s10 + $0x138] sm:$0xf]
    %v7496 = vld [vmem:[%s10 + $0x13c] sm:$0xf]
    %v7497 = vld [vmem:[%s10 + $0x140] sm:$0xf]
    %v7498 = vld [vmem:[%s10 + $0x144] sm:$0xf]
    %v7499 = vld [vmem:[%s10 + $0x148] sm:$0xf]
    %v7500 = vld [vmem:[%s10 + $0x14c] sm:$0xf]
    %v7501 = vld [vmem:[%s10 + $0x150] sm:$0xf]
    %v7502 = vld [vmem:[%s10 + $0x154] sm:$0xf]
    %v7503 = vld [vmem:[%s10 + $0x158] sm:$0xf]
    %v7504 = vld [vmem:[%s10 + $0x15c] sm:$0xf]
    %v7505 = vld [vmem:[%s10 + $0x160] sm:$0xf]
    %v7506 = vld [vmem:[%s10 + $0x164] sm:$0xf]
    %v7507 = vld [vmem:[%s10 + $0x168] sm:$0xf]
    %v7508 = vld [vmem:[%s10 + $0x16c] sm:$0xf]
    %v7509 = vld [vmem:[%s10 + $0x170] sm:$0xf]
    %v7510 = vld [vmem:[%s10 + $0x174] sm:$0xf]
    %v7511 = vld [vmem:[%s10 + $0x178] sm:$0xf]
    %v7512 = vld [vmem:[%s10 + $0x17c] sm:$0xf]
    %v7513 = vld [vmem:[%s10 + $0x180] sm:$0xf]
    %v7514 = vld [vmem:[%s10 + $0x184] sm:$0xf]
    %v7515 = vld [vmem:[%s10 + $0x188] sm:$0xf]
    %v7516 = vld [vmem:[%s10 + $0x18c] sm:$0xf]
    %v7518 = vrot.slane %v7410, 2
    %v7523 = vunpack.c.l.b16 %v7421
    %v7524 = vunpack.c.l.b16 %v7422
    %v7525 = vunpack.c.l.b16 %v7423
    %v7526 = vunpack.c.l.b16 %v7424
    %v7527 = vpack.c.b16 %v7524, %v7523
    %v7528 = vpack.c.b16 %v7526, %v7525
    %vm7531 = vcmask 261120
    %v7533 = vsel %vm7531, %v7518, 0
    %7535 = vmatprep.subr.bf16.mxu0 0
    %7536 = vmatpush1.bf16.msra.mxu0 %v7527
    %7537 = vmatprep.subr.bf16.mxu0 0
    %7538 = vmatpush1.bf16.msra.mxu0 %v7528
    %7539 = vmatprep.subr.bf16.mxu0 0
    %7540 = vmatpush1.bf16.msra.mxu0 0
    %7541 = vmatprep.subr.bf16.mxu0 0
    %7542 = vmatpush1.bf16.msra.mxu0 0
    %7543 = vmatprep.subr.bf16.mxu0 0
    %7544 = vmatpush1.bf16.msra.mxu0 0
    %7545 = vmatprep.subr.bf16.mxu0 0
    %7546 = vmatpush1.bf16.msra.mxu0 0
    %7547 = vmatprep.subr.bf16.mxu0 0
    %7548 = vmatpush1.bf16.msra.mxu0 0
    %7549 = vmatprep.subr.bf16.mxu0 0
    %7550 = vmatpush1.bf16.msra.mxu0 0
    %7551 = vmatprep.subr.bf16.mxu0 0
    %7552 = vmatpush1.bf16.msra.mxu0 0
    %7553 = vmatprep.subr.bf16.mxu0 0
    %7554 = vmatpush1.bf16.msra.mxu0 0
    %7555 = vmatprep.subr.bf16.mxu0 0
    %7556 = vmatpush1.bf16.msra.mxu0 0
    %7557 = vmatprep.subr.bf16.mxu0 0
    %7558 = vmatpush1.bf16.msra.mxu0 0
    %7559 = vmatprep.subr.bf16.mxu0 0
    %7560 = vmatpush1.bf16.msra.mxu0 0
    %7561 = vmatprep.subr.bf16.mxu0 0
    %7562 = vmatpush1.bf16.msra.mxu0 0
    %7563 = vmatprep.subr.bf16.mxu0 0
    %7564 = vmatpush1.bf16.msra.mxu0 0
    %7565 = vmatprep.subr.bf16.mxu0 0
    %7566 = vmatpush1.bf16.msra.mxu0 0
    %7567 = vmatprep.mubr.bf16.mxu0 0
    %7568 = vmatmul.mubr.bf16.gmra.mrb[0].mxu0 %v7533
    %v7569 = vpop.f32.mrb[0].mxu0
    %v7570 = vadd.f32 0.0, %v7569
    %v7571 = vpop.f32.mrb[0].mxu0
    %v7572 = vpop.f32.mrb[0].mxu0
    %v7573 = vpop.f32.mrb[0].mxu0
    %7574 = vdwg.mxu0
    %v7575 = vrot.slane %v7410, 6
    %v7580 = vunpack.c.l.b16 %v7429
    %v7581 = vunpack.c.l.b16 %v7430
    %v7582 = vunpack.c.l.b16 %v7431
    %v7583 = vunpack.c.l.b16 %v7432
    %v7584 = vpack.c.b16 %v7581, %v7580
    %v7585 = vpack.c.b16 %v7583, %v7582
    %v7589 = vsel %vm7531, %v7575, 0
    %7591 = vmatprep.subr.bf16.mxu0 0
    %7592 = vmatpush1.bf16.msra.mxu0 %v7584
    %7593 = vmatprep.subr.bf16.mxu0 0
    %7594 = vmatpush1.bf16.msra.mxu0 %v7585
    %7595 = vmatprep.subr.bf16.mxu0 0
    %7596 = vmatpush1.bf16.msra.mxu0 0
    %7597 = vmatprep.subr.bf16.mxu0 0
    %7598 = vmatpush1.bf16.msra.mxu0 0
    %7599 = vmatprep.subr.bf16.mxu0 0
    %7600 = vmatpush1.bf16.msra.mxu0 0
    %7601 = vmatprep.subr.bf16.mxu0 0
    %7602 = vmatpush1.bf16.msra.mxu0 0
    %7603 = vmatprep.subr.bf16.mxu0 0
    %7604 = vmatpush1.bf16.msra.mxu0 0
    %7605 = vmatprep.subr.bf16.mxu0 0
    %7606 = vmatpush1.bf16.msra.mxu0 0
    %7607 = vmatprep.subr.bf16.mxu0 0
    %7608 = vmatpush1.bf16.msra.mxu0 0
    %7609 = vmatprep.subr.bf16.mxu0 0
    %7610 = vmatpush1.bf16.msra.mxu0 0
    %7611 = vmatprep.subr.bf16.mxu0 0
    %7612 = vmatpush1.bf16.msra.mxu0 0
    %7613 = vmatprep.subr.bf16.mxu0 0
    %7614 = vmatpush1.bf16.msra.mxu0 0
    %7615 = vmatprep.subr.bf16.mxu0 0
    %7616 = vmatpush1.bf16.msra.mxu0 0
    %7617 = vmatprep.subr.bf16.mxu0 0
    %7618 = vmatpush1.bf16.msra.mxu0 0
    %7619 = vmatprep.subr.bf16.mxu0 0
    %7620 = vmatpush1.bf16.msra.mxu0 0
    %7621 = vmatprep.subr.bf16.mxu0 0
    %7622 = vmatpush1.bf16.msra.mxu0 0
    %7623 = vmatprep.mubr.bf16.mxu0 0
    %7624 = vmatmul.mubr.bf16.gmra.mrb[0].mxu0 %v7589
    %v7625 = vpop.f32.mrb[0].mxu0
    %v7626 = vadd.f32 0.0, %v7625
    %v7627 = vpop.f32.mrb[0].mxu0
    %v7628 = vpop.f32.mrb[0].mxu0
    %v7629 = vpop.f32.mrb[0].mxu0
    %7630 = vdwg.mxu0
    %v7632 = vrot.slane %v7411, 2
    %v7637 = vunpack.c.l.b16 %v7437
    %v7638 = vunpack.c.l.b16 %v7438
    %v7639 = vunpack.c.l.b16 %v7439
    %v7640 = vunpack.c.l.b16 %v7440
    %v7641 = vpack.c.b16 %v7638, %v7637
    %v7642 = vpack.c.b16 %v7640, %v7639
    %v7646 = vsel %vm7531, %v7632, 0
    %7648 = vmatprep.subr.bf16.mxu0 0
    %7649 = vmatpush1.bf16.msra.mxu0 %v7641
    %7650 = vmatprep.subr.bf16.mxu0 0
    %7651 = vmatpush1.bf16.msra.mxu0 %v7642
    %7652 = vmatprep.subr.bf16.mxu0 0
    %7653 = vmatpush1.bf16.msra.mxu0 0
    %7654 = vmatprep.subr.bf16.mxu0 0
    %7655 = vmatpush1.bf16.msra.mxu0 0
    %7656 = vmatprep.subr.bf16.mxu0 0
    %7657 = vmatpush1.bf16.msra.mxu0 0
    %7658 = vmatprep.subr.bf16.mxu0 0
    %7659 = vmatpush1.bf16.msra.mxu0 0
    %7660 = vmatprep.subr.bf16.mxu0 0
    %7661 = vmatpush1.bf16.msra.mxu0 0
    %7662 = vmatprep.subr.bf16.mxu0 0
    %7663 = vmatpush1.bf16.msra.mxu0 0
    %7664 = vmatprep.subr.bf16.mxu0 0
    %7665 = vmatpush1.bf16.msra.mxu0 0
    %7666 = vmatprep.subr.bf16.mxu0 0
    %7667 = vmatpush1.bf16.msra.mxu0 0
    %7668 = vmatprep.subr.bf16.mxu0 0
    %7669 = vmatpush1.bf16.msra.mxu0 0
    %7670 = vmatprep.subr.bf16.mxu0 0
    %7671 = vmatpush1.bf16.msra.mxu0 0
    %7672 = vmatprep.subr.bf16.mxu0 0
    %7673 = vmatpush1.bf16.msra.mxu0 0
    %7674 = vmatprep.subr.bf16.mxu0 0
    %7675 = vmatpush1.bf16.msra.mxu0 0
    %7676 = vmatprep.subr.bf16.mxu0 0
    %7677 = vmatpush1.bf16.msra.mxu0 0
    %7678 = vmatprep.subr.bf16.mxu0 0
    %7679 = vmatpush1.bf16.msra.mxu0 0
    %7680 = vmatprep.mubr.bf16.mxu0 0
    %7681 = vmatmul.mubr.bf16.gmra.mrb[0].mxu0 %v7646
    %v7682 = vpop.f32.mrb[0].mxu0
    %v7683 = vadd.f32 0.0, %v7682
    %v7684 = vpop.f32.mrb[0].mxu0
    %v7685 = vpop.f32.mrb[0].mxu0
    %v7686 = vpop.f32.mrb[0].mxu0
    %7687 = vdwg.mxu0
    %v7688 = vrot.slane %v7411, 6
    %v7693 = vunpack.c.l.b16 %v7445
    %v7694 = vunpack.c.l.b16 %v7446
    %v7695 = vunpack.c.l.b16 %v7447
    %v7696 = vunpack.c.l.b16 %v7448
    %v7697 = vpack.c.b16 %v7694, %v7693
    %v7698 = vpack.c.b16 %v7696, %v7695
    %v7702 = vsel %vm7531, %v7688, 0
    %7704 = vmatprep.subr.bf16.mxu0 0
    %7705 = vmatpush1.bf16.msra.mxu0 %v7697
    %7706 = vmatprep.subr.bf16.mxu0 0
    %7707 = vmatpush1.bf16.msra.mxu0 %v7698
    %7708 = vmatprep.subr.bf16.mxu0 0
    %7709 = vmatpush1.bf16.msra.mxu0 0
    %7710 = vmatprep.subr.bf16.mxu0 0
    %7711 = vmatpush1.bf16.msra.mxu0 0
    %7712 = vmatprep.subr.bf16.mxu0 0
    %7713 = vmatpush1.bf16.msra.mxu0 0
    %7714 = vmatprep.subr.bf16.mxu0 0
    %7715 = vmatpush1.bf16.msra.mxu0 0
    %7716 = vmatprep.subr.bf16.mxu0 0
    %7717 = vmatpush1.bf16.msra.mxu0 0
    %7718 = vmatprep.subr.bf16.mxu0 0
    %7719 = vmatpush1.bf16.msra.mxu0 0
    %7720 = vmatprep.subr.bf16.mxu0 0
    %7721 = vmatpush1.bf16.msra.mxu0 0
    %7722 = vmatprep.subr.bf16.mxu0 0
    %7723 = vmatpush1.bf16.msra.mxu0 0
    %7724 = vmatprep.subr.bf16.mxu0 0
    %7725 = vmatpush1.bf16.msra.mxu0 0
    %7726 = vmatprep.subr.bf16.mxu0 0
    %7727 = vmatpush1.bf16.msra.mxu0 0
    %7728 = vmatprep.subr.bf16.mxu0 0
    %7729 = vmatpush1.bf16.msra.mxu0 0
    %7730 = vmatprep.subr.bf16.mxu0 0
    %7731 = vmatpush1.bf16.msra.mxu0 0
    %7732 = vmatprep.subr.bf16.mxu0 0
    %7733 = vmatpush1.bf16.msra.mxu0 0
    %7734 = vmatprep.subr.bf16.mxu0 0
    %7735 = vmatpush1.bf16.msra.mxu0 0
    %7736 = vmatprep.mubr.bf16.mxu0 0
    %7737 = vmatmul.mubr.bf16.gmra.mrb[0].mxu0 %v7702
    %v7738 = vpop.f32.mrb[0].mxu0
    %v7739 = vadd.f32 0.0, %v7738
    %v7740 = vpop.f32.mrb[0].mxu0
    %v7741 = vpop.f32.mrb[0].mxu0
    %v7742 = vpop.f32.mrb[0].mxu0
    %7743 = vdwg.mxu0
    %v7745 = vrot.slane %v7412, 2
    %v7750 = vunpack.c.l.b16 %v7453
    %v7751 = vunpack.c.l.b16 %v7454
    %v7752 = vunpack.c.l.b16 %v7455
    %v7753 = vunpack.c.l.b16 %v7456
    %v7754 = vpack.c.b16 %v7751, %v7750
    %v7755 = vpack.c.b16 %v7753, %v7752
    %v7759 = vsel %vm7531, %v7745, 0
    %7761 = vmatprep.subr.bf16.mxu0 0
    %7762 = vmatpush1.bf16.msra.mxu0 %v7754
    %7763 = vmatprep.subr.bf16.mxu0 0
    %7764 = vmatpush1.bf16.msra.mxu0 %v7755
    %7765 = vmatprep.subr.bf16.mxu0 0
    %7766 = vmatpush1.bf16.msra.mxu0 0
    %7767 = vmatprep.subr.bf16.mxu0 0
    %7768 = vmatpush1.bf16.msra.mxu0 0
    %7769 = vmatprep.subr.bf16.mxu0 0
    %7770 = vmatpush1.bf16.msra.mxu0 0
    %7771 = vmatprep.subr.bf16.mxu0 0
    %7772 = vmatpush1.bf16.msra.mxu0 0
    %7773 = vmatprep.subr.bf16.mxu0 0
    %7774 = vmatpush1.bf16.msra.mxu0 0
    %7775 = vmatprep.subr.bf16.mxu0 0
    %7776 = vmatpush1.bf16.msra.mxu0 0
    %7777 = vmatprep.subr.bf16.mxu0 0
    %7778 = vmatpush1.bf16.msra.mxu0 0
    %7779 = vmatprep.subr.bf16.mxu0 0
    %7780 = vmatpush1.bf16.msra.mxu0 0
    %7781 = vmatprep.subr.bf16.mxu0 0
    %7782 = vmatpush1.bf16.msra.mxu0 0
    %7783 = vmatprep.subr.bf16.mxu0 0
    %7784 = vmatpush1.bf16.msra.mxu0 0
    %7785 = vmatprep.subr.bf16.mxu0 0
    %7786 = vmatpush1.bf16.msra.mxu0 0
    %7787 = vmatprep.subr.bf16.mxu0 0
    %7788 = vmatpush1.bf16.msra.mxu0 0
    %7789 = vmatprep.subr.bf16.mxu0 0
    %7790 = vmatpush1.bf16.msra.mxu0 0
    %7791 = vmatprep.subr.bf16.mxu0 0
    %7792 = vmatpush1.bf16.msra.mxu0 0
    %7793 = vmatprep.mubr.bf16.mxu0 0
    %7794 = vmatmul.mubr.bf16.gmra.mrb[0].mxu0 %v7759
    %v7795 = vpop.f32.mrb[0].mxu0
    %v7796 = vadd.f32 0.0, %v7795
    %v7797 = vpop.f32.mrb[0].mxu0
    %v7798 = vpop.f32.mrb[0].mxu0
    %v7799 = vpop.f32.mrb[0].mxu0
    %7800 = vdwg.mxu0
    %v7801 = vrot.slane %v7412, 6
    %v7806 = vunpack.c.l.b16 %v7461
    %v7807 = vunpack.c.l.b16 %v7462
    %v7808 = vunpack.c.l.b16 %v7463
    %v7809 = vunpack.c.l.b16 %v7464
    %v7810 = vpack.c.b16 %v7807, %v7806
    %v7811 = vpack.c.b16 %v7809, %v7808
    %v7815 = vsel %vm7531, %v7801, 0
    %7817 = vmatprep.subr.bf16.mxu0 0
    %7818 = vmatpush1.bf16.msra.mxu0 %v7810
    %7819 = vmatprep.subr.bf16.mxu0 0
    %7820 = vmatpush1.bf16.msra.mxu0 %v7811
    %7821 = vmatprep.subr.bf16.mxu0 0
    %7822 = vmatpush1.bf16.msra.mxu0 0
    %7823 = vmatprep.subr.bf16.mxu0 0
    %7824 = vmatpush1.bf16.msra.mxu0 0
    %7825 = vmatprep.subr.bf16.mxu0 0
    %7826 = vmatpush1.bf16.msra.mxu0 0
    %7827 = vmatprep.subr.bf16.mxu0 0
    %7828 = vmatpush1.bf16.msra.mxu0 0
    %7829 = vmatprep.subr.bf16.mxu0 0
    %7830 = vmatpush1.bf16.msra.mxu0 0
    %7831 = vmatprep.subr.bf16.mxu0 0
    %7832 = vmatpush1.bf16.msra.mxu0 0
    %7833 = vmatprep.subr.bf16.mxu0 0
    %7834 = vmatpush1.bf16.msra.mxu0 0
    %7835 = vmatprep.subr.bf16.mxu0 0
    %7836 = vmatpush1.bf16.msra.mxu0 0
    %7837 = vmatprep.subr.bf16.mxu0 0
    %7838 = vmatpush1.bf16.msra.mxu0 0
    %7839 = vmatprep.subr.bf16.mxu0 0
    %7840 = vmatpush1.bf16.msra.mxu0 0
    %7841 = vmatprep.subr.bf16.mxu0 0
    %7842 = vmatpush1.bf16.msra.mxu0 0
    %7843 = vmatprep.subr.bf16.mxu0 0
    %7844 = vmatpush1.bf16.msra.mxu0 0
    %7845 = vmatprep.subr.bf16.mxu0 0
    %7846 = vmatpush1.bf16.msra.mxu0 0
    %7847 = vmatprep.subr.bf16.mxu0 0
    %7848 = vmatpush1.bf16.msra.mxu0 0
    %7849 = vmatprep.mubr.bf16.mxu0 0
    %7850 = vmatmul.mubr.bf16.gmra.mrb[0].mxu0 %v7815
    %v7851 = vpop.f32.mrb[0].mxu0
    %v7852 = vadd.f32 0.0, %v7851
    %v7853 = vpop.f32.mrb[0].mxu0
    %v7854 = vpop.f32.mrb[0].mxu0
    %v7855 = vpop.f32.mrb[0].mxu0
    %7856 = vdwg.mxu0
    %v7858 = vrot.slane %v7413, 2
    %v7863 = vunpack.c.l.b16 %v7469
    %v7864 = vunpack.c.l.b16 %v7470
    %v7865 = vunpack.c.l.b16 %v7471
    %v7866 = vunpack.c.l.b16 %v7472
    %v7867 = vpack.c.b16 %v7864, %v7863
    %v7868 = vpack.c.b16 %v7866, %v7865
    %v7872 = vsel %vm7531, %v7858, 0
    %7874 = vmatprep.subr.bf16.mxu0 0
    %7875 = vmatpush1.bf16.msra.mxu0 %v7867
    %7876 = vmatprep.subr.bf16.mxu0 0
    %7877 = vmatpush1.bf16.msra.mxu0 %v7868
    %7878 = vmatprep.subr.bf16.mxu0 0
    %7879 = vmatpush1.bf16.msra.mxu0 0
    %7880 = vmatprep.subr.bf16.mxu0 0
    %7881 = vmatpush1.bf16.msra.mxu0 0
    %7882 = vmatprep.subr.bf16.mxu0 0
    %7883 = vmatpush1.bf16.msra.mxu0 0
    %7884 = vmatprep.subr.bf16.mxu0 0
    %7885 = vmatpush1.bf16.msra.mxu0 0
    %7886 = vmatprep.subr.bf16.mxu0 0
    %7887 = vmatpush1.bf16.msra.mxu0 0
    %7888 = vmatprep.subr.bf16.mxu0 0
    %7889 = vmatpush1.bf16.msra.mxu0 0
    %7890 = vmatprep.subr.bf16.mxu0 0
    %7891 = vmatpush1.bf16.msra.mxu0 0
    %7892 = vmatprep.subr.bf16.mxu0 0
    %7893 = vmatpush1.bf16.msra.mxu0 0
    %7894 = vmatprep.subr.bf16.mxu0 0
    %7895 = vmatpush1.bf16.msra.mxu0 0
    %7896 = vmatprep.subr.bf16.mxu0 0
    %7897 = vmatpush1.bf16.msra.mxu0 0
    %7898 = vmatprep.subr.bf16.mxu0 0
    %7899 = vmatpush1.bf16.msra.mxu0 0
    %7900 = vmatprep.subr.bf16.mxu0 0
    %7901 = vmatpush1.bf16.msra.mxu0 0
    %7902 = vmatprep.subr.bf16.mxu0 0
    %7903 = vmatpush1.bf16.msra.mxu0 0
    %7904 = vmatprep.subr.bf16.mxu0 0
    %7905 = vmatpush1.bf16.msra.mxu0 0
    %7906 = vmatprep.mubr.bf16.mxu0 0
    %7907 = vmatmul.mubr.bf16.gmra.mrb[0].mxu0 %v7872
    %v7908 = vpop.f32.mrb[0].mxu0
    %v7909 = vadd.f32 0.0, %v7908
    %v7910 = vpop.f32.mrb[0].mxu0
    %v7911 = vpop.f32.mrb[0].mxu0
    %v7912 = vpop.f32.mrb[0].mxu0
    %7913 = vdwg.mxu0
    %v7914 = vrot.slane %v7413, 6
    %v7919 = vunpack.c.l.b16 %v7477
    %v7920 = vunpack.c.l.b16 %v7478
    %v7921 = vunpack.c.l.b16 %v7479
    %v7922 = vunpack.c.l.b16 %v7480
    %v7923 = vpack.c.b16 %v7920, %v7919
    %v7924 = vpack.c.b16 %v7922, %v7921
    %v7928 = vsel %vm7531, %v7914, 0
    %7930 = vmatprep.subr.bf16.mxu0 0
    %7931 = vmatpush1.bf16.msra.mxu0 %v7923
    %7932 = vmatprep.subr.bf16.mxu0 0
    %7933 = vmatpush1.bf16.msra.mxu0 %v7924
    %7934 = vmatprep.subr.bf16.mxu0 0
    %7935 = vmatpush1.bf16.msra.mxu0 0
    %7936 = vmatprep.subr.bf16.mxu0 0
    %7937 = vmatpush1.bf16.msra.mxu0 0
    %7938 = vmatprep.subr.bf16.mxu0 0
    %7939 = vmatpush1.bf16.msra.mxu0 0
    %7940 = vmatprep.subr.bf16.mxu0 0
    %7941 = vmatpush1.bf16.msra.mxu0 0
    %7942 = vmatprep.subr.bf16.mxu0 0
    %7943 = vmatpush1.bf16.msra.mxu0 0
    %7944 = vmatprep.subr.bf16.mxu0 0
    %7945 = vmatpush1.bf16.msra.mxu0 0
    %7946 = vmatprep.subr.bf16.mxu0 0
    %7947 = vmatpush1.bf16.msra.mxu0 0
    %7948 = vmatprep.subr.bf16.mxu0 0
    %7949 = vmatpush1.bf16.msra.mxu0 0
    %7950 = vmatprep.subr.bf16.mxu0 0
    %7951 = vmatpush1.bf16.msra.mxu0 0
    %7952 = vmatprep.subr.bf16.mxu0 0
    %7953 = vmatpush1.bf16.msra.mxu0 0
    %7954 = vmatprep.subr.bf16.mxu0 0
    %7955 = vmatpush1.bf16.msra.mxu0 0
    %7956 = vmatprep.subr.bf16.mxu0 0
    %7957 = vmatpush1.bf16.msra.mxu0 0
    %7958 = vmatprep.subr.bf16.mxu0 0
    %7959 = vmatpush1.bf16.msra.mxu0 0
    %7960 = vmatprep.subr.bf16.mxu0 0
    %7961 = vmatpush1.bf16.msra.mxu0 0
    %7962 = vmatprep.mubr.bf16.mxu0 0
    %7963 = vmatmul.mubr.bf16.gmra.mrb[0].mxu0 %v7928
    %v7964 = vpop.f32.mrb[0].mxu0
    %v7965 = vadd.f32 0.0, %v7964
    %v7966 = vpop.f32.mrb[0].mxu0
    %v7967 = vpop.f32.mrb[0].mxu0
    %v7968 = vpop.f32.mrb[0].mxu0
    %7969 = vdwg.mxu0
    %v7971 = vrot.slane %v7414, 2
    %v7976 = vunpack.c.l.b16 %v7485
    %v7977 = vunpack.c.l.b16 %v7486
    %v7978 = vunpack.c.l.b16 %v7487
    %v7979 = vunpack.c.l.b16 %v7488
    %v7980 = vpack.c.b16 %v7977, %v7976
    %v7981 = vpack.c.b16 %v7979, %v7978
    %v7985 = vsel %vm7531, %v7971, 0
    %7987 = vmatprep.subr.bf16.mxu0 0
    %7988 = vmatpush1.bf16.msra.mxu0 %v7980
    %7989 = vmatprep.subr.bf16.mxu0 0
    %7990 = vmatpush1.bf16.msra.mxu0 %v7981
    %7991 = vmatprep.subr.bf16.mxu0 0
    %7992 = vmatpush1.bf16.msra.mxu0 0
    %7993 = vmatprep.subr.bf16.mxu0 0
    %7994 = vmatpush1.bf16.msra.mxu0 0
    %7995 = vmatprep.subr.bf16.mxu0 0
    %7996 = vmatpush1.bf16.msra.mxu0 0
    %7997 = vmatprep.subr.bf16.mxu0 0
    %7998 = vmatpush1.bf16.msra.mxu0 0
    %7999 = vmatprep.subr.bf16.mxu0 0
    %8000 = vmatpush1.bf16.msra.mxu0 0
    %8001 = vmatprep.subr.bf16.mxu0 0
    %8002 = vmatpush1.bf16.msra.mxu0 0
    %8003 = vmatprep.subr.bf16.mxu0 0
    %8004 = vmatpush1.bf16.msra.mxu0 0
    %8005 = vmatprep.subr.bf16.mxu0 0
    %8006 = vmatpush1.bf16.msra.mxu0 0
    %8007 = vmatprep.subr.bf16.mxu0 0
    %8008 = vmatpush1.bf16.msra.mxu0 0
    %8009 = vmatprep.subr.bf16.mxu0 0
    %8010 = vmatpush1.bf16.msra.mxu0 0
    %8011 = vmatprep.subr.bf16.mxu0 0
    %8012 = vmatpush1.bf16.msra.mxu0 0
    %8013 = vmatprep.subr.bf16.mxu0 0
    %8014 = vmatpush1.bf16.msra.mxu0 0
    %8015 = vmatprep.subr.bf16.mxu0 0
    %8016 = vmatpush1.bf16.msra.mxu0 0
    %8017 = vmatprep.subr.bf16.mxu0 0
    %8018 = vmatpush1.bf16.msra.mxu0 0
    %8019 = vmatprep.mubr.bf16.mxu0 0
    %8020 = vmatmul.mubr.bf16.gmra.mrb[0].mxu0 %v7985
    %v8021 = vpop.f32.mrb[0].mxu0
    %v8022 = vadd.f32 0.0, %v8021
    %v8023 = vpop.f32.mrb[0].mxu0
    %v8024 = vpop.f32.mrb[0].mxu0
    %v8025 = vpop.f32.mrb[0].mxu0
    %8026 = vdwg.mxu0
    %v8027 = vrot.slane %v7414, 6
    %v8032 = vunpack.c.l.b16 %v7493
    %v8033 = vunpack.c.l.b16 %v7494
    %v8034 = vunpack.c.l.b16 %v7495
    %v8035 = vunpack.c.l.b16 %v7496
    %v8036 = vpack.c.b16 %v8033, %v8032
    %v8037 = vpack.c.b16 %v8035, %v8034
    %v8041 = vsel %vm7531, %v8027, 0
    %8043 = vmatprep.subr.bf16.mxu0 0
    %8044 = vmatpush1.bf16.msra.mxu0 %v8036
    %8045 = vmatprep.subr.bf16.mxu0 0
    %8046 = vmatpush1.bf16.msra.mxu0 %v8037
    %8047 = vmatprep.subr.bf16.mxu0 0
    %8048 = vmatpush1.bf16.msra.mxu0 0
    %8049 = vmatprep.subr.bf16.mxu0 0
    %8050 = vmatpush1.bf16.msra.mxu0 0
    %8051 = vmatprep.subr.bf16.mxu0 0
    %8052 = vmatpush1.bf16.msra.mxu0 0
    %8053 = vmatprep.subr.bf16.mxu0 0
    %8054 = vmatpush1.bf16.msra.mxu0 0
    %8055 = vmatprep.subr.bf16.mxu0 0
    %8056 = vmatpush1.bf16.msra.mxu0 0
    %8057 = vmatprep.subr.bf16.mxu0 0
    %8058 = vmatpush1.bf16.msra.mxu0 0
    %8059 = vmatprep.subr.bf16.mxu0 0
    %8060 = vmatpush1.bf16.msra.mxu0 0
    %8061 = vmatprep.subr.bf16.mxu0 0
    %8062 = vmatpush1.bf16.msra.mxu0 0
    %8063 = vmatprep.subr.bf16.mxu0 0
    %8064 = vmatpush1.bf16.msra.mxu0 0
    %8065 = vmatprep.subr.bf16.mxu0 0
    %8066 = vmatpush1.bf16.msra.mxu0 0
    %8067 = vmatprep.subr.bf16.mxu0 0
    %8068 = vmatpush1.bf16.msra.mxu0 0
    %8069 = vmatprep.subr.bf16.mxu0 0
    %8070 = vmatpush1.bf16.msra.mxu0 0
    %8071 = vmatprep.subr.bf16.mxu0 0
    %8072 = vmatpush1.bf16.msra.mxu0 0
    %8073 = vmatprep.subr.bf16.mxu0 0
    %8074 = vmatpush1.bf16.msra.mxu0 0
    %8075 = vmatprep.mubr.bf16.mxu0 0
    %8076 = vmatmul.mubr.bf16.gmra.mrb[0].mxu0 %v8041
    %v8077 = vpop.f32.mrb[0].mxu0
    %v8078 = vadd.f32 0.0, %v8077
    %v8079 = vpop.f32.mrb[0].mxu0
    %v8080 = vpop.f32.mrb[0].mxu0
    %v8081 = vpop.f32.mrb[0].mxu0
    %8082 = vdwg.mxu0
    %v8084 = vrot.slane %v7415, 2
    %v8089 = vunpack.c.l.b16 %v7501
    %v8090 = vunpack.c.l.b16 %v7502
    %v8091 = vunpack.c.l.b16 %v7503
    %v8092 = vunpack.c.l.b16 %v7504
    %v8093 = vpack.c.b16 %v8090, %v8089
    %v8094 = vpack.c.b16 %v8092, %v8091
    %v8098 = vsel %vm7531, %v8084, 0
    %8100 = vmatprep.subr.bf16.mxu0 0
    %8101 = vmatpush1.bf16.msra.mxu0 %v8093
    %8102 = vmatprep.subr.bf16.mxu0 0
    %8103 = vmatpush1.bf16.msra.mxu0 %v8094
    %8104 = vmatprep.subr.bf16.mxu0 0
    %8105 = vmatpush1.bf16.msra.mxu0 0
    %8106 = vmatprep.subr.bf16.mxu0 0
    %8107 = vmatpush1.bf16.msra.mxu0 0
    %8108 = vmatprep.subr.bf16.mxu0 0
    %8109 = vmatpush1.bf16.msra.mxu0 0
    %8110 = vmatprep.subr.bf16.mxu0 0
    %8111 = vmatpush1.bf16.msra.mxu0 0
    %8112 = vmatprep.subr.bf16.mxu0 0
    %8113 = vmatpush1.bf16.msra.mxu0 0
    %8114 = vmatprep.subr.bf16.mxu0 0
    %8115 = vmatpush1.bf16.msra.mxu0 0
    %8116 = vmatprep.subr.bf16.mxu0 0
    %8117 = vmatpush1.bf16.msra.mxu0 0
    %8118 = vmatprep.subr.bf16.mxu0 0
    %8119 = vmatpush1.bf16.msra.mxu0 0
    %8120 = vmatprep.subr.bf16.mxu0 0
    %8121 = vmatpush1.bf16.msra.mxu0 0
    %8122 = vmatprep.subr.bf16.mxu0 0
    %8123 = vmatpush1.bf16.msra.mxu0 0
    %8124 = vmatprep.subr.bf16.mxu0 0
    %8125 = vmatpush1.bf16.msra.mxu0 0
    %8126 = vmatprep.subr.bf16.mxu0 0
    %8127 = vmatpush1.bf16.msra.mxu0 0
    %8128 = vmatprep.subr.bf16.mxu0 0
    %8129 = vmatpush1.bf16.msra.mxu0 0
    %8130 = vmatprep.subr.bf16.mxu0 0
    %8131 = vmatpush1.bf16.msra.mxu0 0
    %8132 = vmatprep.mubr.bf16.mxu0 0
    %8133 = vmatmul.mubr.bf16.gmra.mrb[0].mxu0 %v8098
    %v8134 = vpop.f32.mrb[0].mxu0
    %v8135 = vadd.f32 0.0, %v8134
    %v8136 = vpop.f32.mrb[0].mxu0
    %v8137 = vpop.f32.mrb[0].mxu0
    %v8138 = vpop.f32.mrb[0].mxu0
    %8139 = vdwg.mxu0
    %v8140 = vrot.slane %v7415, 6
    %v8145 = vunpack.c.l.b16 %v7509
    %v8146 = vunpack.c.l.b16 %v7510
    %v8147 = vunpack.c.l.b16 %v7511
    %v8148 = vunpack.c.l.b16 %v7512
    %v8149 = vpack.c.b16 %v8146, %v8145
    %v8150 = vpack.c.b16 %v8148, %v8147
    %v8154 = vsel %vm7531, %v8140, 0
    %8156 = vmatprep.subr.bf16.mxu0 0
    %8157 = vmatpush1.bf16.msra.mxu0 %v8149
    %8158 = vmatprep.subr.bf16.mxu0 0
    %8159 = vmatpush1.bf16.msra.mxu0 %v8150
    %8160 = vmatprep.subr.bf16.mxu0 0
    %8161 = vmatpush1.bf16.msra.mxu0 0
    %8162 = vmatprep.subr.bf16.mxu0 0
    %8163 = vmatpush1.bf16.msra.mxu0 0
    %8164 = vmatprep.subr.bf16.mxu0 0
    %8165 = vmatpush1.bf16.msra.mxu0 0
    %8166 = vmatprep.subr.bf16.mxu0 0
    %8167 = vmatpush1.bf16.msra.mxu0 0
    %8168 = vmatprep.subr.bf16.mxu0 0
    %8169 = vmatpush1.bf16.msra.mxu0 0
    %8170 = vmatprep.subr.bf16.mxu0 0
    %8171 = vmatpush1.bf16.msra.mxu0 0
    %8172 = vmatprep.subr.bf16.mxu0 0
    %8173 = vmatpush1.bf16.msra.mxu0 0
    %8174 = vmatprep.subr.bf16.mxu0 0
    %8175 = vmatpush1.bf16.msra.mxu0 0
    %8176 = vmatprep.subr.bf16.mxu0 0
    %8177 = vmatpush1.bf16.msra.mxu0 0
    %8178 = vmatprep.subr.bf16.mxu0 0
    %8179 = vmatpush1.bf16.msra.mxu0 0
    %8180 = vmatprep.subr.bf16.mxu0 0
    %8181 = vmatpush1.bf16.msra.mxu0 0
    %8182 = vmatprep.subr.bf16.mxu0 0
    %8183 = vmatpush1.bf16.msra.mxu0 0
    %8184 = vmatprep.subr.bf16.mxu0 0
    %8185 = vmatpush1.bf16.msra.mxu0 0
    %8186 = vmatprep.subr.bf16.mxu0 0
    %8187 = vmatpush1.bf16.msra.mxu0 0
    %8188 = vmatprep.mubr.bf16.mxu0 0
    %8189 = vmatmul.mubr.bf16.gmra.mrb[0].mxu0 %v8154
    %v8190 = vpop.f32.mrb[0].mxu0
    %v8191 = vadd.f32 0.0, %v8190
    %v8192 = vpop.f32.mrb[0].mxu0
    %v8193 = vpop.f32.mrb[0].mxu0
    %v8194 = vpop.f32.mrb[0].mxu0
    %8195 = vdwg.mxu0
    %v8200 = vunpack.c.l.b16 %v7513
    %v8201 = vunpack.c.l.b16 %v7514
    %v8202 = vunpack.c.l.b16 %v7515
    %v8203 = vunpack.c.l.b16 %v7516
    %v8204 = vpack.c.b16 %v8201, %v8200
    %v8205 = vpack.c.b16 %v8203, %v8202
    %v8209 = vsel %vm7531, %v7416, 0
    %8211 = vmatprep.subr.bf16.mxu0 0
    %8212 = vmatpush1.bf16.msra.mxu0 %v8204
    %8213 = vmatprep.subr.bf16.mxu0 0
    %8214 = vmatpush1.bf16.msra.mxu0 %v8205
    %8215 = vmatprep.subr.bf16.mxu0 0
    %8216 = vmatpush1.bf16.msra.mxu0 0
    %8217 = vmatprep.subr.bf16.mxu0 0
    %8218 = vmatpush1.bf16.msra.mxu0 0
    %8219 = vmatprep.subr.bf16.mxu0 0
    %8220 = vmatpush1.bf16.msra.mxu0 0
    %8221 = vmatprep.subr.bf16.mxu0 0
    %8222 = vmatpush1.bf16.msra.mxu0 0
    %8223 = vmatprep.subr.bf16.mxu0 0
    %8224 = vmatpush1.bf16.msra.mxu0 0
    %8225 = vmatprep.subr.bf16.mxu0 0
    %8226 = vmatpush1.bf16.msra.mxu0 0
    %8227 = vmatprep.subr.bf16.mxu0 0
    %8228 = vmatpush1.bf16.msra.mxu0 0
    %8229 = vmatprep.subr.bf16.mxu0 0
    %8230 = vmatpush1.bf16.msra.mxu0 0
    %8231 = vmatprep.subr.bf16.mxu0 0
    %8232 = vmatpush1.bf16.msra.mxu0 0
    %8233 = vmatprep.subr.bf16.mxu0 0
    %8234 = vmatpush1.bf16.msra.mxu0 0
    %8235 = vmatprep.subr.bf16.mxu0 0
    %8236 = vmatpush1.bf16.msra.mxu0 0
    %8237 = vmatprep.subr.bf16.mxu0 0
    %8238 = vmatpush1.bf16.msra.mxu0 0
    %8239 = vmatprep.subr.bf16.mxu0 0
    %8240 = vmatpush1.bf16.msra.mxu0 0
    %8241 = vmatprep.subr.bf16.mxu0 0
    %8242 = vmatpush1.bf16.msra.mxu0 0
    %8243 = vmatprep.mubr.bf16.mxu0 0
    %8244 = vmatmul.mubr.bf16.gmra.mrb[0].mxu0 %v8209
    %v8245 = vpop.f32.mrb[0].mxu0
    %v8246 = vadd.f32 0.0, %v8245
    %v8247 = vpop.f32.mrb[0].mxu0
    %v8248 = vpop.f32.mrb[0].mxu0
    %v8249 = vpop.f32.mrb[0].mxu0
    %8250 = vdwg.mxu0
    %v8255 = vunpack.c.l.b16 %v7417
    %v8256 = vunpack.c.l.b16 %v7418
    %v8257 = vunpack.c.l.b16 %v7419
    %v8258 = vunpack.c.l.b16 %v7420
    %v8259 = vpack.c.b16 %v8256, %v8255
    %v8260 = vpack.c.b16 %v8258, %v8257
    %v8264 = vsel %vm7531, %v7410, 0
    %8266 = vmatprep.subr.bf16.mxu0 0
    %8267 = vmatpush1.bf16.msra.mxu0 %v8259
    %8268 = vmatprep.subr.bf16.mxu0 0
    %8269 = vmatpush1.bf16.msra.mxu0 %v8260
    %8270 = vmatprep.subr.bf16.mxu0 0
    %8271 = vmatpush1.bf16.msra.mxu0 0
    %8272 = vmatprep.subr.bf16.mxu0 0
    %8273 = vmatpush1.bf16.msra.mxu0 0
    %8274 = vmatprep.subr.bf16.mxu0 0
    %8275 = vmatpush1.bf16.msra.mxu0 0
    %8276 = vmatprep.subr.bf16.mxu0 0
    %8277 = vmatpush1.bf16.msra.mxu0 0
    %8278 = vmatprep.subr.bf16.mxu0 0
    %8279 = vmatpush1.bf16.msra.mxu0 0
    %8280 = vmatprep.subr.bf16.mxu0 0
    %8281 = vmatpush1.bf16.msra.mxu0 0
    %8282 = vmatprep.subr.bf16.mxu0 0
    %8283 = vmatpush1.bf16.msra.mxu0 0
    %8284 = vmatprep.subr.bf16.mxu0 0
    %8285 = vmatpush1.bf16.msra.mxu0 0
    %8286 = vmatprep.subr.bf16.mxu0 0
    %8287 = vmatpush1.bf16.msra.mxu0 0
    %8288 = vmatprep.subr.bf16.mxu0 0
    %8289 = vmatpush1.bf16.msra.mxu0 0
    %8290 = vmatprep.subr.bf16.mxu0 0
    %8291 = vmatpush1.bf16.msra.mxu0 0
    %8292 = vmatprep.subr.bf16.mxu0 0
    %8293 = vmatpush1.bf16.msra.mxu0 0
    %8294 = vmatprep.subr.bf16.mxu0 0
    %8295 = vmatpush1.bf16.msra.mxu0 0
    %8296 = vmatprep.subr.bf16.mxu0 0
    %8297 = vmatpush1.bf16.msra.mxu0 0
    %8298 = vmatprep.mubr.bf16.mxu0 0
    %8299 = vmatmul.mubr.bf16.gmra.mrb[0].mxu0 %v8264
    %v8300 = vpop.f32.mrb[0].mxu0
    %v8301 = vadd.f32 %v7570, %v8300
    %v8302 = vpop.f32.mrb[0].mxu0
    %v8303 = vpop.f32.mrb[0].mxu0
    %v8304 = vpop.f32.mrb[0].mxu0
    %8305 = vdwg.mxu0
    %v8306 = vrot.slane %v7410, 4
    %v8311 = vunpack.c.l.b16 %v7425
    %v8312 = vunpack.c.l.b16 %v7426
    %v8313 = vunpack.c.l.b16 %v7427
    %v8314 = vunpack.c.l.b16 %v7428
    %v8315 = vpack.c.b16 %v8312, %v8311
    %v8316 = vpack.c.b16 %v8314, %v8313
    %v8320 = vsel %vm7531, %v8306, 0
    %8322 = vmatprep.subr.bf16.mxu0 0
    %8323 = vmatpush1.bf16.msra.mxu0 %v8315
    %8324 = vmatprep.subr.bf16.mxu0 0
    %8325 = vmatpush1.bf16.msra.mxu0 %v8316
    %8326 = vmatprep.subr.bf16.mxu0 0
    %8327 = vmatpush1.bf16.msra.mxu0 0
    %8328 = vmatprep.subr.bf16.mxu0 0
    %8329 = vmatpush1.bf16.msra.mxu0 0
    %8330 = vmatprep.subr.bf16.mxu0 0
    %8331 = vmatpush1.bf16.msra.mxu0 0
    %8332 = vmatprep.subr.bf16.mxu0 0
    %8333 = vmatpush1.bf16.msra.mxu0 0
    %8334 = vmatprep.subr.bf16.mxu0 0
    %8335 = vmatpush1.bf16.msra.mxu0 0
    %8336 = vmatprep.subr.bf16.mxu0 0
    %8337 = vmatpush1.bf16.msra.mxu0 0
    %8338 = vmatprep.subr.bf16.mxu0 0
    %8339 = vmatpush1.bf16.msra.mxu0 0
    %8340 = vmatprep.subr.bf16.mxu0 0
    %8341 = vmatpush1.bf16.msra.mxu0 0
    %8342 = vmatprep.subr.bf16.mxu0 0
    %8343 = vmatpush1.bf16.msra.mxu0 0
    %8344 = vmatprep.subr.bf16.mxu0 0
    %8345 = vmatpush1.bf16.msra.mxu0 0
    %8346 = vmatprep.subr.bf16.mxu0 0
    %8347 = vmatpush1.bf16.msra.mxu0 0
    %8348 = vmatprep.subr.bf16.mxu0 0
    %8349 = vmatpush1.bf16.msra.mxu0 0
    %8350 = vmatprep.subr.bf16.mxu0 0
    %8351 = vmatpush1.bf16.msra.mxu0 0
    %8352 = vmatprep.subr.bf16.mxu0 0
    %8353 = vmatpush1.bf16.msra.mxu0 0
    %8354 = vmatprep.mubr.bf16.mxu0 0
    %8355 = vmatmul.mubr.bf16.gmra.mrb[0].mxu0 %v8320
    %v8356 = vpop.f32.mrb[0].mxu0
    %v8357 = vadd.f32 %v7626, %v8356
    %v8358 = vpop.f32.mrb[0].mxu0
    %v8359 = vpop.f32.mrb[0].mxu0
    %v8360 = vpop.f32.mrb[0].mxu0
    %8361 = vdwg.mxu0
    %v8366 = vunpack.c.l.b16 %v7433
    %v8367 = vunpack.c.l.b16 %v7434
    %v8368 = vunpack.c.l.b16 %v7435
    %v8369 = vunpack.c.l.b16 %v7436
    %v8370 = vpack.c.b16 %v8367, %v8366
    %v8371 = vpack.c.b16 %v8369, %v8368
    %v8375 = vsel %vm7531, %v7411, 0
    %8377 = vmatprep.subr.bf16.mxu0 0
    %8378 = vmatpush1.bf16.msra.mxu0 %v8370
    %8379 = vmatprep.subr.bf16.mxu0 0
    %8380 = vmatpush1.bf16.msra.mxu0 %v8371
    %8381 = vmatprep.subr.bf16.mxu0 0
    %8382 = vmatpush1.bf16.msra.mxu0 0
    %8383 = vmatprep.subr.bf16.mxu0 0
    %8384 = vmatpush1.bf16.msra.mxu0 0
    %8385 = vmatprep.subr.bf16.mxu0 0
    %8386 = vmatpush1.bf16.msra.mxu0 0
    %8387 = vmatprep.subr.bf16.mxu0 0
    %8388 = vmatpush1.bf16.msra.mxu0 0
    %8389 = vmatprep.subr.bf16.mxu0 0
    %8390 = vmatpush1.bf16.msra.mxu0 0
    %8391 = vmatprep.subr.bf16.mxu0 0
    %8392 = vmatpush1.bf16.msra.mxu0 0
    %8393 = vmatprep.subr.bf16.mxu0 0
    %8394 = vmatpush1.bf16.msra.mxu0 0
    %8395 = vmatprep.subr.bf16.mxu0 0
    %8396 = vmatpush1.bf16.msra.mxu0 0
    %8397 = vmatprep.subr.bf16.mxu0 0
    %8398 = vmatpush1.bf16.msra.mxu0 0
    %8399 = vmatprep.subr.bf16.mxu0 0
    %8400 = vmatpush1.bf16.msra.mxu0 0
    %8401 = vmatprep.subr.bf16.mxu0 0
    %8402 = vmatpush1.bf16.msra.mxu0 0
    %8403 = vmatprep.subr.bf16.mxu0 0
    %8404 = vmatpush1.bf16.msra.mxu0 0
    %8405 = vmatprep.subr.bf16.mxu0 0
    %8406 = vmatpush1.bf16.msra.mxu0 0
    %8407 = vmatprep.subr.bf16.mxu0 0
    %8408 = vmatpush1.bf16.msra.mxu0 0
    %8409 = vmatprep.mubr.bf16.mxu0 0
    %8410 = vmatmul.mubr.bf16.gmra.mrb[0].mxu0 %v8375
    %v8411 = vpop.f32.mrb[0].mxu0
    %v8412 = vadd.f32 %v7683, %v8411
    %v8413 = vpop.f32.mrb[0].mxu0
    %v8414 = vpop.f32.mrb[0].mxu0
    %v8415 = vpop.f32.mrb[0].mxu0
    %8416 = vdwg.mxu0
    %v8417 = vrot.slane %v7411, 4
    %v8422 = vunpack.c.l.b16 %v7441
    %v8423 = vunpack.c.l.b16 %v7442
    %v8424 = vunpack.c.l.b16 %v7443
    %v8425 = vunpack.c.l.b16 %v7444
    %v8426 = vpack.c.b16 %v8423, %v8422
    %v8427 = vpack.c.b16 %v8425, %v8424
    %v8431 = vsel %vm7531, %v8417, 0
    %8433 = vmatprep.subr.bf16.mxu0 0
    %8434 = vmatpush1.bf16.msra.mxu0 %v8426
    %8435 = vmatprep.subr.bf16.mxu0 0
    %8436 = vmatpush1.bf16.msra.mxu0 %v8427
    %8437 = vmatprep.subr.bf16.mxu0 0
    %8438 = vmatpush1.bf16.msra.mxu0 0
    %8439 = vmatprep.subr.bf16.mxu0 0
    %8440 = vmatpush1.bf16.msra.mxu0 0
    %8441 = vmatprep.subr.bf16.mxu0 0
    %8442 = vmatpush1.bf16.msra.mxu0 0
    %8443 = vmatprep.subr.bf16.mxu0 0
    %8444 = vmatpush1.bf16.msra.mxu0 0
    %8445 = vmatprep.subr.bf16.mxu0 0
    %8446 = vmatpush1.bf16.msra.mxu0 0
    %8447 = vmatprep.subr.bf16.mxu0 0
    %8448 = vmatpush1.bf16.msra.mxu0 0
    %8449 = vmatprep.subr.bf16.mxu0 0
    %8450 = vmatpush1.bf16.msra.mxu0 0
    %8451 = vmatprep.subr.bf16.mxu0 0
    %8452 = vmatpush1.bf16.msra.mxu0 0
    %8453 = vmatprep.subr.bf16.mxu0 0
    %8454 = vmatpush1.bf16.msra.mxu0 0
    %8455 = vmatprep.subr.bf16.mxu0 0
    %8456 = vmatpush1.bf16.msra.mxu0 0
    %8457 = vmatprep.subr.bf16.mxu0 0
    %8458 = vmatpush1.bf16.msra.mxu0 0
    %8459 = vmatprep.subr.bf16.mxu0 0
    %8460 = vmatpush1.bf16.msra.mxu0 0
    %8461 = vmatprep.subr.bf16.mxu0 0
    %8462 = vmatpush1.bf16.msra.mxu0 0
    %8463 = vmatprep.subr.bf16.mxu0 0
    %8464 = vmatpush1.bf16.msra.mxu0 0
    %8465 = vmatprep.mubr.bf16.mxu0 0
    %8466 = vmatmul.mubr.bf16.gmra.mrb[0].mxu0 %v8431
    %v8467 = vpop.f32.mrb[0].mxu0
    %v8468 = vadd.f32 %v7739, %v8467
    %v8469 = vpop.f32.mrb[0].mxu0
    %v8470 = vpop.f32.mrb[0].mxu0
    %v8471 = vpop.f32.mrb[0].mxu0
    %8472 = vdwg.mxu0
    %v8477 = vunpack.c.l.b16 %v7449
    %v8478 = vunpack.c.l.b16 %v7450
    %v8479 = vunpack.c.l.b16 %v7451
    %v8480 = vunpack.c.l.b16 %v7452
    %v8481 = vpack.c.b16 %v8478, %v8477
    %v8482 = vpack.c.b16 %v8480, %v8479
    %v8486 = vsel %vm7531, %v7412, 0
    %8488 = vmatprep.subr.bf16.mxu0 0
    %8489 = vmatpush1.bf16.msra.mxu0 %v8481
    %8490 = vmatprep.subr.bf16.mxu0 0
    %8491 = vmatpush1.bf16.msra.mxu0 %v8482
    %8492 = vmatprep.subr.bf16.mxu0 0
    %8493 = vmatpush1.bf16.msra.mxu0 0
    %8494 = vmatprep.subr.bf16.mxu0 0
    %8495 = vmatpush1.bf16.msra.mxu0 0
    %8496 = vmatprep.subr.bf16.mxu0 0
    %8497 = vmatpush1.bf16.msra.mxu0 0
    %8498 = vmatprep.subr.bf16.mxu0 0
    %8499 = vmatpush1.bf16.msra.mxu0 0
    %8500 = vmatprep.subr.bf16.mxu0 0
    %8501 = vmatpush1.bf16.msra.mxu0 0
    %8502 = vmatprep.subr.bf16.mxu0 0
    %8503 = vmatpush1.bf16.msra.mxu0 0
    %8504 = vmatprep.subr.bf16.mxu0 0
    %8505 = vmatpush1.bf16.msra.mxu0 0
    %8506 = vmatprep.subr.bf16.mxu0 0
    %8507 = vmatpush1.bf16.msra.mxu0 0
    %8508 = vmatprep.subr.bf16.mxu0 0
    %8509 = vmatpush1.bf16.msra.mxu0 0
    %8510 = vmatprep.subr.bf16.mxu0 0
    %8511 = vmatpush1.bf16.msra.mxu0 0
    %8512 = vmatprep.subr.bf16.mxu0 0
    %8513 = vmatpush1.bf16.msra.mxu0 0
    %8514 = vmatprep.subr.bf16.mxu0 0
    %8515 = vmatpush1.bf16.msra.mxu0 0
    %8516 = vmatprep.subr.bf16.mxu0 0
    %8517 = vmatpush1.bf16.msra.mxu0 0
    %8518 = vmatprep.subr.bf16.mxu0 0
    %8519 = vmatpush1.bf16.msra.mxu0 0
    %8520 = vmatprep.mubr.bf16.mxu0 0
    %8521 = vmatmul.mubr.bf16.gmra.mrb[0].mxu0 %v8486
    %v8522 = vpop.f32.mrb[0].mxu0
    %v8523 = vadd.f32 %v7796, %v8522
    %v8524 = vpop.f32.mrb[0].mxu0
    %v8525 = vpop.f32.mrb[0].mxu0
    %v8526 = vpop.f32.mrb[0].mxu0
    %8527 = vdwg.mxu0
    %v8528 = vrot.slane %v7412, 4
    %v8533 = vunpack.c.l.b16 %v7457
    %v8534 = vunpack.c.l.b16 %v7458
    %v8535 = vunpack.c.l.b16 %v7459
    %v8536 = vunpack.c.l.b16 %v7460
    %v8537 = vpack.c.b16 %v8534, %v8533
    %v8538 = vpack.c.b16 %v8536, %v8535
    %v8542 = vsel %vm7531, %v8528, 0
    %8544 = vmatprep.subr.bf16.mxu0 0
    %8545 = vmatpush1.bf16.msra.mxu0 %v8537
    %8546 = vmatprep.subr.bf16.mxu0 0
    %8547 = vmatpush1.bf16.msra.mxu0 %v8538
    %8548 = vmatprep.subr.bf16.mxu0 0
    %8549 = vmatpush1.bf16.msra.mxu0 0
    %8550 = vmatprep.subr.bf16.mxu0 0
    %8551 = vmatpush1.bf16.msra.mxu0 0
    %8552 = vmatprep.subr.bf16.mxu0 0
    %8553 = vmatpush1.bf16.msra.mxu0 0
    %8554 = vmatprep.subr.bf16.mxu0 0
    %8555 = vmatpush1.bf16.msra.mxu0 0
    %8556 = vmatprep.subr.bf16.mxu0 0
    %8557 = vmatpush1.bf16.msra.mxu0 0
    %8558 = vmatprep.subr.bf16.mxu0 0
    %8559 = vmatpush1.bf16.msra.mxu0 0
    %8560 = vmatprep.subr.bf16.mxu0 0
    %8561 = vmatpush1.bf16.msra.mxu0 0
    %8562 = vmatprep.subr.bf16.mxu0 0
    %8563 = vmatpush1.bf16.msra.mxu0 0
    %8564 = vmatprep.subr.bf16.mxu0 0
    %8565 = vmatpush1.bf16.msra.mxu0 0
    %8566 = vmatprep.subr.bf16.mxu0 0
    %8567 = vmatpush1.bf16.msra.mxu0 0
    %8568 = vmatprep.subr.bf16.mxu0 0
    %8569 = vmatpush1.bf16.msra.mxu0 0
    %8570 = vmatprep.subr.bf16.mxu0 0
    %8571 = vmatpush1.bf16.msra.mxu0 0
    %8572 = vmatprep.subr.bf16.mxu0 0
    %8573 = vmatpush1.bf16.msra.mxu0 0
    %8574 = vmatprep.subr.bf16.mxu0 0
    %8575 = vmatpush1.bf16.msra.mxu0 0
    %8576 = vmatprep.mubr.bf16.mxu0 0
    %8577 = vmatmul.mubr.bf16.gmra.mrb[0].mxu0 %v8542
    %v8578 = vpop.f32.mrb[0].mxu0
    %v8579 = vadd.f32 %v7852, %v8578
    %v8580 = vpop.f32.mrb[0].mxu0
    %v8581 = vpop.f32.mrb[0].mxu0
    %v8582 = vpop.f32.mrb[0].mxu0
    %8583 = vdwg.mxu0
    %v8588 = vunpack.c.l.b16 %v7465
    %v8589 = vunpack.c.l.b16 %v7466
    %v8590 = vunpack.c.l.b16 %v7467
    %v8591 = vunpack.c.l.b16 %v7468
    %v8592 = vpack.c.b16 %v8589, %v8588
    %v8593 = vpack.c.b16 %v8591, %v8590
    %v8597 = vsel %vm7531, %v7413, 0
    %8599 = vmatprep.subr.bf16.mxu0 0
    %8600 = vmatpush1.bf16.msra.mxu0 %v8592
    %8601 = vmatprep.subr.bf16.mxu0 0
    %8602 = vmatpush1.bf16.msra.mxu0 %v8593
    %8603 = vmatprep.subr.bf16.mxu0 0
    %8604 = vmatpush1.bf16.msra.mxu0 0
    %8605 = vmatprep.subr.bf16.mxu0 0
    %8606 = vmatpush1.bf16.msra.mxu0 0
    %8607 = vmatprep.subr.bf16.mxu0 0
    %8608 = vmatpush1.bf16.msra.mxu0 0
    %8609 = vmatprep.subr.bf16.mxu0 0
    %8610 = vmatpush1.bf16.msra.mxu0 0
    %8611 = vmatprep.subr.bf16.mxu0 0
    %8612 = vmatpush1.bf16.msra.mxu0 0
    %8613 = vmatprep.subr.bf16.mxu0 0
    %8614 = vmatpush1.bf16.msra.mxu0 0
    %8615 = vmatprep.subr.bf16.mxu0 0
    %8616 = vmatpush1.bf16.msra.mxu0 0
    %8617 = vmatprep.subr.bf16.mxu0 0
    %8618 = vmatpush1.bf16.msra.mxu0 0
    %8619 = vmatprep.subr.bf16.mxu0 0
    %8620 = vmatpush1.bf16.msra.mxu0 0
    %8621 = vmatprep.subr.bf16.mxu0 0
    %8622 = vmatpush1.bf16.msra.mxu0 0
    %8623 = vmatprep.subr.bf16.mxu0 0
    %8624 = vmatpush1.bf16.msra.mxu0 0
    %8625 = vmatprep.subr.bf16.mxu0 0
    %8626 = vmatpush1.bf16.msra.mxu0 0
    %8627 = vmatprep.subr.bf16.mxu0 0
    %8628 = vmatpush1.bf16.msra.mxu0 0
    %8629 = vmatprep.subr.bf16.mxu0 0
    %8630 = vmatpush1.bf16.msra.mxu0 0
    %8631 = vmatprep.mubr.bf16.mxu0 0
    %8632 = vmatmul.mubr.bf16.gmra.mrb[0].mxu0 %v8597
    %v8633 = vpop.f32.mrb[0].mxu0
    %v8634 = vadd.f32 %v7909, %v8633
    %v8635 = vpop.f32.mrb[0].mxu0
    %v8636 = vpop.f32.mrb[0].mxu0
    %v8637 = vpop.f32.mrb[0].mxu0
    %8638 = vdwg.mxu0
    %v8639 = vrot.slane %v7413, 4
    %v8644 = vunpack.c.l.b16 %v7473
    %v8645 = vunpack.c.l.b16 %v7474
    %v8646 = vunpack.c.l.b16 %v7475
    %v8647 = vunpack.c.l.b16 %v7476
    %v8648 = vpack.c.b16 %v8645, %v8644
    %v8649 = vpack.c.b16 %v8647, %v8646
    %v8653 = vsel %vm7531, %v8639, 0
    %8655 = vmatprep.subr.bf16.mxu0 0
    %8656 = vmatpush1.bf16.msra.mxu0 %v8648
    %8657 = vmatprep.subr.bf16.mxu0 0
    %8658 = vmatpush1.bf16.msra.mxu0 %v8649
    %8659 = vmatprep.subr.bf16.mxu0 0
    %8660 = vmatpush1.bf16.msra.mxu0 0
    %8661 = vmatprep.subr.bf16.mxu0 0
    %8662 = vmatpush1.bf16.msra.mxu0 0
    %8663 = vmatprep.subr.bf16.mxu0 0
    %8664 = vmatpush1.bf16.msra.mxu0 0
    %8665 = vmatprep.subr.bf16.mxu0 0
    %8666 = vmatpush1.bf16.msra.mxu0 0
    %8667 = vmatprep.subr.bf16.mxu0 0
    %8668 = vmatpush1.bf16.msra.mxu0 0
    %8669 = vmatprep.subr.bf16.mxu0 0
    %8670 = vmatpush1.bf16.msra.mxu0 0
    %8671 = vmatprep.subr.bf16.mxu0 0
    %8672 = vmatpush1.bf16.msra.mxu0 0
    %8673 = vmatprep.subr.bf16.mxu0 0
    %8674 = vmatpush1.bf16.msra.mxu0 0
    %8675 = vmatprep.subr.bf16.mxu0 0
    %8676 = vmatpush1.bf16.msra.mxu0 0
    %8677 = vmatprep.subr.bf16.mxu0 0
    %8678 = vmatpush1.bf16.msra.mxu0 0
    %8679 = vmatprep.subr.bf16.mxu0 0
    %8680 = vmatpush1.bf16.msra.mxu0 0
    %8681 = vmatprep.subr.bf16.mxu0 0
    %8682 = vmatpush1.bf16.msra.mxu0 0
    %8683 = vmatprep.subr.bf16.mxu0 0
    %8684 = vmatpush1.bf16.msra.mxu0 0
    %8685 = vmatprep.subr.bf16.mxu0 0
    %8686 = vmatpush1.bf16.msra.mxu0 0
    %8687 = vmatprep.mubr.bf16.mxu0 0
    %8688 = vmatmul.mubr.bf16.gmra.mrb[0].mxu0 %v8653
    %v8689 = vpop.f32.mrb[0].mxu0
    %v8690 = vadd.f32 %v7965, %v8689
    %v8691 = vpop.f32.mrb[0].mxu0
    %v8692 = vpop.f32.mrb[0].mxu0
    %v8693 = vpop.f32.mrb[0].mxu0
    %8694 = vdwg.mxu0
    %v8699 = vunpack.c.l.b16 %v7481
    %v8700 = vunpack.c.l.b16 %v7482
    %v8701 = vunpack.c.l.b16 %v7483
    %v8702 = vunpack.c.l.b16 %v7484
    %v8703 = vpack.c.b16 %v8700, %v8699
    %v8704 = vpack.c.b16 %v8702, %v8701
    %v8708 = vsel %vm7531, %v7414, 0
    %8710 = vmatprep.subr.bf16.mxu0 0
    %8711 = vmatpush1.bf16.msra.mxu0 %v8703
    %8712 = vmatprep.subr.bf16.mxu0 0
    %8713 = vmatpush1.bf16.msra.mxu0 %v8704
    %8714 = vmatprep.subr.bf16.mxu0 0
    %8715 = vmatpush1.bf16.msra.mxu0 0
    %8716 = vmatprep.subr.bf16.mxu0 0
    %8717 = vmatpush1.bf16.msra.mxu0 0
    %8718 = vmatprep.subr.bf16.mxu0 0
    %8719 = vmatpush1.bf16.msra.mxu0 0
    %8720 = vmatprep.subr.bf16.mxu0 0
    %8721 = vmatpush1.bf16.msra.mxu0 0
    %8722 = vmatprep.subr.bf16.mxu0 0
    %8723 = vmatpush1.bf16.msra.mxu0 0
    %8724 = vmatprep.subr.bf16.mxu0 0
    %8725 = vmatpush1.bf16.msra.mxu0 0
    %8726 = vmatprep.subr.bf16.mxu0 0
    %8727 = vmatpush1.bf16.msra.mxu0 0
    %8728 = vmatprep.subr.bf16.mxu0 0
    %8729 = vmatpush1.bf16.msra.mxu0 0
    %8730 = vmatprep.subr.bf16.mxu0 0
    %8731 = vmatpush1.bf16.msra.mxu0 0
    %8732 = vmatprep.subr.bf16.mxu0 0
    %8733 = vmatpush1.bf16.msra.mxu0 0
    %8734 = vmatprep.subr.bf16.mxu0 0
    %8735 = vmatpush1.bf16.msra.mxu0 0
    %8736 = vmatprep.subr.bf16.mxu0 0
    %8737 = vmatpush1.bf16.msra.mxu0 0
    %8738 = vmatprep.subr.bf16.mxu0 0
    %8739 = vmatpush1.bf16.msra.mxu0 0
    %8740 = vmatprep.subr.bf16.mxu0 0
    %8741 = vmatpush1.bf16.msra.mxu0 0
    %8742 = vmatprep.mubr.bf16.mxu0 0
    %8743 = vmatmul.mubr.bf16.gmra.mrb[0].mxu0 %v8708
    %v8744 = vpop.f32.mrb[0].mxu0
    %v8745 = vadd.f32 %v8022, %v8744
    %v8746 = vpop.f32.mrb[0].mxu0
    %v8747 = vpop.f32.mrb[0].mxu0
    %v8748 = vpop.f32.mrb[0].mxu0
    %8749 = vdwg.mxu0
    %v8750 = vrot.slane %v7414, 4
    %v8755 = vunpack.c.l.b16 %v7489
    %v8756 = vunpack.c.l.b16 %v7490
    %v8757 = vunpack.c.l.b16 %v7491
    %v8758 = vunpack.c.l.b16 %v7492
    %v8759 = vpack.c.b16 %v8756, %v8755
    %v8760 = vpack.c.b16 %v8758, %v8757
    %v8764 = vsel %vm7531, %v8750, 0
    %8766 = vmatprep.subr.bf16.mxu0 0
    %8767 = vmatpush1.bf16.msra.mxu0 %v8759
    %8768 = vmatprep.subr.bf16.mxu0 0
    %8769 = vmatpush1.bf16.msra.mxu0 %v8760
    %8770 = vmatprep.subr.bf16.mxu0 0
    %8771 = vmatpush1.bf16.msra.mxu0 0
    %8772 = vmatprep.subr.bf16.mxu0 0
    %8773 = vmatpush1.bf16.msra.mxu0 0
    %8774 = vmatprep.subr.bf16.mxu0 0
    %8775 = vmatpush1.bf16.msra.mxu0 0
    %8776 = vmatprep.subr.bf16.mxu0 0
    %8777 = vmatpush1.bf16.msra.mxu0 0
    %8778 = vmatprep.subr.bf16.mxu0 0
    %8779 = vmatpush1.bf16.msra.mxu0 0
    %8780 = vmatprep.subr.bf16.mxu0 0
    %8781 = vmatpush1.bf16.msra.mxu0 0
    %8782 = vmatprep.subr.bf16.mxu0 0
    %8783 = vmatpush1.bf16.msra.mxu0 0
    %8784 = vmatprep.subr.bf16.mxu0 0
    %8785 = vmatpush1.bf16.msra.mxu0 0
    %8786 = vmatprep.subr.bf16.mxu0 0
    %8787 = vmatpush1.bf16.msra.mxu0 0
    %8788 = vmatprep.subr.bf16.mxu0 0
    %8789 = vmatpush1.bf16.msra.mxu0 0
    %8790 = vmatprep.subr.bf16.mxu0 0
    %8791 = vmatpush1.bf16.msra.mxu0 0
    %8792 = vmatprep.subr.bf16.mxu0 0
    %8793 = vmatpush1.bf16.msra.mxu0 0
    %8794 = vmatprep.subr.bf16.mxu0 0
    %8795 = vmatpush1.bf16.msra.mxu0 0
    %8796 = vmatprep.subr.bf16.mxu0 0
    %8797 = vmatpush1.bf16.msra.mxu0 0
    %8798 = vmatprep.mubr.bf16.mxu0 0
    %8799 = vmatmul.mubr.bf16.gmra.mrb[0].mxu0 %v8764
    %v8800 = vpop.f32.mrb[0].mxu0
    %v8801 = vadd.f32 %v8078, %v8800
    %v8802 = vpop.f32.mrb[0].mxu0
    %v8803 = vpop.f32.mrb[0].mxu0
    %v8804 = vpop.f32.mrb[0].mxu0
    %8805 = vdwg.mxu0
    %v8810 = vunpack.c.l.b16 %v7497
    %v8811 = vunpack.c.l.b16 %v7498
    %v8812 = vunpack.c.l.b16 %v7499
    %v8813 = vunpack.c.l.b16 %v7500
    %v8814 = vpack.c.b16 %v8811, %v8810
    %v8815 = vpack.c.b16 %v8813, %v8812
    %v8819 = vsel %vm7531, %v7415, 0
    %8821 = vmatprep.subr.bf16.mxu0 0
    %8822 = vmatpush1.bf16.msra.mxu0 %v8814
    %8823 = vmatprep.subr.bf16.mxu0 0
    %8824 = vmatpush1.bf16.msra.mxu0 %v8815
    %8825 = vmatprep.subr.bf16.mxu0 0
    %8826 = vmatpush1.bf16.msra.mxu0 0
    %8827 = vmatprep.subr.bf16.mxu0 0
    %8828 = vmatpush1.bf16.msra.mxu0 0
    %8829 = vmatprep.subr.bf16.mxu0 0
    %8830 = vmatpush1.bf16.msra.mxu0 0
    %8831 = vmatprep.subr.bf16.mxu0 0
    %8832 = vmatpush1.bf16.msra.mxu0 0
    %8833 = vmatprep.subr.bf16.mxu0 0
    %8834 = vmatpush1.bf16.msra.mxu0 0
    %8835 = vmatprep.subr.bf16.mxu0 0
    %8836 = vmatpush1.bf16.msra.mxu0 0
    %8837 = vmatprep.subr.bf16.mxu0 0
    %8838 = vmatpush1.bf16.msra.mxu0 0
    %8839 = vmatprep.subr.bf16.mxu0 0
    %8840 = vmatpush1.bf16.msra.mxu0 0
    %8841 = vmatprep.subr.bf16.mxu0 0
    %8842 = vmatpush1.bf16.msra.mxu0 0
    %8843 = vmatprep.subr.bf16.mxu0 0
    %8844 = vmatpush1.bf16.msra.mxu0 0
    %8845 = vmatprep.subr.bf16.mxu0 0
    %8846 = vmatpush1.bf16.msra.mxu0 0
    %8847 = vmatprep.subr.bf16.mxu0 0
    %8848 = vmatpush1.bf16.msra.mxu0 0
    %8849 = vmatprep.subr.bf16.mxu0 0
    %8850 = vmatpush1.bf16.msra.mxu0 0
    %8851 = vmatprep.subr.bf16.mxu0 0
    %8852 = vmatpush1.bf16.msra.mxu0 0
    %8853 = vmatprep.mubr.bf16.mxu0 0
    %8854 = vmatmul.mubr.bf16.gmra.mrb[0].mxu0 %v8819
    %v8855 = vpop.f32.mrb[0].mxu0
    %v8856 = vadd.f32 %v8135, %v8855
    %v8857 = vpop.f32.mrb[0].mxu0
    %v8858 = vpop.f32.mrb[0].mxu0
    %v8859 = vpop.f32.mrb[0].mxu0
    %8860 = vdwg.mxu0
    %v8861 = vrot.slane %v7415, 4
    %v8866 = vunpack.c.l.b16 %v7505
    %v8867 = vunpack.c.l.b16 %v7506
    %v8868 = vunpack.c.l.b16 %v7507
    %v8869 = vunpack.c.l.b16 %v7508
    %v8870 = vpack.c.b16 %v8867, %v8866
    %v8871 = vpack.c.b16 %v8869, %v8868
    %v8875 = vsel %vm7531, %v8861, 0
    %8877 = vmatprep.subr.bf16.mxu0 0
    %8878 = vmatpush1.bf16.msra.mxu0 %v8870
    %8879 = vmatprep.subr.bf16.mxu0 0
    %8880 = vmatpush1.bf16.msra.mxu0 %v8871
    %8881 = vmatprep.subr.bf16.mxu0 0
    %8882 = vmatpush1.bf16.msra.mxu0 0
    %8883 = vmatprep.subr.bf16.mxu0 0
    %8884 = vmatpush1.bf16.msra.mxu0 0
    %8885 = vmatprep.subr.bf16.mxu0 0
    %8886 = vmatpush1.bf16.msra.mxu0 0
    %8887 = vmatprep.subr.bf16.mxu0 0
    %8888 = vmatpush1.bf16.msra.mxu0 0
    %8889 = vmatprep.subr.bf16.mxu0 0
    %8890 = vmatpush1.bf16.msra.mxu0 0
    %8891 = vmatprep.subr.bf16.mxu0 0
    %8892 = vmatpush1.bf16.msra.mxu0 0
    %8893 = vmatprep.subr.bf16.mxu0 0
    %8894 = vmatpush1.bf16.msra.mxu0 0
    %8895 = vmatprep.subr.bf16.mxu0 0
    %8896 = vmatpush1.bf16.msra.mxu0 0
    %8897 = vmatprep.subr.bf16.mxu0 0
    %8898 = vmatpush1.bf16.msra.mxu0 0
    %8899 = vmatprep.subr.bf16.mxu0 0
    %8900 = vmatpush1.bf16.msra.mxu0 0
    %8901 = vmatprep.subr.bf16.mxu0 0
    %8902 = vmatpush1.bf16.msra.mxu0 0
    %8903 = vmatprep.subr.bf16.mxu0 0
    %8904 = vmatpush1.bf16.msra.mxu0 0
    %8905 = vmatprep.subr.bf16.mxu0 0
    %8906 = vmatpush1.bf16.msra.mxu0 0
    %8907 = vmatprep.subr.bf16.mxu0 0
    %8908 = vmatpush1.bf16.msra.mxu0 0
    %8909 = vmatprep.mubr.bf16.mxu0 0
    %8910 = vmatmul.mubr.bf16.gmra.mrb[0].mxu0 %v8875
    %v8911 = vpop.f32.mrb[0].mxu0
    %v8912 = vadd.f32 %v8191, %v8911
    %v8913 = vpop.f32.mrb[0].mxu0
    %v8914 = vpop.f32.mrb[0].mxu0
    %v8915 = vpop.f32.mrb[0].mxu0
    %8916 = vdwg.mxu0
    %v8917 = vadd.f32 %v8301, %v8357
    %v8918 = vadd.f32 %v8412, %v8468
    %v8919 = vadd.f32 %v8523, %v8579
    %v8920 = vadd.f32 %v8634, %v8690
    %v8921 = vadd.f32 %v8745, %v8801
    %v8922 = vadd.f32 %v8856, %v8912
    %v8923 = vadd.f32 %v8917, %v8918
    %v8924 = vadd.f32 %v8919, %v8920
    %v8925 = vadd.f32 %v8921, %v8922
    %v8926 = vadd.f32 %v8923, %v8924
    %v8927 = vadd.f32 %v8925, %v8246
    %v8928 = vadd.f32 %v8926, %v8927
    %v8929 = vld [vmem:[%s11] sm:$0x1]
    %v8930 = vld [vmem:[%s12] sm:$0x1]
    %vm8931 = vcmask 31744
    %v8932 = vsel %vm8931, 1.0, 0
    %vm8934 = vcmask 1043456
    %v8936 = vsel %vm8934, %v8928, 0
    %8938 = vmatprep.subr.mxu0 0.0
    %8939 = vmatpush1.msra.mxu0 %v8936
    %8940 = vmatprep.subr.mxu0 0.0
    %8941 = vmatpush1.msra.mxu0 0.0
    %8942 = vmatprep.subr.mxu0 0.0
    %8943 = vmatpush1.msra.mxu0 0.0
    %8944 = vmatprep.subr.mxu0 0.0
    %8945 = vmatpush1.msra.mxu0 0.0
    %8946 = vmatprep.subr.mxu0 0.0
    %8947 = vmatpush1.msra.mxu0 0.0
    %8948 = vmatprep.subr.mxu0 0.0
    %8949 = vmatpush1.msra.mxu0 0.0
    %8950 = vmatprep.subr.mxu0 0.0
    %8951 = vmatpush1.msra.mxu0 0.0
    %8952 = vmatprep.subr.mxu0 0.0
    %8953 = vmatpush1.msra.mxu0 0.0
    %8954 = vmatprep.subr.mxu0 0.0
    %8955 = vmatpush1.msra.mxu0 0.0
    %8956 = vmatprep.subr.mxu0 0.0
    %8957 = vmatpush1.msra.mxu0 0.0
    %8958 = vmatprep.subr.mxu0 0.0
    %8959 = vmatpush1.msra.mxu0 0.0
    %8960 = vmatprep.subr.mxu0 0.0
    %8961 = vmatpush1.msra.mxu0 0.0
    %8962 = vmatprep.subr.mxu0 0.0
    %8963 = vmatpush1.msra.mxu0 0.0
    %8964 = vmatprep.subr.mxu0 0.0
    %8965 = vmatpush1.msra.mxu0 0.0
    %8966 = vmatprep.subr.mxu0 0.0
    %8967 = vmatpush1.msra.mxu0 0.0
    %8968 = vmatprep.subr.mxu0 0.0
    %8969 = vmatpush1.msra.mxu0 0.0
    %8970 = vmatprep.subr.mxu0 0.0
    %8971 = vmatpush1.msra.mxu0 0.0
    %8972 = vmatprep.subr.mxu0 0.0
    %8973 = vmatpush1.msra.mxu0 0.0
    %8974 = vmatprep.subr.mxu0 0.0
    %8975 = vmatpush1.msra.mxu0 0.0
    %8976 = vmatprep.subr.mxu0 0.0
    %8977 = vmatpush1.msra.mxu0 0.0
    %8978 = vmatprep.subr.mxu0 0.0
    %8979 = vmatpush1.msra.mxu0 0.0
    %8980 = vmatprep.subr.mxu0 0.0
    %8981 = vmatpush1.msra.mxu0 0.0
    %8982 = vmatprep.subr.mxu0 0.0
    %8983 = vmatpush1.msra.mxu0 0.0
    %8984 = vmatprep.subr.mxu0 0.0
    %8985 = vmatpush1.msra.mxu0 0.0
    %8986 = vmatprep.subr.mxu0 0.0
    %8987 = vmatpush1.msra.mxu0 0.0
    %8988 = vmatprep.subr.mxu0 0.0
    %8989 = vmatpush1.msra.mxu0 0.0
    %8990 = vmatprep.subr.mxu0 0.0
    %8991 = vmatpush1.msra.mxu0 0.0
    %8992 = vmatprep.subr.mxu0 0.0
    %8993 = vmatpush1.msra.mxu0 0.0
    %8994 = vmatprep.subr.mxu0 0.0
    %8995 = vmatpush1.msra.mxu0 0.0
    %8996 = vmatprep.subr.mxu0 0.0
    %8997 = vmatpush1.msra.mxu0 0.0
    %8998 = vmatprep.subr.mxu0 0.0
    %8999 = vmatpush1.msra.mxu0 0.0
    %9000 = vmatprep.subr.mxu0 0.0
    %9001 = vmatpush1.msra.mxu0 0.0
    %9002 = vmatprep.mubr.f32.mxu0 0.0
    %9003 = vmatmul.mubr.f32.gmra.mrb[0].mxu0 %v8932
    %v9004 = vpop.f32.mrb[0].mxu0
    %v9005 = vadd.f32 0.0, %v9004
    %v9006 = vpop.f32.mrb[0].mxu0
    %9007 = vdwg.mxu0
    %v9008 = vmul.f32 %v9005, 0.25
    %v9009 = vmul.f32 %v8928, %v8928
    %v9011 = vsel %vm8934, %v9009, 0
    %9013 = vmatprep.subr.mxu0 0.0
    %9014 = vmatpush1.msra.mxu0 %v9011
    %9015 = vmatprep.subr.mxu0 0.0
    %9016 = vmatpush1.msra.mxu0 0.0
    %9017 = vmatprep.subr.mxu0 0.0
    %9018 = vmatpush1.msra.mxu0 0.0
    %9019 = vmatprep.subr.mxu0 0.0
    %9020 = vmatpush1.msra.mxu0 0.0
    %9021 = vmatprep.subr.mxu0 0.0
    %9022 = vmatpush1.msra.mxu0 0.0
    %9023 = vmatprep.subr.mxu0 0.0
    %9024 = vmatpush1.msra.mxu0 0.0
    %9025 = vmatprep.subr.mxu0 0.0
    %9026 = vmatpush1.msra.mxu0 0.0
    %9027 = vmatprep.subr.mxu0 0.0
    %9028 = vmatpush1.msra.mxu0 0.0
    %9029 = vmatprep.subr.mxu0 0.0
    %9030 = vmatpush1.msra.mxu0 0.0
    %9031 = vmatprep.subr.mxu0 0.0
    %9032 = vmatpush1.msra.mxu0 0.0
    %9033 = vmatprep.subr.mxu0 0.0
    %9034 = vmatpush1.msra.mxu0 0.0
    %9035 = vmatprep.subr.mxu0 0.0
    %9036 = vmatpush1.msra.mxu0 0.0
    %9037 = vmatprep.subr.mxu0 0.0
    %9038 = vmatpush1.msra.mxu0 0.0
    %9039 = vmatprep.subr.mxu0 0.0
    %9040 = vmatpush1.msra.mxu0 0.0
    %9041 = vmatprep.subr.mxu0 0.0
    %9042 = vmatpush1.msra.mxu0 0.0
    %9043 = vmatprep.subr.mxu0 0.0
    %9044 = vmatpush1.msra.mxu0 0.0
    %9045 = vmatprep.subr.mxu0 0.0
    %9046 = vmatpush1.msra.mxu0 0.0
    %9047 = vmatprep.subr.mxu0 0.0
    %9048 = vmatpush1.msra.mxu0 0.0
    %9049 = vmatprep.subr.mxu0 0.0
    %9050 = vmatpush1.msra.mxu0 0.0
    %9051 = vmatprep.subr.mxu0 0.0
    %9052 = vmatpush1.msra.mxu0 0.0
    %9053 = vmatprep.subr.mxu0 0.0
    %9054 = vmatpush1.msra.mxu0 0.0
    %9055 = vmatprep.subr.mxu0 0.0
    %9056 = vmatpush1.msra.mxu0 0.0
    %9057 = vmatprep.subr.mxu0 0.0
    %9058 = vmatpush1.msra.mxu0 0.0
    %9059 = vmatprep.subr.mxu0 0.0
    %9060 = vmatpush1.msra.mxu0 0.0
    %9061 = vmatprep.subr.mxu0 0.0
    %9062 = vmatpush1.msra.mxu0 0.0
    %9063 = vmatprep.subr.mxu0 0.0
    %9064 = vmatpush1.msra.mxu0 0.0
    %9065 = vmatprep.subr.mxu0 0.0
    %9066 = vmatpush1.msra.mxu0 0.0
    %9067 = vmatprep.subr.mxu0 0.0
    %9068 = vmatpush1.msra.mxu0 0.0
    %9069 = vmatprep.subr.mxu0 0.0
    %9070 = vmatpush1.msra.mxu0 0.0
    %9071 = vmatprep.subr.mxu0 0.0
    %9072 = vmatpush1.msra.mxu0 0.0
    %9073 = vmatprep.subr.mxu0 0.0
    %9074 = vmatpush1.msra.mxu0 0.0
    %9075 = vmatprep.subr.mxu0 0.0
    %9076 = vmatpush1.msra.mxu0 0.0
    %9077 = vmatprep.mubr.f32.mxu0 0.0
    %9078 = vmatmul.mubr.f32.gmra.mrb[0].mxu0 %v8932
    %v9079 = vpop.f32.mrb[0].mxu0
    %v9080 = vadd.f32 0.0, %v9079
    %v9081 = vpop.f32.mrb[0].mxu0
    %9082 = vdwg.mxu0
    %v9083 = vmul.f32 %v9080, 0.25
    %v9084 = vmul.f32 %v9008, %v9008
    %v9085 = vsub.f32 %v9083, %v9084
    %v9086 = vadd.f32 %v9085, 1e-05
    %v9087 = vrsqrt.pop %v9086
    %v9088 = vmul.f32 %v9087, %v8929
    %v9089 = vlaneseq
    %v9090 = vshrl.u32 %v9089, 7
    %v9091 = vsub.s32 0, %v9090
    %v9092 = vrot.slane %v9008, %v9091
    %v9093 = vsub.f32 %v8928, %v9092
    %v9094 = vlaneseq
    %v9095 = vshrl.u32 %v9094, 7
    %v9096 = vsub.s32 0, %v9095
    %v9097 = vrot.slane %v9088, %v9096
    %v9098 = vmul.f32 %v9093, %v9097
    %v9100 = vlaneseq
    %v9101 = vshrl.u32 %v9100, 7
    %v9102 = vsub.s32 0, %v9101
    %v9103 = vrot.slane %v8930, %v9102
    %v9105 = vadd.f32 %v9098, %v9103
    %v9106 = vmax.f32 %v9105, 0.0
    %v9107 = vld [vmem:[%s13] sm:$0xff]
    %v9108 = vld [vmem:[%s13 + $0x8] sm:$0xff]
    %v9109 = vld [vmem:[%s13 + $0x10] sm:$0xff]
    %v9110 = vld [vmem:[%s13 + $0x18] sm:$0xff]
    %v9111 = vld [vmem:[%s14] sm:$0x1]
    %vm9112 = vcmask 130048
    %v9114 = vsel %vm9112, %v9106, 0
    %9116 = vmatprep.subr.mxu0 0.0
    %9117 = vmatpush1.msra.mxu0 %v9107
    %9118 = vmatprep.subr.mxu0 0.0
    %9119 = vmatpush1.msra.mxu0 %v9108
    %9120 = vmatprep.subr.mxu0 0.0
    %9121 = vmatpush1.msra.mxu0 0.0
    %9122 = vmatprep.subr.mxu0 0.0
    %9123 = vmatpush1.msra.mxu0 0.0
    %9124 = vmatprep.subr.mxu0 0.0
    %9125 = vmatpush1.msra.mxu0 0.0
    %9126 = vmatprep.subr.mxu0 0.0
    %9127 = vmatpush1.msra.mxu0 0.0
    %9128 = vmatprep.subr.mxu0 0.0
    %9129 = vmatpush1.msra.mxu0 0.0
    %9130 = vmatprep.subr.mxu0 0.0
    %9131 = vmatpush1.msra.mxu0 0.0
    %9132 = vmatprep.subr.mxu0 0.0
    %9133 = vmatpush1.msra.mxu0 0.0
    %9134 = vmatprep.subr.mxu0 0.0
    %9135 = vmatpush1.msra.mxu0 0.0
    %9136 = vmatprep.subr.mxu0 0.0
    %9137 = vmatpush1.msra.mxu0 0.0
    %9138 = vmatprep.subr.mxu0 0.0
    %9139 = vmatpush1.msra.mxu0 0.0
    %9140 = vmatprep.subr.mxu0 0.0
    %9141 = vmatpush1.msra.mxu0 0.0
    %9142 = vmatprep.subr.mxu0 0.0
    %9143 = vmatpush1.msra.mxu0 0.0
    %9144 = vmatprep.subr.mxu0 0.0
    %9145 = vmatpush1.msra.mxu0 0.0
    %9146 = vmatprep.subr.mxu0 0.0
    %9147 = vmatpush1.msra.mxu0 0.0
    %9148 = vmatprep.subr.mxu0 0.0
    %9149 = vmatpush1.msra.mxu0 0.0
    %9150 = vmatprep.subr.mxu0 0.0
    %9151 = vmatpush1.msra.mxu0 0.0
    %9152 = vmatprep.subr.mxu0 0.0
    %9153 = vmatpush1.msra.mxu0 0.0
    %9154 = vmatprep.subr.mxu0 0.0
    %9155 = vmatpush1.msra.mxu0 0.0
    %9156 = vmatprep.subr.mxu0 0.0
    %9157 = vmatpush1.msra.mxu0 0.0
    %9158 = vmatprep.subr.mxu0 0.0
    %9159 = vmatpush1.msra.mxu0 0.0
    %9160 = vmatprep.subr.mxu0 0.0
    %9161 = vmatpush1.msra.mxu0 0.0
    %9162 = vmatprep.subr.mxu0 0.0
    %9163 = vmatpush1.msra.mxu0 0.0
    %9164 = vmatprep.subr.mxu0 0.0
    %9165 = vmatpush1.msra.mxu0 0.0
    %9166 = vmatprep.subr.mxu0 0.0
    %9167 = vmatpush1.msra.mxu0 0.0
    %9168 = vmatprep.subr.mxu0 0.0
    %9169 = vmatpush1.msra.mxu0 0.0
    %9170 = vmatprep.subr.mxu0 0.0
    %9171 = vmatpush1.msra.mxu0 0.0
    %9172 = vmatprep.subr.mxu0 0.0
    %9173 = vmatpush1.msra.mxu0 0.0
    %9174 = vmatprep.subr.mxu0 0.0
    %9175 = vmatpush1.msra.mxu0 0.0
    %9176 = vmatprep.subr.mxu0 0.0
    %9177 = vmatpush1.msra.mxu0 0.0
    %9178 = vmatprep.subr.mxu0 0.0
    %9179 = vmatpush1.msra.mxu0 0.0
    %9180 = vmatprep.mubr.f32.mxu0 0.0
    %9181 = vmatmul.mubr.f32.gmra.mrb[0].mxu0 %v9114
    %v9182 = vpop.f32.mrb[0].mxu0
    %v9183 = vadd.f32 0.0, %v9182
    %v9184 = vpop.f32.mrb[0].mxu0
    %9185 = vdwg.mxu0
    %v9186 = vrot.slane %v9106, 2
    %v9187 = vsel %vm9112, %v9186, 0
    %9189 = vmatprep.subr.mxu0 0.0
    %9190 = vmatpush1.msra.mxu0 %v9109
    %9191 = vmatprep.subr.mxu0 0.0
    %9192 = vmatpush1.msra.mxu0 %v9110
    %9193 = vmatprep.subr.mxu0 0.0
    %9194 = vmatpush1.msra.mxu0 0.0
    %9195 = vmatprep.subr.mxu0 0.0
    %9196 = vmatpush1.msra.mxu0 0.0
    %9197 = vmatprep.subr.mxu0 0.0
    %9198 = vmatpush1.msra.mxu0 0.0
    %9199 = vmatprep.subr.mxu0 0.0
    %9200 = vmatpush1.msra.mxu0 0.0
    %9201 = vmatprep.subr.mxu0 0.0
    %9202 = vmatpush1.msra.mxu0 0.0
    %9203 = vmatprep.subr.mxu0 0.0
    %9204 = vmatpush1.msra.mxu0 0.0
    %9205 = vmatprep.subr.mxu0 0.0
    %9206 = vmatpush1.msra.mxu0 0.0
    %9207 = vmatprep.subr.mxu0 0.0
    %9208 = vmatpush1.msra.mxu0 0.0
    %9209 = vmatprep.subr.mxu0 0.0
    %9210 = vmatpush1.msra.mxu0 0.0
    %9211 = vmatprep.subr.mxu0 0.0
    %9212 = vmatpush1.msra.mxu0 0.0
    %9213 = vmatprep.subr.mxu0 0.0
    %9214 = vmatpush1.msra.mxu0 0.0
    %9215 = vmatprep.subr.mxu0 0.0
    %9216 = vmatpush1.msra.mxu0 0.0
    %9217 = vmatprep.subr.mxu0 0.0
    %9218 = vmatpush1.msra.mxu0 0.0
    %9219 = vmatprep.subr.mxu0 0.0
    %9220 = vmatpush1.msra.mxu0 0.0
    %9221 = vmatprep.subr.mxu0 0.0
    %9222 = vmatpush1.msra.mxu0 0.0
    %9223 = vmatprep.subr.mxu0 0.0
    %9224 = vmatpush1.msra.mxu0 0.0
    %9225 = vmatprep.subr.mxu0 0.0
    %9226 = vmatpush1.msra.mxu0 0.0
    %9227 = vmatprep.subr.mxu0 0.0
    %9228 = vmatpush1.msra.mxu0 0.0
    %9229 = vmatprep.subr.mxu0 0.0
    %9230 = vmatpush1.msra.mxu0 0.0
    %9231 = vmatprep.subr.mxu0 0.0
    %9232 = vmatpush1.msra.mxu0 0.0
    %9233 = vmatprep.subr.mxu0 0.0
    %9234 = vmatpush1.msra.mxu0 0.0
    %9235 = vmatprep.subr.mxu0 0.0
    %9236 = vmatpush1.msra.mxu0 0.0
    %9237 = vmatprep.subr.mxu0 0.0
    %9238 = vmatpush1.msra.mxu0 0.0
    %9239 = vmatprep.subr.mxu0 0.0
    %9240 = vmatpush1.msra.mxu0 0.0
    %9241 = vmatprep.subr.mxu0 0.0
    %9242 = vmatpush1.msra.mxu0 0.0
    %9243 = vmatprep.subr.mxu0 0.0
    %9244 = vmatpush1.msra.mxu0 0.0
    %9245 = vmatprep.subr.mxu0 0.0
    %9246 = vmatpush1.msra.mxu0 0.0
    %9247 = vmatprep.subr.mxu0 0.0
    %9248 = vmatpush1.msra.mxu0 0.0
    %9249 = vmatprep.subr.mxu0 0.0
    %9250 = vmatpush1.msra.mxu0 0.0
    %9251 = vmatprep.subr.mxu0 0.0
    %9252 = vmatpush1.msra.mxu0 0.0
    %9253 = vmatprep.mubr.f32.mxu0 0.0
    %9254 = vmatmul.mubr.f32.gmra.mrb[0].mxu0 %v9187
    %v9255 = vpop.f32.mrb[0].mxu0
    %v9256 = vadd.f32 0.0, %v9255
    %v9257 = vpop.f32.mrb[0].mxu0
    %9258 = vdwg.mxu0
    %v9260 = vlaneseq
    %v9261 = vshrl.u32 %v9260, 7
    %v9262 = vsub.s32 0, %v9261
    %v9263 = vrot.slane %v9111, %v9262
    %v9265 = vadd.f32 %v9263, %v9183
    %v9266 = vadd.f32 %v9265, %v9256
    %v9267 = vmax.f32 %v9266, 0.0
    %v9268 = vld [vmem:[%s15] sm:$0xff]
    %v9269 = vld [vmem:[%s15 + $0x8] sm:$0xff]
    %v9270 = vld [vmem:[%s15 + $0x10] sm:$0xff]
    %v9271 = vld [vmem:[%s15 + $0x18] sm:$0xff]
    %v9272 = vld [vmem:[%s15 + $0x20] sm:$0xff]
    %v9273 = vld [vmem:[%s15 + $0x28] sm:$0xff]
    %v9274 = vld [vmem:[%s15 + $0x30] sm:$0xff]
    %v9275 = vld [vmem:[%s15 + $0x38] sm:$0xff]
    %v9276 = vld [vmem:[%s16] sm:$0x1]
    %v9278 = vlaneseq
    %v9279 = vshrl.u32 %v9278, 7
    %v9280 = vsub.s32 0, %v9279
    %v9281 = vrot.slane %v9276, %v9280
    %v9284 = vsel %vm3985, %v9267, 0
    %9286 = vmatprep.subr.mxu0 0.0
    %9287 = vmatpush1.msra.mxu0 %v9268
    %9288 = vmatprep.subr.mxu0 0.0
    %9289 = vmatpush1.msra.mxu0 %v9269
    %9290 = vmatprep.subr.mxu0 0.0
    %9291 = vmatpush1.msra.mxu0 %v9270
    %9292 = vmatprep.subr.mxu0 0.0
    %9293 = vmatpush1.msra.mxu0 %v9271
    %9294 = vmatprep.subr.mxu0 0.0
    %9295 = vmatpush1.msra.mxu0 %v9272
    %9296 = vmatprep.subr.mxu0 0.0
    %9297 = vmatpush1.msra.mxu0 %v9273
    %9298 = vmatprep.subr.mxu0 0.0
    %9299 = vmatpush1.msra.mxu0 %v9274
    %9300 = vmatprep.subr.mxu0 0.0
    %9301 = vmatpush1.msra.mxu0 %v9275
    %9302 = vmatprep.subr.mxu0 0.0
    %9303 = vmatpush1.msra.mxu0 0.0
    %9304 = vmatprep.subr.mxu0 0.0
    %9305 = vmatpush1.msra.mxu0 0.0
    %9306 = vmatprep.subr.mxu0 0.0
    %9307 = vmatpush1.msra.mxu0 0.0
    %9308 = vmatprep.subr.mxu0 0.0
    %9309 = vmatpush1.msra.mxu0 0.0
    %9310 = vmatprep.subr.mxu0 0.0
    %9311 = vmatpush1.msra.mxu0 0.0
    %9312 = vmatprep.subr.mxu0 0.0
    %9313 = vmatpush1.msra.mxu0 0.0
    %9314 = vmatprep.subr.mxu0 0.0
    %9315 = vmatpush1.msra.mxu0 0.0
    %9316 = vmatprep.subr.mxu0 0.0
    %9317 = vmatpush1.msra.mxu0 0.0
    %9318 = vmatprep.subr.mxu0 0.0
    %9319 = vmatpush1.msra.mxu0 0.0
    %9320 = vmatprep.subr.mxu0 0.0
    %9321 = vmatpush1.msra.mxu0 0.0
    %9322 = vmatprep.subr.mxu0 0.0
    %9323 = vmatpush1.msra.mxu0 0.0
    %9324 = vmatprep.subr.mxu0 0.0
    %9325 = vmatpush1.msra.mxu0 0.0
    %9326 = vmatprep.subr.mxu0 0.0
    %9327 = vmatpush1.msra.mxu0 0.0
    %9328 = vmatprep.subr.mxu0 0.0
    %9329 = vmatpush1.msra.mxu0 0.0
    %9330 = vmatprep.subr.mxu0 0.0
    %9331 = vmatpush1.msra.mxu0 0.0
    %9332 = vmatprep.subr.mxu0 0.0
    %9333 = vmatpush1.msra.mxu0 0.0
    %9334 = vmatprep.subr.mxu0 0.0
    %9335 = vmatpush1.msra.mxu0 0.0
    %9336 = vmatprep.subr.mxu0 0.0
    %9337 = vmatpush1.msra.mxu0 0.0
    %9338 = vmatprep.subr.mxu0 0.0
    %9339 = vmatpush1.msra.mxu0 0.0
    %9340 = vmatprep.subr.mxu0 0.0
    %9341 = vmatpush1.msra.mxu0 0.0
    %9342 = vmatprep.subr.mxu0 0.0
    %9343 = vmatpush1.msra.mxu0 0.0
    %9344 = vmatprep.subr.mxu0 0.0
    %9345 = vmatpush1.msra.mxu0 0.0
    %9346 = vmatprep.subr.mxu0 0.0
    %9347 = vmatpush1.msra.mxu0 0.0
    %9348 = vmatprep.subr.mxu0 0.0
    %9349 = vmatpush1.msra.mxu0 0.0
    %9350 = vmatprep.mubr.f32.mxu0 0.0
    %9351 = vmatmul.mubr.f32.gmra.mrb[0].mxu0 %v9284
    %v9352 = vpop.f32.mrb[0].mxu0
    %v9353 = vadd.f32 %v9281, %v9352
    %v9354 = vpop.f32.mrb[0].mxu0
    %9355 = vdwg.mxu0
    %v9356 = vmax.f32 %v9353, 0.0
    %v9357 = vld [vmem:[%s17] sm:$0xff]
    %v9358 = vld [vmem:[%s17 + $0x8] sm:$0xff]
    %v9359 = vld [vmem:[%s17 + $0x10] sm:$0xff]
    %v9360 = vld [vmem:[%s17 + $0x18] sm:$0xff]
    %v9361 = vld [vmem:[%s17 + $0x20] sm:$0xff]
    %v9362 = vld [vmem:[%s17 + $0x28] sm:$0xff]
    %v9363 = vld [vmem:[%s17 + $0x30] sm:$0xff]
    %v9364 = vld [vmem:[%s17 + $0x38] sm:$0xff]
    %v9365 = vld [vmem:[%s18] sm:$0x1]
    %v9367 = vlaneseq
    %v9368 = vshrl.u32 %v9367, 7
    %v9369 = vsub.s32 0, %v9368
    %v9370 = vrot.slane %v9365, %v9369
    %v9373 = vsel %vm3985, %v9356, 0
    %9375 = vmatprep.subr.mxu0 0.0
    %9376 = vmatpush1.msra.mxu0 %v9357
    %9377 = vmatprep.subr.mxu0 0.0
    %9378 = vmatpush1.msra.mxu0 %v9358
    %9379 = vmatprep.subr.mxu0 0.0
    %9380 = vmatpush1.msra.mxu0 %v9359
    %9381 = vmatprep.subr.mxu0 0.0
    %9382 = vmatpush1.msra.mxu0 %v9360
    %9383 = vmatprep.subr.mxu0 0.0
    %9384 = vmatpush1.msra.mxu0 %v9361
    %9385 = vmatprep.subr.mxu0 0.0
    %9386 = vmatpush1.msra.mxu0 %v9362
    %9387 = vmatprep.subr.mxu0 0.0
    %9388 = vmatpush1.msra.mxu0 %v9363
    %9389 = vmatprep.subr.mxu0 0.0
    %9390 = vmatpush1.msra.mxu0 %v9364
    %9391 = vmatprep.subr.mxu0 0.0
    %9392 = vmatpush1.msra.mxu0 0.0
    %9393 = vmatprep.subr.mxu0 0.0
    %9394 = vmatpush1.msra.mxu0 0.0
    %9395 = vmatprep.subr.mxu0 0.0
    %9396 = vmatpush1.msra.mxu0 0.0
    %9397 = vmatprep.subr.mxu0 0.0
    %9398 = vmatpush1.msra.mxu0 0.0
    %9399 = vmatprep.subr.mxu0 0.0
    %9400 = vmatpush1.msra.mxu0 0.0
    %9401 = vmatprep.subr.mxu0 0.0
    %9402 = vmatpush1.msra.mxu0 0.0
    %9403 = vmatprep.subr.mxu0 0.0
    %9404 = vmatpush1.msra.mxu0 0.0
    %9405 = vmatprep.subr.mxu0 0.0
    %9406 = vmatpush1.msra.mxu0 0.0
    %9407 = vmatprep.subr.mxu0 0.0
    %9408 = vmatpush1.msra.mxu0 0.0
    %9409 = vmatprep.subr.mxu0 0.0
    %9410 = vmatpush1.msra.mxu0 0.0
    %9411 = vmatprep.subr.mxu0 0.0
    %9412 = vmatpush1.msra.mxu0 0.0
    %9413 = vmatprep.subr.mxu0 0.0
    %9414 = vmatpush1.msra.mxu0 0.0
    %9415 = vmatprep.subr.mxu0 0.0
    %9416 = vmatpush1.msra.mxu0 0.0
    %9417 = vmatprep.subr.mxu0 0.0
    %9418 = vmatpush1.msra.mxu0 0.0
    %9419 = vmatprep.subr.mxu0 0.0
    %9420 = vmatpush1.msra.mxu0 0.0
    %9421 = vmatprep.subr.mxu0 0.0
    %9422 = vmatpush1.msra.mxu0 0.0
    %9423 = vmatprep.subr.mxu0 0.0
    %9424 = vmatpush1.msra.mxu0 0.0
    %9425 = vmatprep.subr.mxu0 0.0
    %9426 = vmatpush1.msra.mxu0 0.0
    %9427 = vmatprep.subr.mxu0 0.0
    %9428 = vmatpush1.msra.mxu0 0.0
    %9429 = vmatprep.subr.mxu0 0.0
    %9430 = vmatpush1.msra.mxu0 0.0
    %9431 = vmatprep.subr.mxu0 0.0
    %9432 = vmatpush1.msra.mxu0 0.0
    %9433 = vmatprep.subr.mxu0 0.0
    %9434 = vmatpush1.msra.mxu0 0.0
    %9435 = vmatprep.subr.mxu0 0.0
    %9436 = vmatpush1.msra.mxu0 0.0
    %9437 = vmatprep.subr.mxu0 0.0
    %9438 = vmatpush1.msra.mxu0 0.0
    %9439 = vmatprep.mubr.f32.mxu0 0.0
    %9440 = vmatmul.mubr.f32.gmra.mrb[0].mxu0 %v9373
    %v9441 = vpop.f32.mrb[0].mxu0
    %v9442 = vadd.f32 %v9370, %v9441
    %v9443 = vpop.f32.mrb[0].mxu0
    %9444 = vdwg.mxu0
    %vm9445 = vcmask 41984
    %9446 = vst.msk [vmem:[#allocation5] sm:$0x3] %vm9445, %v9442
    // Predicated region
    $region138: #{_lambda_.1} parent=1 // pred_check
      _
    $region139: #{_lambda_.1} parent=1 // pred_check_branch
      %9448 = sbr.rel (0) target = $region141
    $region140: #{_lambda_.1} parent=1 // pred_region
      %s9450 = ssub.s32 32, 32
      %9451 = vsyncadd [#allocation6], %s9450
      %s9453 = sshll.u32 [#allocation5], 4
      %s9454 = int_to_ptr.vmem [resolvable:$true] %s9453
      %9456 = dma.vmem_to_hbm [thread:$0]  %s9454, 32, %s19, [#allocation6]
    $region141: #{_lambda_.1} parent=1 // pred_fallthru
      _
    // Predicated region
    $region142: #{_lambda_.1} parent=1 // pred_check
      _
    $region143: #{_lambda_.1} parent=1 // pred_check_branch
      %9458 = sbr.rel (0) target = $region145
    $region144: #{_lambda_.1} parent=1 // pred_region
      %9459 = dma.done [#allocation6], 32
    $region145: #{_lambda_.1} parent=1 // pred_fallthru
      _
    %9460 = vsyncpa [#allocation6], 1
  %9461 = vsyncmov [#allocation4]
  %s9462 = vpop.sfrf %9461
  %p9463 = scmp.eq.s32.totalorder %s9462, 0
  %p9464 = pneg %p9463
  %9466 = shalt.err (%p9464)
  %s9467 = scalar_lea.sflag [#allocation4], 1
  %9468 = vsyncmov %s9467
  %s9469 = vpop.sfrf %9468
  %p9470 = scmp.eq.s32.totalorder %s9469, 0
  %p9471 = pneg %p9470
  %9473 = shalt.err (%p9471)

</llo_original>
